<compile_context>
chip_gen: v5e
topology: v5e:2x2
jax: 0.10.0
libtpu: 0.0.40
codegen_flags: <defaults>
</compile_context>

<pallas_src>
import functools

import jax
import jax.numpy as jnp
from jax.experimental import pallas as pl
from jax.experimental.pallas import tpu as pltpu


# ---------------------------------------------------------------------------
# helpers
# ---------------------------------------------------------------------------
def _leaky(v, neg_slope):
    return jnp.where(v >= 0.0, v, neg_slope * v)


def _pick_s_tile(S, max_tile=2048):
    """Largest divisor of S that is a multiple of 128 and <= max_tile."""
    best = None
    t = 128
    while t <= min(S, max_tile):
        if S % t == 0:
            best = t
        t += 128
    return best if best is not None else S


# ---------------------------------------------------------------------------
# Kernels
# ---------------------------------------------------------------------------
def _e1_kernel(mask_ref, x_ref, w_ref, b_ref,
               y_ref, mean_ref, rstd_ref, ssum_ref, ssq_ref,
               *, inv_n, eps):
    """e1: masked 1x1x1 conv + bias + clamp; single-pass IN stats over S tiles."""
    s = pl.program_id(1)

    @pl.when(s == 0)
    def _():
        ssum_ref[...] = jnp.zeros_like(ssum_ref)
        ssq_ref[...] = jnp.zeros_like(ssq_ref)

    # modality mask folded into the weight:  W @ (m . x) == (W . m) @ x
    wm = w_ref[...] * mask_ref[0]                            # (Cout, Kin)
    y = jnp.dot(wm, x_ref[0], preferred_element_type=jnp.float32)
    y = jnp.clip(y + b_ref[...], -10000.0, 10000.0)          # (Cout, TS)
    y_ref[0] = y.astype(y_ref.dtype)

    ssum_ref[...] += jnp.sum(y, axis=-1, keepdims=True)
    ssq_ref[...] += jnp.sum(y * y, axis=-1, keepdims=True)

    @pl.when(s == pl.num_programs(1) - 1)
    def _():
        mean = ssum_ref[...] * inv_n
        var = jnp.maximum(ssq_ref[...] * inv_n - mean * mean, 0.0)
        mean_ref[0] = mean
        rstd_ref[0] = jax.lax.rsqrt(var + eps)


def _embed_kernel(y1_ref, m1_ref, r1_ref, bm_ref,
                  w2_ref, b2_ref, w3_ref, b3_ref,
                  h3_ref, *, H, W, Z, eps, neg_slope):
    """e2 (3x3x3 conv) + e3 (1x1x1 conv), whole volume of one batch resident.

    IN1(normalize+lrelu) of the e1 output is fused here; the 3x3x3 conv is 27
    lane-shifted matmuls with border masks (zero padding); IN2/IN3 + lrelu are
    computed in-kernel since the full spatial extent is resident.
    """
    S = H * W * Z

    h1 = (y1_ref[0] - m1_ref[0]) * r1_ref[0]                 # (C4, S)
    h1 = _leaky(h1, neg_slope)

    bm = bm_ref[...]                                         # (6, S) border masks

    def shifted(x, off):
        # out[:, s] = x[:, (s + off) % S]  (explicit, semantics-exact roll)
        k = off % S
        if k == 0:
            return x
        return jnp.concatenate([x[:, k:], x[:, :k]], axis=-1)

    cmid = w2_ref.shape[1]
    acc = jnp.zeros((cmid, S), jnp.float32)
    t = 0
    for i in range(3):
        for j in range(3):
            for k in range(3):
                off = (i - 1) * W * Z + (j - 1) * Z + (k - 1)
                xt = shifted(h1, off)
                # zero padding at the volume border == mask invalid neighbours
                if i == 0:
                    xt = xt * bm[0:1]
                if i == 2:
                    xt = xt * bm[1:2]
                if j == 0:
                    xt = xt * bm[2:3]
                if j == 2:
                    xt = xt * bm[3:4]
                if k == 0:
                    xt = xt * bm[4:5]
                if k == 2:
                    xt = xt * bm[5:6]
                acc = acc + jnp.dot(w2_ref[t], xt,
                                    preferred_element_type=jnp.float32)
                t += 1

    y2 = jnp.clip(acc + b2_ref[...], -10000.0, 10000.0)
    mean2 = jnp.mean(y2, axis=-1, keepdims=True)
    y2c = y2 - mean2
    var2 = jnp.mean(y2c * y2c, axis=-1, keepdims=True)
    h2 = _leaky(y2c * jax.lax.rsqrt(var2 + eps), neg_slope)

    y3 = jnp.dot(w3_ref[...], h2, preferred_element_type=jnp.float32)
    y3 = jnp.clip(y3 + b3_ref[...], -10000.0, 10000.0)
    mean3 = jnp.mean(y3, axis=-1, keepdims=True)
    y3c = y3 - mean3
    var3 = jnp.mean(y3c * y3c, axis=-1, keepdims=True)
    h3 = _leaky(y3c * jax.lax.rsqrt(var3 + eps), neg_slope)
    h3_ref[0] = h3.astype(h3_ref.dtype)


def _p1_kernel(x1_ref, h3_ref, wx_ref, wh_ref, b_ref,
               y_ref, mean_ref, rstd_ref, ssum_ref, ssq_ref,
               *, inv_n, eps):
    """p1: cat(x1,h3) @ W == x1@Wx + h3@Wh (no concat); clamp; IN stats over S."""
    s = pl.program_id(1)

    @pl.when(s == 0)
    def _():
        ssum_ref[...] = jnp.zeros_like(ssum_ref)
        ssq_ref[...] = jnp.zeros_like(ssq_ref)

    y = jnp.dot(wx_ref[...], x1_ref[0], preferred_element_type=jnp.float32)
    y = y + jnp.dot(wh_ref[...], h3_ref[0], preferred_element_type=jnp.float32)
    y = jnp.clip(y + b_ref[...], -10000.0, 10000.0)
    y_ref[0] = y.astype(y_ref.dtype)

    ssum_ref[...] += jnp.sum(y, axis=-1, keepdims=True)
    ssq_ref[...] += jnp.sum(y * y, axis=-1, keepdims=True)

    @pl.when(s == pl.num_programs(1) - 1)
    def _():
        mean = ssum_ref[...] * inv_n
        var = jnp.maximum(ssq_ref[...] * inv_n - mean * mean, 0.0)
        mean_ref[0] = mean
        rstd_ref[0] = jax.lax.rsqrt(var + eps)


def _prm_softmax_kernel(y4_ref, m4_ref, r4_ref, w_ref, b_ref, seg_ref,
                        *, neg_slope):
    """Normalize+lrelu p1 output, final 1x1x1 conv, channel softmax."""
    g = _leaky((y4_ref[0] - m4_ref[0]) * r4_ref[0], neg_slope)   # (16, TS)
    logits = jnp.dot(w_ref[...], g, preferred_element_type=jnp.float32)
    logits = logits + b_ref[...]                                  # (ncls, TS)
    m = jnp.max(logits, axis=0, keepdims=True)
    e = jnp.exp(logits - m)
    denom = jnp.sum(e, axis=0, keepdims=True)
    seg_ref[0] = (e * pl.reciprocal(denom, approx=True)).astype(seg_ref.dtype)


# ---------------------------------------------------------------------------
# Pallas wrappers
# ---------------------------------------------------------------------------
def _e1_stage(x2f, mask_ch, w, b, *, s_tile, eps):
    B, Kin, S = x2f.shape
    Cout = w.shape[0]
    nS = S // s_tile
    kernel = functools.partial(_e1_kernel, inv_n=1.0 / S, eps=eps)
    return pl.pallas_call(
        kernel,
        grid=(B, nS),
        in_specs=[
            pl.BlockSpec((1, 1, Kin), lambda b, s: (b, 0, 0)),
            pl.BlockSpec((1, Kin, s_tile), lambda b, s: (b, 0, s)),
            pl.BlockSpec((Cout, Kin), lambda b, s: (0, 0)),
            pl.BlockSpec((Cout, 1), lambda b, s: (0, 0)),
        ],
        out_specs=(
            pl.BlockSpec((1, Cout, s_tile), lambda b, s: (b, 0, s)),
            pl.BlockSpec((1, Cout, 1), lambda b, s: (b, 0, 0)),
            pl.BlockSpec((1, Cout, 1), lambda b, s: (b, 0, 0)),
        ),
        out_shape=(
            jax.ShapeDtypeStruct((B, Cout, S), x2f.dtype),
            jax.ShapeDtypeStruct((B, Cout, 1), jnp.float32),
            jax.ShapeDtypeStruct((B, Cout, 1), jnp.float32),
        ),
        scratch_shapes=[pltpu.VMEM((Cout, 1), jnp.float32),
                        pltpu.VMEM((Cout, 1), jnp.float32)],
        compiler_params=pltpu.CompilerParams(
            dimension_semantics=("parallel", "arbitrary")),
    )(mask_ch, x2f, w, b)


def _embed_stage(y1, mean1, rstd1, bm, w2, b2, w3, b3, *, H, W, Z, eps, neg_slope):
    B, C4, S = y1.shape
    Cout = w3.shape[0]
    kernel = functools.partial(_embed_kernel, H=H, W=W, Z=Z, eps=eps,
                               neg_slope=neg_slope)
    return pl.pallas_call(
        kernel,
        grid=(B,),
        in_specs=[
            pl.BlockSpec((1, C4, S), lambda b: (b, 0, 0)),
            pl.BlockSpec((1, C4, 1), lambda b: (b, 0, 0)),
            pl.BlockSpec((1, C4, 1), lambda b: (b, 0, 0)),
            pl.BlockSpec((6, S), lambda b: (0, 0)),
            pl.BlockSpec((27, C4, C4), lambda b: (0, 0, 0)),
            pl.BlockSpec((C4, 1), lambda b: (0, 0)),
            pl.BlockSpec((Cout, C4), lambda b: (0, 0)),
            pl.BlockSpec((Cout, 1), lambda b: (0, 0)),
        ],
        out_specs=pl.BlockSpec((1, Cout, S), lambda b: (b, 0, 0)),
        out_shape=jax.ShapeDtypeStruct((B, Cout, S), y1.dtype),
        compiler_params=pltpu.CompilerParams(
            dimension_semantics=("parallel",),
            vmem_limit_bytes=32 * 1024 * 1024),
    )(y1, mean1, rstd1, bm, w2, b2, w3, b3)


def _p1_stage(x1f, h3, wx, wh, b, *, s_tile, eps):
    B, C, S = x1f.shape
    Cout = wx.shape[0]
    nS = S // s_tile
    kernel = functools.partial(_p1_kernel, inv_n=1.0 / S, eps=eps)
    return pl.pallas_call(
        kernel,
        grid=(B, nS),
        in_specs=[
            pl.BlockSpec((1, C, s_tile), lambda b, s: (b, 0, s)),
            pl.BlockSpec((1, C, s_tile), lambda b, s: (b, 0, s)),
            pl.BlockSpec((Cout, C), lambda b, s: (0, 0)),
            pl.BlockSpec((Cout, C), lambda b, s: (0, 0)),
            pl.BlockSpec((Cout, 1), lambda b, s: (0, 0)),
        ],
        out_specs=(
            pl.BlockSpec((1, Cout, s_tile), lambda b, s: (b, 0, s)),
            pl.BlockSpec((1, Cout, 1), lambda b, s: (b, 0, 0)),
            pl.BlockSpec((1, Cout, 1), lambda b, s: (b, 0, 0)),
        ),
        out_shape=(
            jax.ShapeDtypeStruct((B, Cout, S), x1f.dtype),
            jax.ShapeDtypeStruct((B, Cout, 1), jnp.float32),
            jax.ShapeDtypeStruct((B, Cout, 1), jnp.float32),
        ),
        scratch_shapes=[pltpu.VMEM((Cout, 1), jnp.float32),
                        pltpu.VMEM((Cout, 1), jnp.float32)],
        compiler_params=pltpu.CompilerParams(
            dimension_semantics=("parallel", "arbitrary")),
    )(x1f, h3, wx, wh, b)


def _prm_stage(y4, mean4, rstd4, w, b, *, s_tile, neg_slope):
    B, Cin, S = y4.shape
    ncls = w.shape[0]
    nS = S // s_tile
    kernel = functools.partial(_prm_softmax_kernel, neg_slope=neg_slope)
    return pl.pallas_call(
        kernel,
        grid=(B, nS),
        in_specs=[
            pl.BlockSpec((1, Cin, s_tile), lambda b, s: (b, 0, s)),
            pl.BlockSpec((1, Cin, 1), lambda b, s: (b, 0, 0)),
            pl.BlockSpec((1, Cin, 1), lambda b, s: (b, 0, 0)),
            pl.BlockSpec((ncls, Cin), lambda b, s: (0, 0)),
            pl.BlockSpec((ncls, 1), lambda b, s: (0, 0)),
        ],
        out_specs=pl.BlockSpec((1, ncls, s_tile), lambda b, s: (b, 0, s)),
        out_shape=jax.ShapeDtypeStruct((B, ncls, S), y4.dtype),
        compiler_params=pltpu.CompilerParams(
            dimension_semantics=("parallel", "parallel")),
    )(y4, mean4, rstd4, w, b)


# ---------------------------------------------------------------------------
# Full prm_generator forward (Pallas path)
# ---------------------------------------------------------------------------
def prm_generator_forward(x1, x2, mask, p, *, eps=1e-3, neg_slope=0.2,
                          s_tile=None):
    """x1: (B,C,H,W,Z), x2: (B,K,C,H,W,Z), mask: (B,K) bool.

    p holds PyTorch-layout parameters:
      e1_w (C//4, K*C,1,1,1), e2_w (C//4, C//4,3,3,3), e3_w (C, C//4,1,1,1),
      p1_w (16, 2C,1,1,1),    p2_w (num_cls,16,1,1,1), matching *_b biases.
    Returns softmax segmentation (B, num_cls, H, W, Z).
    """
    B, K, C, H, W, Z = x2.shape
    S = H * W * Z
    if s_tile is None:
        s_tile = _pick_s_tile(S)
    assert S % s_tile == 0

    # native channels-first flattened layouts: pure reshapes, no transposes
    x2f = x2.reshape(B, K * C, S)
    x1f = x1.reshape(B, C, S)

    # modality-drop mask, expanded to per input channel of e1: (B, 1, K*C)
    mask_ch = jnp.repeat(mask.astype(jnp.float32), C, axis=1).reshape(B, 1, K * C)

    # weight prep: channels-first matmul layout (Cout, Cin)
    C4 = p["e1_w"].shape[0]
    w_e1 = p["e1_w"][:, :, 0, 0, 0].astype(jnp.float32)                 # (C4, K*C)
    w_e2 = jnp.transpose(p["e2_w"], (2, 3, 4, 0, 1)).reshape(27, C4, C4).astype(jnp.float32)
    w_e3 = p["e3_w"][:, :, 0, 0, 0].astype(jnp.float32)                 # (C, C4)
    w_p1 = p["p1_w"][:, :, 0, 0, 0].astype(jnp.float32)                 # (16, 2C)
    w_p1x, w_p1h = w_p1[:, :C], w_p1[:, C:]
    w_p2 = p["p2_w"][:, :, 0, 0, 0].astype(jnp.float32)                 # (ncls, 16)
    num_cls = w_p2.shape[0]

    b_e1 = p["e1_b"].reshape(C4, 1).astype(jnp.float32)
    b_e2 = p["e2_b"].reshape(C4, 1).astype(jnp.float32)
    b_e3 = p["e3_b"].reshape(C, 1).astype(jnp.float32)
    b_p1 = p["p1_b"].reshape(16, 1).astype(jnp.float32)
    b_p2 = p["p2_b"].reshape(num_cls, 1).astype(jnp.float32)

    # border validity masks for the in-kernel 3x3x3 conv (tiny, built once):
    # [h>=1, h<H-1, w>=1, w<W-1, z>=1, z<Z-1] per flattened voxel.
    hh = jnp.arange(H).reshape(H, 1, 1)
    ww = jnp.arange(W).reshape(1, W, 1)
    zz = jnp.arange(Z).reshape(1, 1, Z)
    ones = jnp.ones((H, W, Z), jnp.float32)
    bm = jnp.stack([
        (hh >= 1) * ones, (hh < H - 1) * ones,
        (ww >= 1) * ones, (ww < W - 1) * ones,
        (zz >= 1) * ones, (zz < Z - 1) * ones,
    ]).reshape(6, S).astype(jnp.float32)

    # embedding_layer
    y1, m1, r1 = _e1_stage(x2f, mask_ch, w_e1, b_e1, s_tile=s_tile, eps=eps)
    h3 = _embed_stage(y1, m1, r1, bm, w_e2, b_e2, w_e3, b_e3,
                      H=H, W=W, Z=Z, eps=eps, neg_slope=neg_slope)       # (B, C, S)

    # prm_layer (concat folded into two matmuls; softmax in the last kernel)
    y4, m4, r4 = _p1_stage(x1f, h3, w_p1x, w_p1h, b_p1, s_tile=s_tile, eps=eps)
    seg = _prm_stage(y4, m4, r4, w_p2, b_p2, s_tile=s_tile, neg_slope=neg_slope)

    return seg.reshape(B, num_cls, H, W, Z)


# ---------------------------------------------------------------------------
# Plain-JAX reference mirroring the PyTorch module
# ---------------------------------------------------------------------------
def _conv3d_ref(x, w, b, padding):
    out = jax.lax.conv_general_dilated(
        x, w, window_strides=(1, 1, 1), padding=[(padding, padding)] * 3,
        dimension_numbers=("NCDHW", "OIDHW", "NCDHW"),
        precision=jax.lax.Precision.HIGHEST)
    return out + b[None, :, None, None, None]


def _general_conv3d_ref(x, w, b, padding, eps=1e-3, neg_slope=0.2):
    y = jnp.clip(_conv3d_ref(x, w, b, padding), -10000.0, 10000.0)
    mean = jnp.mean(y, axis=(2, 3, 4), keepdims=True)
    var = jnp.mean(jnp.square(y - mean), axis=(2, 3, 4), keepdims=True)
    y = (y - mean) / jnp.sqrt(var + eps)
    return jnp.where(y >= 0.0, y, neg_slope * y)


def _reference_forward(x1, x2, mask, p):
    B, K, C, H, W, Z = x2.shape
    y = jnp.where(mask[:, :, None, None, None, None], x2, 0.0).reshape(B, K * C, H, W, Z)
    h = _general_conv3d_ref(y, p["e1_w"], p["e1_b"], 0)
    h = _general_conv3d_ref(h, p["e2_w"], p["e2_b"], 1)
    h = _general_conv3d_ref(h, p["e3_w"], p["e3_b"], 0)
    g = _general_conv3d_ref(jnp.concatenate([x1, h], axis=1), p["p1_w"], p["p1_b"], 0)
    logits = _conv3d_ref(g, p["p2_w"], p["p2_b"], 0)
    return jax.nn.softmax(logits, axis=1)


# ---------------------------------------------------------------------------
if __name__ == "__main__":
    # in_channel=16, num_modal=4, num_cls=4, spatial 8x8x8, batch 2.
    B, K, C = 2, 4, 16
    H = W = Z = 8
    num_cls = 4
    C4 = C // 4

    key = jax.random.PRNGKey(0)
    ks = jax.random.split(key, 12)

    def init(k, shape, s=0.1):
        return s * jax.random.normal(k, shape, dtype=jnp.float32)

    x1 = jax.random.normal(ks[0], (B, C, H, W, Z), dtype=jnp.float32)
    x2 = jax.random.normal(ks[1], (B, K, C, H, W, Z), dtype=jnp.float32)
    mask = jnp.array([[True, False, True, True],
                      [False, True, True, False]])

    params = {
        "e1_w": init(ks[2], (C4, K * C, 1, 1, 1)), "e1_b": init(ks[3], (C4,)),
        "e2_w": init(ks[4], (C4, C4, 3, 3, 3)),    "e2_b": init(ks[5], (C4,)),
        "e3_w": init(ks[6], (C, C4, 1, 1, 1)),     "e3_b": init(ks[7], (C,)),
        "p1_w": init(ks[8], (16, 2 * C, 1, 1, 1)), "p1_b": init(ks[9], (16,)),
        "p2_w": init(ks[10], (num_cls, 16, 1, 1, 1)), "p2_b": init(ks[11], (num_cls,)),
    }

    fwd = jax.jit(prm_generator_forward, static_argnames=("s_tile",))
    out = fwd(x1, x2, mask, params, s_tile=128)   # 4 spatial tiles per batch
    out = jax.block_until_ready(out)

    ref = jax.jit(_reference_forward)(x1, x2, mask, params)
    ref = jax.block_until_ready(ref)

    assert out.shape == (B, num_cls, H, W, Z)
    assert bool(jnp.all(jnp.isfinite(out)))
    assert bool(jnp.allclose(out.sum(axis=1), 1.0, atol=5e-3)), "softmax rows must sum to 1"
    max_err = float(jnp.max(jnp.abs(out - ref)))
    assert bool(jnp.allclose(out, ref, atol=5e-2, rtol=5e-2)), f"max abs err {max_err}"

    print("KERNEL_OK")
</pallas_src>

<mosaic_0001>
module attributes {stable_mosaic.version = 11 : i64} {
  func.func @_e1_kernel(%arg0: i32, %arg1: i32, %arg2: memref<1x1x64xf32, #tpu.memory_space<vmem>>, %arg3: memref<1x64x128xf32, #tpu.memory_space<vmem>>, %arg4: memref<4x64xf32, #tpu.memory_space<vmem>>, %arg5: memref<4x1xf32, #tpu.memory_space<vmem>>, %arg6: memref<1x4x128xf32, #tpu.memory_space<vmem>>, %arg7: memref<1x4x1xf32, #tpu.memory_space<vmem>>, %arg8: memref<1x4x1xf32, #tpu.memory_space<vmem>>, %arg9: memref<4x1xf32, #tpu.memory_space<vmem>>, %arg10: memref<4x1xf32, #tpu.memory_space<vmem>>) attributes {dimension_semantics = [#tpu.dimension_semantics<parallel>, #tpu.dimension_semantics<arbitrary>], iteration_bounds = array<i64: 2, 4>, scalar_prefetch = 0 : i64, scratch_operands = 2 : i64, tpu.core_type = #tpu.core_type<tc>, window_params = [{transform_indices = @transform_0, window_bounds = array<i64: 1, 1, 64>}, {transform_indices = @transform_1, window_bounds = array<i64: 1, 64, 128>}, {pipeline_mode = #tpu.pipeline_mode<synchronous>, transform_indices = @transform_2, window_bounds = array<i64: 4, 64>}, {pipeline_mode = #tpu.pipeline_mode<synchronous>, transform_indices = @transform_3, window_bounds = array<i64: 4, 1>}, {transform_indices = @transform_4, window_bounds = array<i64: 1, 4, 128>}, {transform_indices = @transform_5, window_bounds = array<i64: 1, 4, 1>}, {transform_indices = @transform_6, window_bounds = array<i64: 1, 4, 1>}]} {
    %c0_i32 = arith.constant 0 : i32
    %0 = arith.cmpi eq, %arg1, %c0_i32 : i32
    %1 = arith.extui %0 : i1 to i32
    %c0_i32_0 = arith.constant 0 : i32
    %2 = arith.cmpi ne, %1, %c0_i32_0 : i32
    scf.if %2 {
      %cst_26 = arith.constant 0.000000e+00 : f32
      %35 = vector.broadcast %cst_26 : f32 to vector<4x1xf32>
      %c0_27 = arith.constant 0 : index
      %c0_28 = arith.constant 0 : index
      %36 = vector.load %arg9[%c0_27, %c0_28] : memref<4x1xf32, #tpu.memory_space<vmem>>, vector<4x1xf32>
      tpu.vector_store %arg9[%c0_27, %c0_28], %35 {strides = array<i32>} : memref<4x1xf32, #tpu.memory_space<vmem>>, vector<4x1xf32>,
      %cst_29 = arith.constant 0.000000e+00 : f32
      %37 = vector.broadcast %cst_29 : f32 to vector<4x1xf32>
      %c0_30 = arith.constant 0 : index
      %c0_31 = arith.constant 0 : index
      %38 = vector.load %arg10[%c0_30, %c0_31] : memref<4x1xf32, #tpu.memory_space<vmem>>, vector<4x1xf32>
      tpu.vector_store %arg10[%c0_30, %c0_31], %37 {strides = array<i32>} : memref<4x1xf32, #tpu.memory_space<vmem>>, vector<4x1xf32>,
    } else {
    }
    %c0 = arith.constant 0 : index
    %c0_1 = arith.constant 0 : index
    %3 = vector.load %arg4[%c0, %c0_1] : memref<4x64xf32, #tpu.memory_space<vmem>>, vector<4x64xf32>
    %c0_2 = arith.constant 0 : index
    %c0_3 = arith.constant 0 : index
    %c0_4 = arith.constant 0 : index
    %4 = vector.load %arg2[%c0_2, %c0_3, %c0_4] : memref<1x1x64xf32, #tpu.memory_space<vmem>>, vector<1x1x64xf32>
    %5 = vector.shape_cast %4 : vector<1x1x64xf32> to vector<1x64xf32>
    %6 = vector.broadcast %5 : vector<1x64xf32> to vector<4x64xf32>
    %7 = arith.mulf %3, %6 : vector<4x64xf32>
    %c0_5 = arith.constant 0 : index
    %c0_6 = arith.constant 0 : index
    %c0_7 = arith.constant 0 : index
    %8 = vector.load %arg3[%c0_5, %c0_6, %c0_7] : memref<1x64x128xf32, #tpu.memory_space<vmem>>, vector<1x64x128xf32>
    %9 = vector.shape_cast %8 : vector<1x64x128xf32> to vector<64x128xf32>
    %cst = arith.constant dense<0.000000e+00> : vector<4x128xf32>
    %10 = tpu.matmul %7, %9, %cst {dimension_numbers = #tpu.dot_dimension_numbers<[1], [0], [0], [1], [0, 0, 1, 1], [], []>} : vector<4x64xf32>, vector<64x128xf32>, vector<4x128xf32> -> vector<4x128xf32>
    %c0_8 = arith.constant 0 : index
    %c0_9 = arith.constant 0 : index
    %11 = vector.load %arg5[%c0_8, %c0_9] : memref<4x1xf32, #tpu.memory_space<vmem>>, vector<4x1xf32>
    %12 = vector.broadcast %11 : vector<4x1xf32> to vector<4x128xf32>
    %13 = arith.addf %10, %12 : vector<4x128xf32>
    %cst_10 = arith.constant -1.000000e+04 : f32
    %cst_11 = arith.constant 1.000000e+04 : f32
    %14 = vector.broadcast %cst_10 : f32 to vector<4x128xf32>
    %15 = arith.maximumf %14, %13 : vector<4x128xf32>
    %16 = vector.broadcast %cst_11 : f32 to vector<4x128xf32>
    %17 = arith.minimumf %16, %15 : vector<4x128xf32>
    %c0_12 = arith.constant 0 : index
    %c0_13 = arith.constant 0 : index
    %c0_14 = arith.constant 0 : index
    %18 = vector.load %arg6[%c0_12, %c0_13, %c0_14] : memref<1x4x128xf32, #tpu.memory_space<vmem>>, vector<1x4x128xf32>
    %19 = vector.shape_cast %18 : vector<1x4x128xf32> to vector<4x128xf32>
    %20 = vector.shape_cast %17 : vector<4x128xf32> to vector<1x4x128xf32>
    tpu.vector_store %arg6[%c0_12, %c0_13, %c0_14], %20 {strides = array<i32>} : memref<1x4x128xf32, #tpu.memory_space<vmem>>, vector<1x4x128xf32>,
    %c0_15 = arith.constant 0 : index
    %c0_16 = arith.constant 0 : index
    %21 = vector.load %arg9[%c0_15, %c0_16] : memref<4x1xf32, #tpu.memory_space<vmem>>, vector<4x1xf32>
    %cst_17 = arith.constant dense<0.000000e+00> : vector<4xf32>
    %22 = vector.multi_reduction <add>, %17, %cst_17 [1] : vector<4x128xf32> to vector<4xf32>
    %23 = vector.shape_cast %22 : vector<4xf32> to vector<4x1xf32>
    %24 = arith.addf %21, %23 : vector<4x1xf32>
    %c0_18 = arith.constant 0 : index
    %c0_19 = arith.constant 0 : index
    %25 = vector.load %arg9[%c0_18, %c0_19] : memref<4x1xf32, #tpu.memory_space<vmem>>, vector<4x1xf32>
    tpu.vector_store %arg9[%c0_18, %c0_19], %24 {strides = array<i32>} : memref<4x1xf32, #tpu.memory_space<vmem>>, vector<4x1xf32>,
    %c0_20 = arith.constant 0 : index
    %c0_21 = arith.constant 0 : index
    %26 = vector.load %arg10[%c0_20, %c0_21] : memref<4x1xf32, #tpu.memory_space<vmem>>, vector<4x1xf32>
    %27 = arith.mulf %17, %17 : vector<4x128xf32>
    %cst_22 = arith.constant dense<0.000000e+00> : vector<4xf32>
    %28 = vector.multi_reduction <add>, %27, %cst_22 [1] : vector<4x128xf32> to vector<4xf32>
    %29 = vector.shape_cast %28 : vector<4xf32> to vector<4x1xf32>
    %30 = arith.addf %26, %29 : vector<4x1xf32>
    %c0_23 = arith.constant 0 : index
    %c0_24 = arith.constant 0 : index
    %31 = vector.load %arg10[%c0_23, %c0_24] : memref<4x1xf32, #tpu.memory_space<vmem>>, vector<4x1xf32>
    tpu.vector_store %arg10[%c0_23, %c0_24], %30 {strides = array<i32>} : memref<4x1xf32, #tpu.memory_space<vmem>>, vector<4x1xf32>,
    %c3_i32 = arith.constant 3 : i32
    %32 = arith.cmpi eq, %arg1, %c3_i32 : i32
    %33 = arith.extui %32 : i1 to i32
    %c0_i32_25 = arith.constant 0 : i32
    %34 = arith.cmpi ne, %33, %c0_i32_25 : i32
    scf.if %34 {
      %c0_26 = arith.constant 0 : index
      %c0_27 = arith.constant 0 : index
      %35 = vector.load %arg9[%c0_26, %c0_27] : memref<4x1xf32, #tpu.memory_space<vmem>>, vector<4x1xf32>
      %cst_28 = arith.constant 0.001953125 : f32
      %36 = vector.broadcast %cst_28 : f32 to vector<4x1xf32>
      %37 = arith.mulf %35, %36 : vector<4x1xf32>
      %c0_29 = arith.constant 0 : index
      %c0_30 = arith.constant 0 : index
      %38 = vector.load %arg10[%c0_29, %c0_30] : memref<4x1xf32, #tpu.memory_space<vmem>>, vector<4x1xf32>
      %cst_31 = arith.constant 0.001953125 : f32
      %39 = vector.broadcast %cst_31 : f32 to vector<4x1xf32>
      %40 = arith.mulf %38, %39 : vector<4x1xf32>
      %41 = arith.mulf %37, %37 : vector<4x1xf32>
      %42 = arith.subf %40, %41 : vector<4x1xf32>
      %cst_32 = arith.constant 0.000000e+00 : f32
      %43 = vector.broadcast %cst_32 : f32 to vector<4x1xf32>
      %44 = arith.maximumf %42, %43 : vector<4x1xf32>
      %c0_33 = arith.constant 0 : index
      %c0_34 = arith.constant 0 : index
      %c0_35 = arith.constant 0 : index
      %45 = vector.load %arg7[%c0_33, %c0_34, %c0_35] : memref<1x4x1xf32, #tpu.memory_space<vmem>>, vector<1x4x1xf32>
      %46 = vector.shape_cast %45 : vector<1x4x1xf32> to vector<4x1xf32>
      %47 = vector.shape_cast %37 : vector<4x1xf32> to vector<1x4x1xf32>
      tpu.vector_store %arg7[%c0_33, %c0_34, %c0_35], %47 {strides = array<i32>} : memref<1x4x1xf32, #tpu.memory_space<vmem>>, vector<1x4x1xf32>,
      %cst_36 = arith.constant 1.000000e-03 : f32
      %48 = vector.broadcast %cst_36 : f32 to vector<4x1xf32>
      %49 = arith.addf %44, %48 : vector<4x1xf32>
      %50 = math.rsqrt %49 : vector<4x1xf32>
      %c0_37 = arith.constant 0 : index
      %c0_38 = arith.constant 0 : index
      %c0_39 = arith.constant 0 : index
      %51 = vector.load %arg8[%c0_37, %c0_38, %c0_39] : memref<1x4x1xf32, #tpu.memory_space<vmem>>, vector<1x4x1xf32>
      %52 = vector.shape_cast %51 : vector<1x4x1xf32> to vector<4x1xf32>
      %53 = vector.shape_cast %50 : vector<4x1xf32> to vector<1x4x1xf32>
      tpu.vector_store %arg8[%c0_37, %c0_38, %c0_39], %53 {strides = array<i32>} : memref<1x4x1xf32, #tpu.memory_space<vmem>>, vector<1x4x1xf32>,
    } else {
    }
    return
  }
  func.func @transform_0(%arg0: i32, %arg1: i32) -> (i32, i32, i32) {
    %c0_i32 = arith.constant 0 : i32
    %c0_i32_0 = arith.constant 0 : i32
    %c0_i32_1 = arith.constant 0 : i32
    return %arg0, %c0_i32, %c0_i32_0 : i32, i32, i32
  }
  func.func @transform_1(%arg0: i32, %arg1: i32) -> (i32, i32, i32) {
    %c0_i32 = arith.constant 0 : i32
    %c0_i32_0 = arith.constant 0 : i32
    return %arg0, %c0_i32, %arg1 : i32, i32, i32
  }
  func.func @transform_2(%arg0: i32, %arg1: i32) -> (i32, i32) {
    %c0_i32 = arith.constant 0 : i32
    %c0_i32_0 = arith.constant 0 : i32
    %c0_i32_1 = arith.constant 0 : i32
    return %c0_i32, %c0_i32_0 : i32, i32
  }
  func.func @transform_3(%arg0: i32, %arg1: i32) -> (i32, i32) {
    %c0_i32 = arith.constant 0 : i32
    %c0_i32_0 = arith.constant 0 : i32
    %c0_i32_1 = arith.constant 0 : i32
    return %c0_i32, %c0_i32_0 : i32, i32
  }
  func.func @transform_4(%arg0: i32, %arg1: i32) -> (i32, i32, i32) {
    %c0_i32 = arith.constant 0 : i32
    %c0_i32_0 = arith.constant 0 : i32
    return %arg0, %c0_i32, %arg1 : i32, i32, i32
  }
  func.func @transform_5(%arg0: i32, %arg1: i32) -> (i32, i32, i32) {
    %c0_i32 = arith.constant 0 : i32
    %c0_i32_0 = arith.constant 0 : i32
    %c0_i32_1 = arith.constant 0 : i32
    return %arg0, %c0_i32, %c0_i32_0 : i32, i32, i32
  }
  func.func @transform_6(%arg0: i32, %arg1: i32) -> (i32, i32, i32) {
    %c0_i32 = arith.constant 0 : i32
    %c0_i32_0 = arith.constant 0 : i32
    %c0_i32_1 = arith.constant 0 : i32
    return %arg0, %c0_i32, %c0_i32_0 : i32, i32, i32
  }
}

module attributes {stable_mosaic.version = 11 : i64} {
  func.func @_embed_kernel(%arg0: i32, %arg1: memref<1x4x512xf32, #tpu.memory_space<vmem>>, %arg2: memref<1x4x1xf32, #tpu.memory_space<vmem>>, %arg3: memref<1x4x1xf32, #tpu.memory_space<vmem>>, %arg4: memref<6x512xf32, #tpu.memory_space<vmem>>, %arg5: memref<27x4x4xf32, #tpu.memory_space<vmem>>, %arg6: memref<4x1xf32, #tpu.memory_space<vmem>>, %arg7: memref<16x4xf32, #tpu.memory_space<vmem>>, %arg8: memref<16x1xf32, #tpu.memory_space<vmem>>, %arg9: memref<1x16x512xf32, #tpu.memory_space<vmem>>) attributes {dimension_semantics = [#tpu.dimension_semantics<parallel>], iteration_bounds = array<i64: 2>, scalar_prefetch = 0 : i64, scratch_operands = 0 : i64, tpu.core_type = #tpu.core_type<tc>, window_params = [{transform_indices = @transform_0, window_bounds = array<i64: 1, 4, 512>}, {transform_indices = @transform_1, window_bounds = array<i64: 1, 4, 1>}, {transform_indices = @transform_2, window_bounds = array<i64: 1, 4, 1>}, {pipeline_mode = #tpu.pipeline_mode<synchronous>, transform_indices = @transform_3, window_bounds = array<i64: 6, 512>}, {pipeline_mode = #tpu.pipeline_mode<synchronous>, transform_indices = @transform_4, window_bounds = array<i64: 27, 4, 4>}, {pipeline_mode = #tpu.pipeline_mode<synchronous>, transform_indices = @transform_5, window_bounds = array<i64: 4, 1>}, {pipeline_mode = #tpu.pipeline_mode<synchronous>, transform_indices = @transform_6, window_bounds = array<i64: 16, 4>}, {pipeline_mode = #tpu.pipeline_mode<synchronous>, transform_indices = @transform_7, window_bounds = array<i64: 16, 1>}, {transform_indices = @transform_8, window_bounds = array<i64: 1, 16, 512>}]} {
    %c0 = arith.constant 0 : index
    %c0_0 = arith.constant 0 : index
    %c0_1 = arith.constant 0 : index
    %0 = vector.load %arg1[%c0, %c0_0, %c0_1] : memref<1x4x512xf32, #tpu.memory_space<vmem>>, vector<1x4x512xf32>
    %1 = vector.shape_cast %0 : vector<1x4x512xf32> to vector<4x512xf32>
    %c0_2 = arith.constant 0 : index
    %c0_3 = arith.constant 0 : index
    %c0_4 = arith.constant 0 : index
    %2 = vector.load %arg2[%c0_2, %c0_3, %c0_4] : memref<1x4x1xf32, #tpu.memory_space<vmem>>, vector<1x4x1xf32>
    %3 = vector.shape_cast %2 : vector<1x4x1xf32> to vector<4x1xf32>
    %4 = vector.broadcast %3 : vector<4x1xf32> to vector<4x512xf32>
    %5 = arith.subf %1, %4 : vector<4x512xf32>
    %c0_5 = arith.constant 0 : index
    %c0_6 = arith.constant 0 : index
    %c0_7 = arith.constant 0 : index
    %6 = vector.load %arg3[%c0_5, %c0_6, %c0_7] : memref<1x4x1xf32, #tpu.memory_space<vmem>>, vector<1x4x1xf32>
    %7 = vector.shape_cast %6 : vector<1x4x1xf32> to vector<4x1xf32>
    %8 = vector.broadcast %7 : vector<4x1xf32> to vector<4x512xf32>
    %9 = arith.mulf %5, %8 : vector<4x512xf32>
    %cst = arith.constant 0.000000e+00 : f32
    %10 = vector.broadcast %cst : f32 to vector<4x512xf32>
    %11 = arith.cmpf oge, %9, %10 : vector<4x512xf32>
    %cst_8 = arith.constant 2.000000e-01 : f32
    %12 = vector.broadcast %cst_8 : f32 to vector<4x512xf32>
    %13 = arith.mulf %12, %9 : vector<4x512xf32>
    %14 = arith.select %11, %9, %13 : vector<4x512xi1>, vector<4x512xf32>
    %c0_9 = arith.constant 0 : index
    %c0_10 = arith.constant 0 : index
    %15 = vector.load %arg4[%c0_9, %c0_10] : memref<6x512xf32, #tpu.memory_space<vmem>>, vector<6x512xf32>
    %cst_11 = arith.constant 0.000000e+00 : f32
    %16 = vector.broadcast %cst_11 : f32 to vector<4x512xf32>
    %17 = vector.extract_strided_slice %14 {offsets = [0, 439], sizes = [4, 73], strides = [1, 1]} : vector<4x512xf32> to vector<4x73xf32>
    %18 = vector.extract_strided_slice %14 {offsets = [0, 0], sizes = [4, 439], strides = [1, 1]} : vector<4x512xf32> to vector<4x439xf32>
    %19 = tpu.concatenate %17, %18 in 1 : vector<4x73xf32>, vector<4x439xf32> -> vector<4x512xf32>
    %20 = vector.extract_strided_slice %15 {offsets = [0, 0], sizes = [1, 512], strides = [1, 1]} : vector<6x512xf32> to vector<1x512xf32>
    %21 = vector.broadcast %20 : vector<1x512xf32> to vector<4x512xf32>
    %22 = arith.mulf %19, %21 : vector<4x512xf32>
    %23 = vector.extract_strided_slice %15 {offsets = [2, 0], sizes = [1, 512], strides = [1, 1]} : vector<6x512xf32> to vector<1x512xf32>
    %24 = vector.broadcast %23 : vector<1x512xf32> to vector<4x512xf32>
    %25 = arith.mulf %22, %24 : vector<4x512xf32>
    %26 = vector.extract_strided_slice %15 {offsets = [4, 0], sizes = [1, 512], strides = [1, 1]} : vector<6x512xf32> to vector<1x512xf32>
    %27 = vector.broadcast %26 : vector<1x512xf32> to vector<4x512xf32>
    %28 = arith.mulf %25, %27 : vector<4x512xf32>
    %c0_12 = arith.constant 0 : index
    %c0_13 = arith.constant 0 : index
    %c0_14 = arith.constant 0 : index
    %29 = vector.load %arg5[%c0_12, %c0_13, %c0_14] : memref<27x4x4xf32, #tpu.memory_space<vmem>>, vector<1x4x4xf32>
    %30 = vector.shape_cast %29 : vector<1x4x4xf32> to vector<4x4xf32>
    %cst_15 = arith.constant dense<0.000000e+00> : vector<4x512xf32>
    %31 = tpu.matmul %30, %28, %cst_15 {dimension_numbers = #tpu.dot_dimension_numbers<[1], [0], [0], [1], [0, 0, 1, 1], [], []>} : vector<4x4xf32>, vector<4x512xf32>, vector<4x512xf32> -> vector<4x512xf32>
    %32 = arith.addf %16, %31 : vector<4x512xf32>
    %33 = vector.extract_strided_slice %14 {offsets = [0, 440], sizes = [4, 72], strides = [1, 1]} : vector<4x512xf32> to vector<4x72xf32>
    %34 = vector.extract_strided_slice %14 {offsets = [0, 0], sizes = [4, 440], strides = [1, 1]} : vector<4x512xf32> to vector<4x440xf32>
    %35 = tpu.concatenate %33, %34 in 1 : vector<4x72xf32>, vector<4x440xf32> -> vector<4x512xf32>
    %36 = vector.extract_strided_slice %15 {offsets = [0, 0], sizes = [1, 512], strides = [1, 1]} : vector<6x512xf32> to vector<1x512xf32>
    %37 = vector.broadcast %36 : vector<1x512xf32> to vector<4x512xf32>
    %38 = arith.mulf %35, %37 : vector<4x512xf32>
    %39 = vector.extract_strided_slice %15 {offsets = [2, 0], sizes = [1, 512], strides = [1, 1]} : vector<6x512xf32> to vector<1x512xf32>
    %40 = vector.broadcast %39 : vector<1x512xf32> to vector<4x512xf32>
    %41 = arith.mulf %38, %40 : vector<4x512xf32>
    %c1 = arith.constant 1 : index
    %c0_16 = arith.constant 0 : index
    %c0_17 = arith.constant 0 : index
    %42 = vector.load %arg5[%c1, %c0_16, %c0_17] : memref<27x4x4xf32, #tpu.memory_space<vmem>>, vector<1x4x4xf32>
    %43 = vector.shape_cast %42 : vector<1x4x4xf32> to vector<4x4xf32>
    %cst_18 = arith.constant dense<0.000000e+00> : vector<4x512xf32>
    %44 = tpu.matmul %43, %41, %cst_18 {dimension_numbers = #tpu.dot_dimension_numbers<[1], [0], [0], [1], [0, 0, 1, 1], [], []>} : vector<4x4xf32>, vector<4x512xf32>, vector<4x512xf32> -> vector<4x512xf32>
    %45 = arith.addf %32, %44 : vector<4x512xf32>
    %46 = vector.extract_strided_slice %14 {offsets = [0, 441], sizes = [4, 71], strides = [1, 1]} : vector<4x512xf32> to vector<4x71xf32>
    %47 = vector.extract_strided_slice %14 {offsets = [0, 0], sizes = [4, 441], strides = [1, 1]} : vector<4x512xf32> to vector<4x441xf32>
    %48 = tpu.concatenate %46, %47 in 1 : vector<4x71xf32>, vector<4x441xf32> -> vector<4x512xf32>
    %49 = vector.extract_strided_slice %15 {offsets = [0, 0], sizes = [1, 512], strides = [1, 1]} : vector<6x512xf32> to vector<1x512xf32>
    %50 = vector.broadcast %49 : vector<1x512xf32> to vector<4x512xf32>
    %51 = arith.mulf %48, %50 : vector<4x512xf32>
    %52 = vector.extract_strided_slice %15 {offsets = [2, 0], sizes = [1, 512], strides = [1, 1]} : vector<6x512xf32> to vector<1x512xf32>
    %53 = vector.broadcast %52 : vector<1x512xf32> to vector<4x512xf32>
    %54 = arith.mulf %51, %53 : vector<4x512xf32>
    %55 = vector.extract_strided_slice %15 {offsets = [5, 0], sizes = [1, 512], strides = [1, 1]} : vector<6x512xf32> to vector<1x512xf32>
    %56 = vector.broadcast %55 : vector<1x512xf32> to vector<4x512xf32>
    %57 = arith.mulf %54, %56 : vector<4x512xf32>
    %c2 = arith.constant 2 : index
    %c0_19 = arith.constant 0 : index
    %c0_20 = arith.constant 0 : index
    %58 = vector.load %arg5[%c2, %c0_19, %c0_20] : memref<27x4x4xf32, #tpu.memory_space<vmem>>, vector<1x4x4xf32>
    %59 = vector.shape_cast %58 : vector<1x4x4xf32> to vector<4x4xf32>
    %cst_21 = arith.constant dense<0.000000e+00> : vector<4x512xf32>
    %60 = tpu.matmul %59, %57, %cst_21 {dimension_numbers = #tpu.dot_dimension_numbers<[1], [0], [0], [1], [0, 0, 1, 1], [], []>} : vector<4x4xf32>, vector<4x512xf32>, vector<4x512xf32> -> vector<4x512xf32>
    %61 = arith.addf %45, %60 : vector<4x512xf32>
    %62 = vector.extract_strided_slice %14 {offsets = [0, 447], sizes = [4, 65], strides = [1, 1]} : vector<4x512xf32> to vector<4x65xf32>
    %63 = vector.extract_strided_slice %14 {offsets = [0, 0], sizes = [4, 447], strides = [1, 1]} : vector<4x512xf32> to vector<4x447xf32>
    %64 = tpu.concatenate %62, %63 in 1 : vector<4x65xf32>, vector<4x447xf32> -> vector<4x512xf32>
    %65 = vector.extract_strided_slice %15 {offsets = [0, 0], sizes = [1, 512], strides = [1, 1]} : vector<6x512xf32> to vector<1x512xf32>
    %66 = vector.broadcast %65 : vector<1x512xf32> to vector<4x512xf32>
    %67 = arith.mulf %64, %66 : vector<4x512xf32>
    %68 = vector.extract_strided_slice %15 {offsets = [4, 0], sizes = [1, 512], strides = [1, 1]} : vector<6x512xf32> to vector<1x512xf32>
    %69 = vector.broadcast %68 : vector<1x512xf32> to vector<4x512xf32>
    %70 = arith.mulf %67, %69 : vector<4x512xf32>
    %c3 = arith.constant 3 : index
    %c0_22 = arith.constant 0 : index
    %c0_23 = arith.constant 0 : index
    %71 = vector.load %arg5[%c3, %c0_22, %c0_23] : memref<27x4x4xf32, #tpu.memory_space<vmem>>, vector<1x4x4xf32>
    %72 = vector.shape_cast %71 : vector<1x4x4xf32> to vector<4x4xf32>
    %cst_24 = arith.constant dense<0.000000e+00> : vector<4x512xf32>
    %73 = tpu.matmul %72, %70, %cst_24 {dimension_numbers = #tpu.dot_dimension_numbers<[1], [0], [0], [1], [0, 0, 1, 1], [], []>} : vector<4x4xf32>, vector<4x512xf32>, vector<4x512xf32> -> vector<4x512xf32>
    %74 = arith.addf %61, %73 : vector<4x512xf32>
    %75 = vector.extract_strided_slice %14 {offsets = [0, 448], sizes = [4, 64], strides = [1, 1]} : vector<4x512xf32> to vector<4x64xf32>
    %76 = vector.extract_strided_slice %14 {offsets = [0, 0], sizes = [4, 448], strides = [1, 1]} : vector<4x512xf32> to vector<4x448xf32>
    %77 = tpu.concatenate %75, %76 in 1 : vector<4x64xf32>, vector<4x448xf32> -> vector<4x512xf32>
    %78 = vector.extract_strided_slice %15 {offsets = [0, 0], sizes = [1, 512], strides = [1, 1]} : vector<6x512xf32> to vector<1x512xf32>
    %79 = vector.broadcast %78 : vector<1x512xf32> to vector<4x512xf32>
    %80 = arith.mulf %77, %79 : vector<4x512xf32>
    %c4 = arith.constant 4 : index
    %c0_25 = arith.constant 0 : index
    %c0_26 = arith.constant 0 : index
    %81 = vector.load %arg5[%c4, %c0_25, %c0_26] : memref<27x4x4xf32, #tpu.memory_space<vmem>>, vector<1x4x4xf32>
    %82 = vector.shape_cast %81 : vector<1x4x4xf32> to vector<4x4xf32>
    %cst_27 = arith.constant dense<0.000000e+00> : vector<4x512xf32>
    %83 = tpu.matmul %82, %80, %cst_27 {dimension_numbers = #tpu.dot_dimension_numbers<[1], [0], [0], [1], [0, 0, 1, 1], [], []>} : vector<4x4xf32>, vector<4x512xf32>, vector<4x512xf32> -> vector<4x512xf32>
    %84 = arith.addf %74, %83 : vector<4x512xf32>
    %85 = vector.extract_strided_slice %14 {offsets = [0, 449], sizes = [4, 63], strides = [1, 1]} : vector<4x512xf32> to vector<4x63xf32>
    %86 = vector.extract_strided_slice %14 {offsets = [0, 0], sizes = [4, 449], strides = [1, 1]} : vector<4x512xf32> to vector<4x449xf32>
    %87 = tpu.concatenate %85, %86 in 1 : vector<4x63xf32>, vector<4x449xf32> -> vector<4x512xf32>
    %88 = vector.extract_strided_slice %15 {offsets = [0, 0], sizes = [1, 512], strides = [1, 1]} : vector<6x512xf32> to vector<1x512xf32>
    %89 = vector.broadcast %88 : vector<1x512xf32> to vector<4x512xf32>
    %90 = arith.mulf %87, %89 : vector<4x512xf32>
    %91 = vector.extract_strided_slice %15 {offsets = [5, 0], sizes = [1, 512], strides = [1, 1]} : vector<6x512xf32> to vector<1x512xf32>
    %92 = vector.broadcast %91 : vector<1x512xf32> to vector<4x512xf32>
    %93 = arith.mulf %90, %92 : vector<4x512xf32>
    %c5 = arith.constant 5 : index
    %c0_28 = arith.constant 0 : index
    %c0_29 = arith.constant 0 : index
    %94 = vector.load %arg5[%c5, %c0_28, %c0_29] : memref<27x4x4xf32, #tpu.memory_space<vmem>>, vector<1x4x4xf32>
    %95 = vector.shape_cast %94 : vector<1x4x4xf32> to vector<4x4xf32>
    %cst_30 = arith.constant dense<0.000000e+00> : vector<4x512xf32>
    %96 = tpu.matmul %95, %93, %cst_30 {dimension_numbers = #tpu.dot_dimension_numbers<[1], [0], [0], [1], [0, 0, 1, 1], [], []>} : vector<4x4xf32>, vector<4x512xf32>, vector<4x512xf32> -> vector<4x512xf32>
    %97 = arith.addf %84, %96 : vector<4x512xf32>
    %98 = vector.extract_strided_slice %14 {offsets = [0, 455], sizes = [4, 57], strides = [1, 1]} : vector<4x512xf32> to vector<4x57xf32>
    %99 = vector.extract_strided_slice %14 {offsets = [0, 0], sizes = [4, 455], strides = [1, 1]} : vector<4x512xf32> to vector<4x455xf32>
    %100 = tpu.concatenate %98, %99 in 1 : vector<4x57xf32>, vector<4x455xf32> -> vector<4x512xf32>
    %101 = vector.extract_strided_slice %15 {offsets = [0, 0], sizes = [1, 512], strides = [1, 1]} : vector<6x512xf32> to vector<1x512xf32>
    %102 = vector.broadcast %101 : vector<1x512xf32> to vector<4x512xf32>
    %103 = arith.mulf %100, %102 : vector<4x512xf32>
    %104 = vector.extract_strided_slice %15 {offsets = [3, 0], sizes = [1, 512], strides = [1, 1]} : vector<6x512xf32> to vector<1x512xf32>
    %105 = vector.broadcast %104 : vector<1x512xf32> to vector<4x512xf32>
    %106 = arith.mulf %103, %105 : vector<4x512xf32>
    %107 = vector.extract_strided_slice %15 {offsets = [4, 0], sizes = [1, 512], strides = [1, 1]} : vector<6x512xf32> to vector<1x512xf32>
    %108 = vector.broadcast %107 : vector<1x512xf32> to vector<4x512xf32>
    %109 = arith.mulf %106, %108 : vector<4x512xf32>
    %c6 = arith.constant 6 : index
    %c0_31 = arith.constant 0 : index
    %c0_32 = arith.constant 0 : index
    %110 = vector.load %arg5[%c6, %c0_31, %c0_32] : memref<27x4x4xf32, #tpu.memory_space<vmem>>, vector<1x4x4xf32>
    %111 = vector.shape_cast %110 : vector<1x4x4xf32> to vector<4x4xf32>
    %cst_33 = arith.constant dense<0.000000e+00> : vector<4x512xf32>
    %112 = tpu.matmul %111, %109, %cst_33 {dimension_numbers = #tpu.dot_dimension_numbers<[1], [0], [0], [1], [0, 0, 1, 1], [], []>} : vector<4x4xf32>, vector<4x512xf32>, vector<4x512xf32> -> vector<4x512xf32>
    %113 = arith.addf %97, %112 : vector<4x512xf32>
    %114 = vector.extract_strided_slice %14 {offsets = [0, 456], sizes = [4, 56], strides = [1, 1]} : vector<4x512xf32> to vector<4x56xf32>
    %115 = vector.extract_strided_slice %14 {offsets = [0, 0], sizes = [4, 456], strides = [1, 1]} : vector<4x512xf32> to vector<4x456xf32>
    %116 = tpu.concatenate %114, %115 in 1 : vector<4x56xf32>, vector<4x456xf32> -> vector<4x512xf32>
    %117 = vector.extract_strided_slice %15 {offsets = [0, 0], sizes = [1, 512], strides = [1, 1]} : vector<6x512xf32> to vector<1x512xf32>
    %118 = vector.broadcast %117 : vector<1x512xf32> to vector<4x512xf32>
    %119 = arith.mulf %116, %118 : vector<4x512xf32>
    %120 = vector.extract_strided_slice %15 {offsets = [3, 0], sizes = [1, 512], strides = [1, 1]} : vector<6x512xf32> to vector<1x512xf32>
    %121 = vector.broadcast %120 : vector<1x512xf32> to vector<4x512xf32>
    %122 = arith.mulf %119, %121 : vector<4x512xf32>
    %c7 = arith.constant 7 : index
    %c0_34 = arith.constant 0 : index
    %c0_35 = arith.constant 0 : index
    %123 = vector.load %arg5[%c7, %c0_34, %c0_35] : memref<27x4x4xf32, #tpu.memory_space<vmem>>, vector<1x4x4xf32>
    %124 = vector.shape_cast %123 : vector<1x4x4xf32> to vector<4x4xf32>
    %cst_36 = arith.constant dense<0.000000e+00> : vector<4x512xf32>
    %125 = tpu.matmul %124, %122, %cst_36 {dimension_numbers = #tpu.dot_dimension_numbers<[1], [0], [0], [1], [0, 0, 1, 1], [], []>} : vector<4x4xf32>, vector<4x512xf32>, vector<4x512xf32> -> vector<4x512xf32>
    %126 = arith.addf %113, %125 : vector<4x512xf32>
    %127 = vector.extract_strided_slice %14 {offsets = [0, 457], sizes = [4, 55], strides = [1, 1]} : vector<4x512xf32> to vector<4x55xf32>
    %128 = vector.extract_strided_slice %14 {offsets = [0, 0], sizes = [4, 457], strides = [1, 1]} : vector<4x512xf32> to vector<4x457xf32>
    %129 = tpu.concatenate %127, %128 in 1 : vector<4x55xf32>, vector<4x457xf32> -> vector<4x512xf32>
    %130 = vector.extract_strided_slice %15 {offsets = [0, 0], sizes = [1, 512], strides = [1, 1]} : vector<6x512xf32> to vector<1x512xf32>
    %131 = vector.broadcast %130 : vector<1x512xf32> to vector<4x512xf32>
    %132 = arith.mulf %129, %131 : vector<4x512xf32>
    %133 = vector.extract_strided_slice %15 {offsets = [3, 0], sizes = [1, 512], strides = [1, 1]} : vector<6x512xf32> to vector<1x512xf32>
    %134 = vector.broadcast %133 : vector<1x512xf32> to vector<4x512xf32>
    %135 = arith.mulf %132, %134 : vector<4x512xf32>
    %136 = vector.extract_strided_slice %15 {offsets = [5, 0], sizes = [1, 512], strides = [1, 1]} : vector<6x512xf32> to vector<1x512xf32>
    %137 = vector.broadcast %136 : vector<1x512xf32> to vector<4x512xf32>
    %138 = arith.mulf %135, %137 : vector<4x512xf32>
    %c8 = arith.constant 8 : index
    %c0_37 = arith.constant 0 : index
    %c0_38 = arith.constant 0 : index
    %139 = vector.load %arg5[%c8, %c0_37, %c0_38] : memref<27x4x4xf32, #tpu.memory_space<vmem>>, vector<1x4x4xf32>
    %140 = vector.shape_cast %139 : vector<1x4x4xf32> to vector<4x4xf32>
    %cst_39 = arith.constant dense<0.000000e+00> : vector<4x512xf32>
    %141 = tpu.matmul %140, %138, %cst_39 {dimension_numbers = #tpu.dot_dimension_numbers<[1], [0], [0], [1], [0, 0, 1, 1], [], []>} : vector<4x4xf32>, vector<4x512xf32>, vector<4x512xf32> -> vector<4x512xf32>
    %142 = arith.addf %126, %141 : vector<4x512xf32>
    %143 = vector.extract_strided_slice %14 {offsets = [0, 503], sizes = [4, 9], strides = [1, 1]} : vector<4x512xf32> to vector<4x9xf32>
    %144 = vector.extract_strided_slice %14 {offsets = [0, 0], sizes = [4, 503], strides = [1, 1]} : vector<4x512xf32> to vector<4x503xf32>
    %145 = tpu.concatenate %143, %144 in 1 : vector<4x9xf32>, vector<4x503xf32> -> vector<4x512xf32>
    %146 = vector.extract_strided_slice %15 {offsets = [2, 0], sizes = [1, 512], strides = [1, 1]} : vector<6x512xf32> to vector<1x512xf32>
    %147 = vector.broadcast %146 : vector<1x512xf32> to vector<4x512xf32>
    %148 = arith.mulf %145, %147 : vector<4x512xf32>
    %149 = vector.extract_strided_slice %15 {offsets = [4, 0], sizes = [1, 512], strides = [1, 1]} : vector<6x512xf32> to vector<1x512xf32>
    %150 = vector.broadcast %149 : vector<1x512xf32> to vector<4x512xf32>
    %151 = arith.mulf %148, %150 : vector<4x512xf32>
    %c9 = arith.constant 9 : index
    %c0_40 = arith.constant 0 : index
    %c0_41 = arith.constant 0 : index
    %152 = vector.load %arg5[%c9, %c0_40, %c0_41] : memref<27x4x4xf32, #tpu.memory_space<vmem>>, vector<1x4x4xf32>
    %153 = vector.shape_cast %152 : vector<1x4x4xf32> to vector<4x4xf32>
    %cst_42 = arith.constant dense<0.000000e+00> : vector<4x512xf32>
    %154 = tpu.matmul %153, %151, %cst_42 {dimension_numbers = #tpu.dot_dimension_numbers<[1], [0], [0], [1], [0, 0, 1, 1], [], []>} : vector<4x4xf32>, vector<4x512xf32>, vector<4x512xf32> -> vector<4x512xf32>
    %155 = arith.addf %142, %154 : vector<4x512xf32>
    %156 = vector.extract_strided_slice %14 {offsets = [0, 504], sizes = [4, 8], strides = [1, 1]} : vector<4x512xf32> to vector<4x8xf32>
    %157 = vector.extract_strided_slice %14 {offsets = [0, 0], sizes = [4, 504], strides = [1, 1]} : vector<4x512xf32> to vector<4x504xf32>
    %158 = tpu.concatenate %156, %157 in 1 : vector<4x8xf32>, vector<4x504xf32> -> vector<4x512xf32>
    %159 = vector.extract_strided_slice %15 {offsets = [2, 0], sizes = [1, 512], strides = [1, 1]} : vector<6x512xf32> to vector<1x512xf32>
    %160 = vector.broadcast %159 : vector<1x512xf32> to vector<4x512xf32>
    %161 = arith.mulf %158, %160 : vector<4x512xf32>
    %c10 = arith.constant 10 : index
    %c0_43 = arith.constant 0 : index
    %c0_44 = arith.constant 0 : index
    %162 = vector.load %arg5[%c10, %c0_43, %c0_44] : memref<27x4x4xf32, #tpu.memory_space<vmem>>, vector<1x4x4xf32>
    %163 = vector.shape_cast %162 : vector<1x4x4xf32> to vector<4x4xf32>
    %cst_45 = arith.constant dense<0.000000e+00> : vector<4x512xf32>
    %164 = tpu.matmul %163, %161, %cst_45 {dimension_numbers = #tpu.dot_dimension_numbers<[1], [0], [0], [1], [0, 0, 1, 1], [], []>} : vector<4x4xf32>, vector<4x512xf32>, vector<4x512xf32> -> vector<4x512xf32>
    %165 = arith.addf %155, %164 : vector<4x512xf32>
    %166 = vector.extract_strided_slice %14 {offsets = [0, 505], sizes = [4, 7], strides = [1, 1]} : vector<4x512xf32> to vector<4x7xf32>
    %167 = vector.extract_strided_slice %14 {offsets = [0, 0], sizes = [4, 505], strides = [1, 1]} : vector<4x512xf32> to vector<4x505xf32>
    %168 = tpu.concatenate %166, %167 in 1 : vector<4x7xf32>, vector<4x505xf32> -> vector<4x512xf32>
    %169 = vector.extract_strided_slice %15 {offsets = [2, 0], sizes = [1, 512], strides = [1, 1]} : vector<6x512xf32> to vector<1x512xf32>
    %170 = vector.broadcast %169 : vector<1x512xf32> to vector<4x512xf32>
    %171 = arith.mulf %168, %170 : vector<4x512xf32>
    %172 = vector.extract_strided_slice %15 {offsets = [5, 0], sizes = [1, 512], strides = [1, 1]} : vector<6x512xf32> to vector<1x512xf32>
    %173 = vector.broadcast %172 : vector<1x512xf32> to vector<4x512xf32>
    %174 = arith.mulf %171, %173 : vector<4x512xf32>
    %c11 = arith.constant 11 : index
    %c0_46 = arith.constant 0 : index
    %c0_47 = arith.constant 0 : index
    %175 = vector.load %arg5[%c11, %c0_46, %c0_47] : memref<27x4x4xf32, #tpu.memory_space<vmem>>, vector<1x4x4xf32>
    %176 = vector.shape_cast %175 : vector<1x4x4xf32> to vector<4x4xf32>
    %cst_48 = arith.constant dense<0.000000e+00> : vector<4x512xf32>
    %177 = tpu.matmul %176, %174, %cst_48 {dimension_numbers = #tpu.dot_dimension_numbers<[1], [0], [0], [1], [0, 0, 1, 1], [], []>} : vector<4x4xf32>, vector<4x512xf32>, vector<4x512xf32> -> vector<4x512xf32>
    %178 = arith.addf %165, %177 : vector<4x512xf32>
    %179 = vector.extract_strided_slice %14 {offsets = [0, 511], sizes = [4, 1], strides = [1, 1]} : vector<4x512xf32> to vector<4x1xf32>
    %180 = vector.extract_strided_slice %14 {offsets = [0, 0], sizes = [4, 511], strides = [1, 1]} : vector<4x512xf32> to vector<4x511xf32>
    %181 = tpu.concatenate %179, %180 in 1 : vector<4x1xf32>, vector<4x511xf32> -> vector<4x512xf32>
    %182 = vector.extract_strided_slice %15 {offsets = [4, 0], sizes = [1, 512], strides = [1, 1]} : vector<6x512xf32> to vector<1x512xf32>
    %183 = vector.broadcast %182 : vector<1x512xf32> to vector<4x512xf32>
    %184 = arith.mulf %181, %183 : vector<4x512xf32>
    %c12 = arith.constant 12 : index
    %c0_49 = arith.constant 0 : index
    %c0_50 = arith.constant 0 : index
    %185 = vector.load %arg5[%c12, %c0_49, %c0_50] : memref<27x4x4xf32, #tpu.memory_space<vmem>>, vector<1x4x4xf32>
    %186 = vector.shape_cast %185 : vector<1x4x4xf32> to vector<4x4xf32>
    %cst_51 = arith.constant dense<0.000000e+00> : vector<4x512xf32>
    %187 = tpu.matmul %186, %184, %cst_51 {dimension_numbers = #tpu.dot_dimension_numbers<[1], [0], [0], [1], [0, 0, 1, 1], [], []>} : vector<4x4xf32>, vector<4x512xf32>, vector<4x512xf32> -> vector<4x512xf32>
    %188 = arith.addf %178, %187 : vector<4x512xf32>
    %c13 = arith.constant 13 : index
    %c0_52 = arith.constant 0 : index
    %c0_53 = arith.constant 0 : index
    %189 = vector.load %arg5[%c13, %c0_52, %c0_53] : memref<27x4x4xf32, #tpu.memory_space<vmem>>, vector<1x4x4xf32>
    %190 = vector.shape_cast %189 : vector<1x4x4xf32> to vector<4x4xf32>
    %cst_54 = arith.constant dense<0.000000e+00> : vector<4x512xf32>
    %191 = tpu.matmul %190, %14, %cst_54 {dimension_numbers = #tpu.dot_dimension_numbers<[1], [0], [0], [1], [0, 0, 1, 1], [], []>} : vector<4x4xf32>, vector<4x512xf32>, vector<4x512xf32> -> vector<4x512xf32>
    %192 = arith.addf %188, %191 : vector<4x512xf32>
    %193 = vector.extract_strided_slice %14 {offsets = [0, 1], sizes = [4, 511], strides = [1, 1]} : vector<4x512xf32> to vector<4x511xf32>
    %194 = vector.extract_strided_slice %14 {offsets = [0, 0], sizes = [4, 1], strides = [1, 1]} : vector<4x512xf32> to vector<4x1xf32>
    %195 = tpu.concatenate %193, %194 in 1 : vector<4x511xf32>, vector<4x1xf32> -> vector<4x512xf32>
    %196 = vector.extract_strided_slice %15 {offsets = [5, 0], sizes = [1, 512], strides = [1, 1]} : vector<6x512xf32> to vector<1x512xf32>
    %197 = vector.broadcast %196 : vector<1x512xf32> to vector<4x512xf32>
    %198 = arith.mulf %195, %197 : vector<4x512xf32>
    %c14 = arith.constant 14 : index
    %c0_55 = arith.constant 0 : index
    %c0_56 = arith.constant 0 : index
    %199 = vector.load %arg5[%c14, %c0_55, %c0_56] : memref<27x4x4xf32, #tpu.memory_space<vmem>>, vector<1x4x4xf32>
    %200 = vector.shape_cast %199 : vector<1x4x4xf32> to vector<4x4xf32>
    %cst_57 = arith.constant dense<0.000000e+00> : vector<4x512xf32>
    %201 = tpu.matmul %200, %198, %cst_57 {dimension_numbers = #tpu.dot_dimension_numbers<[1], [0], [0], [1], [0, 0, 1, 1], [], []>} : vector<4x4xf32>, vector<4x512xf32>, vector<4x512xf32> -> vector<4x512xf32>
    %202 = arith.addf %192, %201 : vector<4x512xf32>
    %203 = vector.extract_strided_slice %14 {offsets = [0, 7], sizes = [4, 505], strides = [1, 1]} : vector<4x512xf32> to vector<4x505xf32>
    %204 = vector.extract_strided_slice %14 {offsets = [0, 0], sizes = [4, 7], strides = [1, 1]} : vector<4x512xf32> to vector<4x7xf32>
    %205 = tpu.concatenate %203, %204 in 1 : vector<4x505xf32>, vector<4x7xf32> -> vector<4x512xf32>
    %206 = vector.extract_strided_slice %15 {offsets = [3, 0], sizes = [1, 512], strides = [1, 1]} : vector<6x512xf32> to vector<1x512xf32>
    %207 = vector.broadcast %206 : vector<1x512xf32> to vector<4x512xf32>
    %208 = arith.mulf %205, %207 : vector<4x512xf32>
    %209 = vector.extract_strided_slice %15 {offsets = [4, 0], sizes = [1, 512], strides = [1, 1]} : vector<6x512xf32> to vector<1x512xf32>
    %210 = vector.broadcast %209 : vector<1x512xf32> to vector<4x512xf32>
    %211 = arith.mulf %208, %210 : vector<4x512xf32>
    %c15 = arith.constant 15 : index
    %c0_58 = arith.constant 0 : index
    %c0_59 = arith.constant 0 : index
    %212 = vector.load %arg5[%c15, %c0_58, %c0_59] : memref<27x4x4xf32, #tpu.memory_space<vmem>>, vector<1x4x4xf32>
    %213 = vector.shape_cast %212 : vector<1x4x4xf32> to vector<4x4xf32>
    %cst_60 = arith.constant dense<0.000000e+00> : vector<4x512xf32>
    %214 = tpu.matmul %213, %211, %cst_60 {dimension_numbers = #tpu.dot_dimension_numbers<[1], [0], [0], [1], [0, 0, 1, 1], [], []>} : vector<4x4xf32>, vector<4x512xf32>, vector<4x512xf32> -> vector<4x512xf32>
    %215 = arith.addf %202, %214 : vector<4x512xf32>
    %216 = vector.extract_strided_slice %14 {offsets = [0, 8], sizes = [4, 504], strides = [1, 1]} : vector<4x512xf32> to vector<4x504xf32>
    %217 = vector.extract_strided_slice %14 {offsets = [0, 0], sizes = [4, 8], strides = [1, 1]} : vector<4x512xf32> to vector<4x8xf32>
    %218 = tpu.concatenate %216, %217 in 1 : vector<4x504xf32>, vector<4x8xf32> -> vector<4x512xf32>
    %219 = vector.extract_strided_slice %15 {offsets = [3, 0], sizes = [1, 512], strides = [1, 1]} : vector<6x512xf32> to vector<1x512xf32>
    %220 = vector.broadcast %219 : vector<1x512xf32> to vector<4x512xf32>
    %221 = arith.mulf %218, %220 : vector<4x512xf32>
    %c16 = arith.constant 16 : index
    %c0_61 = arith.constant 0 : index
    %c0_62 = arith.constant 0 : index
    %222 = vector.load %arg5[%c16, %c0_61, %c0_62] : memref<27x4x4xf32, #tpu.memory_space<vmem>>, vector<1x4x4xf32>
    %223 = vector.shape_cast %222 : vector<1x4x4xf32> to vector<4x4xf32>
    %cst_63 = arith.constant dense<0.000000e+00> : vector<4x512xf32>
    %224 = tpu.matmul %223, %221, %cst_63 {dimension_numbers = #tpu.dot_dimension_numbers<[1], [0], [0], [1], [0, 0, 1, 1], [], []>} : vector<4x4xf32>, vector<4x512xf32>, vector<4x512xf32> -> vector<4x512xf32>
    %225 = arith.addf %215, %224 : vector<4x512xf32>
    %226 = vector.extract_strided_slice %14 {offsets = [0, 9], sizes = [4, 503], strides = [1, 1]} : vector<4x512xf32> to vector<4x503xf32>
    %227 = vector.extract_strided_slice %14 {offsets = [0, 0], sizes = [4, 9], strides = [1, 1]} : vector<4x512xf32> to vector<4x9xf32>
    %228 = tpu.concatenate %226, %227 in 1 : vector<4x503xf32>, vector<4x9xf32> -> vector<4x512xf32>
    %229 = vector.extract_strided_slice %15 {offsets = [3, 0], sizes = [1, 512], strides = [1, 1]} : vector<6x512xf32> to vector<1x512xf32>
    %230 = vector.broadcast %229 : vector<1x512xf32> to vector<4x512xf32>
    %231 = arith.mulf %228, %230 : vector<4x512xf32>
    %232 = vector.extract_strided_slice %15 {offsets = [5, 0], sizes = [1, 512], strides = [1, 1]} : vector<6x512xf32> to vector<1x512xf32>
    %233 = vector.broadcast %232 : vector<1x512xf32> to vector<4x512xf32>
    %234 = arith.mulf %231, %233 : vector<4x512xf32>
    %c17 = arith.constant 17 : index
    %c0_64 = arith.constant 0 : index
    %c0_65 = arith.constant 0 : index
    %235 = vector.load %arg5[%c17, %c0_64, %c0_65] : memref<27x4x4xf32, #tpu.memory_space<vmem>>, vector<1x4x4xf32>
    %236 = vector.shape_cast %235 : vector<1x4x4xf32> to vector<4x4xf32>
    %cst_66 = arith.constant dense<0.000000e+00> : vector<4x512xf32>
    %237 = tpu.matmul %236, %234, %cst_66 {dimension_numbers = #tpu.dot_dimension_numbers<[1], [0], [0], [1], [0, 0, 1, 1], [], []>} : vector<4x4xf32>, vector<4x512xf32>, vector<4x512xf32> -> vector<4x512xf32>
    %238 = arith.addf %225, %237 : vector<4x512xf32>
    %239 = vector.extract_strided_slice %14 {offsets = [0, 55], sizes = [4, 457], strides = [1, 1]} : vector<4x512xf32> to vector<4x457xf32>
    %240 = vector.extract_strided_slice %14 {offsets = [0, 0], sizes = [4, 55], strides = [1, 1]} : vector<4x512xf32> to vector<4x55xf32>
    %241 = tpu.concatenate %239, %240 in 1 : vector<4x457xf32>, vector<4x55xf32> -> vector<4x512xf32>
    %242 = vector.extract_strided_slice %15 {offsets = [1, 0], sizes = [1, 512], strides = [1, 1]} : vector<6x512xf32> to vector<1x512xf32>
    %243 = vector.broadcast %242 : vector<1x512xf32> to vector<4x512xf32>
    %244 = arith.mulf %241, %243 : vector<4x512xf32>
    %245 = vector.extract_strided_slice %15 {offsets = [2, 0], sizes = [1, 512], strides = [1, 1]} : vector<6x512xf32> to vector<1x512xf32>
    %246 = vector.broadcast %245 : vector<1x512xf32> to vector<4x512xf32>
    %247 = arith.mulf %244, %246 : vector<4x512xf32>
    %248 = vector.extract_strided_slice %15 {offsets = [4, 0], sizes = [1, 512], strides = [1, 1]} : vector<6x512xf32> to vector<1x512xf32>
    %249 = vector.broadcast %248 : vector<1x512xf32> to vector<4x512xf32>
    %250 = arith.mulf %247, %249 : vector<4x512xf32>
    %c18 = arith.constant 18 : index
    %c0_67 = arith.constant 0 : index
    %c0_68 = arith.constant 0 : index
    %251 = vector.load %arg5[%c18, %c0_67, %c0_68] : memref<27x4x4xf32, #tpu.memory_space<vmem>>, vector<1x4x4xf32>
    %252 = vector.shape_cast %251 : vector<1x4x4xf32> to vector<4x4xf32>
    %cst_69 = arith.constant dense<0.000000e+00> : vector<4x512xf32>
    %253 = tpu.matmul %252, %250, %cst_69 {dimension_numbers = #tpu.dot_dimension_numbers<[1], [0], [0], [1], [0, 0, 1, 1], [], []>} : vector<4x4xf32>, vector<4x512xf32>, vector<4x512xf32> -> vector<4x512xf32>
    %254 = arith.addf %238, %253 : vector<4x512xf32>
    %255 = vector.extract_strided_slice %14 {offsets = [0, 56], sizes = [4, 456], strides = [1, 1]} : vector<4x512xf32> to vector<4x456xf32>
    %256 = vector.extract_strided_slice %14 {offsets = [0, 0], sizes = [4, 56], strides = [1, 1]} : vector<4x512xf32> to vector<4x56xf32>
    %257 = tpu.concatenate %255, %256 in 1 : vector<4x456xf32>, vector<4x56xf32> -> vector<4x512xf32>
    %258 = vector.extract_strided_slice %15 {offsets = [1, 0], sizes = [1, 512], strides = [1, 1]} : vector<6x512xf32> to vector<1x512xf32>
    %259 = vector.broadcast %258 : vector<1x512xf32> to vector<4x512xf32>
    %260 = arith.mulf %257, %259 : vector<4x512xf32>
    %261 = vector.extract_strided_slice %15 {offsets = [2, 0], sizes = [1, 512], strides = [1, 1]} : vector<6x512xf32> to vector<1x512xf32>
    %262 = vector.broadcast %261 : vector<1x512xf32> to vector<4x512xf32>
    %263 = arith.mulf %260, %262 : vector<4x512xf32>
    %c19 = arith.constant 19 : index
    %c0_70 = arith.constant 0 : index
    %c0_71 = arith.constant 0 : index
    %264 = vector.load %arg5[%c19, %c0_70, %c0_71] : memref<27x4x4xf32, #tpu.memory_space<vmem>>, vector<1x4x4xf32>
    %265 = vector.shape_cast %264 : vector<1x4x4xf32> to vector<4x4xf32>
    %cst_72 = arith.constant dense<0.000000e+00> : vector<4x512xf32>
    %266 = tpu.matmul %265, %263, %cst_72 {dimension_numbers = #tpu.dot_dimension_numbers<[1], [0], [0], [1], [0, 0, 1, 1], [], []>} : vector<4x4xf32>, vector<4x512xf32>, vector<4x512xf32> -> vector<4x512xf32>
    %267 = arith.addf %254, %266 : vector<4x512xf32>
    %268 = vector.extract_strided_slice %14 {offsets = [0, 57], sizes = [4, 455], strides = [1, 1]} : vector<4x512xf32> to vector<4x455xf32>
    %269 = vector.extract_strided_slice %14 {offsets = [0, 0], sizes = [4, 57], strides = [1, 1]} : vector<4x512xf32> to vector<4x57xf32>
    %270 = tpu.concatenate %268, %269 in 1 : vector<4x455xf32>, vector<4x57xf32> -> vector<4x512xf32>
    %271 = vector.extract_strided_slice %15 {offsets = [1, 0], sizes = [1, 512], strides = [1, 1]} : vector<6x512xf32> to vector<1x512xf32>
    %272 = vector.broadcast %271 : vector<1x512xf32> to vector<4x512xf32>
    %273 = arith.mulf %270, %272 : vector<4x512xf32>
    %274 = vector.extract_strided_slice %15 {offsets = [2, 0], sizes = [1, 512], strides = [1, 1]} : vector<6x512xf32> to vector<1x512xf32>
    %275 = vector.broadcast %274 : vector<1x512xf32> to vector<4x512xf32>
    %276 = arith.mulf %273, %275 : vector<4x512xf32>
    %277 = vector.extract_strided_slice %15 {offsets = [5, 0], sizes = [1, 512], strides = [1, 1]} : vector<6x512xf32> to vector<1x512xf32>
    %278 = vector.broadcast %277 : vector<1x512xf32> to vector<4x512xf32>
    %279 = arith.mulf %276, %278 : vector<4x512xf32>
    %c20 = arith.constant 20 : index
    %c0_73 = arith.constant 0 : index
    %c0_74 = arith.constant 0 : index
    %280 = vector.load %arg5[%c20, %c0_73, %c0_74] : memref<27x4x4xf32, #tpu.memory_space<vmem>>, vector<1x4x4xf32>
    %281 = vector.shape_cast %280 : vector<1x4x4xf32> to vector<4x4xf32>
    %cst_75 = arith.constant dense<0.000000e+00> : vector<4x512xf32>
    %282 = tpu.matmul %281, %279, %cst_75 {dimension_numbers = #tpu.dot_dimension_numbers<[1], [0], [0], [1], [0, 0, 1, 1], [], []>} : vector<4x4xf32>, vector<4x512xf32>, vector<4x512xf32> -> vector<4x512xf32>
    %283 = arith.addf %267, %282 : vector<4x512xf32>
    %284 = vector.extract_strided_slice %14 {offsets = [0, 63], sizes = [4, 449], strides = [1, 1]} : vector<4x512xf32> to vector<4x449xf32>
    %285 = vector.extract_strided_slice %14 {offsets = [0, 0], sizes = [4, 63], strides = [1, 1]} : vector<4x512xf32> to vector<4x63xf32>
    %286 = tpu.concatenate %284, %285 in 1 : vector<4x449xf32>, vector<4x63xf32> -> vector<4x512xf32>
    %287 = vector.extract_strided_slice %15 {offsets = [1, 0], sizes = [1, 512], strides = [1, 1]} : vector<6x512xf32> to vector<1x512xf32>
    %288 = vector.broadcast %287 : vector<1x512xf32> to vector<4x512xf32>
    %289 = arith.mulf %286, %288 : vector<4x512xf32>
    %290 = vector.extract_strided_slice %15 {offsets = [4, 0], sizes = [1, 512], strides = [1, 1]} : vector<6x512xf32> to vector<1x512xf32>
    %291 = vector.broadcast %290 : vector<1x512xf32> to vector<4x512xf32>
    %292 = arith.mulf %289, %291 : vector<4x512xf32>
    %c21 = arith.constant 21 : index
    %c0_76 = arith.constant 0 : index
    %c0_77 = arith.constant 0 : index
    %293 = vector.load %arg5[%c21, %c0_76, %c0_77] : memref<27x4x4xf32, #tpu.memory_space<vmem>>, vector<1x4x4xf32>
    %294 = vector.shape_cast %293 : vector<1x4x4xf32> to vector<4x4xf32>
    %cst_78 = arith.constant dense<0.000000e+00> : vector<4x512xf32>
    %295 = tpu.matmul %294, %292, %cst_78 {dimension_numbers = #tpu.dot_dimension_numbers<[1], [0], [0], [1], [0, 0, 1, 1], [], []>} : vector<4x4xf32>, vector<4x512xf32>, vector<4x512xf32> -> vector<4x512xf32>
    %296 = arith.addf %283, %295 : vector<4x512xf32>
    %297 = vector.extract_strided_slice %14 {offsets = [0, 64], sizes = [4, 448], strides = [1, 1]} : vector<4x512xf32> to vector<4x448xf32>
    %298 = vector.extract_strided_slice %14 {offsets = [0, 0], sizes = [4, 64], strides = [1, 1]} : vector<4x512xf32> to vector<4x64xf32>
    %299 = tpu.concatenate %297, %298 in 1 : vector<4x448xf32>, vector<4x64xf32> -> vector<4x512xf32>
    %300 = vector.extract_strided_slice %15 {offsets = [1, 0], sizes = [1, 512], strides = [1, 1]} : vector<6x512xf32> to vector<1x512xf32>
    %301 = vector.broadcast %300 : vector<1x512xf32> to vector<4x512xf32>
    %302 = arith.mulf %299, %301 : vector<4x512xf32>
    %c22 = arith.constant 22 : index
    %c0_79 = arith.constant 0 : index
    %c0_80 = arith.constant 0 : index
    %303 = vector.load %arg5[%c22, %c0_79, %c0_80] : memref<27x4x4xf32, #tpu.memory_space<vmem>>, vector<1x4x4xf32>
    %304 = vector.shape_cast %303 : vector<1x4x4xf32> to vector<4x4xf32>
    %cst_81 = arith.constant dense<0.000000e+00> : vector<4x512xf32>
    %305 = tpu.matmul %304, %302, %cst_81 {dimension_numbers = #tpu.dot_dimension_numbers<[1], [0], [0], [1], [0, 0, 1, 1], [], []>} : vector<4x4xf32>, vector<4x512xf32>, vector<4x512xf32> -> vector<4x512xf32>
    %306 = arith.addf %296, %305 : vector<4x512xf32>
    %307 = vector.extract_strided_slice %14 {offsets = [0, 65], sizes = [4, 447], strides = [1, 1]} : vector<4x512xf32> to vector<4x447xf32>
    %308 = vector.extract_strided_slice %14 {offsets = [0, 0], sizes = [4, 65], strides = [1, 1]} : vector<4x512xf32> to vector<4x65xf32>
    %309 = tpu.concatenate %307, %308 in 1 : vector<4x447xf32>, vector<4x65xf32> -> vector<4x512xf32>
    %310 = vector.extract_strided_slice %15 {offsets = [1, 0], sizes = [1, 512], strides = [1, 1]} : vector<6x512xf32> to vector<1x512xf32>
    %311 = vector.broadcast %310 : vector<1x512xf32> to vector<4x512xf32>
    %312 = arith.mulf %309, %311 : vector<4x512xf32>
    %313 = vector.extract_strided_slice %15 {offsets = [5, 0], sizes = [1, 512], strides = [1, 1]} : vector<6x512xf32> to vector<1x512xf32>
    %314 = vector.broadcast %313 : vector<1x512xf32> to vector<4x512xf32>
    %315 = arith.mulf %312, %314 : vector<4x512xf32>
    %c23 = arith.constant 23 : index
    %c0_82 = arith.constant 0 : index
    %c0_83 = arith.constant 0 : index
    %316 = vector.load %arg5[%c23, %c0_82, %c0_83] : memref<27x4x4xf32, #tpu.memory_space<vmem>>, vector<1x4x4xf32>
    %317 = vector.shape_cast %316 : vector<1x4x4xf32> to vector<4x4xf32>
    %cst_84 = arith.constant dense<0.000000e+00> : vector<4x512xf32>
    %318 = tpu.matmul %317, %315, %cst_84 {dimension_numbers = #tpu.dot_dimension_numbers<[1], [0], [0], [1], [0, 0, 1, 1], [], []>} : vector<4x4xf32>, vector<4x512xf32>, vector<4x512xf32> -> vector<4x512xf32>
    %319 = arith.addf %306, %318 : vector<4x512xf32>
    %320 = vector.extract_strided_slice %14 {offsets = [0, 71], sizes = [4, 441], strides = [1, 1]} : vector<4x512xf32> to vector<4x441xf32>
    %321 = vector.extract_strided_slice %14 {offsets = [0, 0], sizes = [4, 71], strides = [1, 1]} : vector<4x512xf32> to vector<4x71xf32>
    %322 = tpu.concatenate %320, %321 in 1 : vector<4x441xf32>, vector<4x71xf32> -> vector<4x512xf32>
    %323 = vector.extract_strided_slice %15 {offsets = [1, 0], sizes = [1, 512], strides = [1, 1]} : vector<6x512xf32> to vector<1x512xf32>
    %324 = vector.broadcast %323 : vector<1x512xf32> to vector<4x512xf32>
    %325 = arith.mulf %322, %324 : vector<4x512xf32>
    %326 = vector.extract_strided_slice %15 {offsets = [3, 0], sizes = [1, 512], strides = [1, 1]} : vector<6x512xf32> to vector<1x512xf32>
    %327 = vector.broadcast %326 : vector<1x512xf32> to vector<4x512xf32>
    %328 = arith.mulf %325, %327 : vector<4x512xf32>
    %329 = vector.extract_strided_slice %15 {offsets = [4, 0], sizes = [1, 512], strides = [1, 1]} : vector<6x512xf32> to vector<1x512xf32>
    %330 = vector.broadcast %329 : vector<1x512xf32> to vector<4x512xf32>
    %331 = arith.mulf %328, %330 : vector<4x512xf32>
    %c24 = arith.constant 24 : index
    %c0_85 = arith.constant 0 : index
    %c0_86 = arith.constant 0 : index
    %332 = vector.load %arg5[%c24, %c0_85, %c0_86] : memref<27x4x4xf32, #tpu.memory_space<vmem>>, vector<1x4x4xf32>
    %333 = vector.shape_cast %332 : vector<1x4x4xf32> to vector<4x4xf32>
    %cst_87 = arith.constant dense<0.000000e+00> : vector<4x512xf32>
    %334 = tpu.matmul %333, %331, %cst_87 {dimension_numbers = #tpu.dot_dimension_numbers<[1], [0], [0], [1], [0, 0, 1, 1], [], []>} : vector<4x4xf32>, vector<4x512xf32>, vector<4x512xf32> -> vector<4x512xf32>
    %335 = arith.addf %319, %334 : vector<4x512xf32>
    %336 = vector.extract_strided_slice %14 {offsets = [0, 72], sizes = [4, 440], strides = [1, 1]} : vector<4x512xf32> to vector<4x440xf32>
    %337 = vector.extract_strided_slice %14 {offsets = [0, 0], sizes = [4, 72], strides = [1, 1]} : vector<4x512xf32> to vector<4x72xf32>
    %338 = tpu.concatenate %336, %337 in 1 : vector<4x440xf32>, vector<4x72xf32> -> vector<4x512xf32>
    %339 = vector.extract_strided_slice %15 {offsets = [1, 0], sizes = [1, 512], strides = [1, 1]} : vector<6x512xf32> to vector<1x512xf32>
    %340 = vector.broadcast %339 : vector<1x512xf32> to vector<4x512xf32>
    %341 = arith.mulf %338, %340 : vector<4x512xf32>
    %342 = vector.extract_strided_slice %15 {offsets = [3, 0], sizes = [1, 512], strides = [1, 1]} : vector<6x512xf32> to vector<1x512xf32>
    %343 = vector.broadcast %342 : vector<1x512xf32> to vector<4x512xf32>
    %344 = arith.mulf %341, %343 : vector<4x512xf32>
    %c25 = arith.constant 25 : index
    %c0_88 = arith.constant 0 : index
    %c0_89 = arith.constant 0 : index
    %345 = vector.load %arg5[%c25, %c0_88, %c0_89] : memref<27x4x4xf32, #tpu.memory_space<vmem>>, vector<1x4x4xf32>
    %346 = vector.shape_cast %345 : vector<1x4x4xf32> to vector<4x4xf32>
    %cst_90 = arith.constant dense<0.000000e+00> : vector<4x512xf32>
    %347 = tpu.matmul %346, %344, %cst_90 {dimension_numbers = #tpu.dot_dimension_numbers<[1], [0], [0], [1], [0, 0, 1, 1], [], []>} : vector<4x4xf32>, vector<4x512xf32>, vector<4x512xf32> -> vector<4x512xf32>
    %348 = arith.addf %335, %347 : vector<4x512xf32>
    %349 = vector.extract_strided_slice %14 {offsets = [0, 73], sizes = [4, 439], strides = [1, 1]} : vector<4x512xf32> to vector<4x439xf32>
    %350 = vector.extract_strided_slice %14 {offsets = [0, 0], sizes = [4, 73], strides = [1, 1]} : vector<4x512xf32> to vector<4x73xf32>
    %351 = tpu.concatenate %349, %350 in 1 : vector<4x439xf32>, vector<4x73xf32> -> vector<4x512xf32>
    %352 = vector.extract_strided_slice %15 {offsets = [1, 0], sizes = [1, 512], strides = [1, 1]} : vector<6x512xf32> to vector<1x512xf32>
    %353 = vector.broadcast %352 : vector<1x512xf32> to vector<4x512xf32>
    %354 = arith.mulf %351, %353 : vector<4x512xf32>
    %355 = vector.extract_strided_slice %15 {offsets = [3, 0], sizes = [1, 512], strides = [1, 1]} : vector<6x512xf32> to vector<1x512xf32>
    %356 = vector.broadcast %355 : vector<1x512xf32> to vector<4x512xf32>
    %357 = arith.mulf %354, %356 : vector<4x512xf32>
    %358 = vector.extract_strided_slice %15 {offsets = [5, 0], sizes = [1, 512], strides = [1, 1]} : vector<6x512xf32> to vector<1x512xf32>
    %359 = vector.broadcast %358 : vector<1x512xf32> to vector<4x512xf32>
    %360 = arith.mulf %357, %359 : vector<4x512xf32>
    %c26 = arith.constant 26 : index
    %c0_91 = arith.constant 0 : index
    %c0_92 = arith.constant 0 : index
    %361 = vector.load %arg5[%c26, %c0_91, %c0_92] : memref<27x4x4xf32, #tpu.memory_space<vmem>>, vector<1x4x4xf32>
    %362 = vector.shape_cast %361 : vector<1x4x4xf32> to vector<4x4xf32>
    %cst_93 = arith.constant dense<0.000000e+00> : vector<4x512xf32>
    %363 = tpu.matmul %362, %360, %cst_93 {dimension_numbers = #tpu.dot_dimension_numbers<[1], [0], [0], [1], [0, 0, 1, 1], [], []>} : vector<4x4xf32>, vector<4x512xf32>, vector<4x512xf32> -> vector<4x512xf32>
    %364 = arith.addf %348, %363 : vector<4x512xf32>
    %c0_94 = arith.constant 0 : index
    %c0_95 = arith.constant 0 : index
    %365 = vector.load %arg6[%c0_94, %c0_95] : memref<4x1xf32, #tpu.memory_space<vmem>>, vector<4x1xf32>
    %366 = vector.broadcast %365 : vector<4x1xf32> to vector<4x512xf32>
    %367 = arith.addf %364, %366 : vector<4x512xf32>
    %cst_96 = arith.constant -1.000000e+04 : f32
    %cst_97 = arith.constant 1.000000e+04 : f32
    %368 = vector.broadcast %cst_96 : f32 to vector<4x512xf32>
    %369 = arith.maximumf %368, %367 : vector<4x512xf32>
    %370 = vector.broadcast %cst_97 : f32 to vector<4x512xf32>
    %371 = arith.minimumf %370, %369 : vector<4x512xf32>
    %cst_98 = arith.constant dense<0.000000e+00> : vector<4xf32>
    %372 = vector.multi_reduction <add>, %371, %cst_98 [1] : vector<4x512xf32> to vector<4xf32>
    %373 = vector.shape_cast %372 : vector<4xf32> to vector<4x1xf32>
    %cst_99 = arith.constant 5.120000e+02 : f32
    %374 = vector.broadcast %cst_99 : f32 to vector<4x1xf32>
    %375 = arith.divf %373, %374 : vector<4x1xf32>
    %376 = vector.broadcast %375 : vector<4x1xf32> to vector<4x512xf32>
    %377 = arith.subf %371, %376 : vector<4x512xf32>
    %378 = arith.mulf %377, %377 : vector<4x512xf32>
    %cst_100 = arith.constant dense<0.000000e+00> : vector<4xf32>
    %379 = vector.multi_reduction <add>, %378, %cst_100 [1] : vector<4x512xf32> to vector<4xf32>
    %380 = vector.shape_cast %379 : vector<4xf32> to vector<4x1xf32>
    %cst_101 = arith.constant 5.120000e+02 : f32
    %381 = vector.broadcast %cst_101 : f32 to vector<4x1xf32>
    %382 = arith.divf %380, %381 : vector<4x1xf32>
    %cst_102 = arith.constant 1.000000e-03 : f32
    %383 = vector.broadcast %cst_102 : f32 to vector<4x1xf32>
    %384 = arith.addf %382, %383 : vector<4x1xf32>
    %385 = math.rsqrt %384 : vector<4x1xf32>
    %386 = vector.broadcast %385 : vector<4x1xf32> to vector<4x512xf32>
    %387 = arith.mulf %377, %386 : vector<4x512xf32>
    %cst_103 = arith.constant 0.000000e+00 : f32
    %388 = vector.broadcast %cst_103 : f32 to vector<4x512xf32>
    %389 = arith.cmpf oge, %387, %388 : vector<4x512xf32>
    %cst_104 = arith.constant 2.000000e-01 : f32
    %390 = vector.broadcast %cst_104 : f32 to vector<4x512xf32>
    %391 = arith.mulf %390, %387 : vector<4x512xf32>
    %392 = arith.select %389, %387, %391 : vector<4x512xi1>, vector<4x512xf32>
    %c0_105 = arith.constant 0 : index
    %c0_106 = arith.constant 0 : index
    %393 = vector.load %arg7[%c0_105, %c0_106] : memref<16x4xf32, #tpu.memory_space<vmem>>, vector<16x4xf32>
    %cst_107 = arith.constant dense<0.000000e+00> : vector<16x512xf32>
    %394 = tpu.matmul %393, %392, %cst_107 {dimension_numbers = #tpu.dot_dimension_numbers<[1], [0], [0], [1], [0, 0, 1, 1], [], []>} : vector<16x4xf32>, vector<4x512xf32>, vector<16x512xf32> -> vector<16x512xf32>
    %c0_108 = arith.constant 0 : index
    %c0_109 = arith.constant 0 : index
    %395 = vector.load %arg8[%c0_108, %c0_109] : memref<16x1xf32, #tpu.memory_space<vmem>>, vector<16x1xf32>
    %396 = vector.broadcast %395 : vector<16x1xf32> to vector<16x512xf32>
    %397 = arith.addf %394, %396 : vector<16x512xf32>
    %cst_110 = arith.constant -1.000000e+04 : f32
    %cst_111 = arith.constant 1.000000e+04 : f32
    %398 = vector.broadcast %cst_110 : f32 to vector<16x512xf32>
    %399 = arith.maximumf %398, %397 : vector<16x512xf32>
    %400 = vector.broadcast %cst_111 : f32 to vector<16x512xf32>
    %401 = arith.minimumf %400, %399 : vector<16x512xf32>
    %cst_112 = arith.constant dense<0.000000e+00> : vector<16xf32>
    %402 = vector.multi_reduction <add>, %401, %cst_112 [1] : vector<16x512xf32> to vector<16xf32>
    %403 = vector.shape_cast %402 : vector<16xf32> to vector<16x1xf32>
    %cst_113 = arith.constant 5.120000e+02 : f32
    %404 = vector.broadcast %cst_113 : f32 to vector<16x1xf32>
    %405 = arith.divf %403, %404 : vector<16x1xf32>
    %406 = vector.broadcast %405 : vector<16x1xf32> to vector<16x512xf32>
    %407 = arith.subf %401, %406 : vector<16x512xf32>
    %408 = arith.mulf %407, %407 : vector<16x512xf32>
    %cst_114 = arith.constant dense<0.000000e+00> : vector<16xf32>
    %409 = vector.multi_reduction <add>, %408, %cst_114 [1] : vector<16x512xf32> to vector<16xf32>
    %410 = vector.shape_cast %409 : vector<16xf32> to vector<16x1xf32>
    %cst_115 = arith.constant 5.120000e+02 : f32
    %411 = vector.broadcast %cst_115 : f32 to vector<16x1xf32>
    %412 = arith.divf %410, %411 : vector<16x1xf32>
    %cst_116 = arith.constant 1.000000e-03 : f32
    %413 = vector.broadcast %cst_116 : f32 to vector<16x1xf32>
    %414 = arith.addf %412, %413 : vector<16x1xf32>
    %415 = math.rsqrt %414 : vector<16x1xf32>
    %416 = vector.broadcast %415 : vector<16x1xf32> to vector<16x512xf32>
    %417 = arith.mulf %407, %416 : vector<16x512xf32>
    %cst_117 = arith.constant 0.000000e+00 : f32
    %418 = vector.broadcast %cst_117 : f32 to vector<16x512xf32>
    %419 = arith.cmpf oge, %417, %418 : vector<16x512xf32>
    %cst_118 = arith.constant 2.000000e-01 : f32
    %420 = vector.broadcast %cst_118 : f32 to vector<16x512xf32>
    %421 = arith.mulf %420, %417 : vector<16x512xf32>
    %422 = arith.select %419, %417, %421 : vector<16x512xi1>, vector<16x512xf32>
    %c0_119 = arith.constant 0 : index
    %c0_120 = arith.constant 0 : index
    %c0_121 = arith.constant 0 : index
    %423 = vector.load %arg9[%c0_119, %c0_120, %c0_121] : memref<1x16x512xf32, #tpu.memory_space<vmem>>, vector<1x16x512xf32>
    %424 = vector.shape_cast %423 : vector<1x16x512xf32> to vector<16x512xf32>
    %425 = vector.shape_cast %422 : vector<16x512xf32> to vector<1x16x512xf32>
    tpu.vector_store %arg9[%c0_119, %c0_120, %c0_121], %425 {strides = array<i32>} : memref<1x16x512xf32, #tpu.memory_space<vmem>>, vector<1x16x512xf32>,
    return
  }
  func.func @transform_0(%arg0: i32) -> (i32, i32, i32) {
    %c0_i32 = arith.constant 0 : i32
    %c0_i32_0 = arith.constant 0 : i32
    %c0_i32_1 = arith.constant 0 : i32
    return %arg0, %c0_i32, %c0_i32_0 : i32, i32, i32
  }
  func.func @transform_1(%arg0: i32) -> (i32, i32, i32) {
    %c0_i32 = arith.constant 0 : i32
    %c0_i32_0 = arith.constant 0 : i32
    %c0_i32_1 = arith.constant 0 : i32
    return %arg0, %c0_i32, %c0_i32_0 : i32, i32, i32
  }
  func.func @transform_2(%arg0: i32) -> (i32, i32, i32) {
    %c0_i32 = arith.constant 0 : i32
    %c0_i32_0 = arith.constant 0 : i32
    %c0_i32_1 = arith.constant 0 : i32
    return %arg0, %c0_i32, %c0_i32_0 : i32, i32, i32
  }
  func.func @transform_3(%arg0: i32) -> (i32, i32) {
    %c0_i32 = arith.constant 0 : i32
    %c0_i32_0 = arith.constant 0 : i32
    %c0_i32_1 = arith.constant 0 : i32
    return %c0_i32, %c0_i32_0 : i32, i32
  }
  func.func @transform_4(%arg0: i32) -> (i32, i32, i32) {
    %c0_i32 = arith.constant 0 : i32
    %c0_i32_0 = arith.constant 0 : i32
    %c0_i32_1 = arith.constant 0 : i32
    %c0_i32_2 = arith.constant 0 : i32
    return %c0_i32, %c0_i32_0, %c0_i32_1 : i32, i32, i32
  }
  func.func @transform_5(%arg0: i32) -> (i32, i32) {
    %c0_i32 = arith.constant 0 : i32
    %c0_i32_0 = arith.constant 0 : i32
    %c0_i32_1 = arith.constant 0 : i32
    return %c0_i32, %c0_i32_0 : i32, i32
  }
  func.func @transform_6(%arg0: i32) -> (i32, i32) {
    %c0_i32 = arith.constant 0 : i32
    %c0_i32_0 = arith.constant 0 : i32
    %c0_i32_1 = arith.constant 0 : i32
    return %c0_i32, %c0_i32_0 : i32, i32
  }
  func.func @transform_7(%arg0: i32) -> (i32, i32) {
    %c0_i32 = arith.constant 0 : i32
    %c0_i32_0 = arith.constant 0 : i32
    %c0_i32_1 = arith.constant 0 : i32
    return %c0_i32, %c0_i32_0 : i32, i32
  }
  func.func @transform_8(%arg0: i32) -> (i32, i32, i32) {
    %c0_i32 = arith.constant 0 : i32
    %c0_i32_0 = arith.constant 0 : i32
    %c0_i32_1 = arith.constant 0 : i32
    return %arg0, %c0_i32, %c0_i32_0 : i32, i32, i32
  }
}

module attributes {stable_mosaic.version = 11 : i64} {
  func.func @_p1_kernel(%arg0: i32, %arg1: i32, %arg2: memref<1x16x128xf32, #tpu.memory_space<vmem>>, %arg3: memref<1x16x128xf32, #tpu.memory_space<vmem>>, %arg4: memref<16x16xf32, #tpu.memory_space<vmem>>, %arg5: memref<16x16xf32, #tpu.memory_space<vmem>>, %arg6: memref<16x1xf32, #tpu.memory_space<vmem>>, %arg7: memref<1x16x128xf32, #tpu.memory_space<vmem>>, %arg8: memref<1x16x1xf32, #tpu.memory_space<vmem>>, %arg9: memref<1x16x1xf32, #tpu.memory_space<vmem>>, %arg10: memref<16x1xf32, #tpu.memory_space<vmem>>, %arg11: memref<16x1xf32, #tpu.memory_space<vmem>>) attributes {dimension_semantics = [#tpu.dimension_semantics<parallel>, #tpu.dimension_semantics<arbitrary>], iteration_bounds = array<i64: 2, 4>, scalar_prefetch = 0 : i64, scratch_operands = 2 : i64, tpu.core_type = #tpu.core_type<tc>, window_params = [{transform_indices = @transform_0, window_bounds = array<i64: 1, 16, 128>}, {transform_indices = @transform_1, window_bounds = array<i64: 1, 16, 128>}, {pipeline_mode = #tpu.pipeline_mode<synchronous>, transform_indices = @transform_2, window_bounds = array<i64: 16, 16>}, {pipeline_mode = #tpu.pipeline_mode<synchronous>, transform_indices = @transform_3, window_bounds = array<i64: 16, 16>}, {pipeline_mode = #tpu.pipeline_mode<synchronous>, transform_indices = @transform_4, window_bounds = array<i64: 16, 1>}, {transform_indices = @transform_5, window_bounds = array<i64: 1, 16, 128>}, {transform_indices = @transform_6, window_bounds = array<i64: 1, 16, 1>}, {transform_indices = @transform_7, window_bounds = array<i64: 1, 16, 1>}]} {
    %c0_i32 = arith.constant 0 : i32
    %0 = arith.cmpi eq, %arg1, %c0_i32 : i32
    %1 = arith.extui %0 : i1 to i32
    %c0_i32_0 = arith.constant 0 : i32
    %2 = arith.cmpi ne, %1, %c0_i32_0 : i32
    scf.if %2 {
      %cst_29 = arith.constant 0.000000e+00 : f32
      %36 = vector.broadcast %cst_29 : f32 to vector<16x1xf32>
      %c0_30 = arith.constant 0 : index
      %c0_31 = arith.constant 0 : index
      %37 = vector.load %arg10[%c0_30, %c0_31] : memref<16x1xf32, #tpu.memory_space<vmem>>, vector<16x1xf32>
      tpu.vector_store %arg10[%c0_30, %c0_31], %36 {strides = array<i32>} : memref<16x1xf32, #tpu.memory_space<vmem>>, vector<16x1xf32>,
      %cst_32 = arith.constant 0.000000e+00 : f32
      %38 = vector.broadcast %cst_32 : f32 to vector<16x1xf32>
      %c0_33 = arith.constant 0 : index
      %c0_34 = arith.constant 0 : index
      %39 = vector.load %arg11[%c0_33, %c0_34] : memref<16x1xf32, #tpu.memory_space<vmem>>, vector<16x1xf32>
      tpu.vector_store %arg11[%c0_33, %c0_34], %38 {strides = array<i32>} : memref<16x1xf32, #tpu.memory_space<vmem>>, vector<16x1xf32>,
    } else {
    }
    %c0 = arith.constant 0 : index
    %c0_1 = arith.constant 0 : index
    %3 = vector.load %arg4[%c0, %c0_1] : memref<16x16xf32, #tpu.memory_space<vmem>>, vector<16x16xf32>
    %c0_2 = arith.constant 0 : index
    %c0_3 = arith.constant 0 : index
    %c0_4 = arith.constant 0 : index
    %4 = vector.load %arg2[%c0_2, %c0_3, %c0_4] : memref<1x16x128xf32, #tpu.memory_space<vmem>>, vector<1x16x128xf32>
    %5 = vector.shape_cast %4 : vector<1x16x128xf32> to vector<16x128xf32>
    %cst = arith.constant dense<0.000000e+00> : vector<16x128xf32>
    %6 = tpu.matmul %3, %5, %cst {dimension_numbers = #tpu.dot_dimension_numbers<[1], [0], [0], [1], [0, 0, 1, 1], [], []>} : vector<16x16xf32>, vector<16x128xf32>, vector<16x128xf32> -> vector<16x128xf32>
    %c0_5 = arith.constant 0 : index
    %c0_6 = arith.constant 0 : index
    %7 = vector.load %arg5[%c0_5, %c0_6] : memref<16x16xf32, #tpu.memory_space<vmem>>, vector<16x16xf32>
    %c0_7 = arith.constant 0 : index
    %c0_8 = arith.constant 0 : index
    %c0_9 = arith.constant 0 : index
    %8 = vector.load %arg3[%c0_7, %c0_8, %c0_9] : memref<1x16x128xf32, #tpu.memory_space<vmem>>, vector<1x16x128xf32>
    %9 = vector.shape_cast %8 : vector<1x16x128xf32> to vector<16x128xf32>
    %cst_10 = arith.constant dense<0.000000e+00> : vector<16x128xf32>
    %10 = tpu.matmul %7, %9, %cst_10 {dimension_numbers = #tpu.dot_dimension_numbers<[1], [0], [0], [1], [0, 0, 1, 1], [], []>} : vector<16x16xf32>, vector<16x128xf32>, vector<16x128xf32> -> vector<16x128xf32>
    %11 = arith.addf %6, %10 : vector<16x128xf32>
    %c0_11 = arith.constant 0 : index
    %c0_12 = arith.constant 0 : index
    %12 = vector.load %arg6[%c0_11, %c0_12] : memref<16x1xf32, #tpu.memory_space<vmem>>, vector<16x1xf32>
    %13 = vector.broadcast %12 : vector<16x1xf32> to vector<16x128xf32>
    %14 = arith.addf %11, %13 : vector<16x128xf32>
    %cst_13 = arith.constant -1.000000e+04 : f32
    %cst_14 = arith.constant 1.000000e+04 : f32
    %15 = vector.broadcast %cst_13 : f32 to vector<16x128xf32>
    %16 = arith.maximumf %15, %14 : vector<16x128xf32>
    %17 = vector.broadcast %cst_14 : f32 to vector<16x128xf32>
    %18 = arith.minimumf %17, %16 : vector<16x128xf32>
    %c0_15 = arith.constant 0 : index
    %c0_16 = arith.constant 0 : index
    %c0_17 = arith.constant 0 : index
    %19 = vector.load %arg7[%c0_15, %c0_16, %c0_17] : memref<1x16x128xf32, #tpu.memory_space<vmem>>, vector<1x16x128xf32>
    %20 = vector.shape_cast %19 : vector<1x16x128xf32> to vector<16x128xf32>
    %21 = vector.shape_cast %18 : vector<16x128xf32> to vector<1x16x128xf32>
    tpu.vector_store %arg7[%c0_15, %c0_16, %c0_17], %21 {strides = array<i32>} : memref<1x16x128xf32, #tpu.memory_space<vmem>>, vector<1x16x128xf32>,
    %c0_18 = arith.constant 0 : index
    %c0_19 = arith.constant 0 : index
    %22 = vector.load %arg10[%c0_18, %c0_19] : memref<16x1xf32, #tpu.memory_space<vmem>>, vector<16x1xf32>
    %cst_20 = arith.constant dense<0.000000e+00> : vector<16xf32>
    %23 = vector.multi_reduction <add>, %18, %cst_20 [1] : vector<16x128xf32> to vector<16xf32>
    %24 = vector.shape_cast %23 : vector<16xf32> to vector<16x1xf32>
    %25 = arith.addf %22, %24 : vector<16x1xf32>
    %c0_21 = arith.constant 0 : index
    %c0_22 = arith.constant 0 : index
    %26 = vector.load %arg10[%c0_21, %c0_22] : memref<16x1xf32, #tpu.memory_space<vmem>>, vector<16x1xf32>
    tpu.vector_store %arg10[%c0_21, %c0_22], %25 {strides = array<i32>} : memref<16x1xf32, #tpu.memory_space<vmem>>, vector<16x1xf32>,
    %c0_23 = arith.constant 0 : index
    %c0_24 = arith.constant 0 : index
    %27 = vector.load %arg11[%c0_23, %c0_24] : memref<16x1xf32, #tpu.memory_space<vmem>>, vector<16x1xf32>
    %28 = arith.mulf %18, %18 : vector<16x128xf32>
    %cst_25 = arith.constant dense<0.000000e+00> : vector<16xf32>
    %29 = vector.multi_reduction <add>, %28, %cst_25 [1] : vector<16x128xf32> to vector<16xf32>
    %30 = vector.shape_cast %29 : vector<16xf32> to vector<16x1xf32>
    %31 = arith.addf %27, %30 : vector<16x1xf32>
    %c0_26 = arith.constant 0 : index
    %c0_27 = arith.constant 0 : index
    %32 = vector.load %arg11[%c0_26, %c0_27] : memref<16x1xf32, #tpu.memory_space<vmem>>, vector<16x1xf32>
    tpu.vector_store %arg11[%c0_26, %c0_27], %31 {strides = array<i32>} : memref<16x1xf32, #tpu.memory_space<vmem>>, vector<16x1xf32>,
    %c3_i32 = arith.constant 3 : i32
    %33 = arith.cmpi eq, %arg1, %c3_i32 : i32
    %34 = arith.extui %33 : i1 to i32
    %c0_i32_28 = arith.constant 0 : i32
    %35 = arith.cmpi ne, %34, %c0_i32_28 : i32
    scf.if %35 {
      %c0_29 = arith.constant 0 : index
      %c0_30 = arith.constant 0 : index
      %36 = vector.load %arg10[%c0_29, %c0_30] : memref<16x1xf32, #tpu.memory_space<vmem>>, vector<16x1xf32>
      %cst_31 = arith.constant 0.001953125 : f32
      %37 = vector.broadcast %cst_31 : f32 to vector<16x1xf32>
      %38 = arith.mulf %36, %37 : vector<16x1xf32>
      %c0_32 = arith.constant 0 : index
      %c0_33 = arith.constant 0 : index
      %39 = vector.load %arg11[%c0_32, %c0_33] : memref<16x1xf32, #tpu.memory_space<vmem>>, vector<16x1xf32>
      %cst_34 = arith.constant 0.001953125 : f32
      %40 = vector.broadcast %cst_34 : f32 to vector<16x1xf32>
      %41 = arith.mulf %39, %40 : vector<16x1xf32>
      %42 = arith.mulf %38, %38 : vector<16x1xf32>
      %43 = arith.subf %41, %42 : vector<16x1xf32>
      %cst_35 = arith.constant 0.000000e+00 : f32
      %44 = vector.broadcast %cst_35 : f32 to vector<16x1xf32>
      %45 = arith.maximumf %43, %44 : vector<16x1xf32>
      %c0_36 = arith.constant 0 : index
      %c0_37 = arith.constant 0 : index
      %c0_38 = arith.constant 0 : index
      %46 = vector.load %arg8[%c0_36, %c0_37, %c0_38] : memref<1x16x1xf32, #tpu.memory_space<vmem>>, vector<1x16x1xf32>
      %47 = vector.shape_cast %46 : vector<1x16x1xf32> to vector<16x1xf32>
      %48 = vector.shape_cast %38 : vector<16x1xf32> to vector<1x16x1xf32>
      tpu.vector_store %arg8[%c0_36, %c0_37, %c0_38], %48 {strides = array<i32>} : memref<1x16x1xf32, #tpu.memory_space<vmem>>, vector<1x16x1xf32>,
      %cst_39 = arith.constant 1.000000e-03 : f32
      %49 = vector.broadcast %cst_39 : f32 to vector<16x1xf32>
      %50 = arith.addf %45, %49 : vector<16x1xf32>
      %51 = math.rsqrt %50 : vector<16x1xf32>
      %c0_40 = arith.constant 0 : index
      %c0_41 = arith.constant 0 : index
      %c0_42 = arith.constant 0 : index
      %52 = vector.load %arg9[%c0_40, %c0_41, %c0_42] : memref<1x16x1xf32, #tpu.memory_space<vmem>>, vector<1x16x1xf32>
      %53 = vector.shape_cast %52 : vector<1x16x1xf32> to vector<16x1xf32>
      %54 = vector.shape_cast %51 : vector<16x1xf32> to vector<1x16x1xf32>
      tpu.vector_store %arg9[%c0_40, %c0_41, %c0_42], %54 {strides = array<i32>} : memref<1x16x1xf32, #tpu.memory_space<vmem>>, vector<1x16x1xf32>,
    } else {
    }
    return
  }
  func.func @transform_0(%arg0: i32, %arg1: i32) -> (i32, i32, i32) {
    %c0_i32 = arith.constant 0 : i32
    %c0_i32_0 = arith.constant 0 : i32
    return %arg0, %c0_i32, %arg1 : i32, i32, i32
  }
  func.func @transform_1(%arg0: i32, %arg1: i32) -> (i32, i32, i32) {
    %c0_i32 = arith.constant 0 : i32
    %c0_i32_0 = arith.constant 0 : i32
    return %arg0, %c0_i32, %arg1 : i32, i32, i32
  }
  func.func @transform_2(%arg0: i32, %arg1: i32) -> (i32, i32) {
    %c0_i32 = arith.constant 0 : i32
    %c0_i32_0 = arith.constant 0 : i32
    %c0_i32_1 = arith.constant 0 : i32
    return %c0_i32, %c0_i32_0 : i32, i32
  }
  func.func @transform_3(%arg0: i32, %arg1: i32) -> (i32, i32) {
    %c0_i32 = arith.constant 0 : i32
    %c0_i32_0 = arith.constant 0 : i32
    %c0_i32_1 = arith.constant 0 : i32
    return %c0_i32, %c0_i32_0 : i32, i32
  }
  func.func @transform_4(%arg0: i32, %arg1: i32) -> (i32, i32) {
    %c0_i32 = arith.constant 0 : i32
    %c0_i32_0 = arith.constant 0 : i32
    %c0_i32_1 = arith.constant 0 : i32
    return %c0_i32, %c0_i32_0 : i32, i32
  }
  func.func @transform_5(%arg0: i32, %arg1: i32) -> (i32, i32, i32) {
    %c0_i32 = arith.constant 0 : i32
    %c0_i32_0 = arith.constant 0 : i32
    return %arg0, %c0_i32, %arg1 : i32, i32, i32
  }
  func.func @transform_6(%arg0: i32, %arg1: i32) -> (i32, i32, i32) {
    %c0_i32 = arith.constant 0 : i32
    %c0_i32_0 = arith.constant 0 : i32
    %c0_i32_1 = arith.constant 0 : i32
    return %arg0, %c0_i32, %c0_i32_0 : i32, i32, i32
  }
  func.func @transform_7(%arg0: i32, %arg1: i32) -> (i32, i32, i32) {
    %c0_i32 = arith.constant 0 : i32
    %c0_i32_0 = arith.constant 0 : i32
    %c0_i32_1 = arith.constant 0 : i32
    return %arg0, %c0_i32, %c0_i32_0 : i32, i32, i32
  }
}

module attributes {stable_mosaic.version = 11 : i64} {
  func.func @_prm_softmax_kernel(%arg0: i32, %arg1: i32, %arg2: memref<1x16x128xf32, #tpu.memory_space<vmem>>, %arg3: memref<1x16x1xf32, #tpu.memory_space<vmem>>, %arg4: memref<1x16x1xf32, #tpu.memory_space<vmem>>, %arg5: memref<4x16xf32, #tpu.memory_space<vmem>>, %arg6: memref<4x1xf32, #tpu.memory_space<vmem>>, %arg7: memref<1x4x128xf32, #tpu.memory_space<vmem>>) attributes {dimension_semantics = [#tpu.dimension_semantics<parallel>, #tpu.dimension_semantics<parallel>], iteration_bounds = array<i64: 2, 4>, scalar_prefetch = 0 : i64, scratch_operands = 0 : i64, tpu.core_type = #tpu.core_type<tc>, window_params = [{transform_indices = @transform_0, window_bounds = array<i64: 1, 16, 128>}, {transform_indices = @transform_1, window_bounds = array<i64: 1, 16, 1>}, {transform_indices = @transform_2, window_bounds = array<i64: 1, 16, 1>}, {pipeline_mode = #tpu.pipeline_mode<synchronous>, transform_indices = @transform_3, window_bounds = array<i64: 4, 16>}, {pipeline_mode = #tpu.pipeline_mode<synchronous>, transform_indices = @transform_4, window_bounds = array<i64: 4, 1>}, {transform_indices = @transform_5, window_bounds = array<i64: 1, 4, 128>}]} {
    %c0 = arith.constant 0 : index
    %c0_0 = arith.constant 0 : index
    %c0_1 = arith.constant 0 : index
    %0 = vector.load %arg2[%c0, %c0_0, %c0_1] : memref<1x16x128xf32, #tpu.memory_space<vmem>>, vector<1x16x128xf32>
    %1 = vector.shape_cast %0 : vector<1x16x128xf32> to vector<16x128xf32>
    %c0_2 = arith.constant 0 : index
    %c0_3 = arith.constant 0 : index
    %c0_4 = arith.constant 0 : index
    %2 = vector.load %arg3[%c0_2, %c0_3, %c0_4] : memref<1x16x1xf32, #tpu.memory_space<vmem>>, vector<1x16x1xf32>
    %3 = vector.shape_cast %2 : vector<1x16x1xf32> to vector<16x1xf32>
    %4 = vector.broadcast %3 : vector<16x1xf32> to vector<16x128xf32>
    %5 = arith.subf %1, %4 : vector<16x128xf32>
    %c0_5 = arith.constant 0 : index
    %c0_6 = arith.constant 0 : index
    %c0_7 = arith.constant 0 : index
    %6 = vector.load %arg4[%c0_5, %c0_6, %c0_7] : memref<1x16x1xf32, #tpu.memory_space<vmem>>, vector<1x16x1xf32>
    %7 = vector.shape_cast %6 : vector<1x16x1xf32> to vector<16x1xf32>
    %8 = vector.broadcast %7 : vector<16x1xf32> to vector<16x128xf32>
    %9 = arith.mulf %5, %8 : vector<16x128xf32>
    %cst = arith.constant 0.000000e+00 : f32
    %10 = vector.broadcast %cst : f32 to vector<16x128xf32>
    %11 = arith.cmpf oge, %9, %10 : vector<16x128xf32>
    %cst_8 = arith.constant 2.000000e-01 : f32
    %12 = vector.broadcast %cst_8 : f32 to vector<16x128xf32>
    %13 = arith.mulf %12, %9 : vector<16x128xf32>
    %14 = arith.select %11, %9, %13 : vector<16x128xi1>, vector<16x128xf32>
    %c0_9 = arith.constant 0 : index
    %c0_10 = arith.constant 0 : index
    %15 = vector.load %arg5[%c0_9, %c0_10] : memref<4x16xf32, #tpu.memory_space<vmem>>, vector<4x16xf32>
    %cst_11 = arith.constant dense<0.000000e+00> : vector<4x128xf32>
    %16 = tpu.matmul %15, %14, %cst_11 {dimension_numbers = #tpu.dot_dimension_numbers<[1], [0], [0], [1], [0, 0, 1, 1], [], []>} : vector<4x16xf32>, vector<16x128xf32>, vector<4x128xf32> -> vector<4x128xf32>
    %c0_12 = arith.constant 0 : index
    %c0_13 = arith.constant 0 : index
    %17 = vector.load %arg6[%c0_12, %c0_13] : memref<4x1xf32, #tpu.memory_space<vmem>>, vector<4x1xf32>
    %18 = vector.broadcast %17 : vector<4x1xf32> to vector<4x128xf32>
    %19 = arith.addf %16, %18 : vector<4x128xf32>
    %cst_14 = arith.constant dense<0xFF800000> : vector<128xf32>
    %20 = vector.multi_reduction <maximumf>, %19, %cst_14 [0] : vector<4x128xf32> to vector<128xf32>
    %21 = vector.shape_cast %20 : vector<128xf32> to vector<1x128xf32>
    %22 = vector.broadcast %21 : vector<1x128xf32> to vector<4x128xf32>
    %23 = arith.subf %19, %22 : vector<4x128xf32>
    %24 = math.exp %23 : vector<4x128xf32>
    %cst_15 = arith.constant dense<0.000000e+00> : vector<128xf32>
    %25 = vector.multi_reduction <add>, %24, %cst_15 [0] : vector<4x128xf32> to vector<128xf32>
    %26 = vector.shape_cast %25 : vector<128xf32> to vector<1x128xf32>
    %27 = tpu.reciprocal %26 {approx = true} : vector<1x128xf32> -> vector<1x128xf32>
    %28 = vector.broadcast %27 : vector<1x128xf32> to vector<4x128xf32>
    %29 = arith.mulf %24, %28 : vector<4x128xf32>
    %c0_16 = arith.constant 0 : index
    %c0_17 = arith.constant 0 : index
    %c0_18 = arith.constant 0 : index
    %30 = vector.load %arg7[%c0_16, %c0_17, %c0_18] : memref<1x4x128xf32, #tpu.memory_space<vmem>>, vector<1x4x128xf32>
    %31 = vector.shape_cast %30 : vector<1x4x128xf32> to vector<4x128xf32>
    %32 = vector.shape_cast %29 : vector<4x128xf32> to vector<1x4x128xf32>
    tpu.vector_store %arg7[%c0_16, %c0_17, %c0_18], %32 {strides = array<i32>} : memref<1x4x128xf32, #tpu.memory_space<vmem>>, vector<1x4x128xf32>,
    return
  }
  func.func @transform_0(%arg0: i32, %arg1: i32) -> (i32, i32, i32) {
    %c0_i32 = arith.constant 0 : i32
    %c0_i32_0 = arith.constant 0 : i32
    return %arg0, %c0_i32, %arg1 : i32, i32, i32
  }
  func.func @transform_1(%arg0: i32, %arg1: i32) -> (i32, i32, i32) {
    %c0_i32 = arith.constant 0 : i32
    %c0_i32_0 = arith.constant 0 : i32
    %c0_i32_1 = arith.constant 0 : i32
    return %arg0, %c0_i32, %c0_i32_0 : i32, i32, i32
  }
  func.func @transform_2(%arg0: i32, %arg1: i32) -> (i32, i32, i32) {
    %c0_i32 = arith.constant 0 : i32
    %c0_i32_0 = arith.constant 0 : i32
    %c0_i32_1 = arith.constant 0 : i32
    return %arg0, %c0_i32, %c0_i32_0 : i32, i32, i32
  }
  func.func @transform_3(%arg0: i32, %arg1: i32) -> (i32, i32) {
    %c0_i32 = arith.constant 0 : i32
    %c0_i32_0 = arith.constant 0 : i32
    %c0_i32_1 = arith.constant 0 : i32
    return %c0_i32, %c0_i32_0 : i32, i32
  }
  func.func @transform_4(%arg0: i32, %arg1: i32) -> (i32, i32) {
    %c0_i32 = arith.constant 0 : i32
    %c0_i32_0 = arith.constant 0 : i32
    %c0_i32_1 = arith.constant 0 : i32
    return %c0_i32, %c0_i32_0 : i32, i32
  }
  func.func @transform_5(%arg0: i32, %arg1: i32) -> (i32, i32, i32) {
    %c0_i32 = arith.constant 0 : i32
    %c0_i32_0 = arith.constant 0 : i32
    return %arg0, %c0_i32, %arg1 : i32, i32, i32
  }
}

</mosaic_0001>

<llo_original>
// kernel: prm_generator_forward.4
$region0: #{prm_generator_forward.4}
  #allocation0 [shape = 'u32[]', space=smem, size = 0x4, offset = 0x4, fixed_abs, tag = 'smem constant byte address 0x4 - core index']
  #allocation1 [shape = 'u32[72,128]{1,0:T(1,128)}', space=vmem, size = 0x9000, scoped, tag = 'internal scratch']
  #allocation2 [shape = 'f32[4,1]{1,0:T(4,128)}', space=vmem, size = 0x800, scoped, tag = 'scratch operand']
  #allocation3 [shape = 'f32[4,1]{1,0:T(4,128)}', space=vmem, size = 0x800, scoped, tag = 'scratch operand']
  %s0 = inlined_call_operand.vmem [shape: f32[2,1,64], index: 0, kind: input, shape index: {}]
  %s1 = inlined_call_operand.vmem [shape: f32[2,64,512], index: 1, kind: input, shape index: {}]
  %s2 = inlined_call_operand.vmem [shape: f32[4,64], index: 2, kind: input, shape index: {}]
  %s3 = inlined_call_operand.vmem [shape: f32[4,1], index: 3, kind: input, shape index: {}]
  %s4 = inlined_call_operand.vmem [shape: f32[2,4,512], index: 4, kind: output, shape index: {0}]
  %s5 = inlined_call_operand.vmem [shape: f32[2,4,1], index: 5, kind: output, shape index: {1}]
  %s6 = inlined_call_operand.vmem [shape: f32[2,4,1], index: 6, kind: output, shape index: {2}]
  %7 = xla_tuple %s4, %s5, %s6
  %s8 = sld [smem:[#allocation0]]
  $region111: #{prm_generator_forward.4} parent=0
    _
  %s10 = ssub.s32 1, %s8
  %s11 = scalar_select 0, %s10, %s8
  $region1: #{prm_generator_forward.4} parent=0
    #allocation4 [shape = 'u8[65536]{0}', space=vmem, size = 0x10000, scoped, tag = 'input window, operand 1']
    loop: start=0, step=1, limit=10
    $region2: #{prm_generator_forward.4} parent=1 // loop_pre_header
      _
    $region3: #{prm_generator_forward.4} parent=1 // loop_header
      %s13 = sphi 0, %s17
      %p14 = scmp.ge.s32.totalorder %s13, 10
      %s20 = sphi 0, %s32
      %s21 = sphi 0, %s28
      %s22 = sphi 0, %s20
      %s23 = sphi 0, %s21
      %s24 = sphi 0, %s22
      %s25 = sphi 0, %s23
      %s35 = sphi 0, %s37
      %s38 = sphi 0, %s35
      %s39 = sphi 0, %s38
      %s55 = sphi 0, %s39
      %s63 = sphi 0, %s65
      %s66 = sphi 0, %s63
      %s67 = sphi 0, %s66
      %s83 = sphi 0, %s67
      %s87 = sphi 0, %s87
      %s89 = sphi 0, %s87
      %s90 = sphi 0, %s89
      %s104 = sphi 0, %s90
      %s108 = sphi 0, %s108
      %s110 = sphi 0, %s108
      %s111 = sphi 0, %s110
      %s125 = sphi 0, %s111
      %s133 = sphi 0, %s135
      %s136 = sphi 0, %s133
      %s137 = sphi 0, %s136
      %s153 = sphi 0, %s137
      %s159 = sphi 0, %s161
      %s162 = sphi 0, %s159
      %s163 = sphi 0, %s162
      %s179 = sphi 0, %s163
      %s185 = sphi 0, %s187
      %s188 = sphi 0, %s185
      %s189 = sphi 0, %s188
      %s205 = sphi 0, %s189
    $region4: #{prm_generator_forward.4} parent=1 // loop_header_branch
      %16 = sbr.rel (%p14) target = $region8
    $region5: #{prm_generator_forward.4} parent=1 // loop_body
      %s18 = ssub.s32 %s13, 1
      %s19 = ssub.s32 %s13, 2
      %s26 = sadd.s32 1, %s21
      %p27 = scmp.ge.s32.totalorder %s26, 4
      %s28 = scalar_select %p27, 0, %s26
      %s29 = sadd.s32 1, %s20
      %s30 = scalar_select %p27, %s29, %s20
      %p31 = scmp.ge.s32.totalorder %s30, 2
      %s32 = scalar_select %p31, 0, %s30
      %s33 = ssub.s32 %s20, %s32
      %p34 = scmp.eq.s32.totalorder %s33, 0
      %s36 = sadd.s32 %s35, 1
      %s37 = scalar_select %p34, %s35, %s36
      %p40 = pneg %p34
      %p41 = scmp.eq.s32.totalorder %s13, 7
      %p42 = por %p40, %p41
      %p43 = scmp.ne.s32.totalorder %s35, %s38
      %p44 = scmp.eq.s32.totalorder %s13, 0
      %p45 = por %p43, %p44
      %p46 = scmp.ne.s32.totalorder %s35, %s38
      %p47 = scmp.eq.s32.totalorder %s18, 7
      %p48 = por %p46, %p47
      %p49 = scmp.ne.s32.totalorder %s38, %s39
      %p50 = scmp.eq.s32.totalorder %s18, 0
      %p51 = por %p49, %p50
      %p52 = scmp.ne.s32.totalorder %s38, %s39
      %p53 = scmp.eq.s32.totalorder %s19, 7
      %p54 = por %p52, %p53
      %p56 = scmp.ne.s32.totalorder %s39, %s55
      %p57 = scmp.eq.s32.totalorder %s19, 0
      %p58 = por %p56, %p57
      %s59 = ssub.s32 %s20, %s32
      %s60 = ssub.s32 %s21, %s28
      %s61 = sor.u32 %s59, %s60
      %p62 = scmp.eq.s32.totalorder %s61, 0
      %s64 = sadd.s32 %s63, 1
      %s65 = scalar_select %p62, %s63, %s64
      %p68 = pneg %p62
      %p69 = scmp.eq.s32.totalorder %s13, 7
      %p70 = por %p68, %p69
      %p71 = scmp.ne.s32.totalorder %s63, %s66
      %p72 = scmp.eq.s32.totalorder %s13, 0
      %p73 = por %p71, %p72
      %p74 = scmp.ne.s32.totalorder %s63, %s66
      %p75 = scmp.eq.s32.totalorder %s18, 7
      %p76 = por %p74, %p75
      %p77 = scmp.ne.s32.totalorder %s66, %s67
      %p78 = scmp.eq.s32.totalorder %s18, 0
      %p79 = por %p77, %p78
      %p80 = scmp.ne.s32.totalorder %s66, %s67
      %p81 = scmp.eq.s32.totalorder %s19, 7
      %p82 = por %p80, %p81
      %p84 = scmp.ne.s32.totalorder %s67, %s83
      %p85 = scmp.eq.s32.totalorder %s19, 0
      %p86 = por %p84, %p85
      %s88 = sadd.s32 %s87, 1
      %p91 = scmp.eq.s32.totalorder %s13, 7
      %p92 = scmp.ne.s32.totalorder %s87, %s89
      %p93 = scmp.eq.s32.totalorder %s13, 0
      %p94 = por %p92, %p93
      %p95 = scmp.ne.s32.totalorder %s87, %s89
      %p96 = scmp.eq.s32.totalorder %s18, 7
      %p97 = por %p95, %p96
      %p98 = scmp.ne.s32.totalorder %s89, %s90
      %p99 = scmp.eq.s32.totalorder %s18, 0
      %p100 = por %p98, %p99
      %p101 = scmp.ne.s32.totalorder %s89, %s90
      %p102 = scmp.eq.s32.totalorder %s19, 7
      %p103 = por %p101, %p102
      %p105 = scmp.ne.s32.totalorder %s90, %s104
      %p106 = scmp.eq.s32.totalorder %s19, 0
      %p107 = por %p105, %p106
      %s109 = sadd.s32 %s108, 1
      %p112 = scmp.eq.s32.totalorder %s13, 7
      %p113 = scmp.ne.s32.totalorder %s108, %s110
      %p114 = scmp.eq.s32.totalorder %s13, 0
      %p115 = por %p113, %p114
      %p116 = scmp.ne.s32.totalorder %s108, %s110
      %p117 = scmp.eq.s32.totalorder %s18, 7
      %p118 = por %p116, %p117
      %p119 = scmp.ne.s32.totalorder %s110, %s111
      %p120 = scmp.eq.s32.totalorder %s18, 0
      %p121 = por %p119, %p120
      %p122 = scmp.ne.s32.totalorder %s110, %s111
      %p123 = scmp.eq.s32.totalorder %s19, 7
      %p124 = por %p122, %p123
      %p126 = scmp.ne.s32.totalorder %s111, %s125
      %p127 = scmp.eq.s32.totalorder %s19, 0
      %p128 = por %p126, %p127
      %s129 = ssub.s32 %s20, %s32
      %s130 = ssub.s32 %s21, %s28
      %s131 = sor.u32 %s129, %s130
      %p132 = scmp.eq.s32.totalorder %s131, 0
      %s134 = sadd.s32 %s133, 1
      %s135 = scalar_select %p132, %s133, %s134
      %p138 = pneg %p132
      %p139 = scmp.eq.s32.totalorder %s13, 7
      %p140 = por %p138, %p139
      %p141 = scmp.ne.s32.totalorder %s133, %s136
      %p142 = scmp.eq.s32.totalorder %s13, 0
      %p143 = por %p141, %p142
      %p144 = scmp.ne.s32.totalorder %s133, %s136
      %p145 = scmp.eq.s32.totalorder %s18, 7
      %p146 = por %p144, %p145
      %p147 = scmp.ne.s32.totalorder %s136, %s137
      %p148 = scmp.eq.s32.totalorder %s18, 0
      %p149 = por %p147, %p148
      %p150 = scmp.ne.s32.totalorder %s136, %s137
      %p151 = scmp.eq.s32.totalorder %s19, 7
      %p152 = por %p150, %p151
      %p154 = scmp.ne.s32.totalorder %s137, %s153
      %p155 = scmp.eq.s32.totalorder %s19, 0
      %p156 = por %p154, %p155
      %s157 = ssub.s32 %s20, %s32
      %p158 = scmp.eq.s32.totalorder %s157, 0
      %s160 = sadd.s32 %s159, 1
      %s161 = scalar_select %p158, %s159, %s160
      %p164 = pneg %p158
      %p165 = scmp.eq.s32.totalorder %s13, 7
      %p166 = por %p164, %p165
      %p167 = scmp.ne.s32.totalorder %s159, %s162
      %p168 = scmp.eq.s32.totalorder %s13, 0
      %p169 = por %p167, %p168
      %p170 = scmp.ne.s32.totalorder %s159, %s162
      %p171 = scmp.eq.s32.totalorder %s18, 7
      %p172 = por %p170, %p171
      %p173 = scmp.ne.s32.totalorder %s162, %s163
      %p174 = scmp.eq.s32.totalorder %s18, 0
      %p175 = por %p173, %p174
      %p176 = scmp.ne.s32.totalorder %s162, %s163
      %p177 = scmp.eq.s32.totalorder %s19, 7
      %p178 = por %p176, %p177
      %p180 = scmp.ne.s32.totalorder %s163, %s179
      %p181 = scmp.eq.s32.totalorder %s19, 0
      %p182 = por %p180, %p181
      %s183 = ssub.s32 %s20, %s32
      %p184 = scmp.eq.s32.totalorder %s183, 0
      %s186 = sadd.s32 %s185, 1
      %s187 = scalar_select %p184, %s185, %s186
      %p190 = pneg %p184
      %p191 = scmp.eq.s32.totalorder %s13, 7
      %p192 = por %p190, %p191
      %p193 = scmp.ne.s32.totalorder %s185, %s188
      %p194 = scmp.eq.s32.totalorder %s13, 0
      %p195 = por %p193, %p194
      %p196 = scmp.ne.s32.totalorder %s185, %s188
      %p197 = scmp.eq.s32.totalorder %s18, 7
      %p198 = por %p196, %p197
      %p199 = scmp.ne.s32.totalorder %s188, %s189
      %p200 = scmp.eq.s32.totalorder %s18, 0
      %p201 = por %p199, %p200
      %p202 = scmp.ne.s32.totalorder %s188, %s189
      %p203 = scmp.eq.s32.totalorder %s19, 7
      %p204 = por %p202, %p203
      %p206 = scmp.ne.s32.totalorder %s189, %s205
      %p207 = scmp.eq.s32.totalorder %s19, 0
      %p208 = por %p206, %p207
      %p209 = scmp.le.s32.totalorder 1, %s13
      %p210 = scmp.lt.s32.totalorder %s13, 9
      %p211 = pnand %p209, %p210
      %p212 = pneg %p211
      // Predicated region
      $region9: #{prm_generator_forward.4} parent=5 // pred_check
        _
      $region10: #{prm_generator_forward.4} parent=5 // pred_check_branch
        %214 = sbr.rel (%p211) target = $region12
      $region11: #{prm_generator_forward.4} parent=5 // pred_region
        %s215 = ssub.s32 %s13, 1
        // Predicated region
        $region13: #{prm_generator_forward.4} parent=11 // pred_check
          %p216 = pneg %p100
        $region14: #{prm_generator_forward.4} parent=11 // pred_check_branch
          %218 = sbr.rel (%p216) target = $region16
        $region15: #{prm_generator_forward.4} parent=11 // pred_region
          _
        $region16: #{prm_generator_forward.4} parent=11 // pred_fallthru
          _
        // Predicated region
        $region17: #{prm_generator_forward.4} parent=11 // pred_check
          %p219 = pneg %p121
        $region18: #{prm_generator_forward.4} parent=11 // pred_check_branch
          %221 = sbr.rel (%p219) target = $region20
        $region19: #{prm_generator_forward.4} parent=11 // pred_region
          _
        $region20: #{prm_generator_forward.4} parent=11 // pred_fallthru
          _
      $region12: #{prm_generator_forward.4} parent=5 // pred_fallthru
        _
      %p222 = scmp.lt.s32.totalorder %s13, 8
      // Predicated region
      $region21: #{prm_generator_forward.4} parent=5 // pred_check
        %p223 = pneg %p222
      $region22: #{prm_generator_forward.4} parent=5 // pred_check_branch
        %225 = sbr.rel (%p223) target = $region24
      $region23: #{prm_generator_forward.4} parent=5 // pred_region
        // Predicated region
        $region25: #{prm_generator_forward.4} parent=23 // pred_check
          %p226 = pneg %p45
        $region26: #{prm_generator_forward.4} parent=23 // pred_check_branch
          %228 = sbr.rel (%p226) target = $region28
        $region27: #{prm_generator_forward.4} parent=23 // pred_region
          %p229 = scmp.lt.s32.totalorder %s20, 1
          %s230 = scalar_select %p229, %s20, 1
          %s231 = scalar_lea.vmem %s0, %s230
        $region28: #{prm_generator_forward.4} parent=23 // pred_fallthru
          _
        // Predicated region
        $region29: #{prm_generator_forward.4} parent=23 // pred_check
          %p232 = pneg %p73
        $region30: #{prm_generator_forward.4} parent=23 // pred_check_branch
          %234 = sbr.rel (%p232) target = $region32
        $region31: #{prm_generator_forward.4} parent=23 // pred_region
          %s235 = sand.u32 %s63, 1
          %s236 = sand.u32 %s63, 1
          %s237 = smul.addr %s236, 64
          %s238 = scalar_lea.vmem [#allocation4], %s237
          %s239 = smul.addr %s20, 32
          %s240 = sadd.s32 %s21, %s239
          %s241 = smul.addr %s240, 8
          %s242 = scalar_lea.vmem %s1, %s241
          // Predicated region
          $region33: #{prm_generator_forward.4} parent=31 // pred_check
            _
          $region34: #{prm_generator_forward.4} parent=31 // pred_check_branch
            %244 = sbr.rel (0) target = $region36
          $region35: #{prm_generator_forward.4} parent=31 // pred_region
            // Predicated region
            $region37: #{prm_generator_forward.4} parent=35 // pred_check
              _
            $region38: #{prm_generator_forward.4} parent=35 // pred_check_branch
              %246 = sbr.rel (0) target = $region40
            $region39: #{prm_generator_forward.4} parent=35 // pred_region
              // Predicated region
              $region52: #{prm_generator_forward.4} parent=39 // pred_check
                _
              $region53: #{prm_generator_forward.4} parent=39 // pred_check_branch
                %276 = sbr.rel (0) target = $region55
              $region54: #{prm_generator_forward.4} parent=39 // pred_region
                loop: start=0, step=1, limit=1
                $region56: #{prm_generator_forward.4} parent=54 // loop_pre_header
                  _
                $region57: #{prm_generator_forward.4} parent=54 // loop_header
                  %s278 = sphi 0, %s282
                  %p279 = scmp.ge.s32.totalorder %s278, 1
                  %s283 = sphi %s242, %s242
                  %s284 = sphi %s238, %s238
                $region58: #{prm_generator_forward.4} parent=54 // loop_header_branch
                  %281 = sbr.rel (%p279) target = $region62
                $region59: #{prm_generator_forward.4} parent=54 // loop_body
                  %v285 = vld [vmem:[%s283] sm:$0xff]
                  %286 = vst [vmem:[%s284] sm:$0xff] %v285
                  %v287 = vld [vmem:[%s283 + $0x20] sm:$0xff]
                  %288 = vst [vmem:[%s284 + $0x8] sm:$0xff] %v287
                  %v289 = vld [vmem:[%s283 + $0x40] sm:$0xff]
                  %290 = vst [vmem:[%s284 + $0x10] sm:$0xff] %v289
                  %v291 = vld [vmem:[%s283 + $0x60] sm:$0xff]
                  %292 = vst [vmem:[%s284 + $0x18] sm:$0xff] %v291
                  %v293 = vld [vmem:[%s283 + $0x80] sm:$0xff]
                  %294 = vst [vmem:[%s284 + $0x20] sm:$0xff] %v293
                  %v295 = vld [vmem:[%s283 + $0xa0] sm:$0xff]
                  %296 = vst [vmem:[%s284 + $0x28] sm:$0xff] %v295
                  %v297 = vld [vmem:[%s283 + $0xc0] sm:$0xff]
                  %298 = vst [vmem:[%s284 + $0x30] sm:$0xff] %v297
                  %v299 = vld [vmem:[%s283 + $0xe0] sm:$0xff]
                  %300 = vst [vmem:[%s284 + $0x38] sm:$0xff] %v299
                $region60: #{prm_generator_forward.4} parent=54 // loop_footer
                  %s282 = sadd.s32 1, %s278
                $region61: #{prm_generator_forward.4} parent=54 // loop_footer_branch
                  %277 = sbr.rel target = $region57
                $region62: #{prm_generator_forward.4} parent=54 // loop_exit
                  _
              $region55: #{prm_generator_forward.4} parent=39 // pred_fallthru
                _
              // Predicated region
              $region63: #{prm_generator_forward.4} parent=39 // pred_check
                _
              $region64: #{prm_generator_forward.4} parent=39 // pred_check_branch
                %302 = sbr.rel target = $region66
              $region65: #{prm_generator_forward.4} parent=39 // pred_region
                _
              $region66: #{prm_generator_forward.4} parent=39 // pred_fallthru
                _
            $region40: #{prm_generator_forward.4} parent=35 // pred_fallthru
              _
            // Predicated region
            $region41: #{prm_generator_forward.4} parent=35 // pred_check
              _
            $region42: #{prm_generator_forward.4} parent=35 // pred_check_branch
              %248 = sbr.rel target = $region44
            $region43: #{prm_generator_forward.4} parent=35 // pred_region
              %s250 = ssub.s32 256, 1
              loop: start=0, step=1, limit=1
              $region45: #{prm_generator_forward.4} parent=43 // loop_pre_header
                _
              $region46: #{prm_generator_forward.4} parent=43 // loop_header
                %s252 = sphi 0, %s256
                %p253 = scmp.ge.s32.totalorder %s252, 1
                %s257 = sphi %s242, %s242
                %s258 = sphi %s238, %s238
              $region47: #{prm_generator_forward.4} parent=43 // loop_header_branch
                %255 = sbr.rel (%p253) target = $region51
              $region48: #{prm_generator_forward.4} parent=43 // loop_body
                %v259 = vld [vmem:[%s257] sm:%s250]
                %260 = vst [vmem:[%s258] sm:%s250] %v259
                %v261 = vld [vmem:[%s257 + $0x20] sm:%s250]
                %262 = vst [vmem:[%s258 + $0x8] sm:%s250] %v261
                %v263 = vld [vmem:[%s257 + $0x40] sm:%s250]
                %264 = vst [vmem:[%s258 + $0x10] sm:%s250] %v263
                %v265 = vld [vmem:[%s257 + $0x60] sm:%s250]
                %266 = vst [vmem:[%s258 + $0x18] sm:%s250] %v265
                %v267 = vld [vmem:[%s257 + $0x80] sm:%s250]
                %268 = vst [vmem:[%s258 + $0x20] sm:%s250] %v267
                %v269 = vld [vmem:[%s257 + $0xa0] sm:%s250]
                %270 = vst [vmem:[%s258 + $0x28] sm:%s250] %v269
                %v271 = vld [vmem:[%s257 + $0xc0] sm:%s250]
                %272 = vst [vmem:[%s258 + $0x30] sm:%s250] %v271
                %v273 = vld [vmem:[%s257 + $0xe0] sm:%s250]
                %274 = vst [vmem:[%s258 + $0x38] sm:%s250] %v273
              $region49: #{prm_generator_forward.4} parent=43 // loop_footer
                %s256 = sadd.s32 1, %s252
              $region50: #{prm_generator_forward.4} parent=43 // loop_footer_branch
                %251 = sbr.rel target = $region46
              $region51: #{prm_generator_forward.4} parent=43 // loop_exit
                _
            $region44: #{prm_generator_forward.4} parent=35 // pred_fallthru
              _
          $region36: #{prm_generator_forward.4} parent=31 // pred_fallthru
            _
          %303 = vnop
        $region32: #{prm_generator_forward.4} parent=23 // pred_fallthru
          _
      $region24: #{prm_generator_forward.4} parent=5 // pred_fallthru
        _
      %p304 = scmp.le.s32.totalorder 1, %s13
      %p305 = scmp.lt.s32.totalorder %s13, 9
      %p306 = pnand %p304, %p305
      %p307 = pneg %p306
      // Predicated region
      $region67: #{prm_generator_forward.4} parent=5 // pred_check
        _
      $region68: #{prm_generator_forward.4} parent=5 // pred_check_branch
        %309 = sbr.rel (%p306) target = $region70
      $region69: #{prm_generator_forward.4} parent=5 // pred_region
        %s310 = ssub.s32 %s13, 1
        %s311 = sand.u32 %s66, 1
        %s312 = sand.u32 %s66, 1
        %s313 = smul.addr %s312, 64
        %s314 = scalar_lea.vmem [#allocation4], %s313
        // Predicated region
        $region71: #{prm_generator_forward.4} parent=69 // pred_check
          %p315 = pneg %p79
        $region72: #{prm_generator_forward.4} parent=69 // pred_check_branch
          %317 = sbr.rel (%p315) target = $region74
        $region73: #{prm_generator_forward.4} parent=69 // pred_region
          _
        $region74: #{prm_generator_forward.4} parent=69 // pred_fallthru
          _
        %p318 = scmp.lt.s32.totalorder %s22, 1
        %s319 = scalar_select %p318, %s22, 1
        %s320 = scalar_lea.vmem %s0, %s319
        %p321 = pneg %p51
        %p322 = pneg %p48
        %s323 = sand.u32 %s66, 1
        %s324 = sand.u32 %s66, 1
        %s325 = smul.addr %s324, 64
        %s326 = scalar_lea.vmem [#allocation4], %s325
        %p327 = pneg %p79
        %p328 = pneg %p76
        %p329 = pneg %p100
        %p330 = pneg %p97
        %p331 = pneg %p121
        %p332 = pneg %p118
        %p333 = pneg %p149
        %p334 = pneg %p146
        %p335 = scmp.lt.s32.totalorder %s22, 1
        %s336 = scalar_select %p335, %s22, 1
        %p337 = scmp.lt.s32.totalorder %s23, 3
        %s338 = scalar_select %p337, %s23, 3
        %s339 = smul.addr %s336, 4
        %s340 = sadd.s32 %s338, %s339
        %s341 = smul.addr %s340, 4
        %s342 = scalar_lea.vmem %s4, %s341
        %p343 = pneg %p175
        %p344 = pneg %p172
        %p345 = scmp.lt.s32.totalorder %s22, 1
        %s346 = scalar_select %p345, %s22, 1
        %s347 = smul.addr %s346, 4
        %s348 = scalar_lea.vmem %s5, %s347
        %p349 = pneg %p201
        %p350 = pneg %p198
        %p351 = scmp.lt.s32.totalorder %s22, 1
        %s352 = scalar_select %p351, %s22, 1
        %s353 = smul.addr %s352, 4
        %s354 = scalar_lea.vmem %s6, %s353
        %p355 = scmp.lt.s32.totalorder %s22, 1
        %s356 = scalar_select %p355, %s22, 1
        %s357 = scalar_lea.vmem %s0, %s356
        %p358 = scmp.lt.s32.totalorder %s22, 1
        %s359 = scalar_select %p358, %s22, 1
        %p360 = scmp.lt.s32.totalorder %s23, 3
        %s361 = scalar_select %p360, %s23, 3
        %s362 = smul.addr %s359, 4
        %s363 = sadd.s32 %s361, %s362
        %s364 = smul.addr %s363, 4
        %s365 = scalar_lea.vmem %s4, %s364
        %p366 = scmp.lt.s32.totalorder %s22, 1
        %s367 = scalar_select %p366, %s22, 1
        %s368 = smul.addr %s367, 4
        %s369 = scalar_lea.vmem %s5, %s368
        %p370 = scmp.lt.s32.totalorder %s22, 1
        %s371 = scalar_select %p370, %s22, 1
        %s372 = smul.addr %s371, 4
        %s373 = scalar_lea.vmem %s6, %s372
        %p374 = scmp.eq.s32.totalorder %s23, 0
        // Predicated region
        $region75: #{prm_generator_forward.4} parent=69 // pred_check
          %p375 = pneg %p374
        $region76: #{prm_generator_forward.4} parent=69 // pred_check_branch
          %377 = sbr.rel (%p375) target = $region78
        $region77: #{prm_generator_forward.4} parent=69 // pred_region
          %vm378 = vcmask 3072
          %379 = vst.msk [vmem:[#allocation2] sm:$0xf] %vm378, 0.0
          %380 = vst.msk [vmem:[#allocation3] sm:$0xf] %vm378, 0.0
        $region78: #{prm_generator_forward.4} parent=69 // pred_fallthru
          _
        %v381 = vld [vmem:[%s2] sm:$0xf]
        %v382 = vld [vmem:[%s357] sm:$0x1]
        %v384 = vperm.slane %v382, 0
        %v386 = vmul.f32 %v381, %v384
        %v387 = vld [vmem:[%s314] sm:$0xff]
        %v388 = vld [vmem:[%s314 + $0x8] sm:$0xff]
        %v389 = vld [vmem:[%s314 + $0x10] sm:$0xff]
        %v390 = vld [vmem:[%s314 + $0x18] sm:$0xff]
        %v391 = vld [vmem:[%s314 + $0x20] sm:$0xff]
        %v392 = vld [vmem:[%s314 + $0x28] sm:$0xff]
        %v393 = vld [vmem:[%s314 + $0x30] sm:$0xff]
        %v394 = vld [vmem:[%s314 + $0x38] sm:$0xff]
        %v395 = vld [vmem:[%s3] sm:$0xf]
        %397 = vset.pattern.permute.xlu0 0
        %398 = vperm.xlu0 %397, %v395
        %v399 = vpop.permute.xlu0 %398
        %vm401 = vcmask 523264
        %v403 = vsel %vm401, %v386, 0
        %405 = vmatpush.msra.mxu0 0.0
        %406 = vmatpush.msra.mxu0 0.0
        %407 = vmatpush.msra.mxu0 0.0
        %408 = vmatpush.msra.mxu0 0.0
        %409 = vmatpush.msra.mxu0 0.0
        %410 = vmatpush.msra.mxu0 0.0
        %411 = vmatpush.msra.mxu0 0.0
        %412 = vmatpush.msra.mxu0 0.0
        %413 = vmatpush.msra.mxu0 %v394
        %414 = vmatpush.msra.mxu0 %v393
        %415 = vmatpush.msra.mxu0 %v392
        %416 = vmatpush.msra.mxu0 %v391
        %417 = vmatpush.msra.mxu0 %v390
        %418 = vmatpush.msra.mxu0 %v389
        %419 = vmatpush.msra.mxu0 %v388
        %420 = vmatpush.msra.mxu0 %v387
        %421 = vmatmul.f32.gmra.mxu0 %v403
        %v422 = vpop.f32.mrf.mxu0
        %v423 = vadd.f32 %v399, %v422
        %424 = vdwg.mxu0
        %v425 = vmax.f32 %v423, -10000.0
        %v426 = vmin.f32 %v425, 10000.0
        %427 = vst [vmem:[%s365] sm:$0xf] %v426
        %v428 = vld [vmem:[#allocation2] sm:$0xf]
        %vm429 = vcmask 1043456
        %v430 = vsel %vm429, %v426, 0.0
        %431 = vadd.xlane.f32.xlu0 %v430
        %v432 = vpop.xlane.xlu0 %431
        %v433 = vadd.f32 %v428, %v432
        %vm434 = vcmask 3072
        %435 = vst.msk [vmem:[#allocation2] sm:$0xf] %vm434, %v433
        %v436 = vld [vmem:[#allocation3] sm:$0xf]
        %v437 = vmul.f32 %v426, %v426
        %v438 = vsel %vm429, %v437, 0.0
        %439 = vadd.xlane.f32.xlu0 %v438
        %v440 = vpop.xlane.xlu0 %439
        %v441 = vadd.f32 %v436, %v440
        %442 = vst.msk [vmem:[#allocation3] sm:$0xf] %vm434, %v441
        %p443 = scmp.eq.s32.totalorder %s23, 3
        // Predicated region
        $region79: #{prm_generator_forward.4} parent=69 // pred_check
          %p444 = pneg %p443
        $region80: #{prm_generator_forward.4} parent=69 // pred_check_branch
          %446 = sbr.rel (%p444) target = $region82
        $region81: #{prm_generator_forward.4} parent=69 // pred_region
          %v447 = vld [vmem:[#allocation2] sm:$0xf]
          %v448 = vmul.f32 %v447, 0.001953125
          %v449 = vld [vmem:[#allocation3] sm:$0xf]
          %v450 = vmul.f32 %v449, 0.001953125
          %v451 = vmul.f32 %v448, %v448
          %v452 = vsub.f32 %v450, %v451
          %v453 = vmax.f32 %v452, 0.0
          %454 = vst.msk [vmem:[%s369] sm:$0xf] %vm434, %v448
          %v455 = vadd.f32 %v453, 0.001
          %v456 = vrsqrt.pop %v455
          %v457 = vmul.f32 %v456, %v455
          %v458 = vmul.f32 %v457, %v456
          %v459 = vmul.f32 0.5, %v458
          %v460 = vsub.f32 1.5, %v459
          %v461 = vmul.f32 %v456, %v460
          %vm462 = vweird.f32 %v455
          %vm463 = vweird.f32 %v456
          %vm464 = vmor %vm462, %vm463
          %v465 = vsel %vm464, %v456, %v461
          %466 = vst.msk [vmem:[%s373] sm:$0xf] %vm434, %v465
        $region82: #{prm_generator_forward.4} parent=69 // pred_fallthru
          _
        %p467 = scmp.lt.s32.totalorder %s22, 1
        %s468 = scalar_select %p467, %s22, 1
        %p469 = scmp.lt.s32.totalorder %s23, 3
        %s470 = scalar_select %p469, %s23, 3
        %s471 = smul.addr %s468, 4
        %s472 = sadd.s32 %s470, %s471
        %s473 = smul.addr %s472, 4
        %s474 = scalar_lea.vmem %s4, %s473
        %p475 = scmp.lt.s32.totalorder %s22, 1
        %s476 = scalar_select %p475, %s22, 1
        %s477 = smul.addr %s476, 4
        %s478 = scalar_lea.vmem %s5, %s477
        %p479 = scmp.lt.s32.totalorder %s22, 1
        %s480 = scalar_select %p479, %s22, 1
        %s481 = smul.addr %s480, 4
        %s482 = scalar_lea.vmem %s6, %s481
        // Predicated region
        $region83: #{prm_generator_forward.4} parent=69 // pred_check
          %p483 = pneg %p146
        $region84: #{prm_generator_forward.4} parent=69 // pred_check_branch
          %485 = sbr.rel (%p483) target = $region86
        $region85: #{prm_generator_forward.4} parent=69 // pred_region
          _
        $region86: #{prm_generator_forward.4} parent=69 // pred_fallthru
          _
        // Predicated region
        $region87: #{prm_generator_forward.4} parent=69 // pred_check
          %p486 = pneg %p172
        $region88: #{prm_generator_forward.4} parent=69 // pred_check_branch
          %488 = sbr.rel (%p486) target = $region90
        $region89: #{prm_generator_forward.4} parent=69 // pred_region
          _
        $region90: #{prm_generator_forward.4} parent=69 // pred_fallthru
          _
        // Predicated region
        $region91: #{prm_generator_forward.4} parent=69 // pred_check
          %p489 = pneg %p198
        $region92: #{prm_generator_forward.4} parent=69 // pred_check_branch
          %491 = sbr.rel (%p489) target = $region94
        $region93: #{prm_generator_forward.4} parent=69 // pred_region
          _
        $region94: #{prm_generator_forward.4} parent=69 // pred_fallthru
          _
      $region70: #{prm_generator_forward.4} parent=5 // pred_fallthru
        _
      %p492 = scmp.le.s32.totalorder 2, %s13
      // Predicated region
      $region95: #{prm_generator_forward.4} parent=5 // pred_check
        %p493 = pneg %p492
      $region96: #{prm_generator_forward.4} parent=5 // pred_check_branch
        %495 = sbr.rel (%p493) target = $region98
      $region97: #{prm_generator_forward.4} parent=5 // pred_region
        %s496 = ssub.s32 %s13, 2
        // Predicated region
        $region99: #{prm_generator_forward.4} parent=97 // pred_check
          %p497 = pneg %p152
        $region100: #{prm_generator_forward.4} parent=97 // pred_check_branch
          %499 = sbr.rel (%p497) target = $region102
        $region101: #{prm_generator_forward.4} parent=97 // pred_region
          %p500 = scmp.lt.s32.totalorder %s24, 1
          %s501 = scalar_select %p500, %s24, 1
          %p502 = scmp.lt.s32.totalorder %s25, 3
          %s503 = scalar_select %p502, %s25, 3
          %s504 = smul.addr %s501, 4
          %s505 = sadd.s32 %s503, %s504
          %s506 = smul.addr %s505, 4
          %s507 = scalar_lea.vmem %s4, %s506
        $region102: #{prm_generator_forward.4} parent=97 // pred_fallthru
          _
        // Predicated region
        $region103: #{prm_generator_forward.4} parent=97 // pred_check
          %p508 = pneg %p178
        $region104: #{prm_generator_forward.4} parent=97 // pred_check_branch
          %510 = sbr.rel (%p508) target = $region106
        $region105: #{prm_generator_forward.4} parent=97 // pred_region
          %p511 = scmp.lt.s32.totalorder %s24, 1
          %s512 = scalar_select %p511, %s24, 1
          %s513 = smul.addr %s512, 4
          %s514 = scalar_lea.vmem %s5, %s513
        $region106: #{prm_generator_forward.4} parent=97 // pred_fallthru
          _
        // Predicated region
        $region107: #{prm_generator_forward.4} parent=97 // pred_check
          %p515 = pneg %p204
        $region108: #{prm_generator_forward.4} parent=97 // pred_check_branch
          %517 = sbr.rel (%p515) target = $region110
        $region109: #{prm_generator_forward.4} parent=97 // pred_region
          %p518 = scmp.lt.s32.totalorder %s24, 1
          %s519 = scalar_select %p518, %s24, 1
          %s520 = smul.addr %s519, 4
          %s521 = scalar_lea.vmem %s6, %s520
        $region110: #{prm_generator_forward.4} parent=97 // pred_fallthru
          _
      $region98: #{prm_generator_forward.4} parent=5 // pred_fallthru
        _
    $region6: #{prm_generator_forward.4} parent=1 // loop_footer
      %s17 = sadd.s32 1, %s13
    $region7: #{prm_generator_forward.4} parent=1 // loop_footer_branch
      %12 = sbr.rel target = $region3
    $region8: #{prm_generator_forward.4} parent=1 // loop_exit
      _

// kernel: prm_generator_forward.6
$region0: #{prm_generator_forward.6}
  #allocation0 [shape = 'u32[]', space=smem, size = 0x4, offset = 0x4, fixed_abs, tag = 'smem constant byte address 0x4 - core index']
  #allocation1 [shape = 'u32[72,128]{1,0:T(1,128)}', space=vmem, size = 0x9000, scoped, tag = 'internal scratch']
  #allocation2 [shape = 'f32[16,1]{1,0:T(8,128)}', space=vmem, size = 0x2000, scoped, tag = 'scratch operand']
  #allocation3 [shape = 'f32[16,1]{1,0:T(8,128)}', space=vmem, size = 0x2000, scoped, tag = 'scratch operand']
  %s0 = inlined_call_operand.vmem [shape: f32[2,16,512], index: 0, kind: input, shape index: {}]
  %s1 = inlined_call_operand.vmem [shape: f32[2,16,512], index: 1, kind: input, shape index: {}]
  %s2 = inlined_call_operand.vmem [shape: f32[16,16], index: 2, kind: input, shape index: {}]
  %s3 = inlined_call_operand.vmem [shape: f32[16,16], index: 3, kind: input, shape index: {}]
  %s4 = inlined_call_operand.vmem [shape: f32[16,1], index: 4, kind: input, shape index: {}]
  %s5 = inlined_call_operand.vmem [shape: f32[2,16,512], index: 5, kind: output, shape index: {0}]
  %s6 = inlined_call_operand.vmem [shape: f32[2,16,1], index: 6, kind: output, shape index: {1}]
  %s7 = inlined_call_operand.vmem [shape: f32[2,16,1], index: 7, kind: output, shape index: {2}]
  %8 = xla_tuple %s5, %s6, %s7
  %s9 = sld [smem:[#allocation0]]
  $region187: #{prm_generator_forward.6} parent=0
    _
  %s11 = ssub.s32 1, %s9
  %s12 = scalar_select 0, %s11, %s9
  $region1: #{prm_generator_forward.6} parent=0
    #allocation4 [shape = 'u8[16384]{0}', space=vmem, size = 0x4000, scoped, tag = 'input window, operand 0']
    #allocation5 [shape = 'u8[16384]{0}', space=vmem, size = 0x4000, scoped, tag = 'input window, operand 1']
    #allocation6 [shape = 'u8[16384]{0}', space=vmem, size = 0x4000, scoped, tag = 'output window, operand 0']
    loop: start=0, step=1, limit=10
    $region2: #{prm_generator_forward.6} parent=1 // loop_pre_header
      _
    $region3: #{prm_generator_forward.6} parent=1 // loop_header
      %s14 = sphi 0, %s18
      %p15 = scmp.ge.s32.totalorder %s14, 10
      %s21 = sphi 0, %s33
      %s22 = sphi 0, %s29
      %s23 = sphi 0, %s21
      %s24 = sphi 0, %s22
      %s25 = sphi 0, %s23
      %s26 = sphi 0, %s24
      %s38 = sphi 0, %s40
      %s41 = sphi 0, %s38
      %s42 = sphi 0, %s41
      %s58 = sphi 0, %s42
      %s66 = sphi 0, %s68
      %s69 = sphi 0, %s66
      %s70 = sphi 0, %s69
      %s86 = sphi 0, %s70
      %s90 = sphi 0, %s90
      %s92 = sphi 0, %s90
      %s93 = sphi 0, %s92
      %s107 = sphi 0, %s93
      %s111 = sphi 0, %s111
      %s113 = sphi 0, %s111
      %s114 = sphi 0, %s113
      %s128 = sphi 0, %s114
      %s132 = sphi 0, %s132
      %s134 = sphi 0, %s132
      %s135 = sphi 0, %s134
      %s149 = sphi 0, %s135
      %s157 = sphi 0, %s159
      %s160 = sphi 0, %s157
      %s161 = sphi 0, %s160
      %s177 = sphi 0, %s161
      %s183 = sphi 0, %s185
      %s186 = sphi 0, %s183
      %s187 = sphi 0, %s186
      %s203 = sphi 0, %s187
      %s209 = sphi 0, %s211
      %s212 = sphi 0, %s209
      %s213 = sphi 0, %s212
      %s229 = sphi 0, %s213
    $region4: #{prm_generator_forward.6} parent=1 // loop_header_branch
      %17 = sbr.rel (%p15) target = $region8
    $region5: #{prm_generator_forward.6} parent=1 // loop_body
      %s19 = ssub.s32 %s14, 1
      %s20 = ssub.s32 %s14, 2
      %s27 = sadd.s32 1, %s22
      %p28 = scmp.ge.s32.totalorder %s27, 4
      %s29 = scalar_select %p28, 0, %s27
      %s30 = sadd.s32 1, %s21
      %s31 = scalar_select %p28, %s30, %s21
      %p32 = scmp.ge.s32.totalorder %s31, 2
      %s33 = scalar_select %p32, 0, %s31
      %s34 = ssub.s32 %s21, %s33
      %s35 = ssub.s32 %s22, %s29
      %s36 = sor.u32 %s34, %s35
      %p37 = scmp.eq.s32.totalorder %s36, 0
      %s39 = sadd.s32 %s38, 1
      %s40 = scalar_select %p37, %s38, %s39
      %p43 = pneg %p37
      %p44 = scmp.eq.s32.totalorder %s14, 7
      %p45 = por %p43, %p44
      %p46 = scmp.ne.s32.totalorder %s38, %s41
      %p47 = scmp.eq.s32.totalorder %s14, 0
      %p48 = por %p46, %p47
      %p49 = scmp.ne.s32.totalorder %s38, %s41
      %p50 = scmp.eq.s32.totalorder %s19, 7
      %p51 = por %p49, %p50
      %p52 = scmp.ne.s32.totalorder %s41, %s42
      %p53 = scmp.eq.s32.totalorder %s19, 0
      %p54 = por %p52, %p53
      %p55 = scmp.ne.s32.totalorder %s41, %s42
      %p56 = scmp.eq.s32.totalorder %s20, 7
      %p57 = por %p55, %p56
      %p59 = scmp.ne.s32.totalorder %s42, %s58
      %p60 = scmp.eq.s32.totalorder %s20, 0
      %p61 = por %p59, %p60
      %s62 = ssub.s32 %s21, %s33
      %s63 = ssub.s32 %s22, %s29
      %s64 = sor.u32 %s62, %s63
      %p65 = scmp.eq.s32.totalorder %s64, 0
      %s67 = sadd.s32 %s66, 1
      %s68 = scalar_select %p65, %s66, %s67
      %p71 = pneg %p65
      %p72 = scmp.eq.s32.totalorder %s14, 7
      %p73 = por %p71, %p72
      %p74 = scmp.ne.s32.totalorder %s66, %s69
      %p75 = scmp.eq.s32.totalorder %s14, 0
      %p76 = por %p74, %p75
      %p77 = scmp.ne.s32.totalorder %s66, %s69
      %p78 = scmp.eq.s32.totalorder %s19, 7
      %p79 = por %p77, %p78
      %p80 = scmp.ne.s32.totalorder %s69, %s70
      %p81 = scmp.eq.s32.totalorder %s19, 0
      %p82 = por %p80, %p81
      %p83 = scmp.ne.s32.totalorder %s69, %s70
      %p84 = scmp.eq.s32.totalorder %s20, 7
      %p85 = por %p83, %p84
      %p87 = scmp.ne.s32.totalorder %s70, %s86
      %p88 = scmp.eq.s32.totalorder %s20, 0
      %p89 = por %p87, %p88
      %s91 = sadd.s32 %s90, 1
      %p94 = scmp.eq.s32.totalorder %s14, 7
      %p95 = scmp.ne.s32.totalorder %s90, %s92
      %p96 = scmp.eq.s32.totalorder %s14, 0
      %p97 = por %p95, %p96
      %p98 = scmp.ne.s32.totalorder %s90, %s92
      %p99 = scmp.eq.s32.totalorder %s19, 7
      %p100 = por %p98, %p99
      %p101 = scmp.ne.s32.totalorder %s92, %s93
      %p102 = scmp.eq.s32.totalorder %s19, 0
      %p103 = por %p101, %p102
      %p104 = scmp.ne.s32.totalorder %s92, %s93
      %p105 = scmp.eq.s32.totalorder %s20, 7
      %p106 = por %p104, %p105
      %p108 = scmp.ne.s32.totalorder %s93, %s107
      %p109 = scmp.eq.s32.totalorder %s20, 0
      %p110 = por %p108, %p109
      %s112 = sadd.s32 %s111, 1
      %p115 = scmp.eq.s32.totalorder %s14, 7
      %p116 = scmp.ne.s32.totalorder %s111, %s113
      %p117 = scmp.eq.s32.totalorder %s14, 0
      %p118 = por %p116, %p117
      %p119 = scmp.ne.s32.totalorder %s111, %s113
      %p120 = scmp.eq.s32.totalorder %s19, 7
      %p121 = por %p119, %p120
      %p122 = scmp.ne.s32.totalorder %s113, %s114
      %p123 = scmp.eq.s32.totalorder %s19, 0
      %p124 = por %p122, %p123
      %p125 = scmp.ne.s32.totalorder %s113, %s114
      %p126 = scmp.eq.s32.totalorder %s20, 7
      %p127 = por %p125, %p126
      %p129 = scmp.ne.s32.totalorder %s114, %s128
      %p130 = scmp.eq.s32.totalorder %s20, 0
      %p131 = por %p129, %p130
      %s133 = sadd.s32 %s132, 1
      %p136 = scmp.eq.s32.totalorder %s14, 7
      %p137 = scmp.ne.s32.totalorder %s132, %s134
      %p138 = scmp.eq.s32.totalorder %s14, 0
      %p139 = por %p137, %p138
      %p140 = scmp.ne.s32.totalorder %s132, %s134
      %p141 = scmp.eq.s32.totalorder %s19, 7
      %p142 = por %p140, %p141
      %p143 = scmp.ne.s32.totalorder %s134, %s135
      %p144 = scmp.eq.s32.totalorder %s19, 0
      %p145 = por %p143, %p144
      %p146 = scmp.ne.s32.totalorder %s134, %s135
      %p147 = scmp.eq.s32.totalorder %s20, 7
      %p148 = por %p146, %p147
      %p150 = scmp.ne.s32.totalorder %s135, %s149
      %p151 = scmp.eq.s32.totalorder %s20, 0
      %p152 = por %p150, %p151
      %s153 = ssub.s32 %s21, %s33
      %s154 = ssub.s32 %s22, %s29
      %s155 = sor.u32 %s153, %s154
      %p156 = scmp.eq.s32.totalorder %s155, 0
      %s158 = sadd.s32 %s157, 1
      %s159 = scalar_select %p156, %s157, %s158
      %p162 = pneg %p156
      %p163 = scmp.eq.s32.totalorder %s14, 7
      %p164 = por %p162, %p163
      %p165 = scmp.ne.s32.totalorder %s157, %s160
      %p166 = scmp.eq.s32.totalorder %s14, 0
      %p167 = por %p165, %p166
      %p168 = scmp.ne.s32.totalorder %s157, %s160
      %p169 = scmp.eq.s32.totalorder %s19, 7
      %p170 = por %p168, %p169
      %p171 = scmp.ne.s32.totalorder %s160, %s161
      %p172 = scmp.eq.s32.totalorder %s19, 0
      %p173 = por %p171, %p172
      %p174 = scmp.ne.s32.totalorder %s160, %s161
      %p175 = scmp.eq.s32.totalorder %s20, 7
      %p176 = por %p174, %p175
      %p178 = scmp.ne.s32.totalorder %s161, %s177
      %p179 = scmp.eq.s32.totalorder %s20, 0
      %p180 = por %p178, %p179
      %s181 = ssub.s32 %s21, %s33
      %p182 = scmp.eq.s32.totalorder %s181, 0
      %s184 = sadd.s32 %s183, 1
      %s185 = scalar_select %p182, %s183, %s184
      %p188 = pneg %p182
      %p189 = scmp.eq.s32.totalorder %s14, 7
      %p190 = por %p188, %p189
      %p191 = scmp.ne.s32.totalorder %s183, %s186
      %p192 = scmp.eq.s32.totalorder %s14, 0
      %p193 = por %p191, %p192
      %p194 = scmp.ne.s32.totalorder %s183, %s186
      %p195 = scmp.eq.s32.totalorder %s19, 7
      %p196 = por %p194, %p195
      %p197 = scmp.ne.s32.totalorder %s186, %s187
      %p198 = scmp.eq.s32.totalorder %s19, 0
      %p199 = por %p197, %p198
      %p200 = scmp.ne.s32.totalorder %s186, %s187
      %p201 = scmp.eq.s32.totalorder %s20, 7
      %p202 = por %p200, %p201
      %p204 = scmp.ne.s32.totalorder %s187, %s203
      %p205 = scmp.eq.s32.totalorder %s20, 0
      %p206 = por %p204, %p205
      %s207 = ssub.s32 %s21, %s33
      %p208 = scmp.eq.s32.totalorder %s207, 0
      %s210 = sadd.s32 %s209, 1
      %s211 = scalar_select %p208, %s209, %s210
      %p214 = pneg %p208
      %p215 = scmp.eq.s32.totalorder %s14, 7
      %p216 = por %p214, %p215
      %p217 = scmp.ne.s32.totalorder %s209, %s212
      %p218 = scmp.eq.s32.totalorder %s14, 0
      %p219 = por %p217, %p218
      %p220 = scmp.ne.s32.totalorder %s209, %s212
      %p221 = scmp.eq.s32.totalorder %s19, 7
      %p222 = por %p220, %p221
      %p223 = scmp.ne.s32.totalorder %s212, %s213
      %p224 = scmp.eq.s32.totalorder %s19, 0
      %p225 = por %p223, %p224
      %p226 = scmp.ne.s32.totalorder %s212, %s213
      %p227 = scmp.eq.s32.totalorder %s20, 7
      %p228 = por %p226, %p227
      %p230 = scmp.ne.s32.totalorder %s213, %s229
      %p231 = scmp.eq.s32.totalorder %s20, 0
      %p232 = por %p230, %p231
      %p233 = scmp.le.s32.totalorder 1, %s14
      %p234 = scmp.lt.s32.totalorder %s14, 9
      %p235 = pnand %p233, %p234
      %p236 = pneg %p235
      // Predicated region
      $region9: #{prm_generator_forward.6} parent=5 // pred_check
        _
      $region10: #{prm_generator_forward.6} parent=5 // pred_check_branch
        %238 = sbr.rel (%p235) target = $region12
      $region11: #{prm_generator_forward.6} parent=5 // pred_region
        %s239 = ssub.s32 %s14, 1
        // Predicated region
        $region13: #{prm_generator_forward.6} parent=11 // pred_check
          %p240 = pneg %p103
        $region14: #{prm_generator_forward.6} parent=11 // pred_check_branch
          %242 = sbr.rel (%p240) target = $region16
        $region15: #{prm_generator_forward.6} parent=11 // pred_region
          _
        $region16: #{prm_generator_forward.6} parent=11 // pred_fallthru
          _
        // Predicated region
        $region17: #{prm_generator_forward.6} parent=11 // pred_check
          %p243 = pneg %p124
        $region18: #{prm_generator_forward.6} parent=11 // pred_check_branch
          %245 = sbr.rel (%p243) target = $region20
        $region19: #{prm_generator_forward.6} parent=11 // pred_region
          _
        $region20: #{prm_generator_forward.6} parent=11 // pred_fallthru
          _
        // Predicated region
        $region21: #{prm_generator_forward.6} parent=11 // pred_check
          %p246 = pneg %p145
        $region22: #{prm_generator_forward.6} parent=11 // pred_check_branch
          %248 = sbr.rel (%p246) target = $region24
        $region23: #{prm_generator_forward.6} parent=11 // pred_region
          _
        $region24: #{prm_generator_forward.6} parent=11 // pred_fallthru
          _
      $region12: #{prm_generator_forward.6} parent=5 // pred_fallthru
        _
      %p249 = scmp.lt.s32.totalorder %s14, 8
      // Predicated region
      $region25: #{prm_generator_forward.6} parent=5 // pred_check
        %p250 = pneg %p249
      $region26: #{prm_generator_forward.6} parent=5 // pred_check_branch
        %252 = sbr.rel (%p250) target = $region28
      $region27: #{prm_generator_forward.6} parent=5 // pred_region
        // Predicated region
        $region29: #{prm_generator_forward.6} parent=27 // pred_check
          %p253 = pneg %p48
        $region30: #{prm_generator_forward.6} parent=27 // pred_check_branch
          %255 = sbr.rel (%p253) target = $region32
        $region31: #{prm_generator_forward.6} parent=27 // pred_region
          %s256 = sand.u32 %s38, 1
          %s257 = sand.u32 %s38, 1
          %s258 = smul.addr %s257, 16
          %s259 = scalar_lea.vmem [#allocation4], %s258
          %s260 = smul.addr %s21, 8
          %s261 = sadd.s32 %s22, %s260
          %s262 = smul.addr %s261, 8
          %s263 = scalar_lea.vmem %s0, %s262
          // Predicated region
          $region33: #{prm_generator_forward.6} parent=31 // pred_check
            _
          $region34: #{prm_generator_forward.6} parent=31 // pred_check_branch
            %265 = sbr.rel (0) target = $region36
          $region35: #{prm_generator_forward.6} parent=31 // pred_region
            // Predicated region
            $region37: #{prm_generator_forward.6} parent=35 // pred_check
              _
            $region38: #{prm_generator_forward.6} parent=35 // pred_check_branch
              %267 = sbr.rel (0) target = $region40
            $region39: #{prm_generator_forward.6} parent=35 // pred_region
              // Predicated region
              $region52: #{prm_generator_forward.6} parent=39 // pred_check
                _
              $region53: #{prm_generator_forward.6} parent=39 // pred_check_branch
                %285 = sbr.rel (0) target = $region55
              $region54: #{prm_generator_forward.6} parent=39 // pred_region
                loop: start=0, step=1, limit=1
                $region56: #{prm_generator_forward.6} parent=54 // loop_pre_header
                  _
                $region57: #{prm_generator_forward.6} parent=54 // loop_header
                  %s287 = sphi 0, %s291
                  %p288 = scmp.ge.s32.totalorder %s287, 1
                  %s292 = sphi %s263, %s263
                  %s293 = sphi %s259, %s259
                $region58: #{prm_generator_forward.6} parent=54 // loop_header_branch
                  %290 = sbr.rel (%p288) target = $region62
                $region59: #{prm_generator_forward.6} parent=54 // loop_body
                  %v294 = vld [vmem:[%s292] sm:$0xff]
                  %295 = vst [vmem:[%s293] sm:$0xff] %v294
                  %v296 = vld [vmem:[%s292 + $0x20] sm:$0xff]
                  %297 = vst [vmem:[%s293 + $0x8] sm:$0xff] %v296
                $region60: #{prm_generator_forward.6} parent=54 // loop_footer
                  %s291 = sadd.s32 1, %s287
                $region61: #{prm_generator_forward.6} parent=54 // loop_footer_branch
                  %286 = sbr.rel target = $region57
                $region62: #{prm_generator_forward.6} parent=54 // loop_exit
                  _
              $region55: #{prm_generator_forward.6} parent=39 // pred_fallthru
                _
              // Predicated region
              $region63: #{prm_generator_forward.6} parent=39 // pred_check
                _
              $region64: #{prm_generator_forward.6} parent=39 // pred_check_branch
                %299 = sbr.rel target = $region66
              $region65: #{prm_generator_forward.6} parent=39 // pred_region
                _
              $region66: #{prm_generator_forward.6} parent=39 // pred_fallthru
                _
            $region40: #{prm_generator_forward.6} parent=35 // pred_fallthru
              _
            // Predicated region
            $region41: #{prm_generator_forward.6} parent=35 // pred_check
              _
            $region42: #{prm_generator_forward.6} parent=35 // pred_check_branch
              %269 = sbr.rel target = $region44
            $region43: #{prm_generator_forward.6} parent=35 // pred_region
              %s271 = ssub.s32 256, 1
              loop: start=0, step=1, limit=1
              $region45: #{prm_generator_forward.6} parent=43 // loop_pre_header
                _
              $region46: #{prm_generator_forward.6} parent=43 // loop_header
                %s273 = sphi 0, %s277
                %p274 = scmp.ge.s32.totalorder %s273, 1
                %s278 = sphi %s263, %s263
                %s279 = sphi %s259, %s259
              $region47: #{prm_generator_forward.6} parent=43 // loop_header_branch
                %276 = sbr.rel (%p274) target = $region51
              $region48: #{prm_generator_forward.6} parent=43 // loop_body
                %v280 = vld [vmem:[%s278] sm:%s271]
                %281 = vst [vmem:[%s279] sm:%s271] %v280
                %v282 = vld [vmem:[%s278 + $0x20] sm:%s271]
                %283 = vst [vmem:[%s279 + $0x8] sm:%s271] %v282
              $region49: #{prm_generator_forward.6} parent=43 // loop_footer
                %s277 = sadd.s32 1, %s273
              $region50: #{prm_generator_forward.6} parent=43 // loop_footer_branch
                %272 = sbr.rel target = $region46
              $region51: #{prm_generator_forward.6} parent=43 // loop_exit
                _
            $region44: #{prm_generator_forward.6} parent=35 // pred_fallthru
              _
          $region36: #{prm_generator_forward.6} parent=31 // pred_fallthru
            _
          %300 = vnop
        $region32: #{prm_generator_forward.6} parent=27 // pred_fallthru
          _
        // Predicated region
        $region67: #{prm_generator_forward.6} parent=27 // pred_check
          %p301 = pneg %p76
        $region68: #{prm_generator_forward.6} parent=27 // pred_check_branch
          %303 = sbr.rel (%p301) target = $region70
        $region69: #{prm_generator_forward.6} parent=27 // pred_region
          %s304 = sand.u32 %s66, 1
          %s305 = sand.u32 %s66, 1
          %s306 = smul.addr %s305, 16
          %s307 = scalar_lea.vmem [#allocation5], %s306
          %s308 = smul.addr %s21, 8
          %s309 = sadd.s32 %s22, %s308
          %s310 = smul.addr %s309, 8
          %s311 = scalar_lea.vmem %s1, %s310
          // Predicated region
          $region71: #{prm_generator_forward.6} parent=69 // pred_check
            _
          $region72: #{prm_generator_forward.6} parent=69 // pred_check_branch
            %313 = sbr.rel (0) target = $region74
          $region73: #{prm_generator_forward.6} parent=69 // pred_region
            // Predicated region
            $region75: #{prm_generator_forward.6} parent=73 // pred_check
              _
            $region76: #{prm_generator_forward.6} parent=73 // pred_check_branch
              %315 = sbr.rel (0) target = $region78
            $region77: #{prm_generator_forward.6} parent=73 // pred_region
              // Predicated region
              $region90: #{prm_generator_forward.6} parent=77 // pred_check
                _
              $region91: #{prm_generator_forward.6} parent=77 // pred_check_branch
                %333 = sbr.rel (0) target = $region93
              $region92: #{prm_generator_forward.6} parent=77 // pred_region
                loop: start=0, step=1, limit=1
                $region94: #{prm_generator_forward.6} parent=92 // loop_pre_header
                  _
                $region95: #{prm_generator_forward.6} parent=92 // loop_header
                  %s335 = sphi 0, %s339
                  %p336 = scmp.ge.s32.totalorder %s335, 1
                  %s340 = sphi %s311, %s311
                  %s341 = sphi %s307, %s307
                $region96: #{prm_generator_forward.6} parent=92 // loop_header_branch
                  %338 = sbr.rel (%p336) target = $region100
                $region97: #{prm_generator_forward.6} parent=92 // loop_body
                  %v342 = vld [vmem:[%s340] sm:$0xff]
                  %343 = vst [vmem:[%s341] sm:$0xff] %v342
                  %v344 = vld [vmem:[%s340 + $0x20] sm:$0xff]
                  %345 = vst [vmem:[%s341 + $0x8] sm:$0xff] %v344
                $region98: #{prm_generator_forward.6} parent=92 // loop_footer
                  %s339 = sadd.s32 1, %s335
                $region99: #{prm_generator_forward.6} parent=92 // loop_footer_branch
                  %334 = sbr.rel target = $region95
                $region100: #{prm_generator_forward.6} parent=92 // loop_exit
                  _
              $region93: #{prm_generator_forward.6} parent=77 // pred_fallthru
                _
              // Predicated region
              $region101: #{prm_generator_forward.6} parent=77 // pred_check
                _
              $region102: #{prm_generator_forward.6} parent=77 // pred_check_branch
                %347 = sbr.rel target = $region104
              $region103: #{prm_generator_forward.6} parent=77 // pred_region
                _
              $region104: #{prm_generator_forward.6} parent=77 // pred_fallthru
                _
            $region78: #{prm_generator_forward.6} parent=73 // pred_fallthru
              _
            // Predicated region
            $region79: #{prm_generator_forward.6} parent=73 // pred_check
              _
            $region80: #{prm_generator_forward.6} parent=73 // pred_check_branch
              %317 = sbr.rel target = $region82
            $region81: #{prm_generator_forward.6} parent=73 // pred_region
              %s319 = ssub.s32 256, 1
              loop: start=0, step=1, limit=1
              $region83: #{prm_generator_forward.6} parent=81 // loop_pre_header
                _
              $region84: #{prm_generator_forward.6} parent=81 // loop_header
                %s321 = sphi 0, %s325
                %p322 = scmp.ge.s32.totalorder %s321, 1
                %s326 = sphi %s311, %s311
                %s327 = sphi %s307, %s307
              $region85: #{prm_generator_forward.6} parent=81 // loop_header_branch
                %324 = sbr.rel (%p322) target = $region89
              $region86: #{prm_generator_forward.6} parent=81 // loop_body
                %v328 = vld [vmem:[%s326] sm:%s319]
                %329 = vst [vmem:[%s327] sm:%s319] %v328
                %v330 = vld [vmem:[%s326 + $0x20] sm:%s319]
                %331 = vst [vmem:[%s327 + $0x8] sm:%s319] %v330
              $region87: #{prm_generator_forward.6} parent=81 // loop_footer
                %s325 = sadd.s32 1, %s321
              $region88: #{prm_generator_forward.6} parent=81 // loop_footer_branch
                %320 = sbr.rel target = $region84
              $region89: #{prm_generator_forward.6} parent=81 // loop_exit
                _
            $region82: #{prm_generator_forward.6} parent=73 // pred_fallthru
              _
          $region74: #{prm_generator_forward.6} parent=69 // pred_fallthru
            _
          %348 = vnop
        $region70: #{prm_generator_forward.6} parent=27 // pred_fallthru
          _
      $region28: #{prm_generator_forward.6} parent=5 // pred_fallthru
        _
      %p349 = scmp.le.s32.totalorder 1, %s14
      %p350 = scmp.lt.s32.totalorder %s14, 9
      %p351 = pnand %p349, %p350
      %p352 = pneg %p351
      // Predicated region
      $region105: #{prm_generator_forward.6} parent=5 // pred_check
        _
      $region106: #{prm_generator_forward.6} parent=5 // pred_check_branch
        %354 = sbr.rel (%p351) target = $region108
      $region107: #{prm_generator_forward.6} parent=5 // pred_region
        %s355 = ssub.s32 %s14, 1
        %s356 = sand.u32 %s41, 1
        %s357 = sand.u32 %s41, 1
        %s358 = smul.addr %s357, 16
        %s359 = scalar_lea.vmem [#allocation4], %s358
        // Predicated region
        $region109: #{prm_generator_forward.6} parent=107 // pred_check
          %p360 = pneg %p54
        $region110: #{prm_generator_forward.6} parent=107 // pred_check_branch
          %362 = sbr.rel (%p360) target = $region112
        $region111: #{prm_generator_forward.6} parent=107 // pred_region
          _
        $region112: #{prm_generator_forward.6} parent=107 // pred_fallthru
          _
        %s363 = sand.u32 %s69, 1
        %s364 = sand.u32 %s69, 1
        %s365 = smul.addr %s364, 16
        %s366 = scalar_lea.vmem [#allocation5], %s365
        // Predicated region
        $region113: #{prm_generator_forward.6} parent=107 // pred_check
          %p367 = pneg %p82
        $region114: #{prm_generator_forward.6} parent=107 // pred_check_branch
          %369 = sbr.rel (%p367) target = $region116
        $region115: #{prm_generator_forward.6} parent=107 // pred_region
          _
        $region116: #{prm_generator_forward.6} parent=107 // pred_fallthru
          _
        %s370 = sand.u32 %s41, 1
        %s371 = sand.u32 %s41, 1
        %s372 = smul.addr %s371, 16
        %s373 = scalar_lea.vmem [#allocation4], %s372
        %p374 = pneg %p54
        %p375 = pneg %p51
        %s376 = sand.u32 %s69, 1
        %s377 = sand.u32 %s69, 1
        %s378 = smul.addr %s377, 16
        %s379 = scalar_lea.vmem [#allocation5], %s378
        %p380 = pneg %p82
        %p381 = pneg %p79
        %p382 = pneg %p103
        %p383 = pneg %p100
        %p384 = pneg %p124
        %p385 = pneg %p121
        %p386 = pneg %p145
        %p387 = pneg %p142
        %p388 = pneg %p173
        %p389 = pneg %p170
        %s390 = sand.u32 %s160, 1
        %s391 = sand.u32 %s160, 1
        %s392 = smul.addr %s391, 16
        %s393 = scalar_lea.vmem [#allocation6], %s392
        %p394 = pneg %p199
        %p395 = pneg %p196
        %p396 = scmp.lt.s32.totalorder %s23, 1
        %s397 = scalar_select %p396, %s23, 1
        %s398 = smul.addr %s397, 2
        %s399 = smul.addr %s398, 8
        %s400 = scalar_lea.vmem %s6, %s399
        %p401 = pneg %p225
        %p402 = pneg %p222
        %p403 = scmp.lt.s32.totalorder %s23, 1
        %s404 = scalar_select %p403, %s23, 1
        %s405 = smul.addr %s404, 2
        %s406 = smul.addr %s405, 8
        %s407 = scalar_lea.vmem %s7, %s406
        %p408 = scmp.lt.s32.totalorder %s23, 1
        %s409 = scalar_select %p408, %s23, 1
        %s410 = smul.addr %s409, 2
        %s411 = smul.addr %s410, 8
        %s412 = scalar_lea.vmem %s6, %s411
        %p413 = scmp.lt.s32.totalorder %s23, 1
        %s414 = scalar_select %p413, %s23, 1
        %s415 = smul.addr %s414, 2
        %s416 = smul.addr %s415, 8
        %s417 = scalar_lea.vmem %s7, %s416
        %p418 = scmp.eq.s32.totalorder %s24, 0
        // Predicated region
        $region117: #{prm_generator_forward.6} parent=107 // pred_check
          %p419 = pneg %p418
        $region118: #{prm_generator_forward.6} parent=107 // pred_check_branch
          %421 = sbr.rel (%p419) target = $region120
        $region119: #{prm_generator_forward.6} parent=107 // pred_region
          %vm422 = vcmask 7168
          %423 = vst.msk [vmem:[#allocation2] sm:$0xff] %vm422, 0.0
          %424 = vst.msk [vmem:[#allocation2 + $0x8] sm:$0xff] %vm422, 0.0
          %425 = vst.msk [vmem:[#allocation3] sm:$0xff] %vm422, 0.0
          %426 = vst.msk [vmem:[#allocation3 + $0x8] sm:$0xff] %vm422, 0.0
        $region120: #{prm_generator_forward.6} parent=107 // pred_fallthru
          _
        %v427 = vld [vmem:[%s2] sm:$0xff]
        %v428 = vld [vmem:[%s2 + $0x8] sm:$0xff]
        %v429 = vld [vmem:[%s359] sm:$0xff]
        %v430 = vld [vmem:[%s359 + $0x8] sm:$0xff]
        %v431 = vld [vmem:[%s3] sm:$0xff]
        %v432 = vld [vmem:[%s3 + $0x8] sm:$0xff]
        %v433 = vld [vmem:[%s366] sm:$0xff]
        %v434 = vld [vmem:[%s366 + $0x8] sm:$0xff]
        %vm435 = vcmask 130048
        %v437 = vsel %vm435, %v431, 0
        %v440 = vsel %vm435, %v432, 0
        %442 = vmatpush.msra.mxu0 0.0
        %443 = vmatpush.msra.mxu0 0.0
        %444 = vmatpush.msra.mxu0 0.0
        %445 = vmatpush.msra.mxu0 0.0
        %446 = vmatpush.msra.mxu0 0.0
        %447 = vmatpush.msra.mxu0 0.0
        %448 = vmatpush.msra.mxu0 0.0
        %449 = vmatpush.msra.mxu0 0.0
        %450 = vmatpush.msra.mxu0 0.0
        %451 = vmatpush.msra.mxu0 0.0
        %452 = vmatpush.msra.mxu0 0.0
        %453 = vmatpush.msra.mxu0 0.0
        %454 = vmatpush.msra.mxu0 0.0
        %455 = vmatpush.msra.mxu0 0.0
        %456 = vmatpush.msra.mxu0 %v434
        %457 = vmatpush.msra.mxu0 %v433
        %458 = vmatmul.f32.gmra.mxu0 %v437
        %v459 = vpop.f32.mrf.mxu0
        %v460 = vadd.f32 0.0, %v459
        %461 = vmatmul.f32.gmra.mxu0 %v440
        %v462 = vpop.f32.mrf.mxu0
        %v463 = vadd.f32 0.0, %v462
        %464 = vdwg.mxu0
        %v466 = vsel %vm435, %v427, 0
        %v469 = vsel %vm435, %v428, 0
        %471 = vmatpush.msra.mxu0 0.0
        %472 = vmatpush.msra.mxu0 0.0
        %473 = vmatpush.msra.mxu0 0.0
        %474 = vmatpush.msra.mxu0 0.0
        %475 = vmatpush.msra.mxu0 0.0
        %476 = vmatpush.msra.mxu0 0.0
        %477 = vmatpush.msra.mxu0 0.0
        %478 = vmatpush.msra.mxu0 0.0
        %479 = vmatpush.msra.mxu0 0.0
        %480 = vmatpush.msra.mxu0 0.0
        %481 = vmatpush.msra.mxu0 0.0
        %482 = vmatpush.msra.mxu0 0.0
        %483 = vmatpush.msra.mxu0 0.0
        %484 = vmatpush.msra.mxu0 0.0
        %485 = vmatpush.msra.mxu0 %v430
        %486 = vmatpush.msra.mxu0 %v429
        %487 = vmatmul.f32.gmra.mxu0 %v466
        %v488 = vpop.f32.mrf.mxu0
        %v489 = vadd.f32 %v460, %v488
        %490 = vmatmul.f32.gmra.mxu0 %v469
        %v491 = vpop.f32.mrf.mxu0
        %v492 = vadd.f32 %v463, %v491
        %493 = vdwg.mxu0
        %v494 = vld [vmem:[%s4] sm:$0xff]
        %v495 = vld [vmem:[%s4 + $0x8] sm:$0xff]
        %497 = vset.pattern.permute.xlu0 0
        %498 = vperm.xlu0 %497, %v494
        %v499 = vpop.permute.xlu0 %498
        %502 = vset.pattern.permute.xlu0 0
        %503 = vperm.xlu0 %502, %v495
        %v504 = vpop.permute.xlu0 %503
        %v506 = vadd.f32 %v489, %v499
        %v507 = vadd.f32 %v492, %v504
        %v508 = vmax.f32 %v506, -10000.0
        %v509 = vmax.f32 %v507, -10000.0
        %v510 = vmin.f32 %v508, 10000.0
        %v511 = vmin.f32 %v509, 10000.0
        %512 = vst [vmem:[%s393] sm:$0xff] %v510
        %513 = vst [vmem:[%s393 + $0x8] sm:$0xff] %v511
        %v514 = vld [vmem:[#allocation2] sm:$0xff]
        %v515 = vld [vmem:[#allocation2 + $0x8] sm:$0xff]
        %516 = vadd.xlane.f32.xlu0 %v510
        %v517 = vpop.xlane.xlu0 %516
        %518 = vadd.xlane.f32.xlu0 %v511
        %v519 = vpop.xlane.xlu0 %518
        %v520 = vadd.f32 %v514, %v517
        %v521 = vadd.f32 %v515, %v519
        %vm522 = vcmask 7168
        %523 = vst.msk [vmem:[#allocation2] sm:$0xff] %vm522, %v520
        %524 = vst.msk [vmem:[#allocation2 + $0x8] sm:$0xff] %vm522, %v521
        %v525 = vld [vmem:[#allocation3] sm:$0xff]
        %v526 = vld [vmem:[#allocation3 + $0x8] sm:$0xff]
        %v527 = vmul.f32 %v510, %v510
        %v528 = vmul.f32 %v511, %v511
        %529 = vadd.xlane.f32.xlu0 %v527
        %v530 = vpop.xlane.xlu0 %529
        %531 = vadd.xlane.f32.xlu0 %v528
        %v532 = vpop.xlane.xlu0 %531
        %v533 = vadd.f32 %v525, %v530
        %v534 = vadd.f32 %v526, %v532
        %535 = vst.msk [vmem:[#allocation3] sm:$0xff] %vm522, %v533
        %536 = vst.msk [vmem:[#allocation3 + $0x8] sm:$0xff] %vm522, %v534
        %p537 = scmp.eq.s32.totalorder %s24, 3
        // Predicated region
        $region121: #{prm_generator_forward.6} parent=107 // pred_check
          %p538 = pneg %p537
        $region122: #{prm_generator_forward.6} parent=107 // pred_check_branch
          %540 = sbr.rel (%p538) target = $region124
        $region123: #{prm_generator_forward.6} parent=107 // pred_region
          %v541 = vld [vmem:[#allocation2] sm:$0xff]
          %v542 = vld [vmem:[#allocation2 + $0x8] sm:$0xff]
          %v543 = vmul.f32 %v541, 0.001953125
          %v544 = vmul.f32 %v542, 0.001953125
          %v545 = vld [vmem:[#allocation3] sm:$0xff]
          %v546 = vld [vmem:[#allocation3 + $0x8] sm:$0xff]
          %v547 = vmul.f32 %v545, 0.001953125
          %v548 = vmul.f32 %v546, 0.001953125
          %v549 = vmul.f32 %v543, %v543
          %v550 = vmul.f32 %v544, %v544
          %v551 = vsub.f32 %v547, %v549
          %v552 = vsub.f32 %v548, %v550
          %v553 = vmax.f32 %v551, 0.0
          %v554 = vmax.f32 %v552, 0.0
          %555 = vst.msk [vmem:[%s412] sm:$0xff] %vm522, %v543
          %556 = vst.msk [vmem:[%s412 + $0x8] sm:$0xff] %vm522, %v544
          %v557 = vadd.f32 %v553, 0.001
          %v558 = vadd.f32 %v554, 0.001
          %v559 = vrsqrt.pop %v557
          %v560 = vmul.f32 %v559, %v557
          %v561 = vmul.f32 %v560, %v559
          %v562 = vmul.f32 0.5, %v561
          %v563 = vsub.f32 1.5, %v562
          %v564 = vmul.f32 %v559, %v563
          %vm565 = vweird.f32 %v557
          %vm566 = vweird.f32 %v559
          %vm567 = vmor %vm565, %vm566
          %v568 = vsel %vm567, %v559, %v564
          %v569 = vrsqrt.pop %v558
          %v570 = vmul.f32 %v569, %v558
          %v571 = vmul.f32 %v570, %v569
          %v572 = vmul.f32 0.5, %v571
          %v573 = vsub.f32 1.5, %v572
          %v574 = vmul.f32 %v569, %v573
          %vm575 = vweird.f32 %v558
          %vm576 = vweird.f32 %v569
          %vm577 = vmor %vm575, %vm576
          %v578 = vsel %vm577, %v569, %v574
          %579 = vst.msk [vmem:[%s417] sm:$0xff] %vm522, %v568
          %580 = vst.msk [vmem:[%s417 + $0x8] sm:$0xff] %vm522, %v578
        $region124: #{prm_generator_forward.6} parent=107 // pred_fallthru
          _
        %s581 = sand.u32 %s160, 1
        %s582 = sand.u32 %s160, 1
        %s583 = smul.addr %s582, 16
        %s584 = scalar_lea.vmem [#allocation6], %s583
        %p585 = scmp.lt.s32.totalorder %s23, 1
        %s586 = scalar_select %p585, %s23, 1
        %s587 = smul.addr %s586, 2
        %s588 = smul.addr %s587, 8
        %s589 = scalar_lea.vmem %s6, %s588
        %p590 = scmp.lt.s32.totalorder %s23, 1
        %s591 = scalar_select %p590, %s23, 1
        %s592 = smul.addr %s591, 2
        %s593 = smul.addr %s592, 8
        %s594 = scalar_lea.vmem %s7, %s593
        // Predicated region
        $region125: #{prm_generator_forward.6} parent=107 // pred_check
          %p595 = pneg %p170
        $region126: #{prm_generator_forward.6} parent=107 // pred_check_branch
          %597 = sbr.rel (%p595) target = $region128
        $region127: #{prm_generator_forward.6} parent=107 // pred_region
          %s598 = smul.addr %s23, 8
          %s599 = sadd.s32 %s24, %s598
          %s600 = smul.addr %s599, 8
          %s601 = scalar_lea.vmem %s5, %s600
          // Predicated region
          $region129: #{prm_generator_forward.6} parent=127 // pred_check
            _
          $region130: #{prm_generator_forward.6} parent=127 // pred_check_branch
            %603 = sbr.rel (0) target = $region132
          $region131: #{prm_generator_forward.6} parent=127 // pred_region
            // Predicated region
            $region133: #{prm_generator_forward.6} parent=131 // pred_check
              _
            $region134: #{prm_generator_forward.6} parent=131 // pred_check_branch
              %605 = sbr.rel (0) target = $region136
            $region135: #{prm_generator_forward.6} parent=131 // pred_region
              // Predicated region
              $region148: #{prm_generator_forward.6} parent=135 // pred_check
                _
              $region149: #{prm_generator_forward.6} parent=135 // pred_check_branch
                %623 = sbr.rel (0) target = $region151
              $region150: #{prm_generator_forward.6} parent=135 // pred_region
                loop: start=0, step=1, limit=1
                $region152: #{prm_generator_forward.6} parent=150 // loop_pre_header
                  _
                $region153: #{prm_generator_forward.6} parent=150 // loop_header
                  %s625 = sphi 0, %s629
                  %p626 = scmp.ge.s32.totalorder %s625, 1
                  %s630 = sphi %s584, %s584
                  %s631 = sphi %s601, %s601
                $region154: #{prm_generator_forward.6} parent=150 // loop_header_branch
                  %628 = sbr.rel (%p626) target = $region158
                $region155: #{prm_generator_forward.6} parent=150 // loop_body
                  %v632 = vld [vmem:[%s630] sm:$0xff]
                  %633 = vst [vmem:[%s631] sm:$0xff] %v632
                  %v634 = vld [vmem:[%s630 + $0x8] sm:$0xff]
                  %635 = vst [vmem:[%s631 + $0x20] sm:$0xff] %v634
                $region156: #{prm_generator_forward.6} parent=150 // loop_footer
                  %s629 = sadd.s32 1, %s625
                $region157: #{prm_generator_forward.6} parent=150 // loop_footer_branch
                  %624 = sbr.rel target = $region153
                $region158: #{prm_generator_forward.6} parent=150 // loop_exit
                  _
              $region151: #{prm_generator_forward.6} parent=135 // pred_fallthru
                _
              // Predicated region
              $region159: #{prm_generator_forward.6} parent=135 // pred_check
                _
              $region160: #{prm_generator_forward.6} parent=135 // pred_check_branch
                %637 = sbr.rel target = $region162
              $region161: #{prm_generator_forward.6} parent=135 // pred_region
                _
              $region162: #{prm_generator_forward.6} parent=135 // pred_fallthru
                _
            $region136: #{prm_generator_forward.6} parent=131 // pred_fallthru
              _
            // Predicated region
            $region137: #{prm_generator_forward.6} parent=131 // pred_check
              _
            $region138: #{prm_generator_forward.6} parent=131 // pred_check_branch
              %607 = sbr.rel target = $region140
            $region139: #{prm_generator_forward.6} parent=131 // pred_region
              %s609 = ssub.s32 256, 1
              loop: start=0, step=1, limit=1
              $region141: #{prm_generator_forward.6} parent=139 // loop_pre_header
                _
              $region142: #{prm_generator_forward.6} parent=139 // loop_header
                %s611 = sphi 0, %s615
                %p612 = scmp.ge.s32.totalorder %s611, 1
                %s616 = sphi %s584, %s584
                %s617 = sphi %s601, %s601
              $region143: #{prm_generator_forward.6} parent=139 // loop_header_branch
                %614 = sbr.rel (%p612) target = $region147
              $region144: #{prm_generator_forward.6} parent=139 // loop_body
                %v618 = vld [vmem:[%s616] sm:%s609]
                %619 = vst [vmem:[%s617] sm:%s609] %v618
                %v620 = vld [vmem:[%s616 + $0x8] sm:%s609]
                %621 = vst [vmem:[%s617 + $0x20] sm:%s609] %v620
              $region145: #{prm_generator_forward.6} parent=139 // loop_footer
                %s615 = sadd.s32 1, %s611
              $region146: #{prm_generator_forward.6} parent=139 // loop_footer_branch
                %610 = sbr.rel target = $region142
              $region147: #{prm_generator_forward.6} parent=139 // loop_exit
                _
            $region140: #{prm_generator_forward.6} parent=131 // pred_fallthru
              _
          $region132: #{prm_generator_forward.6} parent=127 // pred_fallthru
            _
          %638 = vnop
        $region128: #{prm_generator_forward.6} parent=107 // pred_fallthru
          _
        // Predicated region
        $region163: #{prm_generator_forward.6} parent=107 // pred_check
          %p639 = pneg %p196
        $region164: #{prm_generator_forward.6} parent=107 // pred_check_branch
          %641 = sbr.rel (%p639) target = $region166
        $region165: #{prm_generator_forward.6} parent=107 // pred_region
          _
        $region166: #{prm_generator_forward.6} parent=107 // pred_fallthru
          _
        // Predicated region
        $region167: #{prm_generator_forward.6} parent=107 // pred_check
          %p642 = pneg %p222
        $region168: #{prm_generator_forward.6} parent=107 // pred_check_branch
          %644 = sbr.rel (%p642) target = $region170
        $region169: #{prm_generator_forward.6} parent=107 // pred_region
          _
        $region170: #{prm_generator_forward.6} parent=107 // pred_fallthru
          _
      $region108: #{prm_generator_forward.6} parent=5 // pred_fallthru
        _
      %p645 = scmp.le.s32.totalorder 2, %s14
      // Predicated region
      $region171: #{prm_generator_forward.6} parent=5 // pred_check
        %p646 = pneg %p645
      $region172: #{prm_generator_forward.6} parent=5 // pred_check_branch
        %648 = sbr.rel (%p646) target = $region174
      $region173: #{prm_generator_forward.6} parent=5 // pred_region
        %s649 = ssub.s32 %s14, 2
        // Predicated region
        $region175: #{prm_generator_forward.6} parent=173 // pred_check
          %p650 = pneg %p176
        $region176: #{prm_generator_forward.6} parent=173 // pred_check_branch
          %652 = sbr.rel (%p650) target = $region178
        $region177: #{prm_generator_forward.6} parent=173 // pred_region
          %s653 = sand.u32 %s161, 1
          %s654 = sand.u32 %s161, 1
          %s655 = smul.addr %s654, 16
          %s656 = scalar_lea.vmem [#allocation6], %s655
        $region178: #{prm_generator_forward.6} parent=173 // pred_fallthru
          _
        // Predicated region
        $region179: #{prm_generator_forward.6} parent=173 // pred_check
          %p657 = pneg %p202
        $region180: #{prm_generator_forward.6} parent=173 // pred_check_branch
          %659 = sbr.rel (%p657) target = $region182
        $region181: #{prm_generator_forward.6} parent=173 // pred_region
          %p660 = scmp.lt.s32.totalorder %s25, 1
          %s661 = scalar_select %p660, %s25, 1
          %s662 = smul.addr %s661, 2
          %s663 = smul.addr %s662, 8
          %s664 = scalar_lea.vmem %s6, %s663
        $region182: #{prm_generator_forward.6} parent=173 // pred_fallthru
          _
        // Predicated region
        $region183: #{prm_generator_forward.6} parent=173 // pred_check
          %p665 = pneg %p228
        $region184: #{prm_generator_forward.6} parent=173 // pred_check_branch
          %667 = sbr.rel (%p665) target = $region186
        $region185: #{prm_generator_forward.6} parent=173 // pred_region
          %p668 = scmp.lt.s32.totalorder %s25, 1
          %s669 = scalar_select %p668, %s25, 1
          %s670 = smul.addr %s669, 2
          %s671 = smul.addr %s670, 8
          %s672 = scalar_lea.vmem %s7, %s671
        $region186: #{prm_generator_forward.6} parent=173 // pred_fallthru
          _
      $region174: #{prm_generator_forward.6} parent=5 // pred_fallthru
        _
    $region6: #{prm_generator_forward.6} parent=1 // loop_footer
      %s18 = sadd.s32 1, %s14
    $region7: #{prm_generator_forward.6} parent=1 // loop_footer_branch
      %13 = sbr.rel target = $region3
    $region8: #{prm_generator_forward.6} parent=1 // loop_exit
      _

// kernel: prm_generator_forward.5
$region0: #{prm_generator_forward.5}
  #allocation0 [shape = 'u32[]', space=smem, size = 0x4, offset = 0x4, fixed_abs, tag = 'smem constant byte address 0x4 - core index']
  #allocation1 [shape = 'u32[72,128]{1,0:T(1,128)}', space=vmem, size = 0x9000, scoped, tag = 'internal scratch']
  %s0 = inlined_call_operand.vmem [shape: f32[2,4,512], index: 0, kind: input, shape index: {}]
  %s1 = inlined_call_operand.vmem [shape: f32[2,4,1], index: 1, kind: input, shape index: {}]
  %s2 = inlined_call_operand.vmem [shape: f32[2,4,1], index: 2, kind: input, shape index: {}]
  %s3 = inlined_call_operand.vmem [shape: f32[6,512], index: 3, kind: input, shape index: {}]
  %s4 = inlined_call_operand.vmem [shape: f32[27,4,4], index: 4, kind: input, shape index: {}]
  %s5 = inlined_call_operand.vmem [shape: f32[4,1], index: 5, kind: input, shape index: {}]
  %s6 = inlined_call_operand.vmem [shape: f32[16,4], index: 6, kind: input, shape index: {}]
  %s7 = inlined_call_operand.vmem [shape: f32[16,1], index: 7, kind: input, shape index: {}]
  %s8 = inlined_call_operand.vmem [shape: f32[2,16,512], index: 8, kind: output, shape index: {}]
  %s9 = sld [smem:[#allocation0]]
  $region65: #{prm_generator_forward.5} parent=0
    _
  %s11 = ssub.s32 1, %s9
  %s12 = scalar_select 0, %s11, %s9
  loop: start=0, step=1, limit=4
  $region2: #{prm_generator_forward.5} parent=0 // loop_pre_header
    _
  $region3: #{prm_generator_forward.5} parent=0 // loop_header
    %s14 = sphi 0, %s18
    %p15 = scmp.ge.s32.totalorder %s14, 4
    %s24 = sphi 0, %s26
    %s27 = sphi 0, %s24
    %s28 = sphi 0, %s27
    %s44 = sphi 0, %s28
    %s50 = sphi 0, %s52
    %s53 = sphi 0, %s50
    %s54 = sphi 0, %s53
    %s70 = sphi 0, %s54
    %s76 = sphi 0, %s78
    %s79 = sphi 0, %s76
    %s80 = sphi 0, %s79
    %s96 = sphi 0, %s80
    %s100 = sphi 0, %s100
    %s102 = sphi 0, %s100
    %s103 = sphi 0, %s102
    %s117 = sphi 0, %s103
    %s121 = sphi 0, %s121
    %s123 = sphi 0, %s121
    %s124 = sphi 0, %s123
    %s138 = sphi 0, %s124
    %s142 = sphi 0, %s142
    %s144 = sphi 0, %s142
    %s145 = sphi 0, %s144
    %s159 = sphi 0, %s145
    %s163 = sphi 0, %s163
    %s165 = sphi 0, %s163
    %s166 = sphi 0, %s165
    %s180 = sphi 0, %s166
    %s184 = sphi 0, %s184
    %s186 = sphi 0, %s184
    %s187 = sphi 0, %s186
    %s201 = sphi 0, %s187
    %s207 = sphi 0, %s209
    %s210 = sphi 0, %s207
    %s211 = sphi 0, %s210
    %s227 = sphi 0, %s211
  $region4: #{prm_generator_forward.5} parent=0 // loop_header_branch
    %17 = sbr.rel (%p15) target = $region8
  $region5: #{prm_generator_forward.5} parent=0 // loop_body
    %s19 = ssub.s32 %s14, 1
    %s20 = ssub.s32 %s14, 2
    %s21 = sadd.s32 %s14, 1
    %s22 = ssub.s32 %s14, %s21
    %p23 = scmp.eq.s32.totalorder %s22, 0
    %s25 = sadd.s32 %s24, 1
    %s26 = scalar_select %p23, %s24, %s25
    %p29 = pneg %p23
    %p30 = scmp.eq.s32.totalorder %s14, 1
    %p31 = por %p29, %p30
    %p32 = scmp.ne.s32.totalorder %s24, %s27
    %p33 = scmp.eq.s32.totalorder %s14, 0
    %p34 = por %p32, %p33
    %p35 = scmp.ne.s32.totalorder %s24, %s27
    %p36 = scmp.eq.s32.totalorder %s19, 1
    %p37 = por %p35, %p36
    %p38 = scmp.ne.s32.totalorder %s27, %s28
    %p39 = scmp.eq.s32.totalorder %s19, 0
    %p40 = por %p38, %p39
    %p41 = scmp.ne.s32.totalorder %s27, %s28
    %p42 = scmp.eq.s32.totalorder %s20, 1
    %p43 = por %p41, %p42
    %p45 = scmp.ne.s32.totalorder %s28, %s44
    %p46 = scmp.eq.s32.totalorder %s20, 0
    %p47 = por %p45, %p46
    %s48 = ssub.s32 %s14, %s21
    %p49 = scmp.eq.s32.totalorder %s48, 0
    %s51 = sadd.s32 %s50, 1
    %s52 = scalar_select %p49, %s50, %s51
    %p55 = pneg %p49
    %p56 = scmp.eq.s32.totalorder %s14, 1
    %p57 = por %p55, %p56
    %p58 = scmp.ne.s32.totalorder %s50, %s53
    %p59 = scmp.eq.s32.totalorder %s14, 0
    %p60 = por %p58, %p59
    %p61 = scmp.ne.s32.totalorder %s50, %s53
    %p62 = scmp.eq.s32.totalorder %s19, 1
    %p63 = por %p61, %p62
    %p64 = scmp.ne.s32.totalorder %s53, %s54
    %p65 = scmp.eq.s32.totalorder %s19, 0
    %p66 = por %p64, %p65
    %p67 = scmp.ne.s32.totalorder %s53, %s54
    %p68 = scmp.eq.s32.totalorder %s20, 1
    %p69 = por %p67, %p68
    %p71 = scmp.ne.s32.totalorder %s54, %s70
    %p72 = scmp.eq.s32.totalorder %s20, 0
    %p73 = por %p71, %p72
    %s74 = ssub.s32 %s14, %s21
    %p75 = scmp.eq.s32.totalorder %s74, 0
    %s77 = sadd.s32 %s76, 1
    %s78 = scalar_select %p75, %s76, %s77
    %p81 = pneg %p75
    %p82 = scmp.eq.s32.totalorder %s14, 1
    %p83 = por %p81, %p82
    %p84 = scmp.ne.s32.totalorder %s76, %s79
    %p85 = scmp.eq.s32.totalorder %s14, 0
    %p86 = por %p84, %p85
    %p87 = scmp.ne.s32.totalorder %s76, %s79
    %p88 = scmp.eq.s32.totalorder %s19, 1
    %p89 = por %p87, %p88
    %p90 = scmp.ne.s32.totalorder %s79, %s80
    %p91 = scmp.eq.s32.totalorder %s19, 0
    %p92 = por %p90, %p91
    %p93 = scmp.ne.s32.totalorder %s79, %s80
    %p94 = scmp.eq.s32.totalorder %s20, 1
    %p95 = por %p93, %p94
    %p97 = scmp.ne.s32.totalorder %s80, %s96
    %p98 = scmp.eq.s32.totalorder %s20, 0
    %p99 = por %p97, %p98
    %s101 = sadd.s32 %s100, 1
    %p104 = scmp.eq.s32.totalorder %s14, 1
    %p105 = scmp.ne.s32.totalorder %s100, %s102
    %p106 = scmp.eq.s32.totalorder %s14, 0
    %p107 = por %p105, %p106
    %p108 = scmp.ne.s32.totalorder %s100, %s102
    %p109 = scmp.eq.s32.totalorder %s19, 1
    %p110 = por %p108, %p109
    %p111 = scmp.ne.s32.totalorder %s102, %s103
    %p112 = scmp.eq.s32.totalorder %s19, 0
    %p113 = por %p111, %p112
    %p114 = scmp.ne.s32.totalorder %s102, %s103
    %p115 = scmp.eq.s32.totalorder %s20, 1
    %p116 = por %p114, %p115
    %p118 = scmp.ne.s32.totalorder %s103, %s117
    %p119 = scmp.eq.s32.totalorder %s20, 0
    %p120 = por %p118, %p119
    %s122 = sadd.s32 %s121, 1
    %p125 = scmp.eq.s32.totalorder %s14, 1
    %p126 = scmp.ne.s32.totalorder %s121, %s123
    %p127 = scmp.eq.s32.totalorder %s14, 0
    %p128 = por %p126, %p127
    %p129 = scmp.ne.s32.totalorder %s121, %s123
    %p130 = scmp.eq.s32.totalorder %s19, 1
    %p131 = por %p129, %p130
    %p132 = scmp.ne.s32.totalorder %s123, %s124
    %p133 = scmp.eq.s32.totalorder %s19, 0
    %p134 = por %p132, %p133
    %p135 = scmp.ne.s32.totalorder %s123, %s124
    %p136 = scmp.eq.s32.totalorder %s20, 1
    %p137 = por %p135, %p136
    %p139 = scmp.ne.s32.totalorder %s124, %s138
    %p140 = scmp.eq.s32.totalorder %s20, 0
    %p141 = por %p139, %p140
    %s143 = sadd.s32 %s142, 1
    %p146 = scmp.eq.s32.totalorder %s14, 1
    %p147 = scmp.ne.s32.totalorder %s142, %s144
    %p148 = scmp.eq.s32.totalorder %s14, 0
    %p149 = por %p147, %p148
    %p150 = scmp.ne.s32.totalorder %s142, %s144
    %p151 = scmp.eq.s32.totalorder %s19, 1
    %p152 = por %p150, %p151
    %p153 = scmp.ne.s32.totalorder %s144, %s145
    %p154 = scmp.eq.s32.totalorder %s19, 0
    %p155 = por %p153, %p154
    %p156 = scmp.ne.s32.totalorder %s144, %s145
    %p157 = scmp.eq.s32.totalorder %s20, 1
    %p158 = por %p156, %p157
    %p160 = scmp.ne.s32.totalorder %s145, %s159
    %p161 = scmp.eq.s32.totalorder %s20, 0
    %p162 = por %p160, %p161
    %s164 = sadd.s32 %s163, 1
    %p167 = scmp.eq.s32.totalorder %s14, 1
    %p168 = scmp.ne.s32.totalorder %s163, %s165
    %p169 = scmp.eq.s32.totalorder %s14, 0
    %p170 = por %p168, %p169
    %p171 = scmp.ne.s32.totalorder %s163, %s165
    %p172 = scmp.eq.s32.totalorder %s19, 1
    %p173 = por %p171, %p172
    %p174 = scmp.ne.s32.totalorder %s165, %s166
    %p175 = scmp.eq.s32.totalorder %s19, 0
    %p176 = por %p174, %p175
    %p177 = scmp.ne.s32.totalorder %s165, %s166
    %p178 = scmp.eq.s32.totalorder %s20, 1
    %p179 = por %p177, %p178
    %p181 = scmp.ne.s32.totalorder %s166, %s180
    %p182 = scmp.eq.s32.totalorder %s20, 0
    %p183 = por %p181, %p182
    %s185 = sadd.s32 %s184, 1
    %p188 = scmp.eq.s32.totalorder %s14, 1
    %p189 = scmp.ne.s32.totalorder %s184, %s186
    %p190 = scmp.eq.s32.totalorder %s14, 0
    %p191 = por %p189, %p190
    %p192 = scmp.ne.s32.totalorder %s184, %s186
    %p193 = scmp.eq.s32.totalorder %s19, 1
    %p194 = por %p192, %p193
    %p195 = scmp.ne.s32.totalorder %s186, %s187
    %p196 = scmp.eq.s32.totalorder %s19, 0
    %p197 = por %p195, %p196
    %p198 = scmp.ne.s32.totalorder %s186, %s187
    %p199 = scmp.eq.s32.totalorder %s20, 1
    %p200 = por %p198, %p199
    %p202 = scmp.ne.s32.totalorder %s187, %s201
    %p203 = scmp.eq.s32.totalorder %s20, 0
    %p204 = por %p202, %p203
    %s205 = ssub.s32 %s14, %s21
    %p206 = scmp.eq.s32.totalorder %s205, 0
    %s208 = sadd.s32 %s207, 1
    %s209 = scalar_select %p206, %s207, %s208
    %p212 = pneg %p206
    %p213 = scmp.eq.s32.totalorder %s14, 1
    %p214 = por %p212, %p213
    %p215 = scmp.ne.s32.totalorder %s207, %s210
    %p216 = scmp.eq.s32.totalorder %s14, 0
    %p217 = por %p215, %p216
    %p218 = scmp.ne.s32.totalorder %s207, %s210
    %p219 = scmp.eq.s32.totalorder %s19, 1
    %p220 = por %p218, %p219
    %p221 = scmp.ne.s32.totalorder %s210, %s211
    %p222 = scmp.eq.s32.totalorder %s19, 0
    %p223 = por %p221, %p222
    %p224 = scmp.ne.s32.totalorder %s210, %s211
    %p225 = scmp.eq.s32.totalorder %s20, 1
    %p226 = por %p224, %p225
    %p228 = scmp.ne.s32.totalorder %s211, %s227
    %p229 = scmp.eq.s32.totalorder %s20, 0
    %p230 = por %p228, %p229
    %p231 = scmp.le.s32.totalorder 1, %s14
    %p232 = scmp.lt.s32.totalorder %s14, 3
    %p233 = pnand %p231, %p232
    %p234 = pneg %p233
    // Predicated region
    $region9: #{prm_generator_forward.5} parent=5 // pred_check
      _
    $region10: #{prm_generator_forward.5} parent=5 // pred_check_branch
      %236 = sbr.rel (%p233) target = $region12
    $region11: #{prm_generator_forward.5} parent=5 // pred_region
      %s237 = ssub.s32 %s14, 1
      // Predicated region
      $region13: #{prm_generator_forward.5} parent=11 // pred_check
        %p238 = pneg %p113
      $region14: #{prm_generator_forward.5} parent=11 // pred_check_branch
        %240 = sbr.rel (%p238) target = $region16
      $region15: #{prm_generator_forward.5} parent=11 // pred_region
        _
      $region16: #{prm_generator_forward.5} parent=11 // pred_fallthru
        _
      // Predicated region
      $region17: #{prm_generator_forward.5} parent=11 // pred_check
        %p241 = pneg %p134
      $region18: #{prm_generator_forward.5} parent=11 // pred_check_branch
        %243 = sbr.rel (%p241) target = $region20
      $region19: #{prm_generator_forward.5} parent=11 // pred_region
        _
      $region20: #{prm_generator_forward.5} parent=11 // pred_fallthru
        _
      // Predicated region
      $region21: #{prm_generator_forward.5} parent=11 // pred_check
        %p244 = pneg %p155
      $region22: #{prm_generator_forward.5} parent=11 // pred_check_branch
        %246 = sbr.rel (%p244) target = $region24
      $region23: #{prm_generator_forward.5} parent=11 // pred_region
        _
      $region24: #{prm_generator_forward.5} parent=11 // pred_fallthru
        _
      // Predicated region
      $region25: #{prm_generator_forward.5} parent=11 // pred_check
        %p247 = pneg %p176
      $region26: #{prm_generator_forward.5} parent=11 // pred_check_branch
        %249 = sbr.rel (%p247) target = $region28
      $region27: #{prm_generator_forward.5} parent=11 // pred_region
        _
      $region28: #{prm_generator_forward.5} parent=11 // pred_fallthru
        _
      // Predicated region
      $region29: #{prm_generator_forward.5} parent=11 // pred_check
        %p250 = pneg %p197
      $region30: #{prm_generator_forward.5} parent=11 // pred_check_branch
        %252 = sbr.rel (%p250) target = $region32
      $region31: #{prm_generator_forward.5} parent=11 // pred_region
        _
      $region32: #{prm_generator_forward.5} parent=11 // pred_fallthru
        _
    $region12: #{prm_generator_forward.5} parent=5 // pred_fallthru
      _
    %p253 = scmp.lt.s32.totalorder %s14, 2
    // Predicated region
    $region33: #{prm_generator_forward.5} parent=5 // pred_check
      %p254 = pneg %p253
    $region34: #{prm_generator_forward.5} parent=5 // pred_check_branch
      %256 = sbr.rel (%p254) target = $region36
    $region35: #{prm_generator_forward.5} parent=5 // pred_region
      // Predicated region
      $region37: #{prm_generator_forward.5} parent=35 // pred_check
        %p257 = pneg %p34
      $region38: #{prm_generator_forward.5} parent=35 // pred_check_branch
        %259 = sbr.rel (%p257) target = $region40
      $region39: #{prm_generator_forward.5} parent=35 // pred_region
        %p260 = scmp.lt.s32.totalorder %s14, 1
        %s261 = scalar_select %p260, %s14, 1
        %s262 = smul.addr %s261, 4
        %s263 = smul.addr %s262, 4
        %s264 = scalar_lea.vmem %s0, %s263
      $region40: #{prm_generator_forward.5} parent=35 // pred_fallthru
        _
      // Predicated region
      $region41: #{prm_generator_forward.5} parent=35 // pred_check
        %p265 = pneg %p60
      $region42: #{prm_generator_forward.5} parent=35 // pred_check_branch
        %267 = sbr.rel (%p265) target = $region44
      $region43: #{prm_generator_forward.5} parent=35 // pred_region
        %p268 = scmp.lt.s32.totalorder %s14, 1
        %s269 = scalar_select %p268, %s14, 1
        %s270 = smul.addr %s269, 4
        %s271 = scalar_lea.vmem %s1, %s270
      $region44: #{prm_generator_forward.5} parent=35 // pred_fallthru
        _
      // Predicated region
      $region45: #{prm_generator_forward.5} parent=35 // pred_check
        %p272 = pneg %p86
      $region46: #{prm_generator_forward.5} parent=35 // pred_check_branch
        %274 = sbr.rel (%p272) target = $region48
      $region47: #{prm_generator_forward.5} parent=35 // pred_region
        %p275 = scmp.lt.s32.totalorder %s14, 1
        %s276 = scalar_select %p275, %s14, 1
        %s277 = smul.addr %s276, 4
        %s278 = scalar_lea.vmem %s2, %s277
      $region48: #{prm_generator_forward.5} parent=35 // pred_fallthru
        _
    $region36: #{prm_generator_forward.5} parent=5 // pred_fallthru
      _
    %p279 = scmp.le.s32.totalorder 1, %s14
    %p280 = scmp.lt.s32.totalorder %s14, 3
    %p281 = pnand %p279, %p280
    %p282 = pneg %p281
    // Predicated region
    $region49: #{prm_generator_forward.5} parent=5 // pred_check
      _
    $region50: #{prm_generator_forward.5} parent=5 // pred_check_branch
      %284 = sbr.rel (%p281) target = $region52
    $region51: #{prm_generator_forward.5} parent=5 // pred_region
      %s285 = ssub.s32 %s14, 1
      %p286 = scmp.lt.s32.totalorder %s19, 1
      %s287 = scalar_select %p286, %s19, 1
      %s288 = smul.addr %s287, 4
      %s289 = smul.addr %s288, 4
      %s290 = scalar_lea.vmem %s0, %s289
      %p291 = pneg %p40
      %p292 = pneg %p37
      %p293 = scmp.lt.s32.totalorder %s19, 1
      %s294 = scalar_select %p293, %s19, 1
      %s295 = smul.addr %s294, 4
      %s296 = scalar_lea.vmem %s1, %s295
      %p297 = pneg %p66
      %p298 = pneg %p63
      %p299 = scmp.lt.s32.totalorder %s19, 1
      %s300 = scalar_select %p299, %s19, 1
      %s301 = smul.addr %s300, 4
      %s302 = scalar_lea.vmem %s2, %s301
      %p303 = pneg %p92
      %p304 = pneg %p89
      %p305 = pneg %p113
      %p306 = pneg %p110
      %p307 = pneg %p134
      %p308 = pneg %p131
      %p309 = pneg %p155
      %p310 = pneg %p152
      %p311 = pneg %p176
      %p312 = pneg %p173
      %p313 = pneg %p197
      %p314 = pneg %p194
      %p315 = pneg %p223
      %p316 = pneg %p220
      %p317 = scmp.lt.s32.totalorder %s19, 1
      %s318 = scalar_select %p317, %s19, 1
      %s319 = smul.addr %s318, 8
      %s320 = smul.addr %s319, 8
      %s321 = scalar_lea.vmem %s8, %s320
      %p322 = scmp.lt.s32.totalorder %s19, 1
      %s323 = scalar_select %p322, %s19, 1
      %s324 = smul.addr %s323, 4
      %s325 = smul.addr %s324, 4
      %s326 = scalar_lea.vmem %s0, %s325
      %p327 = scmp.lt.s32.totalorder %s19, 1
      %s328 = scalar_select %p327, %s19, 1
      %s329 = smul.addr %s328, 4
      %s330 = scalar_lea.vmem %s1, %s329
      %p331 = scmp.lt.s32.totalorder %s19, 1
      %s332 = scalar_select %p331, %s19, 1
      %s333 = smul.addr %s332, 4
      %s334 = scalar_lea.vmem %s2, %s333
      %p335 = scmp.lt.s32.totalorder %s19, 1
      %s336 = scalar_select %p335, %s19, 1
      %s337 = smul.addr %s336, 8
      %s338 = smul.addr %s337, 8
      %s339 = scalar_lea.vmem %s8, %s338
      %v340 = vld [vmem:[%s326] sm:$0xff]
      %v341 = vld [vmem:[%s326 + $0x8] sm:$0xff]
      %v342 = vld [vmem:[%s330] sm:$0xf]
      %344 = vset.pattern.permute.xlu0 0
      %345 = vperm.xlu0 %344, %v342
      %v346 = vpop.permute.xlu0 %345
      %v348 = vunpack.c.l.s4 839922192
      %v349 = vunpack.c.0.s8 %v348
      %v350 = vperm.slane %v346, %v349
      %v352 = vsub.f32 %v340, %v350
      %v353 = vsub.f32 %v341, %v350
      %v354 = vld [vmem:[%s334] sm:$0xf]
      %356 = vset.pattern.permute.xlu0 0
      %357 = vperm.xlu0 %356, %v354
      %v358 = vpop.permute.xlu0 %357
      %v360 = vunpack.c.l.s4 839922192
      %v361 = vunpack.c.0.s8 %v360
      %v362 = vperm.slane %v358, %v361
      %v364 = vmul.f32 %v352, %v362
      %v365 = vmul.f32 %v353, %v362
      %vm366 = vcmp.ge.f32.partialorder %v364, 0.0
      %vm367 = vcmp.ge.f32.partialorder %v365, 0.0
      %v368 = vmul.f32 %v364, 0.2
      %v369 = vmul.f32 %v365, 0.2
      %v370 = vsel %vm366, %v364, %v368
      %v371 = vsel %vm367, %v365, %v369
      %v372 = vld [vmem:[%s3] sm:$0x3f]
      %v373 = vld [vmem:[%s3 + $0x8] sm:$0x3f]
      %v374 = vld [vmem:[%s3 + $0x10] sm:$0x3f]
      %v375 = vld [vmem:[%s3 + $0x18] sm:$0x3f]
      %377 = vst [vmem:[#allocation1] ss:$2 sm:$0xff] %v371
      %v378 = vld.sshfl [vmem:[#allocation1 + $0x8] sm:$0xff pattern:$0x75316420]
      %379 = vrot.lane.b32.xlu0 %v378, 73
      %v380 = vpop.permute.xlu0 %379
      %383 = vst [vmem:[#allocation1] ss:$2 sm:$0xff] %v370
      %s384 = scalar_lea.vmem [#allocation1], 16
      %385 = vst [vmem:[%s384] ss:$2 sm:$0xff] %v371
      %v386 = vld.sshfl [vmem:[#allocation1] sm:$0xff pattern:$0x75316420]
      %v387 = vld.sshfl [vmem:[#allocation1 + $0x8] sm:$0xff pattern:$0x75316420]
      %v388 = vld.sshfl [vmem:[#allocation1 + $0x10] sm:$0xff pattern:$0x75316420]
      %v389 = vld.sshfl [vmem:[#allocation1 + $0x18] sm:$0xff pattern:$0x75316420]
      %390 = vrot.lane.b32.xlu0 %v386, 73
      %v391 = vpop.permute.xlu0 %390
      %392 = vrot.lane.b32.xlu0 %v387, 73
      %v393 = vpop.permute.xlu0 %392
      %394 = vrot.lane.b32.xlu0 %v388, 73
      %v395 = vpop.permute.xlu0 %394
      %396 = vrot.lane.b32.xlu0 %v389, 73
      %v397 = vpop.permute.xlu0 %396
      %vm398 = vcmask 596992
      %v399 = vsel %vm398, %v391, %v393
      %v400 = vsel %vm398, %v393, %v395
      %v401 = vsel %vm398, %v395, %v397
      %v406 = vsel %vm398, %v380, %v391
      %v407 = vperm.slane %v372, 0
      %v408 = vperm.slane %v373, 0
      %v409 = vperm.slane %v374, 0
      %v410 = vperm.slane %v375, 0
      %v411 = vmul.f32 %v406, %v407
      %v412 = vmul.f32 %v399, %v408
      %v413 = vmul.f32 %v400, %v409
      %v414 = vmul.f32 %v401, %v410
      %v415 = vperm.slane %v372, 2
      %v416 = vperm.slane %v373, 2
      %v417 = vperm.slane %v374, 2
      %v418 = vperm.slane %v375, 2
      %v419 = vmul.f32 %v411, %v415
      %v420 = vmul.f32 %v412, %v416
      %v421 = vmul.f32 %v413, %v417
      %v422 = vmul.f32 %v414, %v418
      %v423 = vperm.slane %v372, 4
      %v424 = vperm.slane %v373, 4
      %v425 = vperm.slane %v374, 4
      %v426 = vperm.slane %v375, 4
      %v427 = vmul.f32 %v419, %v423
      %v428 = vmul.f32 %v420, %v424
      %v429 = vmul.f32 %v421, %v425
      %v430 = vmul.f32 %v422, %v426
      %v431 = vld [vmem:[%s4] sm:$0xf]
      %432 = vst [vmem:[#allocation1] ss:$2 sm:$0xff] %v371
      %v433 = vld.sshfl [vmem:[#allocation1 + $0x8] sm:$0xff pattern:$0x75316420]
      %434 = vrot.lane.b32.xlu0 %v433, 72
      %v435 = vpop.permute.xlu0 %434
      %437 = vst [vmem:[#allocation1] ss:$2 sm:$0xff] %v370
      %s438 = scalar_lea.vmem [#allocation1], 16
      %439 = vst [vmem:[%s438] ss:$2 sm:$0xff] %v371
      %v440 = vld.sshfl [vmem:[#allocation1] sm:$0xff pattern:$0x75316420]
      %v441 = vld.sshfl [vmem:[#allocation1 + $0x8] sm:$0xff pattern:$0x75316420]
      %v442 = vld.sshfl [vmem:[#allocation1 + $0x10] sm:$0xff pattern:$0x75316420]
      %v443 = vld.sshfl [vmem:[#allocation1 + $0x18] sm:$0xff pattern:$0x75316420]
      %444 = vrot.lane.b32.xlu0 %v440, 72
      %v445 = vpop.permute.xlu0 %444
      %446 = vrot.lane.b32.xlu0 %v441, 72
      %v447 = vpop.permute.xlu0 %446
      %448 = vrot.lane.b32.xlu0 %v442, 72
      %v449 = vpop.permute.xlu0 %448
      %450 = vrot.lane.b32.xlu0 %v443, 72
      %v451 = vpop.permute.xlu0 %450
      %vm452 = vcmask 588800
      %v453 = vsel %vm452, %v445, %v447
      %v454 = vsel %vm452, %v447, %v449
      %v455 = vsel %vm452, %v449, %v451
      %v460 = vsel %vm452, %v435, %v445
      %v461 = vmul.f32 %v460, %v407
      %v462 = vmul.f32 %v453, %v408
      %v463 = vmul.f32 %v454, %v409
      %v464 = vmul.f32 %v455, %v410
      %v465 = vmul.f32 %v461, %v415
      %v466 = vmul.f32 %v462, %v416
      %v467 = vmul.f32 %v463, %v417
      %v468 = vmul.f32 %v464, %v418
      %s469 = scalar_lea.vmem %s4, 4
      %v470 = vld [vmem:[%s469] sm:$0xf]
      %vm471 = vcmask 31744
      %v473 = vsel %vm471, %v470, 0
      %vm475 = vcmask 1043456
      %v477 = vsel %vm475, %v465, 0
      %v480 = vsel %vm475, %v466, 0
      %v483 = vsel %vm475, %v467, 0
      %v486 = vsel %vm475, %v468, 0
      %488 = vmatpush.msra.mxu0 0.0
      %489 = vmatpush.msra.mxu0 0.0
      %490 = vmatpush.msra.mxu0 0.0
      %491 = vmatpush.msra.mxu0 0.0
      %492 = vmatpush.msra.mxu0 0.0
      %493 = vmatpush.msra.mxu0 0.0
      %494 = vmatpush.msra.mxu0 0.0
      %495 = vmatpush.msra.mxu0 0.0
      %496 = vmatpush.msra.mxu0 0.0
      %497 = vmatpush.msra.mxu0 0.0
      %498 = vmatpush.msra.mxu0 0.0
      %499 = vmatpush.msra.mxu0 0.0
      %500 = vmatpush.msra.mxu0 0.0
      %501 = vmatpush.msra.mxu0 0.0
      %502 = vmatpush.msra.mxu0 0.0
      %503 = vmatpush.msra.mxu0 %v477
      %504 = vmatmul.f32.gmra.mxu0 %v473
      %v505 = vpop.f32.mrf.mxu0
      %v506 = vadd.f32 0.0, %v505
      %507 = vdwg.mxu0
      %508 = vmatpush.msra.mxu0 0.0
      %509 = vmatpush.msra.mxu0 0.0
      %510 = vmatpush.msra.mxu0 0.0
      %511 = vmatpush.msra.mxu0 0.0
      %512 = vmatpush.msra.mxu0 0.0
      %513 = vmatpush.msra.mxu0 0.0
      %514 = vmatpush.msra.mxu0 0.0
      %515 = vmatpush.msra.mxu0 0.0
      %516 = vmatpush.msra.mxu0 0.0
      %517 = vmatpush.msra.mxu0 0.0
      %518 = vmatpush.msra.mxu0 0.0
      %519 = vmatpush.msra.mxu0 0.0
      %520 = vmatpush.msra.mxu0 0.0
      %521 = vmatpush.msra.mxu0 0.0
      %522 = vmatpush.msra.mxu0 0.0
      %523 = vmatpush.msra.mxu0 %v480
      %524 = vmatmul.f32.gmra.mxu0 %v473
      %v525 = vpop.f32.mrf.mxu0
      %v526 = vadd.f32 0.0, %v525
      %527 = vdwg.mxu0
      %528 = vmatpush.msra.mxu0 0.0
      %529 = vmatpush.msra.mxu0 0.0
      %530 = vmatpush.msra.mxu0 0.0
      %531 = vmatpush.msra.mxu0 0.0
      %532 = vmatpush.msra.mxu0 0.0
      %533 = vmatpush.msra.mxu0 0.0
      %534 = vmatpush.msra.mxu0 0.0
      %535 = vmatpush.msra.mxu0 0.0
      %536 = vmatpush.msra.mxu0 0.0
      %537 = vmatpush.msra.mxu0 0.0
      %538 = vmatpush.msra.mxu0 0.0
      %539 = vmatpush.msra.mxu0 0.0
      %540 = vmatpush.msra.mxu0 0.0
      %541 = vmatpush.msra.mxu0 0.0
      %542 = vmatpush.msra.mxu0 0.0
      %543 = vmatpush.msra.mxu0 %v483
      %544 = vmatmul.f32.gmra.mxu0 %v473
      %v545 = vpop.f32.mrf.mxu0
      %v546 = vadd.f32 0.0, %v545
      %547 = vdwg.mxu0
      %548 = vmatpush.msra.mxu0 0.0
      %549 = vmatpush.msra.mxu0 0.0
      %550 = vmatpush.msra.mxu0 0.0
      %551 = vmatpush.msra.mxu0 0.0
      %552 = vmatpush.msra.mxu0 0.0
      %553 = vmatpush.msra.mxu0 0.0
      %554 = vmatpush.msra.mxu0 0.0
      %555 = vmatpush.msra.mxu0 0.0
      %556 = vmatpush.msra.mxu0 0.0
      %557 = vmatpush.msra.mxu0 0.0
      %558 = vmatpush.msra.mxu0 0.0
      %559 = vmatpush.msra.mxu0 0.0
      %560 = vmatpush.msra.mxu0 0.0
      %561 = vmatpush.msra.mxu0 0.0
      %562 = vmatpush.msra.mxu0 0.0
      %563 = vmatpush.msra.mxu0 %v486
      %564 = vmatmul.f32.gmra.mxu0 %v473
      %v565 = vpop.f32.mrf.mxu0
      %v566 = vadd.f32 0.0, %v565
      %567 = vdwg.mxu0
      %v569 = vsel %vm471, %v431, 0
      %v572 = vsel %vm475, %v427, 0
      %v575 = vsel %vm475, %v428, 0
      %v578 = vsel %vm475, %v429, 0
      %v581 = vsel %vm475, %v430, 0
      %583 = vmatpush.msra.mxu0 0.0
      %584 = vmatpush.msra.mxu0 0.0
      %585 = vmatpush.msra.mxu0 0.0
      %586 = vmatpush.msra.mxu0 0.0
      %587 = vmatpush.msra.mxu0 0.0
      %588 = vmatpush.msra.mxu0 0.0
      %589 = vmatpush.msra.mxu0 0.0
      %590 = vmatpush.msra.mxu0 0.0
      %591 = vmatpush.msra.mxu0 0.0
      %592 = vmatpush.msra.mxu0 0.0
      %593 = vmatpush.msra.mxu0 0.0
      %594 = vmatpush.msra.mxu0 0.0
      %595 = vmatpush.msra.mxu0 0.0
      %596 = vmatpush.msra.mxu0 0.0
      %597 = vmatpush.msra.mxu0 0.0
      %598 = vmatpush.msra.mxu0 %v572
      %599 = vmatmul.f32.gmra.mxu0 %v569
      %v600 = vpop.f32.mrf.mxu0
      %v601 = vadd.f32 %v506, %v600
      %602 = vdwg.mxu0
      %603 = vmatpush.msra.mxu0 0.0
      %604 = vmatpush.msra.mxu0 0.0
      %605 = vmatpush.msra.mxu0 0.0
      %606 = vmatpush.msra.mxu0 0.0
      %607 = vmatpush.msra.mxu0 0.0
      %608 = vmatpush.msra.mxu0 0.0
      %609 = vmatpush.msra.mxu0 0.0
      %610 = vmatpush.msra.mxu0 0.0
      %611 = vmatpush.msra.mxu0 0.0
      %612 = vmatpush.msra.mxu0 0.0
      %613 = vmatpush.msra.mxu0 0.0
      %614 = vmatpush.msra.mxu0 0.0
      %615 = vmatpush.msra.mxu0 0.0
      %616 = vmatpush.msra.mxu0 0.0
      %617 = vmatpush.msra.mxu0 0.0
      %618 = vmatpush.msra.mxu0 %v575
      %619 = vmatmul.f32.gmra.mxu0 %v569
      %v620 = vpop.f32.mrf.mxu0
      %v621 = vadd.f32 %v526, %v620
      %622 = vdwg.mxu0
      %623 = vmatpush.msra.mxu0 0.0
      %624 = vmatpush.msra.mxu0 0.0
      %625 = vmatpush.msra.mxu0 0.0
      %626 = vmatpush.msra.mxu0 0.0
      %627 = vmatpush.msra.mxu0 0.0
      %628 = vmatpush.msra.mxu0 0.0
      %629 = vmatpush.msra.mxu0 0.0
      %630 = vmatpush.msra.mxu0 0.0
      %631 = vmatpush.msra.mxu0 0.0
      %632 = vmatpush.msra.mxu0 0.0
      %633 = vmatpush.msra.mxu0 0.0
      %634 = vmatpush.msra.mxu0 0.0
      %635 = vmatpush.msra.mxu0 0.0
      %636 = vmatpush.msra.mxu0 0.0
      %637 = vmatpush.msra.mxu0 0.0
      %638 = vmatpush.msra.mxu0 %v578
      %639 = vmatmul.f32.gmra.mxu0 %v569
      %v640 = vpop.f32.mrf.mxu0
      %v641 = vadd.f32 %v546, %v640
      %642 = vdwg.mxu0
      %643 = vmatpush.msra.mxu0 0.0
      %644 = vmatpush.msra.mxu0 0.0
      %645 = vmatpush.msra.mxu0 0.0
      %646 = vmatpush.msra.mxu0 0.0
      %647 = vmatpush.msra.mxu0 0.0
      %648 = vmatpush.msra.mxu0 0.0
      %649 = vmatpush.msra.mxu0 0.0
      %650 = vmatpush.msra.mxu0 0.0
      %651 = vmatpush.msra.mxu0 0.0
      %652 = vmatpush.msra.mxu0 0.0
      %653 = vmatpush.msra.mxu0 0.0
      %654 = vmatpush.msra.mxu0 0.0
      %655 = vmatpush.msra.mxu0 0.0
      %656 = vmatpush.msra.mxu0 0.0
      %657 = vmatpush.msra.mxu0 0.0
      %658 = vmatpush.msra.mxu0 %v581
      %659 = vmatmul.f32.gmra.mxu0 %v569
      %v660 = vpop.f32.mrf.mxu0
      %v661 = vadd.f32 %v566, %v660
      %662 = vdwg.mxu0
      %663 = vst [vmem:[#allocation1] ss:$2 sm:$0xff] %v371
      %v664 = vld.sshfl [vmem:[#allocation1 + $0x8] sm:$0xff pattern:$0x75316420]
      %665 = vrot.lane.b32.xlu0 %v664, 71
      %v666 = vpop.permute.xlu0 %665
      %668 = vst [vmem:[#allocation1] ss:$2 sm:$0xff] %v370
      %s669 = scalar_lea.vmem [#allocation1], 16
      %670 = vst [vmem:[%s669] ss:$2 sm:$0xff] %v371
      %v671 = vld.sshfl [vmem:[#allocation1] sm:$0xff pattern:$0x75316420]
      %v672 = vld.sshfl [vmem:[#allocation1 + $0x8] sm:$0xff pattern:$0x75316420]
      %v673 = vld.sshfl [vmem:[#allocation1 + $0x10] sm:$0xff pattern:$0x75316420]
      %v674 = vld.sshfl [vmem:[#allocation1 + $0x18] sm:$0xff pattern:$0x75316420]
      %675 = vrot.lane.b32.xlu0 %v671, 71
      %v676 = vpop.permute.xlu0 %675
      %677 = vrot.lane.b32.xlu0 %v672, 71
      %v678 = vpop.permute.xlu0 %677
      %679 = vrot.lane.b32.xlu0 %v673, 71
      %v680 = vpop.permute.xlu0 %679
      %681 = vrot.lane.b32.xlu0 %v674, 71
      %v682 = vpop.permute.xlu0 %681
      %vm683 = vcmask 580608
      %v684 = vsel %vm683, %v676, %v678
      %v685 = vsel %vm683, %v678, %v680
      %v686 = vsel %vm683, %v680, %v682
      %v691 = vsel %vm683, %v666, %v676
      %v692 = vmul.f32 %v691, %v407
      %v693 = vmul.f32 %v684, %v408
      %v694 = vmul.f32 %v685, %v409
      %v695 = vmul.f32 %v686, %v410
      %v696 = vmul.f32 %v692, %v415
      %v697 = vmul.f32 %v693, %v416
      %v698 = vmul.f32 %v694, %v417
      %v699 = vmul.f32 %v695, %v418
      %v700 = vperm.slane %v372, 5
      %v701 = vperm.slane %v373, 5
      %v702 = vperm.slane %v374, 5
      %v703 = vperm.slane %v375, 5
      %v704 = vmul.f32 %v696, %v700
      %v705 = vmul.f32 %v697, %v701
      %v706 = vmul.f32 %v698, %v702
      %v707 = vmul.f32 %v699, %v703
      %s708 = scalar_lea.vmem %s4, 8
      %v709 = vld [vmem:[%s708] sm:$0xf]
      %v711 = vsel %vm471, %v709, 0
      %v714 = vsel %vm475, %v704, 0
      %v717 = vsel %vm475, %v705, 0
      %v720 = vsel %vm475, %v706, 0
      %v723 = vsel %vm475, %v707, 0
      %725 = vmatpush.msra.mxu0 0.0
      %726 = vmatpush.msra.mxu0 0.0
      %727 = vmatpush.msra.mxu0 0.0
      %728 = vmatpush.msra.mxu0 0.0
      %729 = vmatpush.msra.mxu0 0.0
      %730 = vmatpush.msra.mxu0 0.0
      %731 = vmatpush.msra.mxu0 0.0
      %732 = vmatpush.msra.mxu0 0.0
      %733 = vmatpush.msra.mxu0 0.0
      %734 = vmatpush.msra.mxu0 0.0
      %735 = vmatpush.msra.mxu0 0.0
      %736 = vmatpush.msra.mxu0 0.0
      %737 = vmatpush.msra.mxu0 0.0
      %738 = vmatpush.msra.mxu0 0.0
      %739 = vmatpush.msra.mxu0 0.0
      %740 = vmatpush.msra.mxu0 %v714
      %741 = vmatmul.f32.gmra.mxu0 %v711
      %v742 = vpop.f32.mrf.mxu0
      %v743 = vadd.f32 0.0, %v742
      %744 = vdwg.mxu0
      %745 = vmatpush.msra.mxu0 0.0
      %746 = vmatpush.msra.mxu0 0.0
      %747 = vmatpush.msra.mxu0 0.0
      %748 = vmatpush.msra.mxu0 0.0
      %749 = vmatpush.msra.mxu0 0.0
      %750 = vmatpush.msra.mxu0 0.0
      %751 = vmatpush.msra.mxu0 0.0
      %752 = vmatpush.msra.mxu0 0.0
      %753 = vmatpush.msra.mxu0 0.0
      %754 = vmatpush.msra.mxu0 0.0
      %755 = vmatpush.msra.mxu0 0.0
      %756 = vmatpush.msra.mxu0 0.0
      %757 = vmatpush.msra.mxu0 0.0
      %758 = vmatpush.msra.mxu0 0.0
      %759 = vmatpush.msra.mxu0 0.0
      %760 = vmatpush.msra.mxu0 %v717
      %761 = vmatmul.f32.gmra.mxu0 %v711
      %v762 = vpop.f32.mrf.mxu0
      %v763 = vadd.f32 0.0, %v762
      %764 = vdwg.mxu0
      %765 = vmatpush.msra.mxu0 0.0
      %766 = vmatpush.msra.mxu0 0.0
      %767 = vmatpush.msra.mxu0 0.0
      %768 = vmatpush.msra.mxu0 0.0
      %769 = vmatpush.msra.mxu0 0.0
      %770 = vmatpush.msra.mxu0 0.0
      %771 = vmatpush.msra.mxu0 0.0
      %772 = vmatpush.msra.mxu0 0.0
      %773 = vmatpush.msra.mxu0 0.0
      %774 = vmatpush.msra.mxu0 0.0
      %775 = vmatpush.msra.mxu0 0.0
      %776 = vmatpush.msra.mxu0 0.0
      %777 = vmatpush.msra.mxu0 0.0
      %778 = vmatpush.msra.mxu0 0.0
      %779 = vmatpush.msra.mxu0 0.0
      %780 = vmatpush.msra.mxu0 %v720
      %781 = vmatmul.f32.gmra.mxu0 %v711
      %v782 = vpop.f32.mrf.mxu0
      %v783 = vadd.f32 0.0, %v782
      %784 = vdwg.mxu0
      %785 = vmatpush.msra.mxu0 0.0
      %786 = vmatpush.msra.mxu0 0.0
      %787 = vmatpush.msra.mxu0 0.0
      %788 = vmatpush.msra.mxu0 0.0
      %789 = vmatpush.msra.mxu0 0.0
      %790 = vmatpush.msra.mxu0 0.0
      %791 = vmatpush.msra.mxu0 0.0
      %792 = vmatpush.msra.mxu0 0.0
      %793 = vmatpush.msra.mxu0 0.0
      %794 = vmatpush.msra.mxu0 0.0
      %795 = vmatpush.msra.mxu0 0.0
      %796 = vmatpush.msra.mxu0 0.0
      %797 = vmatpush.msra.mxu0 0.0
      %798 = vmatpush.msra.mxu0 0.0
      %799 = vmatpush.msra.mxu0 0.0
      %800 = vmatpush.msra.mxu0 %v723
      %801 = vmatmul.f32.gmra.mxu0 %v711
      %v802 = vpop.f32.mrf.mxu0
      %v803 = vadd.f32 0.0, %v802
      %804 = vdwg.mxu0
      %v805 = vadd.f32 %v601, %v743
      %v806 = vadd.f32 %v621, %v763
      %v807 = vadd.f32 %v641, %v783
      %v808 = vadd.f32 %v661, %v803
      %809 = vst [vmem:[#allocation1] ss:$2 sm:$0xff] %v371
      %v810 = vld.sshfl [vmem:[#allocation1 + $0x8] sm:$0xff pattern:$0x75316420]
      %811 = vrot.lane.b32.xlu0 %v810, 65
      %v812 = vpop.permute.xlu0 %811
      %814 = vst [vmem:[#allocation1] ss:$2 sm:$0xff] %v370
      %s815 = scalar_lea.vmem [#allocation1], 16
      %816 = vst [vmem:[%s815] ss:$2 sm:$0xff] %v371
      %v817 = vld.sshfl [vmem:[#allocation1] sm:$0xff pattern:$0x75316420]
      %v818 = vld.sshfl [vmem:[#allocation1 + $0x8] sm:$0xff pattern:$0x75316420]
      %v819 = vld.sshfl [vmem:[#allocation1 + $0x10] sm:$0xff pattern:$0x75316420]
      %v820 = vld.sshfl [vmem:[#allocation1 + $0x18] sm:$0xff pattern:$0x75316420]
      %821 = vrot.lane.b32.xlu0 %v817, 65
      %v822 = vpop.permute.xlu0 %821
      %823 = vrot.lane.b32.xlu0 %v818, 65
      %v824 = vpop.permute.xlu0 %823
      %825 = vrot.lane.b32.xlu0 %v819, 65
      %v826 = vpop.permute.xlu0 %825
      %827 = vrot.lane.b32.xlu0 %v820, 65
      %v828 = vpop.permute.xlu0 %827
      %vm829 = vcmask 531456
      %v830 = vsel %vm829, %v822, %v824
      %v831 = vsel %vm829, %v824, %v826
      %v832 = vsel %vm829, %v826, %v828
      %v837 = vsel %vm829, %v812, %v822
      %v838 = vmul.f32 %v837, %v407
      %v839 = vmul.f32 %v830, %v408
      %v840 = vmul.f32 %v831, %v409
      %v841 = vmul.f32 %v832, %v410
      %v842 = vmul.f32 %v838, %v423
      %v843 = vmul.f32 %v839, %v424
      %v844 = vmul.f32 %v840, %v425
      %v845 = vmul.f32 %v841, %v426
      %s846 = scalar_lea.vmem %s4, 12
      %v847 = vld [vmem:[%s846] sm:$0xf]
      %v849 = vsel %vm471, %v847, 0
      %v852 = vsel %vm475, %v842, 0
      %v855 = vsel %vm475, %v843, 0
      %v858 = vsel %vm475, %v844, 0
      %v861 = vsel %vm475, %v845, 0
      %863 = vmatpush.msra.mxu0 0.0
      %864 = vmatpush.msra.mxu0 0.0
      %865 = vmatpush.msra.mxu0 0.0
      %866 = vmatpush.msra.mxu0 0.0
      %867 = vmatpush.msra.mxu0 0.0
      %868 = vmatpush.msra.mxu0 0.0
      %869 = vmatpush.msra.mxu0 0.0
      %870 = vmatpush.msra.mxu0 0.0
      %871 = vmatpush.msra.mxu0 0.0
      %872 = vmatpush.msra.mxu0 0.0
      %873 = vmatpush.msra.mxu0 0.0
      %874 = vmatpush.msra.mxu0 0.0
      %875 = vmatpush.msra.mxu0 0.0
      %876 = vmatpush.msra.mxu0 0.0
      %877 = vmatpush.msra.mxu0 0.0
      %878 = vmatpush.msra.mxu0 %v852
      %879 = vmatmul.f32.gmra.mxu0 %v849
      %v880 = vpop.f32.mrf.mxu0
      %v881 = vadd.f32 0.0, %v880
      %882 = vdwg.mxu0
      %883 = vmatpush.msra.mxu0 0.0
      %884 = vmatpush.msra.mxu0 0.0
      %885 = vmatpush.msra.mxu0 0.0
      %886 = vmatpush.msra.mxu0 0.0
      %887 = vmatpush.msra.mxu0 0.0
      %888 = vmatpush.msra.mxu0 0.0
      %889 = vmatpush.msra.mxu0 0.0
      %890 = vmatpush.msra.mxu0 0.0
      %891 = vmatpush.msra.mxu0 0.0
      %892 = vmatpush.msra.mxu0 0.0
      %893 = vmatpush.msra.mxu0 0.0
      %894 = vmatpush.msra.mxu0 0.0
      %895 = vmatpush.msra.mxu0 0.0
      %896 = vmatpush.msra.mxu0 0.0
      %897 = vmatpush.msra.mxu0 0.0
      %898 = vmatpush.msra.mxu0 %v855
      %899 = vmatmul.f32.gmra.mxu0 %v849
      %v900 = vpop.f32.mrf.mxu0
      %v901 = vadd.f32 0.0, %v900
      %902 = vdwg.mxu0
      %903 = vmatpush.msra.mxu0 0.0
      %904 = vmatpush.msra.mxu0 0.0
      %905 = vmatpush.msra.mxu0 0.0
      %906 = vmatpush.msra.mxu0 0.0
      %907 = vmatpush.msra.mxu0 0.0
      %908 = vmatpush.msra.mxu0 0.0
      %909 = vmatpush.msra.mxu0 0.0
      %910 = vmatpush.msra.mxu0 0.0
      %911 = vmatpush.msra.mxu0 0.0
      %912 = vmatpush.msra.mxu0 0.0
      %913 = vmatpush.msra.mxu0 0.0
      %914 = vmatpush.msra.mxu0 0.0
      %915 = vmatpush.msra.mxu0 0.0
      %916 = vmatpush.msra.mxu0 0.0
      %917 = vmatpush.msra.mxu0 0.0
      %918 = vmatpush.msra.mxu0 %v858
      %919 = vmatmul.f32.gmra.mxu0 %v849
      %v920 = vpop.f32.mrf.mxu0
      %v921 = vadd.f32 0.0, %v920
      %922 = vdwg.mxu0
      %923 = vmatpush.msra.mxu0 0.0
      %924 = vmatpush.msra.mxu0 0.0
      %925 = vmatpush.msra.mxu0 0.0
      %926 = vmatpush.msra.mxu0 0.0
      %927 = vmatpush.msra.mxu0 0.0
      %928 = vmatpush.msra.mxu0 0.0
      %929 = vmatpush.msra.mxu0 0.0
      %930 = vmatpush.msra.mxu0 0.0
      %931 = vmatpush.msra.mxu0 0.0
      %932 = vmatpush.msra.mxu0 0.0
      %933 = vmatpush.msra.mxu0 0.0
      %934 = vmatpush.msra.mxu0 0.0
      %935 = vmatpush.msra.mxu0 0.0
      %936 = vmatpush.msra.mxu0 0.0
      %937 = vmatpush.msra.mxu0 0.0
      %938 = vmatpush.msra.mxu0 %v861
      %939 = vmatmul.f32.gmra.mxu0 %v849
      %v940 = vpop.f32.mrf.mxu0
      %v941 = vadd.f32 0.0, %v940
      %942 = vdwg.mxu0
      %v943 = vadd.f32 %v805, %v881
      %v944 = vadd.f32 %v806, %v901
      %v945 = vadd.f32 %v807, %v921
      %v946 = vadd.f32 %v808, %v941
      %947 = vst [vmem:[#allocation1] ss:$2 sm:$0xff] %v371
      %v948 = vld.sshfl [vmem:[#allocation1 + $0x8] sm:$0xff pattern:$0x75316420]
      %949 = vrot.lane.b32.xlu0 %v948, 64
      %v950 = vpop.permute.xlu0 %949
      %952 = vst [vmem:[#allocation1] ss:$2 sm:$0xff] %v370
      %s953 = scalar_lea.vmem [#allocation1], 16
      %954 = vst [vmem:[%s953] ss:$2 sm:$0xff] %v371
      %v955 = vld.sshfl [vmem:[#allocation1] sm:$0xff pattern:$0x75316420]
      %v956 = vld.sshfl [vmem:[#allocation1 + $0x8] sm:$0xff pattern:$0x75316420]
      %v957 = vld.sshfl [vmem:[#allocation1 + $0x10] sm:$0xff pattern:$0x75316420]
      %v958 = vld.sshfl [vmem:[#allocation1 + $0x18] sm:$0xff pattern:$0x75316420]
      %959 = vrot.lane.b32.xlu0 %v955, 64
      %v960 = vpop.permute.xlu0 %959
      %961 = vrot.lane.b32.xlu0 %v956, 64
      %v962 = vpop.permute.xlu0 %961
      %963 = vrot.lane.b32.xlu0 %v957, 64
      %v964 = vpop.permute.xlu0 %963
      %965 = vrot.lane.b32.xlu0 %v958, 64
      %v966 = vpop.permute.xlu0 %965
      %vm967 = vcmask 523264
      %v968 = vsel %vm967, %v960, %v962
      %v969 = vsel %vm967, %v962, %v964
      %v970 = vsel %vm967, %v964, %v966
      %v975 = vsel %vm967, %v950, %v960
      %v976 = vmul.f32 %v975, %v407
      %v977 = vmul.f32 %v968, %v408
      %v978 = vmul.f32 %v969, %v409
      %v979 = vmul.f32 %v970, %v410
      %s980 = scalar_lea.vmem %s4, 16
      %v981 = vld [vmem:[%s980] sm:$0xf]
      %v983 = vsel %vm471, %v981, 0
      %v986 = vsel %vm475, %v976, 0
      %v989 = vsel %vm475, %v977, 0
      %v992 = vsel %vm475, %v978, 0
      %v995 = vsel %vm475, %v979, 0
      %997 = vmatpush.msra.mxu0 0.0
      %998 = vmatpush.msra.mxu0 0.0
      %999 = vmatpush.msra.mxu0 0.0
      %1000 = vmatpush.msra.mxu0 0.0
      %1001 = vmatpush.msra.mxu0 0.0
      %1002 = vmatpush.msra.mxu0 0.0
      %1003 = vmatpush.msra.mxu0 0.0
      %1004 = vmatpush.msra.mxu0 0.0
      %1005 = vmatpush.msra.mxu0 0.0
      %1006 = vmatpush.msra.mxu0 0.0
      %1007 = vmatpush.msra.mxu0 0.0
      %1008 = vmatpush.msra.mxu0 0.0
      %1009 = vmatpush.msra.mxu0 0.0
      %1010 = vmatpush.msra.mxu0 0.0
      %1011 = vmatpush.msra.mxu0 0.0
      %1012 = vmatpush.msra.mxu0 %v986
      %1013 = vmatmul.f32.gmra.mxu0 %v983
      %v1014 = vpop.f32.mrf.mxu0
      %v1015 = vadd.f32 0.0, %v1014
      %1016 = vdwg.mxu0
      %1017 = vmatpush.msra.mxu0 0.0
      %1018 = vmatpush.msra.mxu0 0.0
      %1019 = vmatpush.msra.mxu0 0.0
      %1020 = vmatpush.msra.mxu0 0.0
      %1021 = vmatpush.msra.mxu0 0.0
      %1022 = vmatpush.msra.mxu0 0.0
      %1023 = vmatpush.msra.mxu0 0.0
      %1024 = vmatpush.msra.mxu0 0.0
      %1025 = vmatpush.msra.mxu0 0.0
      %1026 = vmatpush.msra.mxu0 0.0
      %1027 = vmatpush.msra.mxu0 0.0
      %1028 = vmatpush.msra.mxu0 0.0
      %1029 = vmatpush.msra.mxu0 0.0
      %1030 = vmatpush.msra.mxu0 0.0
      %1031 = vmatpush.msra.mxu0 0.0
      %1032 = vmatpush.msra.mxu0 %v989
      %1033 = vmatmul.f32.gmra.mxu0 %v983
      %v1034 = vpop.f32.mrf.mxu0
      %v1035 = vadd.f32 0.0, %v1034
      %1036 = vdwg.mxu0
      %1037 = vmatpush.msra.mxu0 0.0
      %1038 = vmatpush.msra.mxu0 0.0
      %1039 = vmatpush.msra.mxu0 0.0
      %1040 = vmatpush.msra.mxu0 0.0
      %1041 = vmatpush.msra.mxu0 0.0
      %1042 = vmatpush.msra.mxu0 0.0
      %1043 = vmatpush.msra.mxu0 0.0
      %1044 = vmatpush.msra.mxu0 0.0
      %1045 = vmatpush.msra.mxu0 0.0
      %1046 = vmatpush.msra.mxu0 0.0
      %1047 = vmatpush.msra.mxu0 0.0
      %1048 = vmatpush.msra.mxu0 0.0
      %1049 = vmatpush.msra.mxu0 0.0
      %1050 = vmatpush.msra.mxu0 0.0
      %1051 = vmatpush.msra.mxu0 0.0
      %1052 = vmatpush.msra.mxu0 %v992
      %1053 = vmatmul.f32.gmra.mxu0 %v983
      %v1054 = vpop.f32.mrf.mxu0
      %v1055 = vadd.f32 0.0, %v1054
      %1056 = vdwg.mxu0
      %1057 = vmatpush.msra.mxu0 0.0
      %1058 = vmatpush.msra.mxu0 0.0
      %1059 = vmatpush.msra.mxu0 0.0
      %1060 = vmatpush.msra.mxu0 0.0
      %1061 = vmatpush.msra.mxu0 0.0
      %1062 = vmatpush.msra.mxu0 0.0
      %1063 = vmatpush.msra.mxu0 0.0
      %1064 = vmatpush.msra.mxu0 0.0
      %1065 = vmatpush.msra.mxu0 0.0
      %1066 = vmatpush.msra.mxu0 0.0
      %1067 = vmatpush.msra.mxu0 0.0
      %1068 = vmatpush.msra.mxu0 0.0
      %1069 = vmatpush.msra.mxu0 0.0
      %1070 = vmatpush.msra.mxu0 0.0
      %1071 = vmatpush.msra.mxu0 0.0
      %1072 = vmatpush.msra.mxu0 %v995
      %1073 = vmatmul.f32.gmra.mxu0 %v983
      %v1074 = vpop.f32.mrf.mxu0
      %v1075 = vadd.f32 0.0, %v1074
      %1076 = vdwg.mxu0
      %v1077 = vadd.f32 %v943, %v1015
      %v1078 = vadd.f32 %v944, %v1035
      %v1079 = vadd.f32 %v945, %v1055
      %v1080 = vadd.f32 %v946, %v1075
      %1081 = vst [vmem:[#allocation1] ss:$2 sm:$0xff] %v371
      %v1082 = vld.sshfl [vmem:[#allocation1 + $0x8] sm:$0xff pattern:$0x75316420]
      %1083 = vrot.lane.b32.xlu0 %v1082, 63
      %v1084 = vpop.permute.xlu0 %1083
      %1086 = vst [vmem:[#allocation1] ss:$2 sm:$0xff] %v370
      %s1087 = scalar_lea.vmem [#allocation1], 16
      %1088 = vst [vmem:[%s1087] ss:$2 sm:$0xff] %v371
      %v1089 = vld.sshfl [vmem:[#allocation1] sm:$0xff pattern:$0x75316420]
      %v1090 = vld.sshfl [vmem:[#allocation1 + $0x8] sm:$0xff pattern:$0x75316420]
      %v1091 = vld.sshfl [vmem:[#allocation1 + $0x10] sm:$0xff pattern:$0x75316420]
      %v1092 = vld.sshfl [vmem:[#allocation1 + $0x18] sm:$0xff pattern:$0x75316420]
      %1093 = vrot.lane.b32.xlu0 %v1089, 63
      %v1094 = vpop.permute.xlu0 %1093
      %1095 = vrot.lane.b32.xlu0 %v1090, 63
      %v1096 = vpop.permute.xlu0 %1095
      %1097 = vrot.lane.b32.xlu0 %v1091, 63
      %v1098 = vpop.permute.xlu0 %1097
      %1099 = vrot.lane.b32.xlu0 %v1092, 63
      %v1100 = vpop.permute.xlu0 %1099
      %vm1101 = vcmask 515072
      %v1102 = vsel %vm1101, %v1094, %v1096
      %v1103 = vsel %vm1101, %v1096, %v1098
      %v1104 = vsel %vm1101, %v1098, %v1100
      %v1109 = vsel %vm1101, %v1084, %v1094
      %v1110 = vmul.f32 %v1109, %v407
      %v1111 = vmul.f32 %v1102, %v408
      %v1112 = vmul.f32 %v1103, %v409
      %v1113 = vmul.f32 %v1104, %v410
      %v1114 = vmul.f32 %v1110, %v700
      %v1115 = vmul.f32 %v1111, %v701
      %v1116 = vmul.f32 %v1112, %v702
      %v1117 = vmul.f32 %v1113, %v703
      %s1118 = scalar_lea.vmem %s4, 20
      %v1119 = vld [vmem:[%s1118] sm:$0xf]
      %v1121 = vsel %vm471, %v1119, 0
      %v1124 = vsel %vm475, %v1114, 0
      %v1127 = vsel %vm475, %v1115, 0
      %v1130 = vsel %vm475, %v1116, 0
      %v1133 = vsel %vm475, %v1117, 0
      %1135 = vmatpush.msra.mxu0 0.0
      %1136 = vmatpush.msra.mxu0 0.0
      %1137 = vmatpush.msra.mxu0 0.0
      %1138 = vmatpush.msra.mxu0 0.0
      %1139 = vmatpush.msra.mxu0 0.0
      %1140 = vmatpush.msra.mxu0 0.0
      %1141 = vmatpush.msra.mxu0 0.0
      %1142 = vmatpush.msra.mxu0 0.0
      %1143 = vmatpush.msra.mxu0 0.0
      %1144 = vmatpush.msra.mxu0 0.0
      %1145 = vmatpush.msra.mxu0 0.0
      %1146 = vmatpush.msra.mxu0 0.0
      %1147 = vmatpush.msra.mxu0 0.0
      %1148 = vmatpush.msra.mxu0 0.0
      %1149 = vmatpush.msra.mxu0 0.0
      %1150 = vmatpush.msra.mxu0 %v1124
      %1151 = vmatmul.f32.gmra.mxu0 %v1121
      %v1152 = vpop.f32.mrf.mxu0
      %v1153 = vadd.f32 0.0, %v1152
      %1154 = vdwg.mxu0
      %1155 = vmatpush.msra.mxu0 0.0
      %1156 = vmatpush.msra.mxu0 0.0
      %1157 = vmatpush.msra.mxu0 0.0
      %1158 = vmatpush.msra.mxu0 0.0
      %1159 = vmatpush.msra.mxu0 0.0
      %1160 = vmatpush.msra.mxu0 0.0
      %1161 = vmatpush.msra.mxu0 0.0
      %1162 = vmatpush.msra.mxu0 0.0
      %1163 = vmatpush.msra.mxu0 0.0
      %1164 = vmatpush.msra.mxu0 0.0
      %1165 = vmatpush.msra.mxu0 0.0
      %1166 = vmatpush.msra.mxu0 0.0
      %1167 = vmatpush.msra.mxu0 0.0
      %1168 = vmatpush.msra.mxu0 0.0
      %1169 = vmatpush.msra.mxu0 0.0
      %1170 = vmatpush.msra.mxu0 %v1127
      %1171 = vmatmul.f32.gmra.mxu0 %v1121
      %v1172 = vpop.f32.mrf.mxu0
      %v1173 = vadd.f32 0.0, %v1172
      %1174 = vdwg.mxu0
      %1175 = vmatpush.msra.mxu0 0.0
      %1176 = vmatpush.msra.mxu0 0.0
      %1177 = vmatpush.msra.mxu0 0.0
      %1178 = vmatpush.msra.mxu0 0.0
      %1179 = vmatpush.msra.mxu0 0.0
      %1180 = vmatpush.msra.mxu0 0.0
      %1181 = vmatpush.msra.mxu0 0.0
      %1182 = vmatpush.msra.mxu0 0.0
      %1183 = vmatpush.msra.mxu0 0.0
      %1184 = vmatpush.msra.mxu0 0.0
      %1185 = vmatpush.msra.mxu0 0.0
      %1186 = vmatpush.msra.mxu0 0.0
      %1187 = vmatpush.msra.mxu0 0.0
      %1188 = vmatpush.msra.mxu0 0.0
      %1189 = vmatpush.msra.mxu0 0.0
      %1190 = vmatpush.msra.mxu0 %v1130
      %1191 = vmatmul.f32.gmra.mxu0 %v1121
      %v1192 = vpop.f32.mrf.mxu0
      %v1193 = vadd.f32 0.0, %v1192
      %1194 = vdwg.mxu0
      %1195 = vmatpush.msra.mxu0 0.0
      %1196 = vmatpush.msra.mxu0 0.0
      %1197 = vmatpush.msra.mxu0 0.0
      %1198 = vmatpush.msra.mxu0 0.0
      %1199 = vmatpush.msra.mxu0 0.0
      %1200 = vmatpush.msra.mxu0 0.0
      %1201 = vmatpush.msra.mxu0 0.0
      %1202 = vmatpush.msra.mxu0 0.0
      %1203 = vmatpush.msra.mxu0 0.0
      %1204 = vmatpush.msra.mxu0 0.0
      %1205 = vmatpush.msra.mxu0 0.0
      %1206 = vmatpush.msra.mxu0 0.0
      %1207 = vmatpush.msra.mxu0 0.0
      %1208 = vmatpush.msra.mxu0 0.0
      %1209 = vmatpush.msra.mxu0 0.0
      %1210 = vmatpush.msra.mxu0 %v1133
      %1211 = vmatmul.f32.gmra.mxu0 %v1121
      %v1212 = vpop.f32.mrf.mxu0
      %v1213 = vadd.f32 0.0, %v1212
      %1214 = vdwg.mxu0
      %v1215 = vadd.f32 %v1077, %v1153
      %v1216 = vadd.f32 %v1078, %v1173
      %v1217 = vadd.f32 %v1079, %v1193
      %v1218 = vadd.f32 %v1080, %v1213
      %1219 = vst [vmem:[#allocation1] ss:$2 sm:$0xff] %v371
      %v1220 = vld.sshfl [vmem:[#allocation1 + $0x8] sm:$0xff pattern:$0x75316420]
      %1221 = vrot.lane.b32.xlu0 %v1220, 57
      %v1222 = vpop.permute.xlu0 %1221
      %1224 = vst [vmem:[#allocation1] ss:$2 sm:$0xff] %v370
      %s1225 = scalar_lea.vmem [#allocation1], 16
      %1226 = vst [vmem:[%s1225] ss:$2 sm:$0xff] %v371
      %v1227 = vld.sshfl [vmem:[#allocation1] sm:$0xff pattern:$0x75316420]
      %v1228 = vld.sshfl [vmem:[#allocation1 + $0x8] sm:$0xff pattern:$0x75316420]
      %v1229 = vld.sshfl [vmem:[#allocation1 + $0x10] sm:$0xff pattern:$0x75316420]
      %v1230 = vld.sshfl [vmem:[#allocation1 + $0x18] sm:$0xff pattern:$0x75316420]
      %1231 = vrot.lane.b32.xlu0 %v1227, 57
      %v1232 = vpop.permute.xlu0 %1231
      %1233 = vrot.lane.b32.xlu0 %v1228, 57
      %v1234 = vpop.permute.xlu0 %1233
      %1235 = vrot.lane.b32.xlu0 %v1229, 57
      %v1236 = vpop.permute.xlu0 %1235
      %1237 = vrot.lane.b32.xlu0 %v1230, 57
      %v1238 = vpop.permute.xlu0 %1237
      %vm1239 = vcmask 465920
      %v1240 = vsel %vm1239, %v1232, %v1234
      %v1241 = vsel %vm1239, %v1234, %v1236
      %v1242 = vsel %vm1239, %v1236, %v1238
      %v1247 = vsel %vm1239, %v1222, %v1232
      %v1248 = vmul.f32 %v1247, %v407
      %v1249 = vmul.f32 %v1240, %v408
      %v1250 = vmul.f32 %v1241, %v409
      %v1251 = vmul.f32 %v1242, %v410
      %v1252 = vperm.slane %v372, 3
      %v1253 = vperm.slane %v373, 3
      %v1254 = vperm.slane %v374, 3
      %v1255 = vperm.slane %v375, 3
      %v1256 = vmul.f32 %v1248, %v1252
      %v1257 = vmul.f32 %v1249, %v1253
      %v1258 = vmul.f32 %v1250, %v1254
      %v1259 = vmul.f32 %v1251, %v1255
      %v1260 = vmul.f32 %v1256, %v423
      %v1261 = vmul.f32 %v1257, %v424
      %v1262 = vmul.f32 %v1258, %v425
      %v1263 = vmul.f32 %v1259, %v426
      %s1264 = scalar_lea.vmem %s4, 24
      %v1265 = vld [vmem:[%s1264] sm:$0xf]
      %v1267 = vsel %vm471, %v1265, 0
      %v1270 = vsel %vm475, %v1260, 0
      %v1273 = vsel %vm475, %v1261, 0
      %v1276 = vsel %vm475, %v1262, 0
      %v1279 = vsel %vm475, %v1263, 0
      %1281 = vmatpush.msra.mxu0 0.0
      %1282 = vmatpush.msra.mxu0 0.0
      %1283 = vmatpush.msra.mxu0 0.0
      %1284 = vmatpush.msra.mxu0 0.0
      %1285 = vmatpush.msra.mxu0 0.0
      %1286 = vmatpush.msra.mxu0 0.0
      %1287 = vmatpush.msra.mxu0 0.0
      %1288 = vmatpush.msra.mxu0 0.0
      %1289 = vmatpush.msra.mxu0 0.0
      %1290 = vmatpush.msra.mxu0 0.0
      %1291 = vmatpush.msra.mxu0 0.0
      %1292 = vmatpush.msra.mxu0 0.0
      %1293 = vmatpush.msra.mxu0 0.0
      %1294 = vmatpush.msra.mxu0 0.0
      %1295 = vmatpush.msra.mxu0 0.0
      %1296 = vmatpush.msra.mxu0 %v1270
      %1297 = vmatmul.f32.gmra.mxu0 %v1267
      %v1298 = vpop.f32.mrf.mxu0
      %v1299 = vadd.f32 0.0, %v1298
      %1300 = vdwg.mxu0
      %1301 = vmatpush.msra.mxu0 0.0
      %1302 = vmatpush.msra.mxu0 0.0
      %1303 = vmatpush.msra.mxu0 0.0
      %1304 = vmatpush.msra.mxu0 0.0
      %1305 = vmatpush.msra.mxu0 0.0
      %1306 = vmatpush.msra.mxu0 0.0
      %1307 = vmatpush.msra.mxu0 0.0
      %1308 = vmatpush.msra.mxu0 0.0
      %1309 = vmatpush.msra.mxu0 0.0
      %1310 = vmatpush.msra.mxu0 0.0
      %1311 = vmatpush.msra.mxu0 0.0
      %1312 = vmatpush.msra.mxu0 0.0
      %1313 = vmatpush.msra.mxu0 0.0
      %1314 = vmatpush.msra.mxu0 0.0
      %1315 = vmatpush.msra.mxu0 0.0
      %1316 = vmatpush.msra.mxu0 %v1273
      %1317 = vmatmul.f32.gmra.mxu0 %v1267
      %v1318 = vpop.f32.mrf.mxu0
      %v1319 = vadd.f32 0.0, %v1318
      %1320 = vdwg.mxu0
      %1321 = vmatpush.msra.mxu0 0.0
      %1322 = vmatpush.msra.mxu0 0.0
      %1323 = vmatpush.msra.mxu0 0.0
      %1324 = vmatpush.msra.mxu0 0.0
      %1325 = vmatpush.msra.mxu0 0.0
      %1326 = vmatpush.msra.mxu0 0.0
      %1327 = vmatpush.msra.mxu0 0.0
      %1328 = vmatpush.msra.mxu0 0.0
      %1329 = vmatpush.msra.mxu0 0.0
      %1330 = vmatpush.msra.mxu0 0.0
      %1331 = vmatpush.msra.mxu0 0.0
      %1332 = vmatpush.msra.mxu0 0.0
      %1333 = vmatpush.msra.mxu0 0.0
      %1334 = vmatpush.msra.mxu0 0.0
      %1335 = vmatpush.msra.mxu0 0.0
      %1336 = vmatpush.msra.mxu0 %v1276
      %1337 = vmatmul.f32.gmra.mxu0 %v1267
      %v1338 = vpop.f32.mrf.mxu0
      %v1339 = vadd.f32 0.0, %v1338
      %1340 = vdwg.mxu0
      %1341 = vmatpush.msra.mxu0 0.0
      %1342 = vmatpush.msra.mxu0 0.0
      %1343 = vmatpush.msra.mxu0 0.0
      %1344 = vmatpush.msra.mxu0 0.0
      %1345 = vmatpush.msra.mxu0 0.0
      %1346 = vmatpush.msra.mxu0 0.0
      %1347 = vmatpush.msra.mxu0 0.0
      %1348 = vmatpush.msra.mxu0 0.0
      %1349 = vmatpush.msra.mxu0 0.0
      %1350 = vmatpush.msra.mxu0 0.0
      %1351 = vmatpush.msra.mxu0 0.0
      %1352 = vmatpush.msra.mxu0 0.0
      %1353 = vmatpush.msra.mxu0 0.0
      %1354 = vmatpush.msra.mxu0 0.0
      %1355 = vmatpush.msra.mxu0 0.0
      %1356 = vmatpush.msra.mxu0 %v1279
      %1357 = vmatmul.f32.gmra.mxu0 %v1267
      %v1358 = vpop.f32.mrf.mxu0
      %v1359 = vadd.f32 0.0, %v1358
      %1360 = vdwg.mxu0
      %v1361 = vadd.f32 %v1215, %v1299
      %v1362 = vadd.f32 %v1216, %v1319
      %v1363 = vadd.f32 %v1217, %v1339
      %v1364 = vadd.f32 %v1218, %v1359
      %1365 = vst [vmem:[#allocation1] ss:$2 sm:$0xff] %v371
      %v1366 = vld.sshfl [vmem:[#allocation1 + $0x8] sm:$0xff pattern:$0x75316420]
      %1367 = vrot.lane.b32.xlu0 %v1366, 56
      %v1368 = vpop.permute.xlu0 %1367
      %1370 = vst [vmem:[#allocation1] ss:$2 sm:$0xff] %v370
      %s1371 = scalar_lea.vmem [#allocation1], 16
      %1372 = vst [vmem:[%s1371] ss:$2 sm:$0xff] %v371
      %v1373 = vld.sshfl [vmem:[#allocation1] sm:$0xff pattern:$0x75316420]
      %v1374 = vld.sshfl [vmem:[#allocation1 + $0x8] sm:$0xff pattern:$0x75316420]
      %v1375 = vld.sshfl [vmem:[#allocation1 + $0x10] sm:$0xff pattern:$0x75316420]
      %v1376 = vld.sshfl [vmem:[#allocation1 + $0x18] sm:$0xff pattern:$0x75316420]
      %1377 = vrot.lane.b32.xlu0 %v1373, 56
      %v1378 = vpop.permute.xlu0 %1377
      %1379 = vrot.lane.b32.xlu0 %v1374, 56
      %v1380 = vpop.permute.xlu0 %1379
      %1381 = vrot.lane.b32.xlu0 %v1375, 56
      %v1382 = vpop.permute.xlu0 %1381
      %1383 = vrot.lane.b32.xlu0 %v1376, 56
      %v1384 = vpop.permute.xlu0 %1383
      %vm1385 = vcmask 457728
      %v1386 = vsel %vm1385, %v1378, %v1380
      %v1387 = vsel %vm1385, %v1380, %v1382
      %v1388 = vsel %vm1385, %v1382, %v1384
      %v1393 = vsel %vm1385, %v1368, %v1378
      %v1394 = vmul.f32 %v1393, %v407
      %v1395 = vmul.f32 %v1386, %v408
      %v1396 = vmul.f32 %v1387, %v409
      %v1397 = vmul.f32 %v1388, %v410
      %v1398 = vmul.f32 %v1394, %v1252
      %v1399 = vmul.f32 %v1395, %v1253
      %v1400 = vmul.f32 %v1396, %v1254
      %v1401 = vmul.f32 %v1397, %v1255
      %s1402 = scalar_lea.vmem %s4, 28
      %v1403 = vld [vmem:[%s1402] sm:$0xf]
      %v1405 = vsel %vm471, %v1403, 0
      %v1408 = vsel %vm475, %v1398, 0
      %v1411 = vsel %vm475, %v1399, 0
      %v1414 = vsel %vm475, %v1400, 0
      %v1417 = vsel %vm475, %v1401, 0
      %1419 = vmatpush.msra.mxu0 0.0
      %1420 = vmatpush.msra.mxu0 0.0
      %1421 = vmatpush.msra.mxu0 0.0
      %1422 = vmatpush.msra.mxu0 0.0
      %1423 = vmatpush.msra.mxu0 0.0
      %1424 = vmatpush.msra.mxu0 0.0
      %1425 = vmatpush.msra.mxu0 0.0
      %1426 = vmatpush.msra.mxu0 0.0
      %1427 = vmatpush.msra.mxu0 0.0
      %1428 = vmatpush.msra.mxu0 0.0
      %1429 = vmatpush.msra.mxu0 0.0
      %1430 = vmatpush.msra.mxu0 0.0
      %1431 = vmatpush.msra.mxu0 0.0
      %1432 = vmatpush.msra.mxu0 0.0
      %1433 = vmatpush.msra.mxu0 0.0
      %1434 = vmatpush.msra.mxu0 %v1408
      %1435 = vmatmul.f32.gmra.mxu0 %v1405
      %v1436 = vpop.f32.mrf.mxu0
      %v1437 = vadd.f32 0.0, %v1436
      %1438 = vdwg.mxu0
      %1439 = vmatpush.msra.mxu0 0.0
      %1440 = vmatpush.msra.mxu0 0.0
      %1441 = vmatpush.msra.mxu0 0.0
      %1442 = vmatpush.msra.mxu0 0.0
      %1443 = vmatpush.msra.mxu0 0.0
      %1444 = vmatpush.msra.mxu0 0.0
      %1445 = vmatpush.msra.mxu0 0.0
      %1446 = vmatpush.msra.mxu0 0.0
      %1447 = vmatpush.msra.mxu0 0.0
      %1448 = vmatpush.msra.mxu0 0.0
      %1449 = vmatpush.msra.mxu0 0.0
      %1450 = vmatpush.msra.mxu0 0.0
      %1451 = vmatpush.msra.mxu0 0.0
      %1452 = vmatpush.msra.mxu0 0.0
      %1453 = vmatpush.msra.mxu0 0.0
      %1454 = vmatpush.msra.mxu0 %v1411
      %1455 = vmatmul.f32.gmra.mxu0 %v1405
      %v1456 = vpop.f32.mrf.mxu0
      %v1457 = vadd.f32 0.0, %v1456
      %1458 = vdwg.mxu0
      %1459 = vmatpush.msra.mxu0 0.0
      %1460 = vmatpush.msra.mxu0 0.0
      %1461 = vmatpush.msra.mxu0 0.0
      %1462 = vmatpush.msra.mxu0 0.0
      %1463 = vmatpush.msra.mxu0 0.0
      %1464 = vmatpush.msra.mxu0 0.0
      %1465 = vmatpush.msra.mxu0 0.0
      %1466 = vmatpush.msra.mxu0 0.0
      %1467 = vmatpush.msra.mxu0 0.0
      %1468 = vmatpush.msra.mxu0 0.0
      %1469 = vmatpush.msra.mxu0 0.0
      %1470 = vmatpush.msra.mxu0 0.0
      %1471 = vmatpush.msra.mxu0 0.0
      %1472 = vmatpush.msra.mxu0 0.0
      %1473 = vmatpush.msra.mxu0 0.0
      %1474 = vmatpush.msra.mxu0 %v1414
      %1475 = vmatmul.f32.gmra.mxu0 %v1405
      %v1476 = vpop.f32.mrf.mxu0
      %v1477 = vadd.f32 0.0, %v1476
      %1478 = vdwg.mxu0
      %1479 = vmatpush.msra.mxu0 0.0
      %1480 = vmatpush.msra.mxu0 0.0
      %1481 = vmatpush.msra.mxu0 0.0
      %1482 = vmatpush.msra.mxu0 0.0
      %1483 = vmatpush.msra.mxu0 0.0
      %1484 = vmatpush.msra.mxu0 0.0
      %1485 = vmatpush.msra.mxu0 0.0
      %1486 = vmatpush.msra.mxu0 0.0
      %1487 = vmatpush.msra.mxu0 0.0
      %1488 = vmatpush.msra.mxu0 0.0
      %1489 = vmatpush.msra.mxu0 0.0
      %1490 = vmatpush.msra.mxu0 0.0
      %1491 = vmatpush.msra.mxu0 0.0
      %1492 = vmatpush.msra.mxu0 0.0
      %1493 = vmatpush.msra.mxu0 0.0
      %1494 = vmatpush.msra.mxu0 %v1417
      %1495 = vmatmul.f32.gmra.mxu0 %v1405
      %v1496 = vpop.f32.mrf.mxu0
      %v1497 = vadd.f32 0.0, %v1496
      %1498 = vdwg.mxu0
      %v1499 = vadd.f32 %v1361, %v1437
      %v1500 = vadd.f32 %v1362, %v1457
      %v1501 = vadd.f32 %v1363, %v1477
      %v1502 = vadd.f32 %v1364, %v1497
      %1503 = vst [vmem:[#allocation1] ss:$2 sm:$0xff] %v371
      %v1504 = vld.sshfl [vmem:[#allocation1 + $0x8] sm:$0xff pattern:$0x75316420]
      %1505 = vrot.lane.b32.xlu0 %v1504, 55
      %v1506 = vpop.permute.xlu0 %1505
      %1508 = vst [vmem:[#allocation1] ss:$2 sm:$0xff] %v370
      %s1509 = scalar_lea.vmem [#allocation1], 16
      %1510 = vst [vmem:[%s1509] ss:$2 sm:$0xff] %v371
      %v1511 = vld.sshfl [vmem:[#allocation1] sm:$0xff pattern:$0x75316420]
      %v1512 = vld.sshfl [vmem:[#allocation1 + $0x8] sm:$0xff pattern:$0x75316420]
      %v1513 = vld.sshfl [vmem:[#allocation1 + $0x10] sm:$0xff pattern:$0x75316420]
      %v1514 = vld.sshfl [vmem:[#allocation1 + $0x18] sm:$0xff pattern:$0x75316420]
      %1515 = vrot.lane.b32.xlu0 %v1511, 55
      %v1516 = vpop.permute.xlu0 %1515
      %1517 = vrot.lane.b32.xlu0 %v1512, 55
      %v1518 = vpop.permute.xlu0 %1517
      %1519 = vrot.lane.b32.xlu0 %v1513, 55
      %v1520 = vpop.permute.xlu0 %1519
      %1521 = vrot.lane.b32.xlu0 %v1514, 55
      %v1522 = vpop.permute.xlu0 %1521
      %vm1523 = vcmask 449536
      %v1524 = vsel %vm1523, %v1516, %v1518
      %v1525 = vsel %vm1523, %v1518, %v1520
      %v1526 = vsel %vm1523, %v1520, %v1522
      %v1531 = vsel %vm1523, %v1506, %v1516
      %v1532 = vmul.f32 %v1531, %v407
      %v1533 = vmul.f32 %v1524, %v408
      %v1534 = vmul.f32 %v1525, %v409
      %v1535 = vmul.f32 %v1526, %v410
      %v1536 = vmul.f32 %v1532, %v1252
      %v1537 = vmul.f32 %v1533, %v1253
      %v1538 = vmul.f32 %v1534, %v1254
      %v1539 = vmul.f32 %v1535, %v1255
      %v1540 = vmul.f32 %v1536, %v700
      %v1541 = vmul.f32 %v1537, %v701
      %v1542 = vmul.f32 %v1538, %v702
      %v1543 = vmul.f32 %v1539, %v703
      %s1544 = scalar_lea.vmem %s4, 32
      %v1545 = vld [vmem:[%s1544] sm:$0xf]
      %v1547 = vsel %vm471, %v1545, 0
      %v1550 = vsel %vm475, %v1540, 0
      %v1553 = vsel %vm475, %v1541, 0
      %v1556 = vsel %vm475, %v1542, 0
      %v1559 = vsel %vm475, %v1543, 0
      %1561 = vmatpush.msra.mxu0 0.0
      %1562 = vmatpush.msra.mxu0 0.0
      %1563 = vmatpush.msra.mxu0 0.0
      %1564 = vmatpush.msra.mxu0 0.0
      %1565 = vmatpush.msra.mxu0 0.0
      %1566 = vmatpush.msra.mxu0 0.0
      %1567 = vmatpush.msra.mxu0 0.0
      %1568 = vmatpush.msra.mxu0 0.0
      %1569 = vmatpush.msra.mxu0 0.0
      %1570 = vmatpush.msra.mxu0 0.0
      %1571 = vmatpush.msra.mxu0 0.0
      %1572 = vmatpush.msra.mxu0 0.0
      %1573 = vmatpush.msra.mxu0 0.0
      %1574 = vmatpush.msra.mxu0 0.0
      %1575 = vmatpush.msra.mxu0 0.0
      %1576 = vmatpush.msra.mxu0 %v1550
      %1577 = vmatmul.f32.gmra.mxu0 %v1547
      %v1578 = vpop.f32.mrf.mxu0
      %v1579 = vadd.f32 0.0, %v1578
      %1580 = vdwg.mxu0
      %1581 = vmatpush.msra.mxu0 0.0
      %1582 = vmatpush.msra.mxu0 0.0
      %1583 = vmatpush.msra.mxu0 0.0
      %1584 = vmatpush.msra.mxu0 0.0
      %1585 = vmatpush.msra.mxu0 0.0
      %1586 = vmatpush.msra.mxu0 0.0
      %1587 = vmatpush.msra.mxu0 0.0
      %1588 = vmatpush.msra.mxu0 0.0
      %1589 = vmatpush.msra.mxu0 0.0
      %1590 = vmatpush.msra.mxu0 0.0
      %1591 = vmatpush.msra.mxu0 0.0
      %1592 = vmatpush.msra.mxu0 0.0
      %1593 = vmatpush.msra.mxu0 0.0
      %1594 = vmatpush.msra.mxu0 0.0
      %1595 = vmatpush.msra.mxu0 0.0
      %1596 = vmatpush.msra.mxu0 %v1553
      %1597 = vmatmul.f32.gmra.mxu0 %v1547
      %v1598 = vpop.f32.mrf.mxu0
      %v1599 = vadd.f32 0.0, %v1598
      %1600 = vdwg.mxu0
      %1601 = vmatpush.msra.mxu0 0.0
      %1602 = vmatpush.msra.mxu0 0.0
      %1603 = vmatpush.msra.mxu0 0.0
      %1604 = vmatpush.msra.mxu0 0.0
      %1605 = vmatpush.msra.mxu0 0.0
      %1606 = vmatpush.msra.mxu0 0.0
      %1607 = vmatpush.msra.mxu0 0.0
      %1608 = vmatpush.msra.mxu0 0.0
      %1609 = vmatpush.msra.mxu0 0.0
      %1610 = vmatpush.msra.mxu0 0.0
      %1611 = vmatpush.msra.mxu0 0.0
      %1612 = vmatpush.msra.mxu0 0.0
      %1613 = vmatpush.msra.mxu0 0.0
      %1614 = vmatpush.msra.mxu0 0.0
      %1615 = vmatpush.msra.mxu0 0.0
      %1616 = vmatpush.msra.mxu0 %v1556
      %1617 = vmatmul.f32.gmra.mxu0 %v1547
      %v1618 = vpop.f32.mrf.mxu0
      %v1619 = vadd.f32 0.0, %v1618
      %1620 = vdwg.mxu0
      %1621 = vmatpush.msra.mxu0 0.0
      %1622 = vmatpush.msra.mxu0 0.0
      %1623 = vmatpush.msra.mxu0 0.0
      %1624 = vmatpush.msra.mxu0 0.0
      %1625 = vmatpush.msra.mxu0 0.0
      %1626 = vmatpush.msra.mxu0 0.0
      %1627 = vmatpush.msra.mxu0 0.0
      %1628 = vmatpush.msra.mxu0 0.0
      %1629 = vmatpush.msra.mxu0 0.0
      %1630 = vmatpush.msra.mxu0 0.0
      %1631 = vmatpush.msra.mxu0 0.0
      %1632 = vmatpush.msra.mxu0 0.0
      %1633 = vmatpush.msra.mxu0 0.0
      %1634 = vmatpush.msra.mxu0 0.0
      %1635 = vmatpush.msra.mxu0 0.0
      %1636 = vmatpush.msra.mxu0 %v1559
      %1637 = vmatmul.f32.gmra.mxu0 %v1547
      %v1638 = vpop.f32.mrf.mxu0
      %v1639 = vadd.f32 0.0, %v1638
      %1640 = vdwg.mxu0
      %v1641 = vadd.f32 %v1499, %v1579
      %v1642 = vadd.f32 %v1500, %v1599
      %v1643 = vadd.f32 %v1501, %v1619
      %v1644 = vadd.f32 %v1502, %v1639
      %1645 = vst [vmem:[#allocation1] ss:$2 sm:$0xff] %v371
      %v1646 = vld.sshfl [vmem:[#allocation1 + $0x8] sm:$0xff pattern:$0x75316420]
      %1647 = vrot.lane.b32.xlu0 %v1646, 9
      %v1648 = vpop.permute.xlu0 %1647
      %1650 = vst [vmem:[#allocation1] ss:$2 sm:$0xff] %v370
      %s1651 = scalar_lea.vmem [#allocation1], 16
      %1652 = vst [vmem:[%s1651] ss:$2 sm:$0xff] %v371
      %v1653 = vld.sshfl [vmem:[#allocation1] sm:$0xff pattern:$0x75316420]
      %v1654 = vld.sshfl [vmem:[#allocation1 + $0x8] sm:$0xff pattern:$0x75316420]
      %v1655 = vld.sshfl [vmem:[#allocation1 + $0x10] sm:$0xff pattern:$0x75316420]
      %v1656 = vld.sshfl [vmem:[#allocation1 + $0x18] sm:$0xff pattern:$0x75316420]
      %1657 = vrot.lane.b32.xlu0 %v1653, 9
      %v1658 = vpop.permute.xlu0 %1657
      %1659 = vrot.lane.b32.xlu0 %v1654, 9
      %v1660 = vpop.permute.xlu0 %1659
      %1661 = vrot.lane.b32.xlu0 %v1655, 9
      %v1662 = vpop.permute.xlu0 %1661
      %1663 = vrot.lane.b32.xlu0 %v1656, 9
      %v1664 = vpop.permute.xlu0 %1663
      %vm1665 = vcmask 72704
      %v1666 = vsel %vm1665, %v1658, %v1660
      %v1667 = vsel %vm1665, %v1660, %v1662
      %v1668 = vsel %vm1665, %v1662, %v1664
      %v1673 = vsel %vm1665, %v1648, %v1658
      %v1674 = vmul.f32 %v1673, %v415
      %v1675 = vmul.f32 %v1666, %v416
      %v1676 = vmul.f32 %v1667, %v417
      %v1677 = vmul.f32 %v1668, %v418
      %v1678 = vmul.f32 %v1674, %v423
      %v1679 = vmul.f32 %v1675, %v424
      %v1680 = vmul.f32 %v1676, %v425
      %v1681 = vmul.f32 %v1677, %v426
      %s1682 = scalar_lea.vmem %s4, 36
      %v1683 = vld [vmem:[%s1682] sm:$0xf]
      %v1685 = vsel %vm471, %v1683, 0
      %v1688 = vsel %vm475, %v1678, 0
      %v1691 = vsel %vm475, %v1679, 0
      %v1694 = vsel %vm475, %v1680, 0
      %v1697 = vsel %vm475, %v1681, 0
      %1699 = vmatpush.msra.mxu0 0.0
      %1700 = vmatpush.msra.mxu0 0.0
      %1701 = vmatpush.msra.mxu0 0.0
      %1702 = vmatpush.msra.mxu0 0.0
      %1703 = vmatpush.msra.mxu0 0.0
      %1704 = vmatpush.msra.mxu0 0.0
      %1705 = vmatpush.msra.mxu0 0.0
      %1706 = vmatpush.msra.mxu0 0.0
      %1707 = vmatpush.msra.mxu0 0.0
      %1708 = vmatpush.msra.mxu0 0.0
      %1709 = vmatpush.msra.mxu0 0.0
      %1710 = vmatpush.msra.mxu0 0.0
      %1711 = vmatpush.msra.mxu0 0.0
      %1712 = vmatpush.msra.mxu0 0.0
      %1713 = vmatpush.msra.mxu0 0.0
      %1714 = vmatpush.msra.mxu0 %v1688
      %1715 = vmatmul.f32.gmra.mxu0 %v1685
      %v1716 = vpop.f32.mrf.mxu0
      %v1717 = vadd.f32 0.0, %v1716
      %1718 = vdwg.mxu0
      %1719 = vmatpush.msra.mxu0 0.0
      %1720 = vmatpush.msra.mxu0 0.0
      %1721 = vmatpush.msra.mxu0 0.0
      %1722 = vmatpush.msra.mxu0 0.0
      %1723 = vmatpush.msra.mxu0 0.0
      %1724 = vmatpush.msra.mxu0 0.0
      %1725 = vmatpush.msra.mxu0 0.0
      %1726 = vmatpush.msra.mxu0 0.0
      %1727 = vmatpush.msra.mxu0 0.0
      %1728 = vmatpush.msra.mxu0 0.0
      %1729 = vmatpush.msra.mxu0 0.0
      %1730 = vmatpush.msra.mxu0 0.0
      %1731 = vmatpush.msra.mxu0 0.0
      %1732 = vmatpush.msra.mxu0 0.0
      %1733 = vmatpush.msra.mxu0 0.0
      %1734 = vmatpush.msra.mxu0 %v1691
      %1735 = vmatmul.f32.gmra.mxu0 %v1685
      %v1736 = vpop.f32.mrf.mxu0
      %v1737 = vadd.f32 0.0, %v1736
      %1738 = vdwg.mxu0
      %1739 = vmatpush.msra.mxu0 0.0
      %1740 = vmatpush.msra.mxu0 0.0
      %1741 = vmatpush.msra.mxu0 0.0
      %1742 = vmatpush.msra.mxu0 0.0
      %1743 = vmatpush.msra.mxu0 0.0
      %1744 = vmatpush.msra.mxu0 0.0
      %1745 = vmatpush.msra.mxu0 0.0
      %1746 = vmatpush.msra.mxu0 0.0
      %1747 = vmatpush.msra.mxu0 0.0
      %1748 = vmatpush.msra.mxu0 0.0
      %1749 = vmatpush.msra.mxu0 0.0
      %1750 = vmatpush.msra.mxu0 0.0
      %1751 = vmatpush.msra.mxu0 0.0
      %1752 = vmatpush.msra.mxu0 0.0
      %1753 = vmatpush.msra.mxu0 0.0
      %1754 = vmatpush.msra.mxu0 %v1694
      %1755 = vmatmul.f32.gmra.mxu0 %v1685
      %v1756 = vpop.f32.mrf.mxu0
      %v1757 = vadd.f32 0.0, %v1756
      %1758 = vdwg.mxu0
      %1759 = vmatpush.msra.mxu0 0.0
      %1760 = vmatpush.msra.mxu0 0.0
      %1761 = vmatpush.msra.mxu0 0.0
      %1762 = vmatpush.msra.mxu0 0.0
      %1763 = vmatpush.msra.mxu0 0.0
      %1764 = vmatpush.msra.mxu0 0.0
      %1765 = vmatpush.msra.mxu0 0.0
      %1766 = vmatpush.msra.mxu0 0.0
      %1767 = vmatpush.msra.mxu0 0.0
      %1768 = vmatpush.msra.mxu0 0.0
      %1769 = vmatpush.msra.mxu0 0.0
      %1770 = vmatpush.msra.mxu0 0.0
      %1771 = vmatpush.msra.mxu0 0.0
      %1772 = vmatpush.msra.mxu0 0.0
      %1773 = vmatpush.msra.mxu0 0.0
      %1774 = vmatpush.msra.mxu0 %v1697
      %1775 = vmatmul.f32.gmra.mxu0 %v1685
      %v1776 = vpop.f32.mrf.mxu0
      %v1777 = vadd.f32 0.0, %v1776
      %1778 = vdwg.mxu0
      %v1779 = vadd.f32 %v1641, %v1717
      %v1780 = vadd.f32 %v1642, %v1737
      %v1781 = vadd.f32 %v1643, %v1757
      %v1782 = vadd.f32 %v1644, %v1777
      %1783 = vst [vmem:[#allocation1] ss:$2 sm:$0xff] %v371
      %v1784 = vld.sshfl [vmem:[#allocation1 + $0x8] sm:$0xff pattern:$0x75316420]
      %1785 = vrot.lane.b32.xlu0 %v1784, 8
      %v1786 = vpop.permute.xlu0 %1785
      %1788 = vst [vmem:[#allocation1] ss:$2 sm:$0xff] %v370
      %s1789 = scalar_lea.vmem [#allocation1], 16
      %1790 = vst [vmem:[%s1789] ss:$2 sm:$0xff] %v371
      %v1791 = vld.sshfl [vmem:[#allocation1] sm:$0xff pattern:$0x75316420]
      %v1792 = vld.sshfl [vmem:[#allocation1 + $0x8] sm:$0xff pattern:$0x75316420]
      %v1793 = vld.sshfl [vmem:[#allocation1 + $0x10] sm:$0xff pattern:$0x75316420]
      %v1794 = vld.sshfl [vmem:[#allocation1 + $0x18] sm:$0xff pattern:$0x75316420]
      %1795 = vrot.lane.b32.xlu0 %v1791, 8
      %v1796 = vpop.permute.xlu0 %1795
      %1797 = vrot.lane.b32.xlu0 %v1792, 8
      %v1798 = vpop.permute.xlu0 %1797
      %1799 = vrot.lane.b32.xlu0 %v1793, 8
      %v1800 = vpop.permute.xlu0 %1799
      %1801 = vrot.lane.b32.xlu0 %v1794, 8
      %v1802 = vpop.permute.xlu0 %1801
      %vm1803 = vcmask 64512
      %v1804 = vsel %vm1803, %v1796, %v1798
      %v1805 = vsel %vm1803, %v1798, %v1800
      %v1806 = vsel %vm1803, %v1800, %v1802
      %v1811 = vsel %vm1803, %v1786, %v1796
      %v1812 = vmul.f32 %v1811, %v415
      %v1813 = vmul.f32 %v1804, %v416
      %v1814 = vmul.f32 %v1805, %v417
      %v1815 = vmul.f32 %v1806, %v418
      %s1816 = scalar_lea.vmem %s4, 40
      %v1817 = vld [vmem:[%s1816] sm:$0xf]
      %v1819 = vsel %vm471, %v1817, 0
      %v1822 = vsel %vm475, %v1812, 0
      %v1825 = vsel %vm475, %v1813, 0
      %v1828 = vsel %vm475, %v1814, 0
      %v1831 = vsel %vm475, %v1815, 0
      %1833 = vmatpush.msra.mxu0 0.0
      %1834 = vmatpush.msra.mxu0 0.0
      %1835 = vmatpush.msra.mxu0 0.0
      %1836 = vmatpush.msra.mxu0 0.0
      %1837 = vmatpush.msra.mxu0 0.0
      %1838 = vmatpush.msra.mxu0 0.0
      %1839 = vmatpush.msra.mxu0 0.0
      %1840 = vmatpush.msra.mxu0 0.0
      %1841 = vmatpush.msra.mxu0 0.0
      %1842 = vmatpush.msra.mxu0 0.0
      %1843 = vmatpush.msra.mxu0 0.0
      %1844 = vmatpush.msra.mxu0 0.0
      %1845 = vmatpush.msra.mxu0 0.0
      %1846 = vmatpush.msra.mxu0 0.0
      %1847 = vmatpush.msra.mxu0 0.0
      %1848 = vmatpush.msra.mxu0 %v1822
      %1849 = vmatmul.f32.gmra.mxu0 %v1819
      %v1850 = vpop.f32.mrf.mxu0
      %v1851 = vadd.f32 0.0, %v1850
      %1852 = vdwg.mxu0
      %1853 = vmatpush.msra.mxu0 0.0
      %1854 = vmatpush.msra.mxu0 0.0
      %1855 = vmatpush.msra.mxu0 0.0
      %1856 = vmatpush.msra.mxu0 0.0
      %1857 = vmatpush.msra.mxu0 0.0
      %1858 = vmatpush.msra.mxu0 0.0
      %1859 = vmatpush.msra.mxu0 0.0
      %1860 = vmatpush.msra.mxu0 0.0
      %1861 = vmatpush.msra.mxu0 0.0
      %1862 = vmatpush.msra.mxu0 0.0
      %1863 = vmatpush.msra.mxu0 0.0
      %1864 = vmatpush.msra.mxu0 0.0
      %1865 = vmatpush.msra.mxu0 0.0
      %1866 = vmatpush.msra.mxu0 0.0
      %1867 = vmatpush.msra.mxu0 0.0
      %1868 = vmatpush.msra.mxu0 %v1825
      %1869 = vmatmul.f32.gmra.mxu0 %v1819
      %v1870 = vpop.f32.mrf.mxu0
      %v1871 = vadd.f32 0.0, %v1870
      %1872 = vdwg.mxu0
      %1873 = vmatpush.msra.mxu0 0.0
      %1874 = vmatpush.msra.mxu0 0.0
      %1875 = vmatpush.msra.mxu0 0.0
      %1876 = vmatpush.msra.mxu0 0.0
      %1877 = vmatpush.msra.mxu0 0.0
      %1878 = vmatpush.msra.mxu0 0.0
      %1879 = vmatpush.msra.mxu0 0.0
      %1880 = vmatpush.msra.mxu0 0.0
      %1881 = vmatpush.msra.mxu0 0.0
      %1882 = vmatpush.msra.mxu0 0.0
      %1883 = vmatpush.msra.mxu0 0.0
      %1884 = vmatpush.msra.mxu0 0.0
      %1885 = vmatpush.msra.mxu0 0.0
      %1886 = vmatpush.msra.mxu0 0.0
      %1887 = vmatpush.msra.mxu0 0.0
      %1888 = vmatpush.msra.mxu0 %v1828
      %1889 = vmatmul.f32.gmra.mxu0 %v1819
      %v1890 = vpop.f32.mrf.mxu0
      %v1891 = vadd.f32 0.0, %v1890
      %1892 = vdwg.mxu0
      %1893 = vmatpush.msra.mxu0 0.0
      %1894 = vmatpush.msra.mxu0 0.0
      %1895 = vmatpush.msra.mxu0 0.0
      %1896 = vmatpush.msra.mxu0 0.0
      %1897 = vmatpush.msra.mxu0 0.0
      %1898 = vmatpush.msra.mxu0 0.0
      %1899 = vmatpush.msra.mxu0 0.0
      %1900 = vmatpush.msra.mxu0 0.0
      %1901 = vmatpush.msra.mxu0 0.0
      %1902 = vmatpush.msra.mxu0 0.0
      %1903 = vmatpush.msra.mxu0 0.0
      %1904 = vmatpush.msra.mxu0 0.0
      %1905 = vmatpush.msra.mxu0 0.0
      %1906 = vmatpush.msra.mxu0 0.0
      %1907 = vmatpush.msra.mxu0 0.0
      %1908 = vmatpush.msra.mxu0 %v1831
      %1909 = vmatmul.f32.gmra.mxu0 %v1819
      %v1910 = vpop.f32.mrf.mxu0
      %v1911 = vadd.f32 0.0, %v1910
      %1912 = vdwg.mxu0
      %v1913 = vadd.f32 %v1779, %v1851
      %v1914 = vadd.f32 %v1780, %v1871
      %v1915 = vadd.f32 %v1781, %v1891
      %v1916 = vadd.f32 %v1782, %v1911
      %1917 = vst [vmem:[#allocation1] ss:$2 sm:$0xff] %v371
      %v1918 = vld.sshfl [vmem:[#allocation1 + $0x8] sm:$0xff pattern:$0x75316420]
      %1919 = vrot.lane.b32.xlu0 %v1918, 7
      %v1920 = vpop.permute.xlu0 %1919
      %1922 = vst [vmem:[#allocation1] ss:$2 sm:$0xff] %v370
      %s1923 = scalar_lea.vmem [#allocation1], 16
      %1924 = vst [vmem:[%s1923] ss:$2 sm:$0xff] %v371
      %v1925 = vld.sshfl [vmem:[#allocation1] sm:$0xff pattern:$0x75316420]
      %v1926 = vld.sshfl [vmem:[#allocation1 + $0x8] sm:$0xff pattern:$0x75316420]
      %v1927 = vld.sshfl [vmem:[#allocation1 + $0x10] sm:$0xff pattern:$0x75316420]
      %v1928 = vld.sshfl [vmem:[#allocation1 + $0x18] sm:$0xff pattern:$0x75316420]
      %1929 = vrot.lane.b32.xlu0 %v1925, 7
      %v1930 = vpop.permute.xlu0 %1929
      %1931 = vrot.lane.b32.xlu0 %v1926, 7
      %v1932 = vpop.permute.xlu0 %1931
      %1933 = vrot.lane.b32.xlu0 %v1927, 7
      %v1934 = vpop.permute.xlu0 %1933
      %1935 = vrot.lane.b32.xlu0 %v1928, 7
      %v1936 = vpop.permute.xlu0 %1935
      %vm1937 = vcmask 56320
      %v1938 = vsel %vm1937, %v1930, %v1932
      %v1939 = vsel %vm1937, %v1932, %v1934
      %v1940 = vsel %vm1937, %v1934, %v1936
      %v1945 = vsel %vm1937, %v1920, %v1930
      %v1946 = vmul.f32 %v1945, %v415
      %v1947 = vmul.f32 %v1938, %v416
      %v1948 = vmul.f32 %v1939, %v417
      %v1949 = vmul.f32 %v1940, %v418
      %v1950 = vmul.f32 %v1946, %v700
      %v1951 = vmul.f32 %v1947, %v701
      %v1952 = vmul.f32 %v1948, %v702
      %v1953 = vmul.f32 %v1949, %v703
      %s1954 = scalar_lea.vmem %s4, 44
      %v1955 = vld [vmem:[%s1954] sm:$0xf]
      %v1957 = vsel %vm471, %v1955, 0
      %v1960 = vsel %vm475, %v1950, 0
      %v1963 = vsel %vm475, %v1951, 0
      %v1966 = vsel %vm475, %v1952, 0
      %v1969 = vsel %vm475, %v1953, 0
      %1971 = vmatpush.msra.mxu0 0.0
      %1972 = vmatpush.msra.mxu0 0.0
      %1973 = vmatpush.msra.mxu0 0.0
      %1974 = vmatpush.msra.mxu0 0.0
      %1975 = vmatpush.msra.mxu0 0.0
      %1976 = vmatpush.msra.mxu0 0.0
      %1977 = vmatpush.msra.mxu0 0.0
      %1978 = vmatpush.msra.mxu0 0.0
      %1979 = vmatpush.msra.mxu0 0.0
      %1980 = vmatpush.msra.mxu0 0.0
      %1981 = vmatpush.msra.mxu0 0.0
      %1982 = vmatpush.msra.mxu0 0.0
      %1983 = vmatpush.msra.mxu0 0.0
      %1984 = vmatpush.msra.mxu0 0.0
      %1985 = vmatpush.msra.mxu0 0.0
      %1986 = vmatpush.msra.mxu0 %v1960
      %1987 = vmatmul.f32.gmra.mxu0 %v1957
      %v1988 = vpop.f32.mrf.mxu0
      %v1989 = vadd.f32 0.0, %v1988
      %1990 = vdwg.mxu0
      %1991 = vmatpush.msra.mxu0 0.0
      %1992 = vmatpush.msra.mxu0 0.0
      %1993 = vmatpush.msra.mxu0 0.0
      %1994 = vmatpush.msra.mxu0 0.0
      %1995 = vmatpush.msra.mxu0 0.0
      %1996 = vmatpush.msra.mxu0 0.0
      %1997 = vmatpush.msra.mxu0 0.0
      %1998 = vmatpush.msra.mxu0 0.0
      %1999 = vmatpush.msra.mxu0 0.0
      %2000 = vmatpush.msra.mxu0 0.0
      %2001 = vmatpush.msra.mxu0 0.0
      %2002 = vmatpush.msra.mxu0 0.0
      %2003 = vmatpush.msra.mxu0 0.0
      %2004 = vmatpush.msra.mxu0 0.0
      %2005 = vmatpush.msra.mxu0 0.0
      %2006 = vmatpush.msra.mxu0 %v1963
      %2007 = vmatmul.f32.gmra.mxu0 %v1957
      %v2008 = vpop.f32.mrf.mxu0
      %v2009 = vadd.f32 0.0, %v2008
      %2010 = vdwg.mxu0
      %2011 = vmatpush.msra.mxu0 0.0
      %2012 = vmatpush.msra.mxu0 0.0
      %2013 = vmatpush.msra.mxu0 0.0
      %2014 = vmatpush.msra.mxu0 0.0
      %2015 = vmatpush.msra.mxu0 0.0
      %2016 = vmatpush.msra.mxu0 0.0
      %2017 = vmatpush.msra.mxu0 0.0
      %2018 = vmatpush.msra.mxu0 0.0
      %2019 = vmatpush.msra.mxu0 0.0
      %2020 = vmatpush.msra.mxu0 0.0
      %2021 = vmatpush.msra.mxu0 0.0
      %2022 = vmatpush.msra.mxu0 0.0
      %2023 = vmatpush.msra.mxu0 0.0
      %2024 = vmatpush.msra.mxu0 0.0
      %2025 = vmatpush.msra.mxu0 0.0
      %2026 = vmatpush.msra.mxu0 %v1966
      %2027 = vmatmul.f32.gmra.mxu0 %v1957
      %v2028 = vpop.f32.mrf.mxu0
      %v2029 = vadd.f32 0.0, %v2028
      %2030 = vdwg.mxu0
      %2031 = vmatpush.msra.mxu0 0.0
      %2032 = vmatpush.msra.mxu0 0.0
      %2033 = vmatpush.msra.mxu0 0.0
      %2034 = vmatpush.msra.mxu0 0.0
      %2035 = vmatpush.msra.mxu0 0.0
      %2036 = vmatpush.msra.mxu0 0.0
      %2037 = vmatpush.msra.mxu0 0.0
      %2038 = vmatpush.msra.mxu0 0.0
      %2039 = vmatpush.msra.mxu0 0.0
      %2040 = vmatpush.msra.mxu0 0.0
      %2041 = vmatpush.msra.mxu0 0.0
      %2042 = vmatpush.msra.mxu0 0.0
      %2043 = vmatpush.msra.mxu0 0.0
      %2044 = vmatpush.msra.mxu0 0.0
      %2045 = vmatpush.msra.mxu0 0.0
      %2046 = vmatpush.msra.mxu0 %v1969
      %2047 = vmatmul.f32.gmra.mxu0 %v1957
      %v2048 = vpop.f32.mrf.mxu0
      %v2049 = vadd.f32 0.0, %v2048
      %2050 = vdwg.mxu0
      %v2051 = vadd.f32 %v1913, %v1989
      %v2052 = vadd.f32 %v1914, %v2009
      %v2053 = vadd.f32 %v1915, %v2029
      %v2054 = vadd.f32 %v1916, %v2049
      %2055 = vst [vmem:[#allocation1] ss:$2 sm:$0xff] %v371
      %v2056 = vld.sshfl [vmem:[#allocation1 + $0x8] sm:$0xff pattern:$0x75316420]
      %2057 = vrot.lane.b32.xlu0 %v2056, 1
      %v2058 = vpop.permute.xlu0 %2057
      %2060 = vst [vmem:[#allocation1] ss:$2 sm:$0xff] %v370
      %s2061 = scalar_lea.vmem [#allocation1], 16
      %2062 = vst [vmem:[%s2061] ss:$2 sm:$0xff] %v371
      %v2063 = vld.sshfl [vmem:[#allocation1] sm:$0xff pattern:$0x75316420]
      %v2064 = vld.sshfl [vmem:[#allocation1 + $0x8] sm:$0xff pattern:$0x75316420]
      %v2065 = vld.sshfl [vmem:[#allocation1 + $0x10] sm:$0xff pattern:$0x75316420]
      %v2066 = vld.sshfl [vmem:[#allocation1 + $0x18] sm:$0xff pattern:$0x75316420]
      %2067 = vrot.lane.b32.xlu0 %v2063, 1
      %v2068 = vpop.permute.xlu0 %2067
      %2069 = vrot.lane.b32.xlu0 %v2064, 1
      %v2070 = vpop.permute.xlu0 %2069
      %2071 = vrot.lane.b32.xlu0 %v2065, 1
      %v2072 = vpop.permute.xlu0 %2071
      %2073 = vrot.lane.b32.xlu0 %v2066, 1
      %v2074 = vpop.permute.xlu0 %2073
      %vm2075 = vcmask 7168
      %v2076 = vsel %vm2075, %v2068, %v2070
      %v2077 = vsel %vm2075, %v2070, %v2072
      %v2078 = vsel %vm2075, %v2072, %v2074
      %v2083 = vsel %vm2075, %v2058, %v2068
      %v2084 = vmul.f32 %v2083, %v423
      %v2085 = vmul.f32 %v2076, %v424
      %v2086 = vmul.f32 %v2077, %v425
      %v2087 = vmul.f32 %v2078, %v426
      %s2088 = scalar_lea.vmem %s4, 48
      %v2089 = vld [vmem:[%s2088] sm:$0xf]
      %v2091 = vsel %vm471, %v2089, 0
      %v2094 = vsel %vm475, %v2084, 0
      %v2097 = vsel %vm475, %v2085, 0
      %v2100 = vsel %vm475, %v2086, 0
      %v2103 = vsel %vm475, %v2087, 0
      %2105 = vmatpush.msra.mxu0 0.0
      %2106 = vmatpush.msra.mxu0 0.0
      %2107 = vmatpush.msra.mxu0 0.0
      %2108 = vmatpush.msra.mxu0 0.0
      %2109 = vmatpush.msra.mxu0 0.0
      %2110 = vmatpush.msra.mxu0 0.0
      %2111 = vmatpush.msra.mxu0 0.0
      %2112 = vmatpush.msra.mxu0 0.0
      %2113 = vmatpush.msra.mxu0 0.0
      %2114 = vmatpush.msra.mxu0 0.0
      %2115 = vmatpush.msra.mxu0 0.0
      %2116 = vmatpush.msra.mxu0 0.0
      %2117 = vmatpush.msra.mxu0 0.0
      %2118 = vmatpush.msra.mxu0 0.0
      %2119 = vmatpush.msra.mxu0 0.0
      %2120 = vmatpush.msra.mxu0 %v2094
      %2121 = vmatmul.f32.gmra.mxu0 %v2091
      %v2122 = vpop.f32.mrf.mxu0
      %v2123 = vadd.f32 0.0, %v2122
      %2124 = vdwg.mxu0
      %2125 = vmatpush.msra.mxu0 0.0
      %2126 = vmatpush.msra.mxu0 0.0
      %2127 = vmatpush.msra.mxu0 0.0
      %2128 = vmatpush.msra.mxu0 0.0
      %2129 = vmatpush.msra.mxu0 0.0
      %2130 = vmatpush.msra.mxu0 0.0
      %2131 = vmatpush.msra.mxu0 0.0
      %2132 = vmatpush.msra.mxu0 0.0
      %2133 = vmatpush.msra.mxu0 0.0
      %2134 = vmatpush.msra.mxu0 0.0
      %2135 = vmatpush.msra.mxu0 0.0
      %2136 = vmatpush.msra.mxu0 0.0
      %2137 = vmatpush.msra.mxu0 0.0
      %2138 = vmatpush.msra.mxu0 0.0
      %2139 = vmatpush.msra.mxu0 0.0
      %2140 = vmatpush.msra.mxu0 %v2097
      %2141 = vmatmul.f32.gmra.mxu0 %v2091
      %v2142 = vpop.f32.mrf.mxu0
      %v2143 = vadd.f32 0.0, %v2142
      %2144 = vdwg.mxu0
      %2145 = vmatpush.msra.mxu0 0.0
      %2146 = vmatpush.msra.mxu0 0.0
      %2147 = vmatpush.msra.mxu0 0.0
      %2148 = vmatpush.msra.mxu0 0.0
      %2149 = vmatpush.msra.mxu0 0.0
      %2150 = vmatpush.msra.mxu0 0.0
      %2151 = vmatpush.msra.mxu0 0.0
      %2152 = vmatpush.msra.mxu0 0.0
      %2153 = vmatpush.msra.mxu0 0.0
      %2154 = vmatpush.msra.mxu0 0.0
      %2155 = vmatpush.msra.mxu0 0.0
      %2156 = vmatpush.msra.mxu0 0.0
      %2157 = vmatpush.msra.mxu0 0.0
      %2158 = vmatpush.msra.mxu0 0.0
      %2159 = vmatpush.msra.mxu0 0.0
      %2160 = vmatpush.msra.mxu0 %v2100
      %2161 = vmatmul.f32.gmra.mxu0 %v2091
      %v2162 = vpop.f32.mrf.mxu0
      %v2163 = vadd.f32 0.0, %v2162
      %2164 = vdwg.mxu0
      %2165 = vmatpush.msra.mxu0 0.0
      %2166 = vmatpush.msra.mxu0 0.0
      %2167 = vmatpush.msra.mxu0 0.0
      %2168 = vmatpush.msra.mxu0 0.0
      %2169 = vmatpush.msra.mxu0 0.0
      %2170 = vmatpush.msra.mxu0 0.0
      %2171 = vmatpush.msra.mxu0 0.0
      %2172 = vmatpush.msra.mxu0 0.0
      %2173 = vmatpush.msra.mxu0 0.0
      %2174 = vmatpush.msra.mxu0 0.0
      %2175 = vmatpush.msra.mxu0 0.0
      %2176 = vmatpush.msra.mxu0 0.0
      %2177 = vmatpush.msra.mxu0 0.0
      %2178 = vmatpush.msra.mxu0 0.0
      %2179 = vmatpush.msra.mxu0 0.0
      %2180 = vmatpush.msra.mxu0 %v2103
      %2181 = vmatmul.f32.gmra.mxu0 %v2091
      %v2182 = vpop.f32.mrf.mxu0
      %v2183 = vadd.f32 0.0, %v2182
      %2184 = vdwg.mxu0
      %v2185 = vadd.f32 %v2051, %v2123
      %v2186 = vadd.f32 %v2052, %v2143
      %v2187 = vadd.f32 %v2053, %v2163
      %v2188 = vadd.f32 %v2054, %v2183
      %s2189 = scalar_lea.vmem %s4, 52
      %v2190 = vld [vmem:[%s2189] sm:$0xf]
      %2191 = vst [vmem:[#allocation1] ss:$2 sm:$0xff] %v370
      %s2192 = scalar_lea.vmem [#allocation1], 16
      %2193 = vst [vmem:[%s2192] ss:$2 sm:$0xff] %v371
      %v2194 = vld.sshfl [vmem:[#allocation1] sm:$0xff pattern:$0x75316420]
      %v2195 = vld.sshfl [vmem:[#allocation1 + $0x8] sm:$0xff pattern:$0x75316420]
      %v2196 = vld.sshfl [vmem:[#allocation1 + $0x10] sm:$0xff pattern:$0x75316420]
      %v2197 = vld.sshfl [vmem:[#allocation1 + $0x18] sm:$0xff pattern:$0x75316420]
      %v2199 = vsel %vm471, %v2190, 0
      %v2201 = vsel %vm475, %v2194, 0
      %v2203 = vsel %vm475, %v2195, 0
      %v2205 = vsel %vm475, %v2196, 0
      %v2207 = vsel %vm475, %v2197, 0
      %2209 = vmatpush.msra.mxu0 0.0
      %2210 = vmatpush.msra.mxu0 0.0
      %2211 = vmatpush.msra.mxu0 0.0
      %2212 = vmatpush.msra.mxu0 0.0
      %2213 = vmatpush.msra.mxu0 0.0
      %2214 = vmatpush.msra.mxu0 0.0
      %2215 = vmatpush.msra.mxu0 0.0
      %2216 = vmatpush.msra.mxu0 0.0
      %2217 = vmatpush.msra.mxu0 0.0
      %2218 = vmatpush.msra.mxu0 0.0
      %2219 = vmatpush.msra.mxu0 0.0
      %2220 = vmatpush.msra.mxu0 0.0
      %2221 = vmatpush.msra.mxu0 0.0
      %2222 = vmatpush.msra.mxu0 0.0
      %2223 = vmatpush.msra.mxu0 0.0
      %2224 = vmatpush.msra.mxu0 %v2201
      %2225 = vmatmul.f32.gmra.mxu0 %v2199
      %v2226 = vpop.f32.mrf.mxu0
      %v2227 = vadd.f32 0.0, %v2226
      %2228 = vdwg.mxu0
      %2229 = vmatpush.msra.mxu0 0.0
      %2230 = vmatpush.msra.mxu0 0.0
      %2231 = vmatpush.msra.mxu0 0.0
      %2232 = vmatpush.msra.mxu0 0.0
      %2233 = vmatpush.msra.mxu0 0.0
      %2234 = vmatpush.msra.mxu0 0.0
      %2235 = vmatpush.msra.mxu0 0.0
      %2236 = vmatpush.msra.mxu0 0.0
      %2237 = vmatpush.msra.mxu0 0.0
      %2238 = vmatpush.msra.mxu0 0.0
      %2239 = vmatpush.msra.mxu0 0.0
      %2240 = vmatpush.msra.mxu0 0.0
      %2241 = vmatpush.msra.mxu0 0.0
      %2242 = vmatpush.msra.mxu0 0.0
      %2243 = vmatpush.msra.mxu0 0.0
      %2244 = vmatpush.msra.mxu0 %v2203
      %2245 = vmatmul.f32.gmra.mxu0 %v2199
      %v2246 = vpop.f32.mrf.mxu0
      %v2247 = vadd.f32 0.0, %v2246
      %2248 = vdwg.mxu0
      %2249 = vmatpush.msra.mxu0 0.0
      %2250 = vmatpush.msra.mxu0 0.0
      %2251 = vmatpush.msra.mxu0 0.0
      %2252 = vmatpush.msra.mxu0 0.0
      %2253 = vmatpush.msra.mxu0 0.0
      %2254 = vmatpush.msra.mxu0 0.0
      %2255 = vmatpush.msra.mxu0 0.0
      %2256 = vmatpush.msra.mxu0 0.0
      %2257 = vmatpush.msra.mxu0 0.0
      %2258 = vmatpush.msra.mxu0 0.0
      %2259 = vmatpush.msra.mxu0 0.0
      %2260 = vmatpush.msra.mxu0 0.0
      %2261 = vmatpush.msra.mxu0 0.0
      %2262 = vmatpush.msra.mxu0 0.0
      %2263 = vmatpush.msra.mxu0 0.0
      %2264 = vmatpush.msra.mxu0 %v2205
      %2265 = vmatmul.f32.gmra.mxu0 %v2199
      %v2266 = vpop.f32.mrf.mxu0
      %v2267 = vadd.f32 0.0, %v2266
      %2268 = vdwg.mxu0
      %2269 = vmatpush.msra.mxu0 0.0
      %2270 = vmatpush.msra.mxu0 0.0
      %2271 = vmatpush.msra.mxu0 0.0
      %2272 = vmatpush.msra.mxu0 0.0
      %2273 = vmatpush.msra.mxu0 0.0
      %2274 = vmatpush.msra.mxu0 0.0
      %2275 = vmatpush.msra.mxu0 0.0
      %2276 = vmatpush.msra.mxu0 0.0
      %2277 = vmatpush.msra.mxu0 0.0
      %2278 = vmatpush.msra.mxu0 0.0
      %2279 = vmatpush.msra.mxu0 0.0
      %2280 = vmatpush.msra.mxu0 0.0
      %2281 = vmatpush.msra.mxu0 0.0
      %2282 = vmatpush.msra.mxu0 0.0
      %2283 = vmatpush.msra.mxu0 0.0
      %2284 = vmatpush.msra.mxu0 %v2207
      %2285 = vmatmul.f32.gmra.mxu0 %v2199
      %v2286 = vpop.f32.mrf.mxu0
      %v2287 = vadd.f32 0.0, %v2286
      %2288 = vdwg.mxu0
      %v2289 = vadd.f32 %v2185, %v2227
      %v2290 = vadd.f32 %v2186, %v2247
      %v2291 = vadd.f32 %v2187, %v2267
      %v2292 = vadd.f32 %v2188, %v2287
      %2293 = vst [vmem:[#allocation1] ss:$2 sm:$0xff] %v370
      %s2294 = scalar_lea.vmem [#allocation1], 16
      %2295 = vst [vmem:[%s2294] ss:$2 sm:$0xff] %v371
      %v2296 = vld.sshfl [vmem:[#allocation1] sm:$0xff pattern:$0x75316420]
      %v2297 = vld.sshfl [vmem:[#allocation1 + $0x8] sm:$0xff pattern:$0x75316420]
      %v2298 = vld.sshfl [vmem:[#allocation1 + $0x10] sm:$0xff pattern:$0x75316420]
      %v2299 = vld.sshfl [vmem:[#allocation1 + $0x18] sm:$0xff pattern:$0x75316420]
      %2300 = vrot.lane.b32.xlu0 %v2296, 127
      %v2301 = vpop.permute.xlu0 %2300
      %2302 = vrot.lane.b32.xlu0 %v2297, 127
      %v2303 = vpop.permute.xlu0 %2302
      %2304 = vrot.lane.b32.xlu0 %v2298, 127
      %v2305 = vpop.permute.xlu0 %2304
      %2306 = vrot.lane.b32.xlu0 %v2299, 127
      %v2307 = vpop.permute.xlu0 %2306
      %vm2308 = vcmask 1039360
      %v2309 = vsel %vm2308, %v2301, %v2303
      %v2310 = vsel %vm2308, %v2303, %v2305
      %v2311 = vsel %vm2308, %v2305, %v2307
      %2316 = vst [vmem:[#allocation1] ss:$2 sm:$0xff] %v370
      %v2317 = vld.sshfl [vmem:[#allocation1] sm:$0xff pattern:$0x75316420]
      %2318 = vrot.lane.b32.xlu0 %v2317, 127
      %v2319 = vpop.permute.xlu0 %2318
      %v2321 = vsel %vm2308, %v2307, %v2319
      %v2322 = vmul.f32 %v2309, %v700
      %v2323 = vmul.f32 %v2310, %v701
      %v2324 = vmul.f32 %v2311, %v702
      %v2325 = vmul.f32 %v2321, %v703
      %s2326 = scalar_lea.vmem %s4, 56
      %v2327 = vld [vmem:[%s2326] sm:$0xf]
      %v2329 = vsel %vm471, %v2327, 0
      %v2332 = vsel %vm475, %v2322, 0
      %v2335 = vsel %vm475, %v2323, 0
      %v2338 = vsel %vm475, %v2324, 0
      %v2341 = vsel %vm475, %v2325, 0
      %2343 = vmatpush.msra.mxu0 0.0
      %2344 = vmatpush.msra.mxu0 0.0
      %2345 = vmatpush.msra.mxu0 0.0
      %2346 = vmatpush.msra.mxu0 0.0
      %2347 = vmatpush.msra.mxu0 0.0
      %2348 = vmatpush.msra.mxu0 0.0
      %2349 = vmatpush.msra.mxu0 0.0
      %2350 = vmatpush.msra.mxu0 0.0
      %2351 = vmatpush.msra.mxu0 0.0
      %2352 = vmatpush.msra.mxu0 0.0
      %2353 = vmatpush.msra.mxu0 0.0
      %2354 = vmatpush.msra.mxu0 0.0
      %2355 = vmatpush.msra.mxu0 0.0
      %2356 = vmatpush.msra.mxu0 0.0
      %2357 = vmatpush.msra.mxu0 0.0
      %2358 = vmatpush.msra.mxu0 %v2332
      %2359 = vmatmul.f32.gmra.mxu0 %v2329
      %v2360 = vpop.f32.mrf.mxu0
      %v2361 = vadd.f32 0.0, %v2360
      %2362 = vdwg.mxu0
      %2363 = vmatpush.msra.mxu0 0.0
      %2364 = vmatpush.msra.mxu0 0.0
      %2365 = vmatpush.msra.mxu0 0.0
      %2366 = vmatpush.msra.mxu0 0.0
      %2367 = vmatpush.msra.mxu0 0.0
      %2368 = vmatpush.msra.mxu0 0.0
      %2369 = vmatpush.msra.mxu0 0.0
      %2370 = vmatpush.msra.mxu0 0.0
      %2371 = vmatpush.msra.mxu0 0.0
      %2372 = vmatpush.msra.mxu0 0.0
      %2373 = vmatpush.msra.mxu0 0.0
      %2374 = vmatpush.msra.mxu0 0.0
      %2375 = vmatpush.msra.mxu0 0.0
      %2376 = vmatpush.msra.mxu0 0.0
      %2377 = vmatpush.msra.mxu0 0.0
      %2378 = vmatpush.msra.mxu0 %v2335
      %2379 = vmatmul.f32.gmra.mxu0 %v2329
      %v2380 = vpop.f32.mrf.mxu0
      %v2381 = vadd.f32 0.0, %v2380
      %2382 = vdwg.mxu0
      %2383 = vmatpush.msra.mxu0 0.0
      %2384 = vmatpush.msra.mxu0 0.0
      %2385 = vmatpush.msra.mxu0 0.0
      %2386 = vmatpush.msra.mxu0 0.0
      %2387 = vmatpush.msra.mxu0 0.0
      %2388 = vmatpush.msra.mxu0 0.0
      %2389 = vmatpush.msra.mxu0 0.0
      %2390 = vmatpush.msra.mxu0 0.0
      %2391 = vmatpush.msra.mxu0 0.0
      %2392 = vmatpush.msra.mxu0 0.0
      %2393 = vmatpush.msra.mxu0 0.0
      %2394 = vmatpush.msra.mxu0 0.0
      %2395 = vmatpush.msra.mxu0 0.0
      %2396 = vmatpush.msra.mxu0 0.0
      %2397 = vmatpush.msra.mxu0 0.0
      %2398 = vmatpush.msra.mxu0 %v2338
      %2399 = vmatmul.f32.gmra.mxu0 %v2329
      %v2400 = vpop.f32.mrf.mxu0
      %v2401 = vadd.f32 0.0, %v2400
      %2402 = vdwg.mxu0
      %2403 = vmatpush.msra.mxu0 0.0
      %2404 = vmatpush.msra.mxu0 0.0
      %2405 = vmatpush.msra.mxu0 0.0
      %2406 = vmatpush.msra.mxu0 0.0
      %2407 = vmatpush.msra.mxu0 0.0
      %2408 = vmatpush.msra.mxu0 0.0
      %2409 = vmatpush.msra.mxu0 0.0
      %2410 = vmatpush.msra.mxu0 0.0
      %2411 = vmatpush.msra.mxu0 0.0
      %2412 = vmatpush.msra.mxu0 0.0
      %2413 = vmatpush.msra.mxu0 0.0
      %2414 = vmatpush.msra.mxu0 0.0
      %2415 = vmatpush.msra.mxu0 0.0
      %2416 = vmatpush.msra.mxu0 0.0
      %2417 = vmatpush.msra.mxu0 0.0
      %2418 = vmatpush.msra.mxu0 %v2341
      %2419 = vmatmul.f32.gmra.mxu0 %v2329
      %v2420 = vpop.f32.mrf.mxu0
      %v2421 = vadd.f32 0.0, %v2420
      %2422 = vdwg.mxu0
      %v2423 = vadd.f32 %v2289, %v2361
      %v2424 = vadd.f32 %v2290, %v2381
      %v2425 = vadd.f32 %v2291, %v2401
      %v2426 = vadd.f32 %v2292, %v2421
      %2427 = vst [vmem:[#allocation1] ss:$2 sm:$0xff] %v370
      %s2428 = scalar_lea.vmem [#allocation1], 16
      %2429 = vst [vmem:[%s2428] ss:$2 sm:$0xff] %v371
      %v2430 = vld.sshfl [vmem:[#allocation1] sm:$0xff pattern:$0x75316420]
      %v2431 = vld.sshfl [vmem:[#allocation1 + $0x8] sm:$0xff pattern:$0x75316420]
      %v2432 = vld.sshfl [vmem:[#allocation1 + $0x10] sm:$0xff pattern:$0x75316420]
      %v2433 = vld.sshfl [vmem:[#allocation1 + $0x18] sm:$0xff pattern:$0x75316420]
      %2434 = vrot.lane.b32.xlu0 %v2430, 121
      %v2435 = vpop.permute.xlu0 %2434
      %2436 = vrot.lane.b32.xlu0 %v2431, 121
      %v2437 = vpop.permute.xlu0 %2436
      %2438 = vrot.lane.b32.xlu0 %v2432, 121
      %v2439 = vpop.permute.xlu0 %2438
      %2440 = vrot.lane.b32.xlu0 %v2433, 121
      %v2441 = vpop.permute.xlu0 %2440
      %vm2442 = vcmask 990208
      %v2443 = vsel %vm2442, %v2435, %v2437
      %v2444 = vsel %vm2442, %v2437, %v2439
      %v2445 = vsel %vm2442, %v2439, %v2441
      %2450 = vst [vmem:[#allocation1] ss:$2 sm:$0xff] %v370
      %v2451 = vld.sshfl [vmem:[#allocation1] sm:$0xff pattern:$0x75316420]
      %2452 = vrot.lane.b32.xlu0 %v2451, 121
      %v2453 = vpop.permute.xlu0 %2452
      %v2455 = vsel %vm2442, %v2441, %v2453
      %v2456 = vmul.f32 %v2443, %v1252
      %v2457 = vmul.f32 %v2444, %v1253
      %v2458 = vmul.f32 %v2445, %v1254
      %v2459 = vmul.f32 %v2455, %v1255
      %v2460 = vmul.f32 %v2456, %v423
      %v2461 = vmul.f32 %v2457, %v424
      %v2462 = vmul.f32 %v2458, %v425
      %v2463 = vmul.f32 %v2459, %v426
      %s2464 = scalar_lea.vmem %s4, 60
      %v2465 = vld [vmem:[%s2464] sm:$0xf]
      %v2467 = vsel %vm471, %v2465, 0
      %v2470 = vsel %vm475, %v2460, 0
      %v2473 = vsel %vm475, %v2461, 0
      %v2476 = vsel %vm475, %v2462, 0
      %v2479 = vsel %vm475, %v2463, 0
      %2481 = vmatpush.msra.mxu0 0.0
      %2482 = vmatpush.msra.mxu0 0.0
      %2483 = vmatpush.msra.mxu0 0.0
      %2484 = vmatpush.msra.mxu0 0.0
      %2485 = vmatpush.msra.mxu0 0.0
      %2486 = vmatpush.msra.mxu0 0.0
      %2487 = vmatpush.msra.mxu0 0.0
      %2488 = vmatpush.msra.mxu0 0.0
      %2489 = vmatpush.msra.mxu0 0.0
      %2490 = vmatpush.msra.mxu0 0.0
      %2491 = vmatpush.msra.mxu0 0.0
      %2492 = vmatpush.msra.mxu0 0.0
      %2493 = vmatpush.msra.mxu0 0.0
      %2494 = vmatpush.msra.mxu0 0.0
      %2495 = vmatpush.msra.mxu0 0.0
      %2496 = vmatpush.msra.mxu0 %v2470
      %2497 = vmatmul.f32.gmra.mxu0 %v2467
      %v2498 = vpop.f32.mrf.mxu0
      %v2499 = vadd.f32 0.0, %v2498
      %2500 = vdwg.mxu0
      %2501 = vmatpush.msra.mxu0 0.0
      %2502 = vmatpush.msra.mxu0 0.0
      %2503 = vmatpush.msra.mxu0 0.0
      %2504 = vmatpush.msra.mxu0 0.0
      %2505 = vmatpush.msra.mxu0 0.0
      %2506 = vmatpush.msra.mxu0 0.0
      %2507 = vmatpush.msra.mxu0 0.0
      %2508 = vmatpush.msra.mxu0 0.0
      %2509 = vmatpush.msra.mxu0 0.0
      %2510 = vmatpush.msra.mxu0 0.0
      %2511 = vmatpush.msra.mxu0 0.0
      %2512 = vmatpush.msra.mxu0 0.0
      %2513 = vmatpush.msra.mxu0 0.0
      %2514 = vmatpush.msra.mxu0 0.0
      %2515 = vmatpush.msra.mxu0 0.0
      %2516 = vmatpush.msra.mxu0 %v2473
      %2517 = vmatmul.f32.gmra.mxu0 %v2467
      %v2518 = vpop.f32.mrf.mxu0
      %v2519 = vadd.f32 0.0, %v2518
      %2520 = vdwg.mxu0
      %2521 = vmatpush.msra.mxu0 0.0
      %2522 = vmatpush.msra.mxu0 0.0
      %2523 = vmatpush.msra.mxu0 0.0
      %2524 = vmatpush.msra.mxu0 0.0
      %2525 = vmatpush.msra.mxu0 0.0
      %2526 = vmatpush.msra.mxu0 0.0
      %2527 = vmatpush.msra.mxu0 0.0
      %2528 = vmatpush.msra.mxu0 0.0
      %2529 = vmatpush.msra.mxu0 0.0
      %2530 = vmatpush.msra.mxu0 0.0
      %2531 = vmatpush.msra.mxu0 0.0
      %2532 = vmatpush.msra.mxu0 0.0
      %2533 = vmatpush.msra.mxu0 0.0
      %2534 = vmatpush.msra.mxu0 0.0
      %2535 = vmatpush.msra.mxu0 0.0
      %2536 = vmatpush.msra.mxu0 %v2476
      %2537 = vmatmul.f32.gmra.mxu0 %v2467
      %v2538 = vpop.f32.mrf.mxu0
      %v2539 = vadd.f32 0.0, %v2538
      %2540 = vdwg.mxu0
      %2541 = vmatpush.msra.mxu0 0.0
      %2542 = vmatpush.msra.mxu0 0.0
      %2543 = vmatpush.msra.mxu0 0.0
      %2544 = vmatpush.msra.mxu0 0.0
      %2545 = vmatpush.msra.mxu0 0.0
      %2546 = vmatpush.msra.mxu0 0.0
      %2547 = vmatpush.msra.mxu0 0.0
      %2548 = vmatpush.msra.mxu0 0.0
      %2549 = vmatpush.msra.mxu0 0.0
      %2550 = vmatpush.msra.mxu0 0.0
      %2551 = vmatpush.msra.mxu0 0.0
      %2552 = vmatpush.msra.mxu0 0.0
      %2553 = vmatpush.msra.mxu0 0.0
      %2554 = vmatpush.msra.mxu0 0.0
      %2555 = vmatpush.msra.mxu0 0.0
      %2556 = vmatpush.msra.mxu0 %v2479
      %2557 = vmatmul.f32.gmra.mxu0 %v2467
      %v2558 = vpop.f32.mrf.mxu0
      %v2559 = vadd.f32 0.0, %v2558
      %2560 = vdwg.mxu0
      %v2561 = vadd.f32 %v2423, %v2499
      %v2562 = vadd.f32 %v2424, %v2519
      %v2563 = vadd.f32 %v2425, %v2539
      %v2564 = vadd.f32 %v2426, %v2559
      %2565 = vst [vmem:[#allocation1] ss:$2 sm:$0xff] %v370
      %s2566 = scalar_lea.vmem [#allocation1], 16
      %2567 = vst [vmem:[%s2566] ss:$2 sm:$0xff] %v371
      %v2568 = vld.sshfl [vmem:[#allocation1] sm:$0xff pattern:$0x75316420]
      %v2569 = vld.sshfl [vmem:[#allocation1 + $0x8] sm:$0xff pattern:$0x75316420]
      %v2570 = vld.sshfl [vmem:[#allocation1 + $0x10] sm:$0xff pattern:$0x75316420]
      %v2571 = vld.sshfl [vmem:[#allocation1 + $0x18] sm:$0xff pattern:$0x75316420]
      %2572 = vrot.lane.b32.xlu0 %v2568, 120
      %v2573 = vpop.permute.xlu0 %2572
      %2574 = vrot.lane.b32.xlu0 %v2569, 120
      %v2575 = vpop.permute.xlu0 %2574
      %2576 = vrot.lane.b32.xlu0 %v2570, 120
      %v2577 = vpop.permute.xlu0 %2576
      %2578 = vrot.lane.b32.xlu0 %v2571, 120
      %v2579 = vpop.permute.xlu0 %2578
      %vm2580 = vcmask 982016
      %v2581 = vsel %vm2580, %v2573, %v2575
      %v2582 = vsel %vm2580, %v2575, %v2577
      %v2583 = vsel %vm2580, %v2577, %v2579
      %2588 = vst [vmem:[#allocation1] ss:$2 sm:$0xff] %v370
      %v2589 = vld.sshfl [vmem:[#allocation1] sm:$0xff pattern:$0x75316420]
      %2590 = vrot.lane.b32.xlu0 %v2589, 120
      %v2591 = vpop.permute.xlu0 %2590
      %v2593 = vsel %vm2580, %v2579, %v2591
      %v2594 = vmul.f32 %v2581, %v1252
      %v2595 = vmul.f32 %v2582, %v1253
      %v2596 = vmul.f32 %v2583, %v1254
      %v2597 = vmul.f32 %v2593, %v1255
      %s2598 = scalar_lea.vmem %s4, 64
      %v2599 = vld [vmem:[%s2598] sm:$0xf]
      %v2601 = vsel %vm471, %v2599, 0
      %v2604 = vsel %vm475, %v2594, 0
      %v2607 = vsel %vm475, %v2595, 0
      %v2610 = vsel %vm475, %v2596, 0
      %v2613 = vsel %vm475, %v2597, 0
      %2615 = vmatpush.msra.mxu0 0.0
      %2616 = vmatpush.msra.mxu0 0.0
      %2617 = vmatpush.msra.mxu0 0.0
      %2618 = vmatpush.msra.mxu0 0.0
      %2619 = vmatpush.msra.mxu0 0.0
      %2620 = vmatpush.msra.mxu0 0.0
      %2621 = vmatpush.msra.mxu0 0.0
      %2622 = vmatpush.msra.mxu0 0.0
      %2623 = vmatpush.msra.mxu0 0.0
      %2624 = vmatpush.msra.mxu0 0.0
      %2625 = vmatpush.msra.mxu0 0.0
      %2626 = vmatpush.msra.mxu0 0.0
      %2627 = vmatpush.msra.mxu0 0.0
      %2628 = vmatpush.msra.mxu0 0.0
      %2629 = vmatpush.msra.mxu0 0.0
      %2630 = vmatpush.msra.mxu0 %v2604
      %2631 = vmatmul.f32.gmra.mxu0 %v2601
      %v2632 = vpop.f32.mrf.mxu0
      %v2633 = vadd.f32 0.0, %v2632
      %2634 = vdwg.mxu0
      %2635 = vmatpush.msra.mxu0 0.0
      %2636 = vmatpush.msra.mxu0 0.0
      %2637 = vmatpush.msra.mxu0 0.0
      %2638 = vmatpush.msra.mxu0 0.0
      %2639 = vmatpush.msra.mxu0 0.0
      %2640 = vmatpush.msra.mxu0 0.0
      %2641 = vmatpush.msra.mxu0 0.0
      %2642 = vmatpush.msra.mxu0 0.0
      %2643 = vmatpush.msra.mxu0 0.0
      %2644 = vmatpush.msra.mxu0 0.0
      %2645 = vmatpush.msra.mxu0 0.0
      %2646 = vmatpush.msra.mxu0 0.0
      %2647 = vmatpush.msra.mxu0 0.0
      %2648 = vmatpush.msra.mxu0 0.0
      %2649 = vmatpush.msra.mxu0 0.0
      %2650 = vmatpush.msra.mxu0 %v2607
      %2651 = vmatmul.f32.gmra.mxu0 %v2601
      %v2652 = vpop.f32.mrf.mxu0
      %v2653 = vadd.f32 0.0, %v2652
      %2654 = vdwg.mxu0
      %2655 = vmatpush.msra.mxu0 0.0
      %2656 = vmatpush.msra.mxu0 0.0
      %2657 = vmatpush.msra.mxu0 0.0
      %2658 = vmatpush.msra.mxu0 0.0
      %2659 = vmatpush.msra.mxu0 0.0
      %2660 = vmatpush.msra.mxu0 0.0
      %2661 = vmatpush.msra.mxu0 0.0
      %2662 = vmatpush.msra.mxu0 0.0
      %2663 = vmatpush.msra.mxu0 0.0
      %2664 = vmatpush.msra.mxu0 0.0
      %2665 = vmatpush.msra.mxu0 0.0
      %2666 = vmatpush.msra.mxu0 0.0
      %2667 = vmatpush.msra.mxu0 0.0
      %2668 = vmatpush.msra.mxu0 0.0
      %2669 = vmatpush.msra.mxu0 0.0
      %2670 = vmatpush.msra.mxu0 %v2610
      %2671 = vmatmul.f32.gmra.mxu0 %v2601
      %v2672 = vpop.f32.mrf.mxu0
      %v2673 = vadd.f32 0.0, %v2672
      %2674 = vdwg.mxu0
      %2675 = vmatpush.msra.mxu0 0.0
      %2676 = vmatpush.msra.mxu0 0.0
      %2677 = vmatpush.msra.mxu0 0.0
      %2678 = vmatpush.msra.mxu0 0.0
      %2679 = vmatpush.msra.mxu0 0.0
      %2680 = vmatpush.msra.mxu0 0.0
      %2681 = vmatpush.msra.mxu0 0.0
      %2682 = vmatpush.msra.mxu0 0.0
      %2683 = vmatpush.msra.mxu0 0.0
      %2684 = vmatpush.msra.mxu0 0.0
      %2685 = vmatpush.msra.mxu0 0.0
      %2686 = vmatpush.msra.mxu0 0.0
      %2687 = vmatpush.msra.mxu0 0.0
      %2688 = vmatpush.msra.mxu0 0.0
      %2689 = vmatpush.msra.mxu0 0.0
      %2690 = vmatpush.msra.mxu0 %v2613
      %2691 = vmatmul.f32.gmra.mxu0 %v2601
      %v2692 = vpop.f32.mrf.mxu0
      %v2693 = vadd.f32 0.0, %v2692
      %2694 = vdwg.mxu0
      %v2695 = vadd.f32 %v2561, %v2633
      %v2696 = vadd.f32 %v2562, %v2653
      %v2697 = vadd.f32 %v2563, %v2673
      %v2698 = vadd.f32 %v2564, %v2693
      %2699 = vst [vmem:[#allocation1] ss:$2 sm:$0xff] %v370
      %s2700 = scalar_lea.vmem [#allocation1], 16
      %2701 = vst [vmem:[%s2700] ss:$2 sm:$0xff] %v371
      %v2702 = vld.sshfl [vmem:[#allocation1] sm:$0xff pattern:$0x75316420]
      %v2703 = vld.sshfl [vmem:[#allocation1 + $0x8] sm:$0xff pattern:$0x75316420]
      %v2704 = vld.sshfl [vmem:[#allocation1 + $0x10] sm:$0xff pattern:$0x75316420]
      %v2705 = vld.sshfl [vmem:[#allocation1 + $0x18] sm:$0xff pattern:$0x75316420]
      %2706 = vrot.lane.b32.xlu0 %v2702, 119
      %v2707 = vpop.permute.xlu0 %2706
      %2708 = vrot.lane.b32.xlu0 %v2703, 119
      %v2709 = vpop.permute.xlu0 %2708
      %2710 = vrot.lane.b32.xlu0 %v2704, 119
      %v2711 = vpop.permute.xlu0 %2710
      %2712 = vrot.lane.b32.xlu0 %v2705, 119
      %v2713 = vpop.permute.xlu0 %2712
      %vm2714 = vcmask 973824
      %v2715 = vsel %vm2714, %v2707, %v2709
      %v2716 = vsel %vm2714, %v2709, %v2711
      %v2717 = vsel %vm2714, %v2711, %v2713
      %2722 = vst [vmem:[#allocation1] ss:$2 sm:$0xff] %v370
      %v2723 = vld.sshfl [vmem:[#allocation1] sm:$0xff pattern:$0x75316420]
      %2724 = vrot.lane.b32.xlu0 %v2723, 119
      %v2725 = vpop.permute.xlu0 %2724
      %v2727 = vsel %vm2714, %v2713, %v2725
      %v2728 = vmul.f32 %v2715, %v1252
      %v2729 = vmul.f32 %v2716, %v1253
      %v2730 = vmul.f32 %v2717, %v1254
      %v2731 = vmul.f32 %v2727, %v1255
      %v2732 = vmul.f32 %v2728, %v700
      %v2733 = vmul.f32 %v2729, %v701
      %v2734 = vmul.f32 %v2730, %v702
      %v2735 = vmul.f32 %v2731, %v703
      %s2736 = scalar_lea.vmem %s4, 68
      %v2737 = vld [vmem:[%s2736] sm:$0xf]
      %v2739 = vsel %vm471, %v2737, 0
      %v2742 = vsel %vm475, %v2732, 0
      %v2745 = vsel %vm475, %v2733, 0
      %v2748 = vsel %vm475, %v2734, 0
      %v2751 = vsel %vm475, %v2735, 0
      %2753 = vmatpush.msra.mxu0 0.0
      %2754 = vmatpush.msra.mxu0 0.0
      %2755 = vmatpush.msra.mxu0 0.0
      %2756 = vmatpush.msra.mxu0 0.0
      %2757 = vmatpush.msra.mxu0 0.0
      %2758 = vmatpush.msra.mxu0 0.0
      %2759 = vmatpush.msra.mxu0 0.0
      %2760 = vmatpush.msra.mxu0 0.0
      %2761 = vmatpush.msra.mxu0 0.0
      %2762 = vmatpush.msra.mxu0 0.0
      %2763 = vmatpush.msra.mxu0 0.0
      %2764 = vmatpush.msra.mxu0 0.0
      %2765 = vmatpush.msra.mxu0 0.0
      %2766 = vmatpush.msra.mxu0 0.0
      %2767 = vmatpush.msra.mxu0 0.0
      %2768 = vmatpush.msra.mxu0 %v2742
      %2769 = vmatmul.f32.gmra.mxu0 %v2739
      %v2770 = vpop.f32.mrf.mxu0
      %v2771 = vadd.f32 0.0, %v2770
      %2772 = vdwg.mxu0
      %2773 = vmatpush.msra.mxu0 0.0
      %2774 = vmatpush.msra.mxu0 0.0
      %2775 = vmatpush.msra.mxu0 0.0
      %2776 = vmatpush.msra.mxu0 0.0
      %2777 = vmatpush.msra.mxu0 0.0
      %2778 = vmatpush.msra.mxu0 0.0
      %2779 = vmatpush.msra.mxu0 0.0
      %2780 = vmatpush.msra.mxu0 0.0
      %2781 = vmatpush.msra.mxu0 0.0
      %2782 = vmatpush.msra.mxu0 0.0
      %2783 = vmatpush.msra.mxu0 0.0
      %2784 = vmatpush.msra.mxu0 0.0
      %2785 = vmatpush.msra.mxu0 0.0
      %2786 = vmatpush.msra.mxu0 0.0
      %2787 = vmatpush.msra.mxu0 0.0
      %2788 = vmatpush.msra.mxu0 %v2745
      %2789 = vmatmul.f32.gmra.mxu0 %v2739
      %v2790 = vpop.f32.mrf.mxu0
      %v2791 = vadd.f32 0.0, %v2790
      %2792 = vdwg.mxu0
      %2793 = vmatpush.msra.mxu0 0.0
      %2794 = vmatpush.msra.mxu0 0.0
      %2795 = vmatpush.msra.mxu0 0.0
      %2796 = vmatpush.msra.mxu0 0.0
      %2797 = vmatpush.msra.mxu0 0.0
      %2798 = vmatpush.msra.mxu0 0.0
      %2799 = vmatpush.msra.mxu0 0.0
      %2800 = vmatpush.msra.mxu0 0.0
      %2801 = vmatpush.msra.mxu0 0.0
      %2802 = vmatpush.msra.mxu0 0.0
      %2803 = vmatpush.msra.mxu0 0.0
      %2804 = vmatpush.msra.mxu0 0.0
      %2805 = vmatpush.msra.mxu0 0.0
      %2806 = vmatpush.msra.mxu0 0.0
      %2807 = vmatpush.msra.mxu0 0.0
      %2808 = vmatpush.msra.mxu0 %v2748
      %2809 = vmatmul.f32.gmra.mxu0 %v2739
      %v2810 = vpop.f32.mrf.mxu0
      %v2811 = vadd.f32 0.0, %v2810
      %2812 = vdwg.mxu0
      %2813 = vmatpush.msra.mxu0 0.0
      %2814 = vmatpush.msra.mxu0 0.0
      %2815 = vmatpush.msra.mxu0 0.0
      %2816 = vmatpush.msra.mxu0 0.0
      %2817 = vmatpush.msra.mxu0 0.0
      %2818 = vmatpush.msra.mxu0 0.0
      %2819 = vmatpush.msra.mxu0 0.0
      %2820 = vmatpush.msra.mxu0 0.0
      %2821 = vmatpush.msra.mxu0 0.0
      %2822 = vmatpush.msra.mxu0 0.0
      %2823 = vmatpush.msra.mxu0 0.0
      %2824 = vmatpush.msra.mxu0 0.0
      %2825 = vmatpush.msra.mxu0 0.0
      %2826 = vmatpush.msra.mxu0 0.0
      %2827 = vmatpush.msra.mxu0 0.0
      %2828 = vmatpush.msra.mxu0 %v2751
      %2829 = vmatmul.f32.gmra.mxu0 %v2739
      %v2830 = vpop.f32.mrf.mxu0
      %v2831 = vadd.f32 0.0, %v2830
      %2832 = vdwg.mxu0
      %v2833 = vadd.f32 %v2695, %v2771
      %v2834 = vadd.f32 %v2696, %v2791
      %v2835 = vadd.f32 %v2697, %v2811
      %v2836 = vadd.f32 %v2698, %v2831
      %2837 = vst [vmem:[#allocation1] ss:$2 sm:$0xff] %v370
      %s2838 = scalar_lea.vmem [#allocation1], 16
      %2839 = vst [vmem:[%s2838] ss:$2 sm:$0xff] %v371
      %v2840 = vld.sshfl [vmem:[#allocation1] sm:$0xff pattern:$0x75316420]
      %v2841 = vld.sshfl [vmem:[#allocation1 + $0x8] sm:$0xff pattern:$0x75316420]
      %v2842 = vld.sshfl [vmem:[#allocation1 + $0x10] sm:$0xff pattern:$0x75316420]
      %v2843 = vld.sshfl [vmem:[#allocation1 + $0x18] sm:$0xff pattern:$0x75316420]
      %2844 = vrot.lane.b32.xlu0 %v2840, 73
      %v2845 = vpop.permute.xlu0 %2844
      %2846 = vrot.lane.b32.xlu0 %v2841, 73
      %v2847 = vpop.permute.xlu0 %2846
      %2848 = vrot.lane.b32.xlu0 %v2842, 73
      %v2849 = vpop.permute.xlu0 %2848
      %2850 = vrot.lane.b32.xlu0 %v2843, 73
      %v2851 = vpop.permute.xlu0 %2850
      %v2852 = vsel %vm398, %v2845, %v2847
      %v2853 = vsel %vm398, %v2847, %v2849
      %v2854 = vsel %vm398, %v2849, %v2851
      %2859 = vst [vmem:[#allocation1] ss:$2 sm:$0xff] %v370
      %v2860 = vld.sshfl [vmem:[#allocation1] sm:$0xff pattern:$0x75316420]
      %2861 = vrot.lane.b32.xlu0 %v2860, 73
      %v2862 = vpop.permute.xlu0 %2861
      %v2864 = vsel %vm398, %v2851, %v2862
      %v2865 = vperm.slane %v372, 1
      %v2866 = vperm.slane %v373, 1
      %v2867 = vperm.slane %v374, 1
      %v2868 = vperm.slane %v375, 1
      %v2869 = vmul.f32 %v2852, %v2865
      %v2870 = vmul.f32 %v2853, %v2866
      %v2871 = vmul.f32 %v2854, %v2867
      %v2872 = vmul.f32 %v2864, %v2868
      %v2873 = vmul.f32 %v2869, %v415
      %v2874 = vmul.f32 %v2870, %v416
      %v2875 = vmul.f32 %v2871, %v417
      %v2876 = vmul.f32 %v2872, %v418
      %v2877 = vmul.f32 %v2873, %v423
      %v2878 = vmul.f32 %v2874, %v424
      %v2879 = vmul.f32 %v2875, %v425
      %v2880 = vmul.f32 %v2876, %v426
      %s2881 = scalar_lea.vmem %s4, 72
      %v2882 = vld [vmem:[%s2881] sm:$0xf]
      %v2884 = vsel %vm471, %v2882, 0
      %v2887 = vsel %vm475, %v2877, 0
      %v2890 = vsel %vm475, %v2878, 0
      %v2893 = vsel %vm475, %v2879, 0
      %v2896 = vsel %vm475, %v2880, 0
      %2898 = vmatpush.msra.mxu0 0.0
      %2899 = vmatpush.msra.mxu0 0.0
      %2900 = vmatpush.msra.mxu0 0.0
      %2901 = vmatpush.msra.mxu0 0.0
      %2902 = vmatpush.msra.mxu0 0.0
      %2903 = vmatpush.msra.mxu0 0.0
      %2904 = vmatpush.msra.mxu0 0.0
      %2905 = vmatpush.msra.mxu0 0.0
      %2906 = vmatpush.msra.mxu0 0.0
      %2907 = vmatpush.msra.mxu0 0.0
      %2908 = vmatpush.msra.mxu0 0.0
      %2909 = vmatpush.msra.mxu0 0.0
      %2910 = vmatpush.msra.mxu0 0.0
      %2911 = vmatpush.msra.mxu0 0.0
      %2912 = vmatpush.msra.mxu0 0.0
      %2913 = vmatpush.msra.mxu0 %v2887
      %2914 = vmatmul.f32.gmra.mxu0 %v2884
      %v2915 = vpop.f32.mrf.mxu0
      %v2916 = vadd.f32 0.0, %v2915
      %2917 = vdwg.mxu0
      %2918 = vmatpush.msra.mxu0 0.0
      %2919 = vmatpush.msra.mxu0 0.0
      %2920 = vmatpush.msra.mxu0 0.0
      %2921 = vmatpush.msra.mxu0 0.0
      %2922 = vmatpush.msra.mxu0 0.0
      %2923 = vmatpush.msra.mxu0 0.0
      %2924 = vmatpush.msra.mxu0 0.0
      %2925 = vmatpush.msra.mxu0 0.0
      %2926 = vmatpush.msra.mxu0 0.0
      %2927 = vmatpush.msra.mxu0 0.0
      %2928 = vmatpush.msra.mxu0 0.0
      %2929 = vmatpush.msra.mxu0 0.0
      %2930 = vmatpush.msra.mxu0 0.0
      %2931 = vmatpush.msra.mxu0 0.0
      %2932 = vmatpush.msra.mxu0 0.0
      %2933 = vmatpush.msra.mxu0 %v2890
      %2934 = vmatmul.f32.gmra.mxu0 %v2884
      %v2935 = vpop.f32.mrf.mxu0
      %v2936 = vadd.f32 0.0, %v2935
      %2937 = vdwg.mxu0
      %2938 = vmatpush.msra.mxu0 0.0
      %2939 = vmatpush.msra.mxu0 0.0
      %2940 = vmatpush.msra.mxu0 0.0
      %2941 = vmatpush.msra.mxu0 0.0
      %2942 = vmatpush.msra.mxu0 0.0
      %2943 = vmatpush.msra.mxu0 0.0
      %2944 = vmatpush.msra.mxu0 0.0
      %2945 = vmatpush.msra.mxu0 0.0
      %2946 = vmatpush.msra.mxu0 0.0
      %2947 = vmatpush.msra.mxu0 0.0
      %2948 = vmatpush.msra.mxu0 0.0
      %2949 = vmatpush.msra.mxu0 0.0
      %2950 = vmatpush.msra.mxu0 0.0
      %2951 = vmatpush.msra.mxu0 0.0
      %2952 = vmatpush.msra.mxu0 0.0
      %2953 = vmatpush.msra.mxu0 %v2893
      %2954 = vmatmul.f32.gmra.mxu0 %v2884
      %v2955 = vpop.f32.mrf.mxu0
      %v2956 = vadd.f32 0.0, %v2955
      %2957 = vdwg.mxu0
      %2958 = vmatpush.msra.mxu0 0.0
      %2959 = vmatpush.msra.mxu0 0.0
      %2960 = vmatpush.msra.mxu0 0.0
      %2961 = vmatpush.msra.mxu0 0.0
      %2962 = vmatpush.msra.mxu0 0.0
      %2963 = vmatpush.msra.mxu0 0.0
      %2964 = vmatpush.msra.mxu0 0.0
      %2965 = vmatpush.msra.mxu0 0.0
      %2966 = vmatpush.msra.mxu0 0.0
      %2967 = vmatpush.msra.mxu0 0.0
      %2968 = vmatpush.msra.mxu0 0.0
      %2969 = vmatpush.msra.mxu0 0.0
      %2970 = vmatpush.msra.mxu0 0.0
      %2971 = vmatpush.msra.mxu0 0.0
      %2972 = vmatpush.msra.mxu0 0.0
      %2973 = vmatpush.msra.mxu0 %v2896
      %2974 = vmatmul.f32.gmra.mxu0 %v2884
      %v2975 = vpop.f32.mrf.mxu0
      %v2976 = vadd.f32 0.0, %v2975
      %2977 = vdwg.mxu0
      %v2978 = vadd.f32 %v2833, %v2916
      %v2979 = vadd.f32 %v2834, %v2936
      %v2980 = vadd.f32 %v2835, %v2956
      %v2981 = vadd.f32 %v2836, %v2976
      %2982 = vst [vmem:[#allocation1] ss:$2 sm:$0xff] %v370
      %s2983 = scalar_lea.vmem [#allocation1], 16
      %2984 = vst [vmem:[%s2983] ss:$2 sm:$0xff] %v371
      %v2985 = vld.sshfl [vmem:[#allocation1] sm:$0xff pattern:$0x75316420]
      %v2986 = vld.sshfl [vmem:[#allocation1 + $0x8] sm:$0xff pattern:$0x75316420]
      %v2987 = vld.sshfl [vmem:[#allocation1 + $0x10] sm:$0xff pattern:$0x75316420]
      %v2988 = vld.sshfl [vmem:[#allocation1 + $0x18] sm:$0xff pattern:$0x75316420]
      %2989 = vrot.lane.b32.xlu0 %v2985, 72
      %v2990 = vpop.permute.xlu0 %2989
      %2991 = vrot.lane.b32.xlu0 %v2986, 72
      %v2992 = vpop.permute.xlu0 %2991
      %2993 = vrot.lane.b32.xlu0 %v2987, 72
      %v2994 = vpop.permute.xlu0 %2993
      %2995 = vrot.lane.b32.xlu0 %v2988, 72
      %v2996 = vpop.permute.xlu0 %2995
      %v2997 = vsel %vm452, %v2990, %v2992
      %v2998 = vsel %vm452, %v2992, %v2994
      %v2999 = vsel %vm452, %v2994, %v2996
      %3004 = vst [vmem:[#allocation1] ss:$2 sm:$0xff] %v370
      %v3005 = vld.sshfl [vmem:[#allocation1] sm:$0xff pattern:$0x75316420]
      %3006 = vrot.lane.b32.xlu0 %v3005, 72
      %v3007 = vpop.permute.xlu0 %3006
      %v3009 = vsel %vm452, %v2996, %v3007
      %v3010 = vmul.f32 %v2997, %v2865
      %v3011 = vmul.f32 %v2998, %v2866
      %v3012 = vmul.f32 %v2999, %v2867
      %v3013 = vmul.f32 %v3009, %v2868
      %v3014 = vmul.f32 %v3010, %v415
      %v3015 = vmul.f32 %v3011, %v416
      %v3016 = vmul.f32 %v3012, %v417
      %v3017 = vmul.f32 %v3013, %v418
      %s3018 = scalar_lea.vmem %s4, 76
      %v3019 = vld [vmem:[%s3018] sm:$0xf]
      %v3021 = vsel %vm471, %v3019, 0
      %v3024 = vsel %vm475, %v3014, 0
      %v3027 = vsel %vm475, %v3015, 0
      %v3030 = vsel %vm475, %v3016, 0
      %v3033 = vsel %vm475, %v3017, 0
      %3035 = vmatpush.msra.mxu0 0.0
      %3036 = vmatpush.msra.mxu0 0.0
      %3037 = vmatpush.msra.mxu0 0.0
      %3038 = vmatpush.msra.mxu0 0.0
      %3039 = vmatpush.msra.mxu0 0.0
      %3040 = vmatpush.msra.mxu0 0.0
      %3041 = vmatpush.msra.mxu0 0.0
      %3042 = vmatpush.msra.mxu0 0.0
      %3043 = vmatpush.msra.mxu0 0.0
      %3044 = vmatpush.msra.mxu0 0.0
      %3045 = vmatpush.msra.mxu0 0.0
      %3046 = vmatpush.msra.mxu0 0.0
      %3047 = vmatpush.msra.mxu0 0.0
      %3048 = vmatpush.msra.mxu0 0.0
      %3049 = vmatpush.msra.mxu0 0.0
      %3050 = vmatpush.msra.mxu0 %v3024
      %3051 = vmatmul.f32.gmra.mxu0 %v3021
      %v3052 = vpop.f32.mrf.mxu0
      %v3053 = vadd.f32 0.0, %v3052
      %3054 = vdwg.mxu0
      %3055 = vmatpush.msra.mxu0 0.0
      %3056 = vmatpush.msra.mxu0 0.0
      %3057 = vmatpush.msra.mxu0 0.0
      %3058 = vmatpush.msra.mxu0 0.0
      %3059 = vmatpush.msra.mxu0 0.0
      %3060 = vmatpush.msra.mxu0 0.0
      %3061 = vmatpush.msra.mxu0 0.0
      %3062 = vmatpush.msra.mxu0 0.0
      %3063 = vmatpush.msra.mxu0 0.0
      %3064 = vmatpush.msra.mxu0 0.0
      %3065 = vmatpush.msra.mxu0 0.0
      %3066 = vmatpush.msra.mxu0 0.0
      %3067 = vmatpush.msra.mxu0 0.0
      %3068 = vmatpush.msra.mxu0 0.0
      %3069 = vmatpush.msra.mxu0 0.0
      %3070 = vmatpush.msra.mxu0 %v3027
      %3071 = vmatmul.f32.gmra.mxu0 %v3021
      %v3072 = vpop.f32.mrf.mxu0
      %v3073 = vadd.f32 0.0, %v3072
      %3074 = vdwg.mxu0
      %3075 = vmatpush.msra.mxu0 0.0
      %3076 = vmatpush.msra.mxu0 0.0
      %3077 = vmatpush.msra.mxu0 0.0
      %3078 = vmatpush.msra.mxu0 0.0
      %3079 = vmatpush.msra.mxu0 0.0
      %3080 = vmatpush.msra.mxu0 0.0
      %3081 = vmatpush.msra.mxu0 0.0
      %3082 = vmatpush.msra.mxu0 0.0
      %3083 = vmatpush.msra.mxu0 0.0
      %3084 = vmatpush.msra.mxu0 0.0
      %3085 = vmatpush.msra.mxu0 0.0
      %3086 = vmatpush.msra.mxu0 0.0
      %3087 = vmatpush.msra.mxu0 0.0
      %3088 = vmatpush.msra.mxu0 0.0
      %3089 = vmatpush.msra.mxu0 0.0
      %3090 = vmatpush.msra.mxu0 %v3030
      %3091 = vmatmul.f32.gmra.mxu0 %v3021
      %v3092 = vpop.f32.mrf.mxu0
      %v3093 = vadd.f32 0.0, %v3092
      %3094 = vdwg.mxu0
      %3095 = vmatpush.msra.mxu0 0.0
      %3096 = vmatpush.msra.mxu0 0.0
      %3097 = vmatpush.msra.mxu0 0.0
      %3098 = vmatpush.msra.mxu0 0.0
      %3099 = vmatpush.msra.mxu0 0.0
      %3100 = vmatpush.msra.mxu0 0.0
      %3101 = vmatpush.msra.mxu0 0.0
      %3102 = vmatpush.msra.mxu0 0.0
      %3103 = vmatpush.msra.mxu0 0.0
      %3104 = vmatpush.msra.mxu0 0.0
      %3105 = vmatpush.msra.mxu0 0.0
      %3106 = vmatpush.msra.mxu0 0.0
      %3107 = vmatpush.msra.mxu0 0.0
      %3108 = vmatpush.msra.mxu0 0.0
      %3109 = vmatpush.msra.mxu0 0.0
      %3110 = vmatpush.msra.mxu0 %v3033
      %3111 = vmatmul.f32.gmra.mxu0 %v3021
      %v3112 = vpop.f32.mrf.mxu0
      %v3113 = vadd.f32 0.0, %v3112
      %3114 = vdwg.mxu0
      %v3115 = vadd.f32 %v2978, %v3053
      %v3116 = vadd.f32 %v2979, %v3073
      %v3117 = vadd.f32 %v2980, %v3093
      %v3118 = vadd.f32 %v2981, %v3113
      %3119 = vst [vmem:[#allocation1] ss:$2 sm:$0xff] %v370
      %s3120 = scalar_lea.vmem [#allocation1], 16
      %3121 = vst [vmem:[%s3120] ss:$2 sm:$0xff] %v371
      %v3122 = vld.sshfl [vmem:[#allocation1] sm:$0xff pattern:$0x75316420]
      %v3123 = vld.sshfl [vmem:[#allocation1 + $0x8] sm:$0xff pattern:$0x75316420]
      %v3124 = vld.sshfl [vmem:[#allocation1 + $0x10] sm:$0xff pattern:$0x75316420]
      %v3125 = vld.sshfl [vmem:[#allocation1 + $0x18] sm:$0xff pattern:$0x75316420]
      %3126 = vrot.lane.b32.xlu0 %v3122, 71
      %v3127 = vpop.permute.xlu0 %3126
      %3128 = vrot.lane.b32.xlu0 %v3123, 71
      %v3129 = vpop.permute.xlu0 %3128
      %3130 = vrot.lane.b32.xlu0 %v3124, 71
      %v3131 = vpop.permute.xlu0 %3130
      %3132 = vrot.lane.b32.xlu0 %v3125, 71
      %v3133 = vpop.permute.xlu0 %3132
      %v3134 = vsel %vm683, %v3127, %v3129
      %v3135 = vsel %vm683, %v3129, %v3131
      %v3136 = vsel %vm683, %v3131, %v3133
      %3141 = vst [vmem:[#allocation1] ss:$2 sm:$0xff] %v370
      %v3142 = vld.sshfl [vmem:[#allocation1] sm:$0xff pattern:$0x75316420]
      %3143 = vrot.lane.b32.xlu0 %v3142, 71
      %v3144 = vpop.permute.xlu0 %3143
      %v3146 = vsel %vm683, %v3133, %v3144
      %v3147 = vmul.f32 %v3134, %v2865
      %v3148 = vmul.f32 %v3135, %v2866
      %v3149 = vmul.f32 %v3136, %v2867
      %v3150 = vmul.f32 %v3146, %v2868
      %v3151 = vmul.f32 %v3147, %v415
      %v3152 = vmul.f32 %v3148, %v416
      %v3153 = vmul.f32 %v3149, %v417
      %v3154 = vmul.f32 %v3150, %v418
      %v3155 = vmul.f32 %v3151, %v700
      %v3156 = vmul.f32 %v3152, %v701
      %v3157 = vmul.f32 %v3153, %v702
      %v3158 = vmul.f32 %v3154, %v703
      %s3159 = scalar_lea.vmem %s4, 80
      %v3160 = vld [vmem:[%s3159] sm:$0xf]
      %v3162 = vsel %vm471, %v3160, 0
      %v3165 = vsel %vm475, %v3155, 0
      %v3168 = vsel %vm475, %v3156, 0
      %v3171 = vsel %vm475, %v3157, 0
      %v3174 = vsel %vm475, %v3158, 0
      %3176 = vmatpush.msra.mxu0 0.0
      %3177 = vmatpush.msra.mxu0 0.0
      %3178 = vmatpush.msra.mxu0 0.0
      %3179 = vmatpush.msra.mxu0 0.0
      %3180 = vmatpush.msra.mxu0 0.0
      %3181 = vmatpush.msra.mxu0 0.0
      %3182 = vmatpush.msra.mxu0 0.0
      %3183 = vmatpush.msra.mxu0 0.0
      %3184 = vmatpush.msra.mxu0 0.0
      %3185 = vmatpush.msra.mxu0 0.0
      %3186 = vmatpush.msra.mxu0 0.0
      %3187 = vmatpush.msra.mxu0 0.0
      %3188 = vmatpush.msra.mxu0 0.0
      %3189 = vmatpush.msra.mxu0 0.0
      %3190 = vmatpush.msra.mxu0 0.0
      %3191 = vmatpush.msra.mxu0 %v3165
      %3192 = vmatmul.f32.gmra.mxu0 %v3162
      %v3193 = vpop.f32.mrf.mxu0
      %v3194 = vadd.f32 0.0, %v3193
      %3195 = vdwg.mxu0
      %3196 = vmatpush.msra.mxu0 0.0
      %3197 = vmatpush.msra.mxu0 0.0
      %3198 = vmatpush.msra.mxu0 0.0
      %3199 = vmatpush.msra.mxu0 0.0
      %3200 = vmatpush.msra.mxu0 0.0
      %3201 = vmatpush.msra.mxu0 0.0
      %3202 = vmatpush.msra.mxu0 0.0
      %3203 = vmatpush.msra.mxu0 0.0
      %3204 = vmatpush.msra.mxu0 0.0
      %3205 = vmatpush.msra.mxu0 0.0
      %3206 = vmatpush.msra.mxu0 0.0
      %3207 = vmatpush.msra.mxu0 0.0
      %3208 = vmatpush.msra.mxu0 0.0
      %3209 = vmatpush.msra.mxu0 0.0
      %3210 = vmatpush.msra.mxu0 0.0
      %3211 = vmatpush.msra.mxu0 %v3168
      %3212 = vmatmul.f32.gmra.mxu0 %v3162
      %v3213 = vpop.f32.mrf.mxu0
      %v3214 = vadd.f32 0.0, %v3213
      %3215 = vdwg.mxu0
      %3216 = vmatpush.msra.mxu0 0.0
      %3217 = vmatpush.msra.mxu0 0.0
      %3218 = vmatpush.msra.mxu0 0.0
      %3219 = vmatpush.msra.mxu0 0.0
      %3220 = vmatpush.msra.mxu0 0.0
      %3221 = vmatpush.msra.mxu0 0.0
      %3222 = vmatpush.msra.mxu0 0.0
      %3223 = vmatpush.msra.mxu0 0.0
      %3224 = vmatpush.msra.mxu0 0.0
      %3225 = vmatpush.msra.mxu0 0.0
      %3226 = vmatpush.msra.mxu0 0.0
      %3227 = vmatpush.msra.mxu0 0.0
      %3228 = vmatpush.msra.mxu0 0.0
      %3229 = vmatpush.msra.mxu0 0.0
      %3230 = vmatpush.msra.mxu0 0.0
      %3231 = vmatpush.msra.mxu0 %v3171
      %3232 = vmatmul.f32.gmra.mxu0 %v3162
      %v3233 = vpop.f32.mrf.mxu0
      %v3234 = vadd.f32 0.0, %v3233
      %3235 = vdwg.mxu0
      %3236 = vmatpush.msra.mxu0 0.0
      %3237 = vmatpush.msra.mxu0 0.0
      %3238 = vmatpush.msra.mxu0 0.0
      %3239 = vmatpush.msra.mxu0 0.0
      %3240 = vmatpush.msra.mxu0 0.0
      %3241 = vmatpush.msra.mxu0 0.0
      %3242 = vmatpush.msra.mxu0 0.0
      %3243 = vmatpush.msra.mxu0 0.0
      %3244 = vmatpush.msra.mxu0 0.0
      %3245 = vmatpush.msra.mxu0 0.0
      %3246 = vmatpush.msra.mxu0 0.0
      %3247 = vmatpush.msra.mxu0 0.0
      %3248 = vmatpush.msra.mxu0 0.0
      %3249 = vmatpush.msra.mxu0 0.0
      %3250 = vmatpush.msra.mxu0 0.0
      %3251 = vmatpush.msra.mxu0 %v3174
      %3252 = vmatmul.f32.gmra.mxu0 %v3162
      %v3253 = vpop.f32.mrf.mxu0
      %v3254 = vadd.f32 0.0, %v3253
      %3255 = vdwg.mxu0
      %v3256 = vadd.f32 %v3115, %v3194
      %v3257 = vadd.f32 %v3116, %v3214
      %v3258 = vadd.f32 %v3117, %v3234
      %v3259 = vadd.f32 %v3118, %v3254
      %3260 = vst [vmem:[#allocation1] ss:$2 sm:$0xff] %v370
      %s3261 = scalar_lea.vmem [#allocation1], 16
      %3262 = vst [vmem:[%s3261] ss:$2 sm:$0xff] %v371
      %v3263 = vld.sshfl [vmem:[#allocation1] sm:$0xff pattern:$0x75316420]
      %v3264 = vld.sshfl [vmem:[#allocation1 + $0x8] sm:$0xff pattern:$0x75316420]
      %v3265 = vld.sshfl [vmem:[#allocation1 + $0x10] sm:$0xff pattern:$0x75316420]
      %v3266 = vld.sshfl [vmem:[#allocation1 + $0x18] sm:$0xff pattern:$0x75316420]
      %3267 = vrot.lane.b32.xlu0 %v3263, 65
      %v3268 = vpop.permute.xlu0 %3267
      %3269 = vrot.lane.b32.xlu0 %v3264, 65
      %v3270 = vpop.permute.xlu0 %3269
      %3271 = vrot.lane.b32.xlu0 %v3265, 65
      %v3272 = vpop.permute.xlu0 %3271
      %3273 = vrot.lane.b32.xlu0 %v3266, 65
      %v3274 = vpop.permute.xlu0 %3273
      %v3275 = vsel %vm829, %v3268, %v3270
      %v3276 = vsel %vm829, %v3270, %v3272
      %v3277 = vsel %vm829, %v3272, %v3274
      %3282 = vst [vmem:[#allocation1] ss:$2 sm:$0xff] %v370
      %v3283 = vld.sshfl [vmem:[#allocation1] sm:$0xff pattern:$0x75316420]
      %3284 = vrot.lane.b32.xlu0 %v3283, 65
      %v3285 = vpop.permute.xlu0 %3284
      %v3287 = vsel %vm829, %v3274, %v3285
      %v3288 = vmul.f32 %v3275, %v2865
      %v3289 = vmul.f32 %v3276, %v2866
      %v3290 = vmul.f32 %v3277, %v2867
      %v3291 = vmul.f32 %v3287, %v2868
      %v3292 = vmul.f32 %v3288, %v423
      %v3293 = vmul.f32 %v3289, %v424
      %v3294 = vmul.f32 %v3290, %v425
      %v3295 = vmul.f32 %v3291, %v426
      %s3296 = scalar_lea.vmem %s4, 84
      %v3297 = vld [vmem:[%s3296] sm:$0xf]
      %v3299 = vsel %vm471, %v3297, 0
      %v3302 = vsel %vm475, %v3292, 0
      %v3305 = vsel %vm475, %v3293, 0
      %v3308 = vsel %vm475, %v3294, 0
      %v3311 = vsel %vm475, %v3295, 0
      %3313 = vmatpush.msra.mxu0 0.0
      %3314 = vmatpush.msra.mxu0 0.0
      %3315 = vmatpush.msra.mxu0 0.0
      %3316 = vmatpush.msra.mxu0 0.0
      %3317 = vmatpush.msra.mxu0 0.0
      %3318 = vmatpush.msra.mxu0 0.0
      %3319 = vmatpush.msra.mxu0 0.0
      %3320 = vmatpush.msra.mxu0 0.0
      %3321 = vmatpush.msra.mxu0 0.0
      %3322 = vmatpush.msra.mxu0 0.0
      %3323 = vmatpush.msra.mxu0 0.0
      %3324 = vmatpush.msra.mxu0 0.0
      %3325 = vmatpush.msra.mxu0 0.0
      %3326 = vmatpush.msra.mxu0 0.0
      %3327 = vmatpush.msra.mxu0 0.0
      %3328 = vmatpush.msra.mxu0 %v3302
      %3329 = vmatmul.f32.gmra.mxu0 %v3299
      %v3330 = vpop.f32.mrf.mxu0
      %v3331 = vadd.f32 0.0, %v3330
      %3332 = vdwg.mxu0
      %3333 = vmatpush.msra.mxu0 0.0
      %3334 = vmatpush.msra.mxu0 0.0
      %3335 = vmatpush.msra.mxu0 0.0
      %3336 = vmatpush.msra.mxu0 0.0
      %3337 = vmatpush.msra.mxu0 0.0
      %3338 = vmatpush.msra.mxu0 0.0
      %3339 = vmatpush.msra.mxu0 0.0
      %3340 = vmatpush.msra.mxu0 0.0
      %3341 = vmatpush.msra.mxu0 0.0
      %3342 = vmatpush.msra.mxu0 0.0
      %3343 = vmatpush.msra.mxu0 0.0
      %3344 = vmatpush.msra.mxu0 0.0
      %3345 = vmatpush.msra.mxu0 0.0
      %3346 = vmatpush.msra.mxu0 0.0
      %3347 = vmatpush.msra.mxu0 0.0
      %3348 = vmatpush.msra.mxu0 %v3305
      %3349 = vmatmul.f32.gmra.mxu0 %v3299
      %v3350 = vpop.f32.mrf.mxu0
      %v3351 = vadd.f32 0.0, %v3350
      %3352 = vdwg.mxu0
      %3353 = vmatpush.msra.mxu0 0.0
      %3354 = vmatpush.msra.mxu0 0.0
      %3355 = vmatpush.msra.mxu0 0.0
      %3356 = vmatpush.msra.mxu0 0.0
      %3357 = vmatpush.msra.mxu0 0.0
      %3358 = vmatpush.msra.mxu0 0.0
      %3359 = vmatpush.msra.mxu0 0.0
      %3360 = vmatpush.msra.mxu0 0.0
      %3361 = vmatpush.msra.mxu0 0.0
      %3362 = vmatpush.msra.mxu0 0.0
      %3363 = vmatpush.msra.mxu0 0.0
      %3364 = vmatpush.msra.mxu0 0.0
      %3365 = vmatpush.msra.mxu0 0.0
      %3366 = vmatpush.msra.mxu0 0.0
      %3367 = vmatpush.msra.mxu0 0.0
      %3368 = vmatpush.msra.mxu0 %v3308
      %3369 = vmatmul.f32.gmra.mxu0 %v3299
      %v3370 = vpop.f32.mrf.mxu0
      %v3371 = vadd.f32 0.0, %v3370
      %3372 = vdwg.mxu0
      %3373 = vmatpush.msra.mxu0 0.0
      %3374 = vmatpush.msra.mxu0 0.0
      %3375 = vmatpush.msra.mxu0 0.0
      %3376 = vmatpush.msra.mxu0 0.0
      %3377 = vmatpush.msra.mxu0 0.0
      %3378 = vmatpush.msra.mxu0 0.0
      %3379 = vmatpush.msra.mxu0 0.0
      %3380 = vmatpush.msra.mxu0 0.0
      %3381 = vmatpush.msra.mxu0 0.0
      %3382 = vmatpush.msra.mxu0 0.0
      %3383 = vmatpush.msra.mxu0 0.0
      %3384 = vmatpush.msra.mxu0 0.0
      %3385 = vmatpush.msra.mxu0 0.0
      %3386 = vmatpush.msra.mxu0 0.0
      %3387 = vmatpush.msra.mxu0 0.0
      %3388 = vmatpush.msra.mxu0 %v3311
      %3389 = vmatmul.f32.gmra.mxu0 %v3299
      %v3390 = vpop.f32.mrf.mxu0
      %v3391 = vadd.f32 0.0, %v3390
      %3392 = vdwg.mxu0
      %v3393 = vadd.f32 %v3256, %v3331
      %v3394 = vadd.f32 %v3257, %v3351
      %v3395 = vadd.f32 %v3258, %v3371
      %v3396 = vadd.f32 %v3259, %v3391
      %3397 = vst [vmem:[#allocation1] ss:$2 sm:$0xff] %v370
      %s3398 = scalar_lea.vmem [#allocation1], 16
      %3399 = vst [vmem:[%s3398] ss:$2 sm:$0xff] %v371
      %v3400 = vld.sshfl [vmem:[#allocation1] sm:$0xff pattern:$0x75316420]
      %v3401 = vld.sshfl [vmem:[#allocation1 + $0x8] sm:$0xff pattern:$0x75316420]
      %v3402 = vld.sshfl [vmem:[#allocation1 + $0x10] sm:$0xff pattern:$0x75316420]
      %v3403 = vld.sshfl [vmem:[#allocation1 + $0x18] sm:$0xff pattern:$0x75316420]
      %3404 = vrot.lane.b32.xlu0 %v3400, 64
      %v3405 = vpop.permute.xlu0 %3404
      %3406 = vrot.lane.b32.xlu0 %v3401, 64
      %v3407 = vpop.permute.xlu0 %3406
      %3408 = vrot.lane.b32.xlu0 %v3402, 64
      %v3409 = vpop.permute.xlu0 %3408
      %3410 = vrot.lane.b32.xlu0 %v3403, 64
      %v3411 = vpop.permute.xlu0 %3410
      %v3412 = vsel %vm967, %v3405, %v3407
      %v3413 = vsel %vm967, %v3407, %v3409
      %v3414 = vsel %vm967, %v3409, %v3411
      %3419 = vst [vmem:[#allocation1] ss:$2 sm:$0xff] %v370
      %v3420 = vld.sshfl [vmem:[#allocation1] sm:$0xff pattern:$0x75316420]
      %3421 = vrot.lane.b32.xlu0 %v3420, 64
      %v3422 = vpop.permute.xlu0 %3421
      %v3424 = vsel %vm967, %v3411, %v3422
      %v3425 = vmul.f32 %v3412, %v2865
      %v3426 = vmul.f32 %v3413, %v2866
      %v3427 = vmul.f32 %v3414, %v2867
      %v3428 = vmul.f32 %v3424, %v2868
      %s3429 = scalar_lea.vmem %s4, 88
      %v3430 = vld [vmem:[%s3429] sm:$0xf]
      %v3432 = vsel %vm471, %v3430, 0
      %v3435 = vsel %vm475, %v3425, 0
      %v3438 = vsel %vm475, %v3426, 0
      %v3441 = vsel %vm475, %v3427, 0
      %v3444 = vsel %vm475, %v3428, 0
      %3446 = vmatpush.msra.mxu0 0.0
      %3447 = vmatpush.msra.mxu0 0.0
      %3448 = vmatpush.msra.mxu0 0.0
      %3449 = vmatpush.msra.mxu0 0.0
      %3450 = vmatpush.msra.mxu0 0.0
      %3451 = vmatpush.msra.mxu0 0.0
      %3452 = vmatpush.msra.mxu0 0.0
      %3453 = vmatpush.msra.mxu0 0.0
      %3454 = vmatpush.msra.mxu0 0.0
      %3455 = vmatpush.msra.mxu0 0.0
      %3456 = vmatpush.msra.mxu0 0.0
      %3457 = vmatpush.msra.mxu0 0.0
      %3458 = vmatpush.msra.mxu0 0.0
      %3459 = vmatpush.msra.mxu0 0.0
      %3460 = vmatpush.msra.mxu0 0.0
      %3461 = vmatpush.msra.mxu0 %v3435
      %3462 = vmatmul.f32.gmra.mxu0 %v3432
      %v3463 = vpop.f32.mrf.mxu0
      %v3464 = vadd.f32 0.0, %v3463
      %3465 = vdwg.mxu0
      %3466 = vmatpush.msra.mxu0 0.0
      %3467 = vmatpush.msra.mxu0 0.0
      %3468 = vmatpush.msra.mxu0 0.0
      %3469 = vmatpush.msra.mxu0 0.0
      %3470 = vmatpush.msra.mxu0 0.0
      %3471 = vmatpush.msra.mxu0 0.0
      %3472 = vmatpush.msra.mxu0 0.0
      %3473 = vmatpush.msra.mxu0 0.0
      %3474 = vmatpush.msra.mxu0 0.0
      %3475 = vmatpush.msra.mxu0 0.0
      %3476 = vmatpush.msra.mxu0 0.0
      %3477 = vmatpush.msra.mxu0 0.0
      %3478 = vmatpush.msra.mxu0 0.0
      %3479 = vmatpush.msra.mxu0 0.0
      %3480 = vmatpush.msra.mxu0 0.0
      %3481 = vmatpush.msra.mxu0 %v3438
      %3482 = vmatmul.f32.gmra.mxu0 %v3432
      %v3483 = vpop.f32.mrf.mxu0
      %v3484 = vadd.f32 0.0, %v3483
      %3485 = vdwg.mxu0
      %3486 = vmatpush.msra.mxu0 0.0
      %3487 = vmatpush.msra.mxu0 0.0
      %3488 = vmatpush.msra.mxu0 0.0
      %3489 = vmatpush.msra.mxu0 0.0
      %3490 = vmatpush.msra.mxu0 0.0
      %3491 = vmatpush.msra.mxu0 0.0
      %3492 = vmatpush.msra.mxu0 0.0
      %3493 = vmatpush.msra.mxu0 0.0
      %3494 = vmatpush.msra.mxu0 0.0
      %3495 = vmatpush.msra.mxu0 0.0
      %3496 = vmatpush.msra.mxu0 0.0
      %3497 = vmatpush.msra.mxu0 0.0
      %3498 = vmatpush.msra.mxu0 0.0
      %3499 = vmatpush.msra.mxu0 0.0
      %3500 = vmatpush.msra.mxu0 0.0
      %3501 = vmatpush.msra.mxu0 %v3441
      %3502 = vmatmul.f32.gmra.mxu0 %v3432
      %v3503 = vpop.f32.mrf.mxu0
      %v3504 = vadd.f32 0.0, %v3503
      %3505 = vdwg.mxu0
      %3506 = vmatpush.msra.mxu0 0.0
      %3507 = vmatpush.msra.mxu0 0.0
      %3508 = vmatpush.msra.mxu0 0.0
      %3509 = vmatpush.msra.mxu0 0.0
      %3510 = vmatpush.msra.mxu0 0.0
      %3511 = vmatpush.msra.mxu0 0.0
      %3512 = vmatpush.msra.mxu0 0.0
      %3513 = vmatpush.msra.mxu0 0.0
      %3514 = vmatpush.msra.mxu0 0.0
      %3515 = vmatpush.msra.mxu0 0.0
      %3516 = vmatpush.msra.mxu0 0.0
      %3517 = vmatpush.msra.mxu0 0.0
      %3518 = vmatpush.msra.mxu0 0.0
      %3519 = vmatpush.msra.mxu0 0.0
      %3520 = vmatpush.msra.mxu0 0.0
      %3521 = vmatpush.msra.mxu0 %v3444
      %3522 = vmatmul.f32.gmra.mxu0 %v3432
      %v3523 = vpop.f32.mrf.mxu0
      %v3524 = vadd.f32 0.0, %v3523
      %3525 = vdwg.mxu0
      %v3526 = vadd.f32 %v3393, %v3464
      %v3527 = vadd.f32 %v3394, %v3484
      %v3528 = vadd.f32 %v3395, %v3504
      %v3529 = vadd.f32 %v3396, %v3524
      %3530 = vst [vmem:[#allocation1] ss:$2 sm:$0xff] %v370
      %s3531 = scalar_lea.vmem [#allocation1], 16
      %3532 = vst [vmem:[%s3531] ss:$2 sm:$0xff] %v371
      %v3533 = vld.sshfl [vmem:[#allocation1] sm:$0xff pattern:$0x75316420]
      %v3534 = vld.sshfl [vmem:[#allocation1 + $0x8] sm:$0xff pattern:$0x75316420]
      %v3535 = vld.sshfl [vmem:[#allocation1 + $0x10] sm:$0xff pattern:$0x75316420]
      %v3536 = vld.sshfl [vmem:[#allocation1 + $0x18] sm:$0xff pattern:$0x75316420]
      %3537 = vrot.lane.b32.xlu0 %v3533, 63
      %v3538 = vpop.permute.xlu0 %3537
      %3539 = vrot.lane.b32.xlu0 %v3534, 63
      %v3540 = vpop.permute.xlu0 %3539
      %3541 = vrot.lane.b32.xlu0 %v3535, 63
      %v3542 = vpop.permute.xlu0 %3541
      %3543 = vrot.lane.b32.xlu0 %v3536, 63
      %v3544 = vpop.permute.xlu0 %3543
      %v3545 = vsel %vm1101, %v3538, %v3540
      %v3546 = vsel %vm1101, %v3540, %v3542
      %v3547 = vsel %vm1101, %v3542, %v3544
      %3552 = vst [vmem:[#allocation1] ss:$2 sm:$0xff] %v370
      %v3553 = vld.sshfl [vmem:[#allocation1] sm:$0xff pattern:$0x75316420]
      %3554 = vrot.lane.b32.xlu0 %v3553, 63
      %v3555 = vpop.permute.xlu0 %3554
      %v3557 = vsel %vm1101, %v3544, %v3555
      %v3558 = vmul.f32 %v3545, %v2865
      %v3559 = vmul.f32 %v3546, %v2866
      %v3560 = vmul.f32 %v3547, %v2867
      %v3561 = vmul.f32 %v3557, %v2868
      %v3562 = vmul.f32 %v3558, %v700
      %v3563 = vmul.f32 %v3559, %v701
      %v3564 = vmul.f32 %v3560, %v702
      %v3565 = vmul.f32 %v3561, %v703
      %s3566 = scalar_lea.vmem %s4, 92
      %v3567 = vld [vmem:[%s3566] sm:$0xf]
      %v3569 = vsel %vm471, %v3567, 0
      %v3572 = vsel %vm475, %v3562, 0
      %v3575 = vsel %vm475, %v3563, 0
      %v3578 = vsel %vm475, %v3564, 0
      %v3581 = vsel %vm475, %v3565, 0
      %3583 = vmatpush.msra.mxu0 0.0
      %3584 = vmatpush.msra.mxu0 0.0
      %3585 = vmatpush.msra.mxu0 0.0
      %3586 = vmatpush.msra.mxu0 0.0
      %3587 = vmatpush.msra.mxu0 0.0
      %3588 = vmatpush.msra.mxu0 0.0
      %3589 = vmatpush.msra.mxu0 0.0
      %3590 = vmatpush.msra.mxu0 0.0
      %3591 = vmatpush.msra.mxu0 0.0
      %3592 = vmatpush.msra.mxu0 0.0
      %3593 = vmatpush.msra.mxu0 0.0
      %3594 = vmatpush.msra.mxu0 0.0
      %3595 = vmatpush.msra.mxu0 0.0
      %3596 = vmatpush.msra.mxu0 0.0
      %3597 = vmatpush.msra.mxu0 0.0
      %3598 = vmatpush.msra.mxu0 %v3572
      %3599 = vmatmul.f32.gmra.mxu0 %v3569
      %v3600 = vpop.f32.mrf.mxu0
      %v3601 = vadd.f32 0.0, %v3600
      %3602 = vdwg.mxu0
      %3603 = vmatpush.msra.mxu0 0.0
      %3604 = vmatpush.msra.mxu0 0.0
      %3605 = vmatpush.msra.mxu0 0.0
      %3606 = vmatpush.msra.mxu0 0.0
      %3607 = vmatpush.msra.mxu0 0.0
      %3608 = vmatpush.msra.mxu0 0.0
      %3609 = vmatpush.msra.mxu0 0.0
      %3610 = vmatpush.msra.mxu0 0.0
      %3611 = vmatpush.msra.mxu0 0.0
      %3612 = vmatpush.msra.mxu0 0.0
      %3613 = vmatpush.msra.mxu0 0.0
      %3614 = vmatpush.msra.mxu0 0.0
      %3615 = vmatpush.msra.mxu0 0.0
      %3616 = vmatpush.msra.mxu0 0.0
      %3617 = vmatpush.msra.mxu0 0.0
      %3618 = vmatpush.msra.mxu0 %v3575
      %3619 = vmatmul.f32.gmra.mxu0 %v3569
      %v3620 = vpop.f32.mrf.mxu0
      %v3621 = vadd.f32 0.0, %v3620
      %3622 = vdwg.mxu0
      %3623 = vmatpush.msra.mxu0 0.0
      %3624 = vmatpush.msra.mxu0 0.0
      %3625 = vmatpush.msra.mxu0 0.0
      %3626 = vmatpush.msra.mxu0 0.0
      %3627 = vmatpush.msra.mxu0 0.0
      %3628 = vmatpush.msra.mxu0 0.0
      %3629 = vmatpush.msra.mxu0 0.0
      %3630 = vmatpush.msra.mxu0 0.0
      %3631 = vmatpush.msra.mxu0 0.0
      %3632 = vmatpush.msra.mxu0 0.0
      %3633 = vmatpush.msra.mxu0 0.0
      %3634 = vmatpush.msra.mxu0 0.0
      %3635 = vmatpush.msra.mxu0 0.0
      %3636 = vmatpush.msra.mxu0 0.0
      %3637 = vmatpush.msra.mxu0 0.0
      %3638 = vmatpush.msra.mxu0 %v3578
      %3639 = vmatmul.f32.gmra.mxu0 %v3569
      %v3640 = vpop.f32.mrf.mxu0
      %v3641 = vadd.f32 0.0, %v3640
      %3642 = vdwg.mxu0
      %3643 = vmatpush.msra.mxu0 0.0
      %3644 = vmatpush.msra.mxu0 0.0
      %3645 = vmatpush.msra.mxu0 0.0
      %3646 = vmatpush.msra.mxu0 0.0
      %3647 = vmatpush.msra.mxu0 0.0
      %3648 = vmatpush.msra.mxu0 0.0
      %3649 = vmatpush.msra.mxu0 0.0
      %3650 = vmatpush.msra.mxu0 0.0
      %3651 = vmatpush.msra.mxu0 0.0
      %3652 = vmatpush.msra.mxu0 0.0
      %3653 = vmatpush.msra.mxu0 0.0
      %3654 = vmatpush.msra.mxu0 0.0
      %3655 = vmatpush.msra.mxu0 0.0
      %3656 = vmatpush.msra.mxu0 0.0
      %3657 = vmatpush.msra.mxu0 0.0
      %3658 = vmatpush.msra.mxu0 %v3581
      %3659 = vmatmul.f32.gmra.mxu0 %v3569
      %v3660 = vpop.f32.mrf.mxu0
      %v3661 = vadd.f32 0.0, %v3660
      %3662 = vdwg.mxu0
      %v3663 = vadd.f32 %v3526, %v3601
      %v3664 = vadd.f32 %v3527, %v3621
      %v3665 = vadd.f32 %v3528, %v3641
      %v3666 = vadd.f32 %v3529, %v3661
      %3667 = vst [vmem:[#allocation1] ss:$2 sm:$0xff] %v370
      %s3668 = scalar_lea.vmem [#allocation1], 16
      %3669 = vst [vmem:[%s3668] ss:$2 sm:$0xff] %v371
      %v3670 = vld.sshfl [vmem:[#allocation1] sm:$0xff pattern:$0x75316420]
      %v3671 = vld.sshfl [vmem:[#allocation1 + $0x8] sm:$0xff pattern:$0x75316420]
      %v3672 = vld.sshfl [vmem:[#allocation1 + $0x10] sm:$0xff pattern:$0x75316420]
      %v3673 = vld.sshfl [vmem:[#allocation1 + $0x18] sm:$0xff pattern:$0x75316420]
      %3674 = vrot.lane.b32.xlu0 %v3670, 57
      %v3675 = vpop.permute.xlu0 %3674
      %3676 = vrot.lane.b32.xlu0 %v3671, 57
      %v3677 = vpop.permute.xlu0 %3676
      %3678 = vrot.lane.b32.xlu0 %v3672, 57
      %v3679 = vpop.permute.xlu0 %3678
      %3680 = vrot.lane.b32.xlu0 %v3673, 57
      %v3681 = vpop.permute.xlu0 %3680
      %v3682 = vsel %vm1239, %v3675, %v3677
      %v3683 = vsel %vm1239, %v3677, %v3679
      %v3684 = vsel %vm1239, %v3679, %v3681
      %3689 = vst [vmem:[#allocation1] ss:$2 sm:$0xff] %v370
      %v3690 = vld.sshfl [vmem:[#allocation1] sm:$0xff pattern:$0x75316420]
      %3691 = vrot.lane.b32.xlu0 %v3690, 57
      %v3692 = vpop.permute.xlu0 %3691
      %v3694 = vsel %vm1239, %v3681, %v3692
      %v3695 = vmul.f32 %v3682, %v2865
      %v3696 = vmul.f32 %v3683, %v2866
      %v3697 = vmul.f32 %v3684, %v2867
      %v3698 = vmul.f32 %v3694, %v2868
      %v3699 = vmul.f32 %v3695, %v1252
      %v3700 = vmul.f32 %v3696, %v1253
      %v3701 = vmul.f32 %v3697, %v1254
      %v3702 = vmul.f32 %v3698, %v1255
      %v3703 = vmul.f32 %v3699, %v423
      %v3704 = vmul.f32 %v3700, %v424
      %v3705 = vmul.f32 %v3701, %v425
      %v3706 = vmul.f32 %v3702, %v426
      %s3707 = scalar_lea.vmem %s4, 96
      %v3708 = vld [vmem:[%s3707] sm:$0xf]
      %v3710 = vsel %vm471, %v3708, 0
      %v3713 = vsel %vm475, %v3703, 0
      %v3716 = vsel %vm475, %v3704, 0
      %v3719 = vsel %vm475, %v3705, 0
      %v3722 = vsel %vm475, %v3706, 0
      %3724 = vmatpush.msra.mxu0 0.0
      %3725 = vmatpush.msra.mxu0 0.0
      %3726 = vmatpush.msra.mxu0 0.0
      %3727 = vmatpush.msra.mxu0 0.0
      %3728 = vmatpush.msra.mxu0 0.0
      %3729 = vmatpush.msra.mxu0 0.0
      %3730 = vmatpush.msra.mxu0 0.0
      %3731 = vmatpush.msra.mxu0 0.0
      %3732 = vmatpush.msra.mxu0 0.0
      %3733 = vmatpush.msra.mxu0 0.0
      %3734 = vmatpush.msra.mxu0 0.0
      %3735 = vmatpush.msra.mxu0 0.0
      %3736 = vmatpush.msra.mxu0 0.0
      %3737 = vmatpush.msra.mxu0 0.0
      %3738 = vmatpush.msra.mxu0 0.0
      %3739 = vmatpush.msra.mxu0 %v3713
      %3740 = vmatmul.f32.gmra.mxu0 %v3710
      %v3741 = vpop.f32.mrf.mxu0
      %v3742 = vadd.f32 0.0, %v3741
      %3743 = vdwg.mxu0
      %3744 = vmatpush.msra.mxu0 0.0
      %3745 = vmatpush.msra.mxu0 0.0
      %3746 = vmatpush.msra.mxu0 0.0
      %3747 = vmatpush.msra.mxu0 0.0
      %3748 = vmatpush.msra.mxu0 0.0
      %3749 = vmatpush.msra.mxu0 0.0
      %3750 = vmatpush.msra.mxu0 0.0
      %3751 = vmatpush.msra.mxu0 0.0
      %3752 = vmatpush.msra.mxu0 0.0
      %3753 = vmatpush.msra.mxu0 0.0
      %3754 = vmatpush.msra.mxu0 0.0
      %3755 = vmatpush.msra.mxu0 0.0
      %3756 = vmatpush.msra.mxu0 0.0
      %3757 = vmatpush.msra.mxu0 0.0
      %3758 = vmatpush.msra.mxu0 0.0
      %3759 = vmatpush.msra.mxu0 %v3716
      %3760 = vmatmul.f32.gmra.mxu0 %v3710
      %v3761 = vpop.f32.mrf.mxu0
      %v3762 = vadd.f32 0.0, %v3761
      %3763 = vdwg.mxu0
      %3764 = vmatpush.msra.mxu0 0.0
      %3765 = vmatpush.msra.mxu0 0.0
      %3766 = vmatpush.msra.mxu0 0.0
      %3767 = vmatpush.msra.mxu0 0.0
      %3768 = vmatpush.msra.mxu0 0.0
      %3769 = vmatpush.msra.mxu0 0.0
      %3770 = vmatpush.msra.mxu0 0.0
      %3771 = vmatpush.msra.mxu0 0.0
      %3772 = vmatpush.msra.mxu0 0.0
      %3773 = vmatpush.msra.mxu0 0.0
      %3774 = vmatpush.msra.mxu0 0.0
      %3775 = vmatpush.msra.mxu0 0.0
      %3776 = vmatpush.msra.mxu0 0.0
      %3777 = vmatpush.msra.mxu0 0.0
      %3778 = vmatpush.msra.mxu0 0.0
      %3779 = vmatpush.msra.mxu0 %v3719
      %3780 = vmatmul.f32.gmra.mxu0 %v3710
      %v3781 = vpop.f32.mrf.mxu0
      %v3782 = vadd.f32 0.0, %v3781
      %3783 = vdwg.mxu0
      %3784 = vmatpush.msra.mxu0 0.0
      %3785 = vmatpush.msra.mxu0 0.0
      %3786 = vmatpush.msra.mxu0 0.0
      %3787 = vmatpush.msra.mxu0 0.0
      %3788 = vmatpush.msra.mxu0 0.0
      %3789 = vmatpush.msra.mxu0 0.0
      %3790 = vmatpush.msra.mxu0 0.0
      %3791 = vmatpush.msra.mxu0 0.0
      %3792 = vmatpush.msra.mxu0 0.0
      %3793 = vmatpush.msra.mxu0 0.0
      %3794 = vmatpush.msra.mxu0 0.0
      %3795 = vmatpush.msra.mxu0 0.0
      %3796 = vmatpush.msra.mxu0 0.0
      %3797 = vmatpush.msra.mxu0 0.0
      %3798 = vmatpush.msra.mxu0 0.0
      %3799 = vmatpush.msra.mxu0 %v3722
      %3800 = vmatmul.f32.gmra.mxu0 %v3710
      %v3801 = vpop.f32.mrf.mxu0
      %v3802 = vadd.f32 0.0, %v3801
      %3803 = vdwg.mxu0
      %v3804 = vadd.f32 %v3663, %v3742
      %v3805 = vadd.f32 %v3664, %v3762
      %v3806 = vadd.f32 %v3665, %v3782
      %v3807 = vadd.f32 %v3666, %v3802
      %3808 = vst [vmem:[#allocation1] ss:$2 sm:$0xff] %v370
      %s3809 = scalar_lea.vmem [#allocation1], 16
      %3810 = vst [vmem:[%s3809] ss:$2 sm:$0xff] %v371
      %v3811 = vld.sshfl [vmem:[#allocation1] sm:$0xff pattern:$0x75316420]
      %v3812 = vld.sshfl [vmem:[#allocation1 + $0x8] sm:$0xff pattern:$0x75316420]
      %v3813 = vld.sshfl [vmem:[#allocation1 + $0x10] sm:$0xff pattern:$0x75316420]
      %v3814 = vld.sshfl [vmem:[#allocation1 + $0x18] sm:$0xff pattern:$0x75316420]
      %3815 = vrot.lane.b32.xlu0 %v3811, 56
      %v3816 = vpop.permute.xlu0 %3815
      %3817 = vrot.lane.b32.xlu0 %v3812, 56
      %v3818 = vpop.permute.xlu0 %3817
      %3819 = vrot.lane.b32.xlu0 %v3813, 56
      %v3820 = vpop.permute.xlu0 %3819
      %3821 = vrot.lane.b32.xlu0 %v3814, 56
      %v3822 = vpop.permute.xlu0 %3821
      %v3823 = vsel %vm1385, %v3816, %v3818
      %v3824 = vsel %vm1385, %v3818, %v3820
      %v3825 = vsel %vm1385, %v3820, %v3822
      %3830 = vst [vmem:[#allocation1] ss:$2 sm:$0xff] %v370
      %v3831 = vld.sshfl [vmem:[#allocation1] sm:$0xff pattern:$0x75316420]
      %3832 = vrot.lane.b32.xlu0 %v3831, 56
      %v3833 = vpop.permute.xlu0 %3832
      %v3835 = vsel %vm1385, %v3822, %v3833
      %v3836 = vmul.f32 %v3823, %v2865
      %v3837 = vmul.f32 %v3824, %v2866
      %v3838 = vmul.f32 %v3825, %v2867
      %v3839 = vmul.f32 %v3835, %v2868
      %v3840 = vmul.f32 %v3836, %v1252
      %v3841 = vmul.f32 %v3837, %v1253
      %v3842 = vmul.f32 %v3838, %v1254
      %v3843 = vmul.f32 %v3839, %v1255
      %s3844 = scalar_lea.vmem %s4, 100
      %v3845 = vld [vmem:[%s3844] sm:$0xf]
      %v3847 = vsel %vm471, %v3845, 0
      %v3850 = vsel %vm475, %v3840, 0
      %v3853 = vsel %vm475, %v3841, 0
      %v3856 = vsel %vm475, %v3842, 0
      %v3859 = vsel %vm475, %v3843, 0
      %3861 = vmatpush.msra.mxu0 0.0
      %3862 = vmatpush.msra.mxu0 0.0
      %3863 = vmatpush.msra.mxu0 0.0
      %3864 = vmatpush.msra.mxu0 0.0
      %3865 = vmatpush.msra.mxu0 0.0
      %3866 = vmatpush.msra.mxu0 0.0
      %3867 = vmatpush.msra.mxu0 0.0
      %3868 = vmatpush.msra.mxu0 0.0
      %3869 = vmatpush.msra.mxu0 0.0
      %3870 = vmatpush.msra.mxu0 0.0
      %3871 = vmatpush.msra.mxu0 0.0
      %3872 = vmatpush.msra.mxu0 0.0
      %3873 = vmatpush.msra.mxu0 0.0
      %3874 = vmatpush.msra.mxu0 0.0
      %3875 = vmatpush.msra.mxu0 0.0
      %3876 = vmatpush.msra.mxu0 %v3850
      %3877 = vmatmul.f32.gmra.mxu0 %v3847
      %v3878 = vpop.f32.mrf.mxu0
      %v3879 = vadd.f32 0.0, %v3878
      %3880 = vdwg.mxu0
      %3881 = vmatpush.msra.mxu0 0.0
      %3882 = vmatpush.msra.mxu0 0.0
      %3883 = vmatpush.msra.mxu0 0.0
      %3884 = vmatpush.msra.mxu0 0.0
      %3885 = vmatpush.msra.mxu0 0.0
      %3886 = vmatpush.msra.mxu0 0.0
      %3887 = vmatpush.msra.mxu0 0.0
      %3888 = vmatpush.msra.mxu0 0.0
      %3889 = vmatpush.msra.mxu0 0.0
      %3890 = vmatpush.msra.mxu0 0.0
      %3891 = vmatpush.msra.mxu0 0.0
      %3892 = vmatpush.msra.mxu0 0.0
      %3893 = vmatpush.msra.mxu0 0.0
      %3894 = vmatpush.msra.mxu0 0.0
      %3895 = vmatpush.msra.mxu0 0.0
      %3896 = vmatpush.msra.mxu0 %v3853
      %3897 = vmatmul.f32.gmra.mxu0 %v3847
      %v3898 = vpop.f32.mrf.mxu0
      %v3899 = vadd.f32 0.0, %v3898
      %3900 = vdwg.mxu0
      %3901 = vmatpush.msra.mxu0 0.0
      %3902 = vmatpush.msra.mxu0 0.0
      %3903 = vmatpush.msra.mxu0 0.0
      %3904 = vmatpush.msra.mxu0 0.0
      %3905 = vmatpush.msra.mxu0 0.0
      %3906 = vmatpush.msra.mxu0 0.0
      %3907 = vmatpush.msra.mxu0 0.0
      %3908 = vmatpush.msra.mxu0 0.0
      %3909 = vmatpush.msra.mxu0 0.0
      %3910 = vmatpush.msra.mxu0 0.0
      %3911 = vmatpush.msra.mxu0 0.0
      %3912 = vmatpush.msra.mxu0 0.0
      %3913 = vmatpush.msra.mxu0 0.0
      %3914 = vmatpush.msra.mxu0 0.0
      %3915 = vmatpush.msra.mxu0 0.0
      %3916 = vmatpush.msra.mxu0 %v3856
      %3917 = vmatmul.f32.gmra.mxu0 %v3847
      %v3918 = vpop.f32.mrf.mxu0
      %v3919 = vadd.f32 0.0, %v3918
      %3920 = vdwg.mxu0
      %3921 = vmatpush.msra.mxu0 0.0
      %3922 = vmatpush.msra.mxu0 0.0
      %3923 = vmatpush.msra.mxu0 0.0
      %3924 = vmatpush.msra.mxu0 0.0
      %3925 = vmatpush.msra.mxu0 0.0
      %3926 = vmatpush.msra.mxu0 0.0
      %3927 = vmatpush.msra.mxu0 0.0
      %3928 = vmatpush.msra.mxu0 0.0
      %3929 = vmatpush.msra.mxu0 0.0
      %3930 = vmatpush.msra.mxu0 0.0
      %3931 = vmatpush.msra.mxu0 0.0
      %3932 = vmatpush.msra.mxu0 0.0
      %3933 = vmatpush.msra.mxu0 0.0
      %3934 = vmatpush.msra.mxu0 0.0
      %3935 = vmatpush.msra.mxu0 0.0
      %3936 = vmatpush.msra.mxu0 %v3859
      %3937 = vmatmul.f32.gmra.mxu0 %v3847
      %v3938 = vpop.f32.mrf.mxu0
      %v3939 = vadd.f32 0.0, %v3938
      %3940 = vdwg.mxu0
      %v3941 = vadd.f32 %v3804, %v3879
      %v3942 = vadd.f32 %v3805, %v3899
      %v3943 = vadd.f32 %v3806, %v3919
      %v3944 = vadd.f32 %v3807, %v3939
      %3945 = vst [vmem:[#allocation1] ss:$2 sm:$0xff] %v370
      %s3946 = scalar_lea.vmem [#allocation1], 16
      %3947 = vst [vmem:[%s3946] ss:$2 sm:$0xff] %v371
      %v3948 = vld.sshfl [vmem:[#allocation1] sm:$0xff pattern:$0x75316420]
      %v3949 = vld.sshfl [vmem:[#allocation1 + $0x8] sm:$0xff pattern:$0x75316420]
      %v3950 = vld.sshfl [vmem:[#allocation1 + $0x10] sm:$0xff pattern:$0x75316420]
      %v3951 = vld.sshfl [vmem:[#allocation1 + $0x18] sm:$0xff pattern:$0x75316420]
      %3952 = vrot.lane.b32.xlu0 %v3948, 55
      %v3953 = vpop.permute.xlu0 %3952
      %3954 = vrot.lane.b32.xlu0 %v3949, 55
      %v3955 = vpop.permute.xlu0 %3954
      %3956 = vrot.lane.b32.xlu0 %v3950, 55
      %v3957 = vpop.permute.xlu0 %3956
      %3958 = vrot.lane.b32.xlu0 %v3951, 55
      %v3959 = vpop.permute.xlu0 %3958
      %v3960 = vsel %vm1523, %v3953, %v3955
      %v3961 = vsel %vm1523, %v3955, %v3957
      %v3962 = vsel %vm1523, %v3957, %v3959
      %3967 = vst [vmem:[#allocation1] ss:$2 sm:$0xff] %v370
      %v3968 = vld.sshfl [vmem:[#allocation1] sm:$0xff pattern:$0x75316420]
      %3969 = vrot.lane.b32.xlu0 %v3968, 55
      %v3970 = vpop.permute.xlu0 %3969
      %v3972 = vsel %vm1523, %v3959, %v3970
      %v3973 = vmul.f32 %v3960, %v2865
      %v3974 = vmul.f32 %v3961, %v2866
      %v3975 = vmul.f32 %v3962, %v2867
      %v3976 = vmul.f32 %v3972, %v2868
      %v3977 = vmul.f32 %v3973, %v1252
      %v3978 = vmul.f32 %v3974, %v1253
      %v3979 = vmul.f32 %v3975, %v1254
      %v3980 = vmul.f32 %v3976, %v1255
      %v3981 = vmul.f32 %v3977, %v700
      %v3982 = vmul.f32 %v3978, %v701
      %v3983 = vmul.f32 %v3979, %v702
      %v3984 = vmul.f32 %v3980, %v703
      %s3985 = scalar_lea.vmem %s4, 104
      %v3986 = vld [vmem:[%s3985] sm:$0xf]
      %v3988 = vsel %vm471, %v3986, 0
      %v3991 = vsel %vm475, %v3981, 0
      %v3994 = vsel %vm475, %v3982, 0
      %v3997 = vsel %vm475, %v3983, 0
      %v4000 = vsel %vm475, %v3984, 0
      %4002 = vmatpush.msra.mxu0 0.0
      %4003 = vmatpush.msra.mxu0 0.0
      %4004 = vmatpush.msra.mxu0 0.0
      %4005 = vmatpush.msra.mxu0 0.0
      %4006 = vmatpush.msra.mxu0 0.0
      %4007 = vmatpush.msra.mxu0 0.0
      %4008 = vmatpush.msra.mxu0 0.0
      %4009 = vmatpush.msra.mxu0 0.0
      %4010 = vmatpush.msra.mxu0 0.0
      %4011 = vmatpush.msra.mxu0 0.0
      %4012 = vmatpush.msra.mxu0 0.0
      %4013 = vmatpush.msra.mxu0 0.0
      %4014 = vmatpush.msra.mxu0 0.0
      %4015 = vmatpush.msra.mxu0 0.0
      %4016 = vmatpush.msra.mxu0 0.0
      %4017 = vmatpush.msra.mxu0 %v3991
      %4018 = vmatmul.f32.gmra.mxu0 %v3988
      %v4019 = vpop.f32.mrf.mxu0
      %v4020 = vadd.f32 0.0, %v4019
      %4021 = vdwg.mxu0
      %4022 = vmatpush.msra.mxu0 0.0
      %4023 = vmatpush.msra.mxu0 0.0
      %4024 = vmatpush.msra.mxu0 0.0
      %4025 = vmatpush.msra.mxu0 0.0
      %4026 = vmatpush.msra.mxu0 0.0
      %4027 = vmatpush.msra.mxu0 0.0
      %4028 = vmatpush.msra.mxu0 0.0
      %4029 = vmatpush.msra.mxu0 0.0
      %4030 = vmatpush.msra.mxu0 0.0
      %4031 = vmatpush.msra.mxu0 0.0
      %4032 = vmatpush.msra.mxu0 0.0
      %4033 = vmatpush.msra.mxu0 0.0
      %4034 = vmatpush.msra.mxu0 0.0
      %4035 = vmatpush.msra.mxu0 0.0
      %4036 = vmatpush.msra.mxu0 0.0
      %4037 = vmatpush.msra.mxu0 %v3994
      %4038 = vmatmul.f32.gmra.mxu0 %v3988
      %v4039 = vpop.f32.mrf.mxu0
      %v4040 = vadd.f32 0.0, %v4039
      %4041 = vdwg.mxu0
      %4042 = vmatpush.msra.mxu0 0.0
      %4043 = vmatpush.msra.mxu0 0.0
      %4044 = vmatpush.msra.mxu0 0.0
      %4045 = vmatpush.msra.mxu0 0.0
      %4046 = vmatpush.msra.mxu0 0.0
      %4047 = vmatpush.msra.mxu0 0.0
      %4048 = vmatpush.msra.mxu0 0.0
      %4049 = vmatpush.msra.mxu0 0.0
      %4050 = vmatpush.msra.mxu0 0.0
      %4051 = vmatpush.msra.mxu0 0.0
      %4052 = vmatpush.msra.mxu0 0.0
      %4053 = vmatpush.msra.mxu0 0.0
      %4054 = vmatpush.msra.mxu0 0.0
      %4055 = vmatpush.msra.mxu0 0.0
      %4056 = vmatpush.msra.mxu0 0.0
      %4057 = vmatpush.msra.mxu0 %v3997
      %4058 = vmatmul.f32.gmra.mxu0 %v3988
      %v4059 = vpop.f32.mrf.mxu0
      %v4060 = vadd.f32 0.0, %v4059
      %4061 = vdwg.mxu0
      %4062 = vmatpush.msra.mxu0 0.0
      %4063 = vmatpush.msra.mxu0 0.0
      %4064 = vmatpush.msra.mxu0 0.0
      %4065 = vmatpush.msra.mxu0 0.0
      %4066 = vmatpush.msra.mxu0 0.0
      %4067 = vmatpush.msra.mxu0 0.0
      %4068 = vmatpush.msra.mxu0 0.0
      %4069 = vmatpush.msra.mxu0 0.0
      %4070 = vmatpush.msra.mxu0 0.0
      %4071 = vmatpush.msra.mxu0 0.0
      %4072 = vmatpush.msra.mxu0 0.0
      %4073 = vmatpush.msra.mxu0 0.0
      %4074 = vmatpush.msra.mxu0 0.0
      %4075 = vmatpush.msra.mxu0 0.0
      %4076 = vmatpush.msra.mxu0 0.0
      %4077 = vmatpush.msra.mxu0 %v4000
      %4078 = vmatmul.f32.gmra.mxu0 %v3988
      %v4079 = vpop.f32.mrf.mxu0
      %v4080 = vadd.f32 0.0, %v4079
      %4081 = vdwg.mxu0
      %v4082 = vadd.f32 %v3941, %v4020
      %v4083 = vadd.f32 %v3942, %v4040
      %v4084 = vadd.f32 %v3943, %v4060
      %v4085 = vadd.f32 %v3944, %v4080
      %v4086 = vld [vmem:[%s5] sm:$0xf]
      %4088 = vset.pattern.permute.xlu0 0
      %4089 = vperm.xlu0 %4088, %v4086
      %v4090 = vpop.permute.xlu0 %4089
      %v4092 = vadd.f32 %v4082, %v4090
      %v4093 = vadd.f32 %v4083, %v4090
      %v4094 = vadd.f32 %v4084, %v4090
      %v4095 = vadd.f32 %v4085, %v4090
      %v4096 = vmax.f32 %v4092, -10000.0
      %v4097 = vmax.f32 %v4093, -10000.0
      %v4098 = vmax.f32 %v4094, -10000.0
      %v4099 = vmax.f32 %v4095, -10000.0
      %v4100 = vmin.f32 %v4096, 10000.0
      %v4101 = vmin.f32 %v4097, 10000.0
      %v4102 = vmin.f32 %v4098, 10000.0
      %v4103 = vmin.f32 %v4099, 10000.0
      %v4104 = vsel %vm475, %v4100, 0.0
      %v4105 = vsel %vm475, %v4101, 0.0
      %v4106 = vadd.f32 %v4104, %v4105
      %v4107 = vsel %vm475, %v4102, 0.0
      %v4108 = vadd.f32 %v4106, %v4107
      %v4109 = vsel %vm475, %v4103, 0.0
      %v4110 = vadd.f32 %v4108, %v4109
      %4111 = vadd.xlane.f32.xlu0 %v4110
      %v4112 = vpop.xlane.xlu0 %4111
      %v4113 = vrcp.pop 512.0
      %v4114 = vmul.f32 512.0, %v4113
      %v4115 = vsub.f32 1.0, %v4114
      %v4116 = vmul.f32 %v4113, %v4115
      %v4117 = vadd.f32 %v4113, %v4116
      %vm4118 = vweird.f32 %v4113
      %v4119 = vsel %vm4118, %v4113, %v4117
      %v4120 = vmul.f32 %v4112, %v4119
      %v4121 = vsub.f32 %v4100, %v4120
      %v4122 = vsub.f32 %v4101, %v4120
      %v4123 = vsub.f32 %v4102, %v4120
      %v4124 = vsub.f32 %v4103, %v4120
      %v4125 = vmul.f32 %v4121, %v4121
      %v4126 = vmul.f32 %v4122, %v4122
      %v4127 = vmul.f32 %v4123, %v4123
      %v4128 = vmul.f32 %v4124, %v4124
      %v4129 = vsel %vm475, %v4125, 0.0
      %v4130 = vsel %vm475, %v4126, 0.0
      %v4131 = vadd.f32 %v4129, %v4130
      %v4132 = vsel %vm475, %v4127, 0.0
      %v4133 = vadd.f32 %v4131, %v4132
      %v4134 = vsel %vm475, %v4128, 0.0
      %v4135 = vadd.f32 %v4133, %v4134
      %4136 = vadd.xlane.f32.xlu0 %v4135
      %v4137 = vpop.xlane.xlu0 %4136
      %v4138 = vmul.f32 %v4137, %v4119
      %v4139 = vadd.f32 %v4138, 0.001
      %v4140 = vrsqrt.pop %v4139
      %v4141 = vmul.f32 %v4140, %v4139
      %v4142 = vmul.f32 %v4141, %v4140
      %v4143 = vmul.f32 0.5, %v4142
      %v4144 = vsub.f32 1.5, %v4143
      %v4145 = vmul.f32 %v4140, %v4144
      %vm4146 = vweird.f32 %v4139
      %vm4147 = vweird.f32 %v4140
      %vm4148 = vmor %vm4146, %vm4147
      %v4149 = vsel %vm4148, %v4140, %v4145
      %v4150 = vmul.f32 %v4121, %v4149
      %v4151 = vmul.f32 %v4122, %v4149
      %v4152 = vmul.f32 %v4123, %v4149
      %v4153 = vmul.f32 %v4124, %v4149
      %vm4154 = vcmp.ge.f32.partialorder %v4150, 0.0
      %vm4155 = vcmp.ge.f32.partialorder %v4151, 0.0
      %vm4156 = vcmp.ge.f32.partialorder %v4152, 0.0
      %vm4157 = vcmp.ge.f32.partialorder %v4153, 0.0
      %v4158 = vmul.f32 %v4150, 0.2
      %v4159 = vmul.f32 %v4151, 0.2
      %v4160 = vmul.f32 %v4152, 0.2
      %v4161 = vmul.f32 %v4153, 0.2
      %v4162 = vsel %vm4154, %v4150, %v4158
      %v4163 = vsel %vm4155, %v4151, %v4159
      %v4164 = vsel %vm4156, %v4152, %v4160
      %v4165 = vsel %vm4157, %v4153, %v4161
      %v4166 = vld [vmem:[%s6] sm:$0xff]
      %v4167 = vld [vmem:[%s6 + $0x8] sm:$0xff]
      %v4168 = vld [vmem:[%s7] sm:$0xff]
      %v4169 = vld [vmem:[%s7 + $0x8] sm:$0xff]
      %4171 = vset.pattern.permute.xlu0 0
      %4172 = vperm.xlu0 %4171, %v4168
      %v4173 = vpop.permute.xlu0 %4172
      %4176 = vset.pattern.permute.xlu0 0
      %4177 = vperm.xlu0 %4176, %v4169
      %v4178 = vpop.permute.xlu0 %4177
      %v4181 = vsel %vm471, %v4166, 0
      %v4184 = vsel %vm471, %v4167, 0
      %v4187 = vsel %vm475, %v4162, 0
      %v4190 = vsel %vm475, %v4163, 0
      %v4193 = vsel %vm475, %v4164, 0
      %v4196 = vsel %vm475, %v4165, 0
      %4198 = vmatpush.msra.mxu0 0.0
      %4199 = vmatpush.msra.mxu0 0.0
      %4200 = vmatpush.msra.mxu0 0.0
      %4201 = vmatpush.msra.mxu0 0.0
      %4202 = vmatpush.msra.mxu0 0.0
      %4203 = vmatpush.msra.mxu0 0.0
      %4204 = vmatpush.msra.mxu0 0.0
      %4205 = vmatpush.msra.mxu0 0.0
      %4206 = vmatpush.msra.mxu0 0.0
      %4207 = vmatpush.msra.mxu0 0.0
      %4208 = vmatpush.msra.mxu0 0.0
      %4209 = vmatpush.msra.mxu0 0.0
      %4210 = vmatpush.msra.mxu0 0.0
      %4211 = vmatpush.msra.mxu0 0.0
      %4212 = vmatpush.msra.mxu0 0.0
      %4213 = vmatpush.msra.mxu0 %v4187
      %4214 = vmatmul.f32.gmra.mxu0 %v4181
      %v4215 = vpop.f32.mrf.mxu0
      %v4216 = vadd.f32 %v4173, %v4215
      %4217 = vmatmul.f32.gmra.mxu0 %v4184
      %v4218 = vpop.f32.mrf.mxu0
      %v4219 = vadd.f32 %v4178, %v4218
      %4220 = vdwg.mxu0
      %4221 = vmatpush.msra.mxu0 0.0
      %4222 = vmatpush.msra.mxu0 0.0
      %4223 = vmatpush.msra.mxu0 0.0
      %4224 = vmatpush.msra.mxu0 0.0
      %4225 = vmatpush.msra.mxu0 0.0
      %4226 = vmatpush.msra.mxu0 0.0
      %4227 = vmatpush.msra.mxu0 0.0
      %4228 = vmatpush.msra.mxu0 0.0
      %4229 = vmatpush.msra.mxu0 0.0
      %4230 = vmatpush.msra.mxu0 0.0
      %4231 = vmatpush.msra.mxu0 0.0
      %4232 = vmatpush.msra.mxu0 0.0
      %4233 = vmatpush.msra.mxu0 0.0
      %4234 = vmatpush.msra.mxu0 0.0
      %4235 = vmatpush.msra.mxu0 0.0
      %4236 = vmatpush.msra.mxu0 %v4190
      %4237 = vmatmul.f32.gmra.mxu0 %v4181
      %v4238 = vpop.f32.mrf.mxu0
      %v4239 = vadd.f32 %v4173, %v4238
      %4240 = vmatmul.f32.gmra.mxu0 %v4184
      %v4241 = vpop.f32.mrf.mxu0
      %v4242 = vadd.f32 %v4178, %v4241
      %4243 = vdwg.mxu0
      %4244 = vmatpush.msra.mxu0 0.0
      %4245 = vmatpush.msra.mxu0 0.0
      %4246 = vmatpush.msra.mxu0 0.0
      %4247 = vmatpush.msra.mxu0 0.0
      %4248 = vmatpush.msra.mxu0 0.0
      %4249 = vmatpush.msra.mxu0 0.0
      %4250 = vmatpush.msra.mxu0 0.0
      %4251 = vmatpush.msra.mxu0 0.0
      %4252 = vmatpush.msra.mxu0 0.0
      %4253 = vmatpush.msra.mxu0 0.0
      %4254 = vmatpush.msra.mxu0 0.0
      %4255 = vmatpush.msra.mxu0 0.0
      %4256 = vmatpush.msra.mxu0 0.0
      %4257 = vmatpush.msra.mxu0 0.0
      %4258 = vmatpush.msra.mxu0 0.0
      %4259 = vmatpush.msra.mxu0 %v4193
      %4260 = vmatmul.f32.gmra.mxu0 %v4181
      %v4261 = vpop.f32.mrf.mxu0
      %v4262 = vadd.f32 %v4173, %v4261
      %4263 = vmatmul.f32.gmra.mxu0 %v4184
      %v4264 = vpop.f32.mrf.mxu0
      %v4265 = vadd.f32 %v4178, %v4264
      %4266 = vdwg.mxu0
      %4267 = vmatpush.msra.mxu0 0.0
      %4268 = vmatpush.msra.mxu0 0.0
      %4269 = vmatpush.msra.mxu0 0.0
      %4270 = vmatpush.msra.mxu0 0.0
      %4271 = vmatpush.msra.mxu0 0.0
      %4272 = vmatpush.msra.mxu0 0.0
      %4273 = vmatpush.msra.mxu0 0.0
      %4274 = vmatpush.msra.mxu0 0.0
      %4275 = vmatpush.msra.mxu0 0.0
      %4276 = vmatpush.msra.mxu0 0.0
      %4277 = vmatpush.msra.mxu0 0.0
      %4278 = vmatpush.msra.mxu0 0.0
      %4279 = vmatpush.msra.mxu0 0.0
      %4280 = vmatpush.msra.mxu0 0.0
      %4281 = vmatpush.msra.mxu0 0.0
      %4282 = vmatpush.msra.mxu0 %v4196
      %4283 = vmatmul.f32.gmra.mxu0 %v4181
      %v4284 = vpop.f32.mrf.mxu0
      %v4285 = vadd.f32 %v4173, %v4284
      %4286 = vmatmul.f32.gmra.mxu0 %v4184
      %v4287 = vpop.f32.mrf.mxu0
      %v4288 = vadd.f32 %v4178, %v4287
      %4289 = vdwg.mxu0
      %v4290 = vmax.f32 %v4216, -10000.0
      %v4291 = vmax.f32 %v4239, -10000.0
      %v4292 = vmax.f32 %v4262, -10000.0
      %v4293 = vmax.f32 %v4285, -10000.0
      %v4294 = vmax.f32 %v4219, -10000.0
      %v4295 = vmax.f32 %v4242, -10000.0
      %v4296 = vmax.f32 %v4265, -10000.0
      %v4297 = vmax.f32 %v4288, -10000.0
      %v4298 = vmin.f32 %v4290, 10000.0
      %v4299 = vmin.f32 %v4291, 10000.0
      %v4300 = vmin.f32 %v4292, 10000.0
      %v4301 = vmin.f32 %v4293, 10000.0
      %v4302 = vmin.f32 %v4294, 10000.0
      %v4303 = vmin.f32 %v4295, 10000.0
      %v4304 = vmin.f32 %v4296, 10000.0
      %v4305 = vmin.f32 %v4297, 10000.0
      %v4306 = vadd.f32 %v4298, %v4299
      %v4307 = vadd.f32 %v4306, %v4300
      %v4308 = vadd.f32 %v4307, %v4301
      %4309 = vadd.xlane.f32.xlu0 %v4308
      %v4310 = vpop.xlane.xlu0 %4309
      %v4311 = vadd.f32 %v4302, %v4303
      %v4312 = vadd.f32 %v4311, %v4304
      %v4313 = vadd.f32 %v4312, %v4305
      %4314 = vadd.xlane.f32.xlu0 %v4313
      %v4315 = vpop.xlane.xlu0 %4314
      %v4316 = vmul.f32 %v4310, %v4119
      %v4317 = vmul.f32 %v4315, %v4119
      %v4318 = vsub.f32 %v4298, %v4316
      %v4319 = vsub.f32 %v4299, %v4316
      %v4320 = vsub.f32 %v4300, %v4316
      %v4321 = vsub.f32 %v4301, %v4316
      %v4322 = vsub.f32 %v4302, %v4317
      %v4323 = vsub.f32 %v4303, %v4317
      %v4324 = vsub.f32 %v4304, %v4317
      %v4325 = vsub.f32 %v4305, %v4317
      %v4326 = vmul.f32 %v4318, %v4318
      %v4327 = vmul.f32 %v4319, %v4319
      %v4328 = vmul.f32 %v4320, %v4320
      %v4329 = vmul.f32 %v4321, %v4321
      %v4330 = vmul.f32 %v4322, %v4322
      %v4331 = vmul.f32 %v4323, %v4323
      %v4332 = vmul.f32 %v4324, %v4324
      %v4333 = vmul.f32 %v4325, %v4325
      %v4334 = vadd.f32 %v4326, %v4327
      %v4335 = vadd.f32 %v4334, %v4328
      %v4336 = vadd.f32 %v4335, %v4329
      %4337 = vadd.xlane.f32.xlu0 %v4336
      %v4338 = vpop.xlane.xlu0 %4337
      %v4339 = vadd.f32 %v4330, %v4331
      %v4340 = vadd.f32 %v4339, %v4332
      %v4341 = vadd.f32 %v4340, %v4333
      %4342 = vadd.xlane.f32.xlu0 %v4341
      %v4343 = vpop.xlane.xlu0 %4342
      %v4344 = vmul.f32 %v4338, %v4119
      %v4345 = vmul.f32 %v4343, %v4119
      %v4346 = vadd.f32 %v4344, 0.001
      %v4347 = vadd.f32 %v4345, 0.001
      %v4348 = vrsqrt.pop %v4346
      %v4349 = vmul.f32 %v4348, %v4346
      %v4350 = vmul.f32 %v4349, %v4348
      %v4351 = vmul.f32 0.5, %v4350
      %v4352 = vsub.f32 1.5, %v4351
      %v4353 = vmul.f32 %v4348, %v4352
      %vm4354 = vweird.f32 %v4346
      %vm4355 = vweird.f32 %v4348
      %vm4356 = vmor %vm4354, %vm4355
      %v4357 = vsel %vm4356, %v4348, %v4353
      %v4358 = vrsqrt.pop %v4347
      %v4359 = vmul.f32 %v4358, %v4347
      %v4360 = vmul.f32 %v4359, %v4358
      %v4361 = vmul.f32 0.5, %v4360
      %v4362 = vsub.f32 1.5, %v4361
      %v4363 = vmul.f32 %v4358, %v4362
      %vm4364 = vweird.f32 %v4347
      %vm4365 = vweird.f32 %v4358
      %vm4366 = vmor %vm4364, %vm4365
      %v4367 = vsel %vm4366, %v4358, %v4363
      %v4368 = vmul.f32 %v4318, %v4357
      %v4369 = vmul.f32 %v4319, %v4357
      %v4370 = vmul.f32 %v4320, %v4357
      %v4371 = vmul.f32 %v4321, %v4357
      %v4372 = vmul.f32 %v4322, %v4367
      %v4373 = vmul.f32 %v4323, %v4367
      %v4374 = vmul.f32 %v4324, %v4367
      %v4375 = vmul.f32 %v4325, %v4367
      %vm4376 = vcmp.ge.f32.partialorder %v4368, 0.0
      %vm4377 = vcmp.ge.f32.partialorder %v4369, 0.0
      %vm4378 = vcmp.ge.f32.partialorder %v4370, 0.0
      %vm4379 = vcmp.ge.f32.partialorder %v4371, 0.0
      %vm4380 = vcmp.ge.f32.partialorder %v4372, 0.0
      %vm4381 = vcmp.ge.f32.partialorder %v4373, 0.0
      %vm4382 = vcmp.ge.f32.partialorder %v4374, 0.0
      %vm4383 = vcmp.ge.f32.partialorder %v4375, 0.0
      %v4384 = vmul.f32 %v4368, 0.2
      %v4385 = vmul.f32 %v4369, 0.2
      %v4386 = vmul.f32 %v4370, 0.2
      %v4387 = vmul.f32 %v4371, 0.2
      %v4388 = vmul.f32 %v4372, 0.2
      %v4389 = vmul.f32 %v4373, 0.2
      %v4390 = vmul.f32 %v4374, 0.2
      %v4391 = vmul.f32 %v4375, 0.2
      %v4392 = vsel %vm4376, %v4368, %v4384
      %v4393 = vsel %vm4377, %v4369, %v4385
      %v4394 = vsel %vm4378, %v4370, %v4386
      %v4395 = vsel %vm4379, %v4371, %v4387
      %v4396 = vsel %vm4380, %v4372, %v4388
      %v4397 = vsel %vm4381, %v4373, %v4389
      %v4398 = vsel %vm4382, %v4374, %v4390
      %v4399 = vsel %vm4383, %v4375, %v4391
      %4400 = vst [vmem:[%s339] sm:$0xff] %v4392
      %4401 = vst [vmem:[%s339 + $0x8] sm:$0xff] %v4393
      %4402 = vst [vmem:[%s339 + $0x10] sm:$0xff] %v4394
      %4403 = vst [vmem:[%s339 + $0x18] sm:$0xff] %v4395
      %4404 = vst [vmem:[%s339 + $0x20] sm:$0xff] %v4396
      %4405 = vst [vmem:[%s339 + $0x28] sm:$0xff] %v4397
      %4406 = vst [vmem:[%s339 + $0x30] sm:$0xff] %v4398
      %4407 = vst [vmem:[%s339 + $0x38] sm:$0xff] %v4399
      %p4408 = scmp.lt.s32.totalorder %s19, 1
      %s4409 = scalar_select %p4408, %s19, 1
      %s4410 = smul.addr %s4409, 8
      %s4411 = smul.addr %s4410, 8
      %s4412 = scalar_lea.vmem %s8, %s4411
      // Predicated region
      $region53: #{prm_generator_forward.5} parent=51 // pred_check
        %p4413 = pneg %p220
      $region54: #{prm_generator_forward.5} parent=51 // pred_check_branch
        %4415 = sbr.rel (%p4413) target = $region56
      $region55: #{prm_generator_forward.5} parent=51 // pred_region
        _
      $region56: #{prm_generator_forward.5} parent=51 // pred_fallthru
        _
    $region52: #{prm_generator_forward.5} parent=5 // pred_fallthru
      _
    %p4416 = scmp.le.s32.totalorder 2, %s14
    // Predicated region
    $region57: #{prm_generator_forward.5} parent=5 // pred_check
      %p4417 = pneg %p4416
    $region58: #{prm_generator_forward.5} parent=5 // pred_check_branch
      %4419 = sbr.rel (%p4417) target = $region60
    $region59: #{prm_generator_forward.5} parent=5 // pred_region
      %s4420 = ssub.s32 %s14, 2
      // Predicated region
      $region61: #{prm_generator_forward.5} parent=59 // pred_check
        %p4421 = pneg %p226
      $region62: #{prm_generator_forward.5} parent=59 // pred_check_branch
        %4423 = sbr.rel (%p4421) target = $region64
      $region63: #{prm_generator_forward.5} parent=59 // pred_region
        %p4424 = scmp.lt.s32.totalorder %s20, 1
        %s4425 = scalar_select %p4424, %s20, 1
        %s4426 = smul.addr %s4425, 8
        %s4427 = smul.addr %s4426, 8
        %s4428 = scalar_lea.vmem %s8, %s4427
      $region64: #{prm_generator_forward.5} parent=59 // pred_fallthru
        _
    $region60: #{prm_generator_forward.5} parent=5 // pred_fallthru
      _
  $region6: #{prm_generator_forward.5} parent=0 // loop_footer
    %s18 = sadd.s32 1, %s14
  $region7: #{prm_generator_forward.5} parent=0 // loop_footer_branch
    %13 = sbr.rel target = $region3
  $region8: #{prm_generator_forward.5} parent=0 // loop_exit
    _

// kernel: prm_generator_forward.7
$region0: #{prm_generator_forward.7}
  #allocation0 [shape = 'u32[]', space=smem, size = 0x4, offset = 0x4, fixed_abs, tag = 'smem constant byte address 0x4 - core index']
  #allocation1 [shape = 'u32[72,128]{1,0:T(1,128)}', space=vmem, size = 0x9000, scoped, tag = 'internal scratch']
  %s0 = inlined_call_operand.vmem [shape: f32[2,16,512], index: 0, kind: input, shape index: {}]
  %s1 = inlined_call_operand.vmem [shape: f32[2,16,1], index: 1, kind: input, shape index: {}]
  %s2 = inlined_call_operand.vmem [shape: f32[2,16,1], index: 2, kind: input, shape index: {}]
  %s3 = inlined_call_operand.vmem [shape: f32[4,16], index: 3, kind: input, shape index: {}]
  %s4 = inlined_call_operand.vmem [shape: f32[4,1], index: 4, kind: input, shape index: {}]
  %s5 = inlined_call_operand.vmem [shape: f32[2,4,512], index: 5, kind: output, shape index: {}]
  %s6 = sld [smem:[#allocation0]]
  $region91: #{prm_generator_forward.7} parent=0
    _
  %s8 = ssub.s32 1, %s6
  %s9 = scalar_select 0, %s8, %s6
  $region1: #{prm_generator_forward.7} parent=0
    #allocation2 [shape = 'u8[16384]{0}', space=vmem, size = 0x4000, scoped, tag = 'input window, operand 0']
    loop: start=0, step=1, limit=10
    $region2: #{prm_generator_forward.7} parent=1 // loop_pre_header
      _
    $region3: #{prm_generator_forward.7} parent=1 // loop_header
      %s11 = sphi 0, %s15
      %p12 = scmp.ge.s32.totalorder %s11, 10
      %s18 = sphi 0, %s30
      %s19 = sphi 0, %s26
      %s20 = sphi 0, %s18
      %s21 = sphi 0, %s19
      %s22 = sphi 0, %s20
      %s23 = sphi 0, %s21
      %s35 = sphi 0, %s37
      %s38 = sphi 0, %s35
      %s39 = sphi 0, %s38
      %s55 = sphi 0, %s39
      %s61 = sphi 0, %s63
      %s64 = sphi 0, %s61
      %s65 = sphi 0, %s64
      %s81 = sphi 0, %s65
      %s87 = sphi 0, %s89
      %s90 = sphi 0, %s87
      %s91 = sphi 0, %s90
      %s107 = sphi 0, %s91
      %s111 = sphi 0, %s111
      %s113 = sphi 0, %s111
      %s114 = sphi 0, %s113
      %s128 = sphi 0, %s114
      %s132 = sphi 0, %s132
      %s134 = sphi 0, %s132
      %s135 = sphi 0, %s134
      %s149 = sphi 0, %s135
      %s157 = sphi 0, %s159
      %s160 = sphi 0, %s157
      %s161 = sphi 0, %s160
      %s177 = sphi 0, %s161
    $region4: #{prm_generator_forward.7} parent=1 // loop_header_branch
      %14 = sbr.rel (%p12) target = $region8
    $region5: #{prm_generator_forward.7} parent=1 // loop_body
      %s16 = ssub.s32 %s11, 1
      %s17 = ssub.s32 %s11, 2
      %s24 = sadd.s32 1, %s19
      %p25 = scmp.ge.s32.totalorder %s24, 4
      %s26 = scalar_select %p25, 0, %s24
      %s27 = sadd.s32 1, %s18
      %s28 = scalar_select %p25, %s27, %s18
      %p29 = scmp.ge.s32.totalorder %s28, 2
      %s30 = scalar_select %p29, 0, %s28
      %s31 = ssub.s32 %s18, %s30
      %s32 = ssub.s32 %s19, %s26
      %s33 = sor.u32 %s31, %s32
      %p34 = scmp.eq.s32.totalorder %s33, 0
      %s36 = sadd.s32 %s35, 1
      %s37 = scalar_select %p34, %s35, %s36
      %p40 = pneg %p34
      %p41 = scmp.eq.s32.totalorder %s11, 7
      %p42 = por %p40, %p41
      %p43 = scmp.ne.s32.totalorder %s35, %s38
      %p44 = scmp.eq.s32.totalorder %s11, 0
      %p45 = por %p43, %p44
      %p46 = scmp.ne.s32.totalorder %s35, %s38
      %p47 = scmp.eq.s32.totalorder %s16, 7
      %p48 = por %p46, %p47
      %p49 = scmp.ne.s32.totalorder %s38, %s39
      %p50 = scmp.eq.s32.totalorder %s16, 0
      %p51 = por %p49, %p50
      %p52 = scmp.ne.s32.totalorder %s38, %s39
      %p53 = scmp.eq.s32.totalorder %s17, 7
      %p54 = por %p52, %p53
      %p56 = scmp.ne.s32.totalorder %s39, %s55
      %p57 = scmp.eq.s32.totalorder %s17, 0
      %p58 = por %p56, %p57
      %s59 = ssub.s32 %s18, %s30
      %p60 = scmp.eq.s32.totalorder %s59, 0
      %s62 = sadd.s32 %s61, 1
      %s63 = scalar_select %p60, %s61, %s62
      %p66 = pneg %p60
      %p67 = scmp.eq.s32.totalorder %s11, 7
      %p68 = por %p66, %p67
      %p69 = scmp.ne.s32.totalorder %s61, %s64
      %p70 = scmp.eq.s32.totalorder %s11, 0
      %p71 = por %p69, %p70
      %p72 = scmp.ne.s32.totalorder %s61, %s64
      %p73 = scmp.eq.s32.totalorder %s16, 7
      %p74 = por %p72, %p73
      %p75 = scmp.ne.s32.totalorder %s64, %s65
      %p76 = scmp.eq.s32.totalorder %s16, 0
      %p77 = por %p75, %p76
      %p78 = scmp.ne.s32.totalorder %s64, %s65
      %p79 = scmp.eq.s32.totalorder %s17, 7
      %p80 = por %p78, %p79
      %p82 = scmp.ne.s32.totalorder %s65, %s81
      %p83 = scmp.eq.s32.totalorder %s17, 0
      %p84 = por %p82, %p83
      %s85 = ssub.s32 %s18, %s30
      %p86 = scmp.eq.s32.totalorder %s85, 0
      %s88 = sadd.s32 %s87, 1
      %s89 = scalar_select %p86, %s87, %s88
      %p92 = pneg %p86
      %p93 = scmp.eq.s32.totalorder %s11, 7
      %p94 = por %p92, %p93
      %p95 = scmp.ne.s32.totalorder %s87, %s90
      %p96 = scmp.eq.s32.totalorder %s11, 0
      %p97 = por %p95, %p96
      %p98 = scmp.ne.s32.totalorder %s87, %s90
      %p99 = scmp.eq.s32.totalorder %s16, 7
      %p100 = por %p98, %p99
      %p101 = scmp.ne.s32.totalorder %s90, %s91
      %p102 = scmp.eq.s32.totalorder %s16, 0
      %p103 = por %p101, %p102
      %p104 = scmp.ne.s32.totalorder %s90, %s91
      %p105 = scmp.eq.s32.totalorder %s17, 7
      %p106 = por %p104, %p105
      %p108 = scmp.ne.s32.totalorder %s91, %s107
      %p109 = scmp.eq.s32.totalorder %s17, 0
      %p110 = por %p108, %p109
      %s112 = sadd.s32 %s111, 1
      %p115 = scmp.eq.s32.totalorder %s11, 7
      %p116 = scmp.ne.s32.totalorder %s111, %s113
      %p117 = scmp.eq.s32.totalorder %s11, 0
      %p118 = por %p116, %p117
      %p119 = scmp.ne.s32.totalorder %s111, %s113
      %p120 = scmp.eq.s32.totalorder %s16, 7
      %p121 = por %p119, %p120
      %p122 = scmp.ne.s32.totalorder %s113, %s114
      %p123 = scmp.eq.s32.totalorder %s16, 0
      %p124 = por %p122, %p123
      %p125 = scmp.ne.s32.totalorder %s113, %s114
      %p126 = scmp.eq.s32.totalorder %s17, 7
      %p127 = por %p125, %p126
      %p129 = scmp.ne.s32.totalorder %s114, %s128
      %p130 = scmp.eq.s32.totalorder %s17, 0
      %p131 = por %p129, %p130
      %s133 = sadd.s32 %s132, 1
      %p136 = scmp.eq.s32.totalorder %s11, 7
      %p137 = scmp.ne.s32.totalorder %s132, %s134
      %p138 = scmp.eq.s32.totalorder %s11, 0
      %p139 = por %p137, %p138
      %p140 = scmp.ne.s32.totalorder %s132, %s134
      %p141 = scmp.eq.s32.totalorder %s16, 7
      %p142 = por %p140, %p141
      %p143 = scmp.ne.s32.totalorder %s134, %s135
      %p144 = scmp.eq.s32.totalorder %s16, 0
      %p145 = por %p143, %p144
      %p146 = scmp.ne.s32.totalorder %s134, %s135
      %p147 = scmp.eq.s32.totalorder %s17, 7
      %p148 = por %p146, %p147
      %p150 = scmp.ne.s32.totalorder %s135, %s149
      %p151 = scmp.eq.s32.totalorder %s17, 0
      %p152 = por %p150, %p151
      %s153 = ssub.s32 %s18, %s30
      %s154 = ssub.s32 %s19, %s26
      %s155 = sor.u32 %s153, %s154
      %p156 = scmp.eq.s32.totalorder %s155, 0
      %s158 = sadd.s32 %s157, 1
      %s159 = scalar_select %p156, %s157, %s158
      %p162 = pneg %p156
      %p163 = scmp.eq.s32.totalorder %s11, 7
      %p164 = por %p162, %p163
      %p165 = scmp.ne.s32.totalorder %s157, %s160
      %p166 = scmp.eq.s32.totalorder %s11, 0
      %p167 = por %p165, %p166
      %p168 = scmp.ne.s32.totalorder %s157, %s160
      %p169 = scmp.eq.s32.totalorder %s16, 7
      %p170 = por %p168, %p169
      %p171 = scmp.ne.s32.totalorder %s160, %s161
      %p172 = scmp.eq.s32.totalorder %s16, 0
      %p173 = por %p171, %p172
      %p174 = scmp.ne.s32.totalorder %s160, %s161
      %p175 = scmp.eq.s32.totalorder %s17, 7
      %p176 = por %p174, %p175
      %p178 = scmp.ne.s32.totalorder %s161, %s177
      %p179 = scmp.eq.s32.totalorder %s17, 0
      %p180 = por %p178, %p179
      %p181 = scmp.le.s32.totalorder 1, %s11
      %p182 = scmp.lt.s32.totalorder %s11, 9
      %p183 = pnand %p181, %p182
      %p184 = pneg %p183
      // Predicated region
      $region9: #{prm_generator_forward.7} parent=5 // pred_check
        _
      $region10: #{prm_generator_forward.7} parent=5 // pred_check_branch
        %186 = sbr.rel (%p183) target = $region12
      $region11: #{prm_generator_forward.7} parent=5 // pred_region
        %s187 = ssub.s32 %s11, 1
        // Predicated region
        $region13: #{prm_generator_forward.7} parent=11 // pred_check
          %p188 = pneg %p124
        $region14: #{prm_generator_forward.7} parent=11 // pred_check_branch
          %190 = sbr.rel (%p188) target = $region16
        $region15: #{prm_generator_forward.7} parent=11 // pred_region
          _
        $region16: #{prm_generator_forward.7} parent=11 // pred_fallthru
          _
        // Predicated region
        $region17: #{prm_generator_forward.7} parent=11 // pred_check
          %p191 = pneg %p145
        $region18: #{prm_generator_forward.7} parent=11 // pred_check_branch
          %193 = sbr.rel (%p191) target = $region20
        $region19: #{prm_generator_forward.7} parent=11 // pred_region
          _
        $region20: #{prm_generator_forward.7} parent=11 // pred_fallthru
          _
      $region12: #{prm_generator_forward.7} parent=5 // pred_fallthru
        _
      %p194 = scmp.lt.s32.totalorder %s11, 8
      // Predicated region
      $region21: #{prm_generator_forward.7} parent=5 // pred_check
        %p195 = pneg %p194
      $region22: #{prm_generator_forward.7} parent=5 // pred_check_branch
        %197 = sbr.rel (%p195) target = $region24
      $region23: #{prm_generator_forward.7} parent=5 // pred_region
        // Predicated region
        $region25: #{prm_generator_forward.7} parent=23 // pred_check
          %p198 = pneg %p45
        $region26: #{prm_generator_forward.7} parent=23 // pred_check_branch
          %200 = sbr.rel (%p198) target = $region28
        $region27: #{prm_generator_forward.7} parent=23 // pred_region
          %s201 = sand.u32 %s35, 1
          %s202 = sand.u32 %s35, 1
          %s203 = smul.addr %s202, 16
          %s204 = scalar_lea.vmem [#allocation2], %s203
          %s205 = smul.addr %s18, 8
          %s206 = sadd.s32 %s19, %s205
          %s207 = smul.addr %s206, 8
          %s208 = scalar_lea.vmem %s0, %s207
          // Predicated region
          $region29: #{prm_generator_forward.7} parent=27 // pred_check
            _
          $region30: #{prm_generator_forward.7} parent=27 // pred_check_branch
            %210 = sbr.rel (0) target = $region32
          $region31: #{prm_generator_forward.7} parent=27 // pred_region
            // Predicated region
            $region33: #{prm_generator_forward.7} parent=31 // pred_check
              _
            $region34: #{prm_generator_forward.7} parent=31 // pred_check_branch
              %212 = sbr.rel (0) target = $region36
            $region35: #{prm_generator_forward.7} parent=31 // pred_region
              // Predicated region
              $region48: #{prm_generator_forward.7} parent=35 // pred_check
                _
              $region49: #{prm_generator_forward.7} parent=35 // pred_check_branch
                %230 = sbr.rel (0) target = $region51
              $region50: #{prm_generator_forward.7} parent=35 // pred_region
                loop: start=0, step=1, limit=1
                $region52: #{prm_generator_forward.7} parent=50 // loop_pre_header
                  _
                $region53: #{prm_generator_forward.7} parent=50 // loop_header
                  %s232 = sphi 0, %s236
                  %p233 = scmp.ge.s32.totalorder %s232, 1
                  %s237 = sphi %s208, %s208
                  %s238 = sphi %s204, %s204
                $region54: #{prm_generator_forward.7} parent=50 // loop_header_branch
                  %235 = sbr.rel (%p233) target = $region58
                $region55: #{prm_generator_forward.7} parent=50 // loop_body
                  %v239 = vld [vmem:[%s237] sm:$0xff]
                  %240 = vst [vmem:[%s238] sm:$0xff] %v239
                  %v241 = vld [vmem:[%s237 + $0x20] sm:$0xff]
                  %242 = vst [vmem:[%s238 + $0x8] sm:$0xff] %v241
                $region56: #{prm_generator_forward.7} parent=50 // loop_footer
                  %s236 = sadd.s32 1, %s232
                $region57: #{prm_generator_forward.7} parent=50 // loop_footer_branch
                  %231 = sbr.rel target = $region53
                $region58: #{prm_generator_forward.7} parent=50 // loop_exit
                  _
              $region51: #{prm_generator_forward.7} parent=35 // pred_fallthru
                _
              // Predicated region
              $region59: #{prm_generator_forward.7} parent=35 // pred_check
                _
              $region60: #{prm_generator_forward.7} parent=35 // pred_check_branch
                %244 = sbr.rel target = $region62
              $region61: #{prm_generator_forward.7} parent=35 // pred_region
                _
              $region62: #{prm_generator_forward.7} parent=35 // pred_fallthru
                _
            $region36: #{prm_generator_forward.7} parent=31 // pred_fallthru
              _
            // Predicated region
            $region37: #{prm_generator_forward.7} parent=31 // pred_check
              _
            $region38: #{prm_generator_forward.7} parent=31 // pred_check_branch
              %214 = sbr.rel target = $region40
            $region39: #{prm_generator_forward.7} parent=31 // pred_region
              %s216 = ssub.s32 256, 1
              loop: start=0, step=1, limit=1
              $region41: #{prm_generator_forward.7} parent=39 // loop_pre_header
                _
              $region42: #{prm_generator_forward.7} parent=39 // loop_header
                %s218 = sphi 0, %s222
                %p219 = scmp.ge.s32.totalorder %s218, 1
                %s223 = sphi %s208, %s208
                %s224 = sphi %s204, %s204
              $region43: #{prm_generator_forward.7} parent=39 // loop_header_branch
                %221 = sbr.rel (%p219) target = $region47
              $region44: #{prm_generator_forward.7} parent=39 // loop_body
                %v225 = vld [vmem:[%s223] sm:%s216]
                %226 = vst [vmem:[%s224] sm:%s216] %v225
                %v227 = vld [vmem:[%s223 + $0x20] sm:%s216]
                %228 = vst [vmem:[%s224 + $0x8] sm:%s216] %v227
              $region45: #{prm_generator_forward.7} parent=39 // loop_footer
                %s222 = sadd.s32 1, %s218
              $region46: #{prm_generator_forward.7} parent=39 // loop_footer_branch
                %217 = sbr.rel target = $region42
              $region47: #{prm_generator_forward.7} parent=39 // loop_exit
                _
            $region40: #{prm_generator_forward.7} parent=31 // pred_fallthru
              _
          $region32: #{prm_generator_forward.7} parent=27 // pred_fallthru
            _
          %245 = vnop
        $region28: #{prm_generator_forward.7} parent=23 // pred_fallthru
          _
        // Predicated region
        $region63: #{prm_generator_forward.7} parent=23 // pred_check
          %p246 = pneg %p71
        $region64: #{prm_generator_forward.7} parent=23 // pred_check_branch
          %248 = sbr.rel (%p246) target = $region66
        $region65: #{prm_generator_forward.7} parent=23 // pred_region
          %p249 = scmp.lt.s32.totalorder %s18, 1
          %s250 = scalar_select %p249, %s18, 1
          %s251 = smul.addr %s250, 2
          %s252 = smul.addr %s251, 8
          %s253 = scalar_lea.vmem %s1, %s252
        $region66: #{prm_generator_forward.7} parent=23 // pred_fallthru
          _
        // Predicated region
        $region67: #{prm_generator_forward.7} parent=23 // pred_check
          %p254 = pneg %p97
        $region68: #{prm_generator_forward.7} parent=23 // pred_check_branch
          %256 = sbr.rel (%p254) target = $region70
        $region69: #{prm_generator_forward.7} parent=23 // pred_region
          %p257 = scmp.lt.s32.totalorder %s18, 1
          %s258 = scalar_select %p257, %s18, 1
          %s259 = smul.addr %s258, 2
          %s260 = smul.addr %s259, 8
          %s261 = scalar_lea.vmem %s2, %s260
        $region70: #{prm_generator_forward.7} parent=23 // pred_fallthru
          _
      $region24: #{prm_generator_forward.7} parent=5 // pred_fallthru
        _
      %p262 = scmp.le.s32.totalorder 1, %s11
      %p263 = scmp.lt.s32.totalorder %s11, 9
      %p264 = pnand %p262, %p263
      %p265 = pneg %p264
      // Predicated region
      $region71: #{prm_generator_forward.7} parent=5 // pred_check
        _
      $region72: #{prm_generator_forward.7} parent=5 // pred_check_branch
        %267 = sbr.rel (%p264) target = $region74
      $region73: #{prm_generator_forward.7} parent=5 // pred_region
        %s268 = ssub.s32 %s11, 1
        %s269 = sand.u32 %s38, 1
        %s270 = sand.u32 %s38, 1
        %s271 = smul.addr %s270, 16
        %s272 = scalar_lea.vmem [#allocation2], %s271
        // Predicated region
        $region75: #{prm_generator_forward.7} parent=73 // pred_check
          %p273 = pneg %p51
        $region76: #{prm_generator_forward.7} parent=73 // pred_check_branch
          %275 = sbr.rel (%p273) target = $region78
        $region77: #{prm_generator_forward.7} parent=73 // pred_region
          _
        $region78: #{prm_generator_forward.7} parent=73 // pred_fallthru
          _
        %s276 = sand.u32 %s38, 1
        %s277 = sand.u32 %s38, 1
        %s278 = smul.addr %s277, 16
        %s279 = scalar_lea.vmem [#allocation2], %s278
        %p280 = pneg %p51
        %p281 = pneg %p48
        %p282 = scmp.lt.s32.totalorder %s20, 1
        %s283 = scalar_select %p282, %s20, 1
        %s284 = smul.addr %s283, 2
        %s285 = smul.addr %s284, 8
        %s286 = scalar_lea.vmem %s1, %s285
        %p287 = pneg %p77
        %p288 = pneg %p74
        %p289 = scmp.lt.s32.totalorder %s20, 1
        %s290 = scalar_select %p289, %s20, 1
        %s291 = smul.addr %s290, 2
        %s292 = smul.addr %s291, 8
        %s293 = scalar_lea.vmem %s2, %s292
        %p294 = pneg %p103
        %p295 = pneg %p100
        %p296 = pneg %p124
        %p297 = pneg %p121
        %p298 = pneg %p145
        %p299 = pneg %p142
        %p300 = pneg %p173
        %p301 = pneg %p170
        %p302 = scmp.lt.s32.totalorder %s20, 1
        %s303 = scalar_select %p302, %s20, 1
        %p304 = scmp.lt.s32.totalorder %s21, 3
        %s305 = scalar_select %p304, %s21, 3
        %s306 = smul.addr %s303, 4
        %s307 = sadd.s32 %s305, %s306
        %s308 = smul.addr %s307, 4
        %s309 = scalar_lea.vmem %s5, %s308
        %p310 = scmp.lt.s32.totalorder %s20, 1
        %s311 = scalar_select %p310, %s20, 1
        %s312 = smul.addr %s311, 2
        %s313 = smul.addr %s312, 8
        %s314 = scalar_lea.vmem %s1, %s313
        %p315 = scmp.lt.s32.totalorder %s20, 1
        %s316 = scalar_select %p315, %s20, 1
        %s317 = smul.addr %s316, 2
        %s318 = smul.addr %s317, 8
        %s319 = scalar_lea.vmem %s2, %s318
        %p320 = scmp.lt.s32.totalorder %s20, 1
        %s321 = scalar_select %p320, %s20, 1
        %p322 = scmp.lt.s32.totalorder %s21, 3
        %s323 = scalar_select %p322, %s21, 3
        %s324 = smul.addr %s321, 4
        %s325 = sadd.s32 %s323, %s324
        %s326 = smul.addr %s325, 4
        %s327 = scalar_lea.vmem %s5, %s326
        %v328 = vld [vmem:[%s272] sm:$0xff]
        %v329 = vld [vmem:[%s272 + $0x8] sm:$0xff]
        %v330 = vld [vmem:[%s314] sm:$0xff]
        %v331 = vld [vmem:[%s314 + $0x8] sm:$0xff]
        %333 = vset.pattern.permute.xlu0 0
        %334 = vperm.xlu0 %333, %v330
        %v335 = vpop.permute.xlu0 %334
        %338 = vset.pattern.permute.xlu0 0
        %339 = vperm.xlu0 %338, %v331
        %v340 = vpop.permute.xlu0 %339
        %v342 = vsub.f32 %v328, %v335
        %v343 = vsub.f32 %v329, %v340
        %v344 = vld [vmem:[%s319] sm:$0xff]
        %v345 = vld [vmem:[%s319 + $0x8] sm:$0xff]
        %347 = vset.pattern.permute.xlu0 0
        %348 = vperm.xlu0 %347, %v344
        %v349 = vpop.permute.xlu0 %348
        %352 = vset.pattern.permute.xlu0 0
        %353 = vperm.xlu0 %352, %v345
        %v354 = vpop.permute.xlu0 %353
        %v356 = vmul.f32 %v342, %v349
        %v357 = vmul.f32 %v343, %v354
        %vm358 = vcmp.ge.f32.partialorder %v356, 0.0
        %vm359 = vcmp.ge.f32.partialorder %v357, 0.0
        %v360 = vmul.f32 %v356, 0.2
        %v361 = vmul.f32 %v357, 0.2
        %v362 = vsel %vm358, %v356, %v360
        %v363 = vsel %vm359, %v357, %v361
        %v364 = vld [vmem:[%s3] sm:$0xf]
        %v365 = vld [vmem:[%s4] sm:$0xf]
        %367 = vset.pattern.permute.xlu0 0
        %368 = vperm.xlu0 %367, %v365
        %v369 = vpop.permute.xlu0 %368
        %vm371 = vcmask 130048
        %v373 = vsel %vm371, %v364, 0
        %375 = vmatpush.msra.mxu0 0.0
        %376 = vmatpush.msra.mxu0 0.0
        %377 = vmatpush.msra.mxu0 0.0
        %378 = vmatpush.msra.mxu0 0.0
        %379 = vmatpush.msra.mxu0 0.0
        %380 = vmatpush.msra.mxu0 0.0
        %381 = vmatpush.msra.mxu0 0.0
        %382 = vmatpush.msra.mxu0 0.0
        %383 = vmatpush.msra.mxu0 0.0
        %384 = vmatpush.msra.mxu0 0.0
        %385 = vmatpush.msra.mxu0 0.0
        %386 = vmatpush.msra.mxu0 0.0
        %387 = vmatpush.msra.mxu0 0.0
        %388 = vmatpush.msra.mxu0 0.0
        %389 = vmatpush.msra.mxu0 %v363
        %390 = vmatpush.msra.mxu0 %v362
        %391 = vmatmul.f32.gmra.mxu0 %v373
        %v392 = vpop.f32.mrf.mxu0
        %v393 = vadd.f32 %v369, %v392
        %394 = vdwg.mxu0
        %vm395 = vcmask 1043456
        %v396 = vsel %vm395, %v393, -inf
        %v397 = vrot.slane %v396, 4
        %v398 = vmax.f32 %v396, %v397
        %v399 = vrot.slane %v398, 2
        %v400 = vmax.f32 %v398, %v399
        %v401 = vrot.slane %v400, 1
        %v402 = vmax.f32 %v400, %v401
        %v403 = vsub.f32 %v393, %v402
        %v404 = vmul.f32 %v403, 1.442695
        %v405 = vpow.pop %v404
        %v406 = vsel %vm395, %v405, 0.0
        %v407 = vrot.slane %v406, 4
        %v408 = vadd.f32 %v406, %v407
        %v409 = vrot.slane %v408, 2
        %v410 = vadd.f32 %v408, %v409
        %v411 = vrot.slane %v410, 1
        %v412 = vadd.f32 %v410, %v411
        %v413 = vrcp.pop %v412
        %v414 = vmul.f32 %v405, %v413
        %415 = vst [vmem:[%s327] sm:$0xf] %v414
        %p416 = scmp.lt.s32.totalorder %s20, 1
        %s417 = scalar_select %p416, %s20, 1
        %p418 = scmp.lt.s32.totalorder %s21, 3
        %s419 = scalar_select %p418, %s21, 3
        %s420 = smul.addr %s417, 4
        %s421 = sadd.s32 %s419, %s420
        %s422 = smul.addr %s421, 4
        %s423 = scalar_lea.vmem %s5, %s422
        // Predicated region
        $region79: #{prm_generator_forward.7} parent=73 // pred_check
          %p424 = pneg %p170
        $region80: #{prm_generator_forward.7} parent=73 // pred_check_branch
          %426 = sbr.rel (%p424) target = $region82
        $region81: #{prm_generator_forward.7} parent=73 // pred_region
          _
        $region82: #{prm_generator_forward.7} parent=73 // pred_fallthru
          _
      $region74: #{prm_generator_forward.7} parent=5 // pred_fallthru
        _
      %p427 = scmp.le.s32.totalorder 2, %s11
      // Predicated region
      $region83: #{prm_generator_forward.7} parent=5 // pred_check
        %p428 = pneg %p427
      $region84: #{prm_generator_forward.7} parent=5 // pred_check_branch
        %430 = sbr.rel (%p428) target = $region86
      $region85: #{prm_generator_forward.7} parent=5 // pred_region
        %s431 = ssub.s32 %s11, 2
        // Predicated region
        $region87: #{prm_generator_forward.7} parent=85 // pred_check
          %p432 = pneg %p176
        $region88: #{prm_generator_forward.7} parent=85 // pred_check_branch
          %434 = sbr.rel (%p432) target = $region90
        $region89: #{prm_generator_forward.7} parent=85 // pred_region
          %p435 = scmp.lt.s32.totalorder %s22, 1
          %s436 = scalar_select %p435, %s22, 1
          %p437 = scmp.lt.s32.totalorder %s23, 3
          %s438 = scalar_select %p437, %s23, 3
          %s439 = smul.addr %s436, 4
          %s440 = sadd.s32 %s438, %s439
          %s441 = smul.addr %s440, 4
          %s442 = scalar_lea.vmem %s5, %s441
        $region90: #{prm_generator_forward.7} parent=85 // pred_fallthru
          _
      $region86: #{prm_generator_forward.7} parent=5 // pred_fallthru
        _
    $region6: #{prm_generator_forward.7} parent=1 // loop_footer
      %s15 = sadd.s32 1, %s11
    $region7: #{prm_generator_forward.7} parent=1 // loop_footer_branch
      %10 = sbr.rel target = $region3
    $region8: #{prm_generator_forward.7} parent=1 // loop_exit
      _

</llo_original>
